<compile_context>
chip_gen: v7x
topology: tpu7x:2x2x1
jax: 0.10.0
libtpu: 0.0.40
codegen_flags: <defaults>
</compile_context>

<pallas_src>
import functools

import jax
import jax.numpy as jnp
from jax import lax
from jax.experimental import pallas as pl
from jax.experimental.pallas import tpu as pltpu


# ----------------------------------------------------------------------------
# small helpers
# ----------------------------------------------------------------------------
def _round_up(x, m):
    return (x + m - 1) // m * m


def _pow2_divisor(n, cap=256):
    d = 1
    while d < cap and n % (2 * d) == 0:
        d *= 2
    return d


@functools.lru_cache(maxsize=1)
def _vmem_limit_bytes():
    # Per-generation scoped-VMEM cap: ~96 MiB on 128-MiB parts (v5e/v6e),
    # ~48 MiB on 64-MiB parts (v7x).  Falls back to 48 MiB.
    cap = 64 * 1024 * 1024
    try:
        info = pltpu.get_tpu_info()
        cap = int(getattr(info, "vmem_capacity_bytes", cap))
    except Exception:
        pass
    return int(min(cap * 3 // 4, 96 * 1024 * 1024))


def _silu(y):
    # In-kernel SiLU: exp + approximate reciprocal both run on the EUP slot.
    return y * pl.reciprocal(1.0 + jnp.exp(-y), approx=True)


def _silu_ref(y):
    return y * jax.nn.sigmoid(y)


def _row_tiling(m, target=1024):
    """Row-tile size for the 1x1 kernels.  Prefers an exact multiple-of-8
    divisor of m so no wrapper-side pad/slice HBM passes are needed."""
    if m <= target:
        tm = _round_up(m, 8)
        return tm, tm
    best = 0
    for tm in range(8, target + 1, 8):
        if m % tm == 0:
            best = tm
    if best >= 256:
        return best, m
    return target, _round_up(m, target)


def _pad_rows(a, mp):
    m = a.shape[0]
    return a if mp == m else jnp.pad(a, ((0, mp - m), (0, 0)))


def _pick_th(H, W, target_rows=4096):
    """Largest divisor TH of H with TH*W <= target_rows and (TH*W) % 8 == 0."""
    cands = [th for th in range(1, H + 1)
             if H % th == 0 and (th * W) % 8 == 0 and th * W <= target_rows]
    return max(cands) if cands else H


# ----------------------------------------------------------------------------
# 1x1 Conv + folded BN + SiLU kernels (dual-output and concat-fused)
# ----------------------------------------------------------------------------
def _cbl_dual_1x1_kernel(x_ref, w1_ref, s1_ref, b1_ref, w2_ref, s2_ref, b2_ref,
                         o1_ref, o2_ref):
    # Reads x once, produces both c1(x) and c_skipped(x).
    x = x_ref[...]
    y1 = jnp.dot(x, w1_ref[...], preferred_element_type=jnp.float32)
    o1_ref[...] = _silu(y1 * s1_ref[...] + b1_ref[...]).astype(o1_ref.dtype)
    y2 = jnp.dot(x, w2_ref[...], preferred_element_type=jnp.float32)
    o2_ref[...] = _silu(y2 * s2_ref[...] + b2_ref[...]).astype(o2_ref.dtype)


def _cbl_cat_1x1_kernel(a_ref, b_ref, wa_ref, wb_ref, s_ref, bias_ref, o_ref):
    # c_out(concat([a, b])) == a @ w[:Ca] + b @ w[Ca:]  -> no concat HBM pass.
    y = jnp.dot(a_ref[...], wa_ref[...], preferred_element_type=jnp.float32)
    y = y + jnp.dot(b_ref[...], wb_ref[...], preferred_element_type=jnp.float32)
    o_ref[...] = _silu(y * s_ref[...] + bias_ref[...]).astype(o_ref.dtype)


def cbl_dual_1x1(x2, p1, p2, tm_target=1024):
    M, Cin = x2.shape
    w1, s1, b1 = p1
    w2, s2, b2 = p2
    C1, C2 = w1.shape[-1], w2.shape[-1]
    tm, Mp = _row_tiling(M, tm_target)
    xp = _pad_rows(x2, Mp)
    a, b = pl.pallas_call(
        _cbl_dual_1x1_kernel,
        out_shape=(jax.ShapeDtypeStruct((Mp, C1), jnp.bfloat16),
                   jax.ShapeDtypeStruct((Mp, C2), jnp.bfloat16)),
        grid_spec=pltpu.PrefetchScalarGridSpec(
            num_scalar_prefetch=0,
            grid=(Mp // tm,),
            in_specs=[
                pl.BlockSpec((tm, Cin), lambda i: (i, 0)),
                pl.BlockSpec((Cin, C1), lambda i: (0, 0)),
                pl.BlockSpec((1, C1), lambda i: (0, 0)),
                pl.BlockSpec((1, C1), lambda i: (0, 0)),
                pl.BlockSpec((Cin, C2), lambda i: (0, 0)),
                pl.BlockSpec((1, C2), lambda i: (0, 0)),
                pl.BlockSpec((1, C2), lambda i: (0, 0)),
            ],
            out_specs=(pl.BlockSpec((tm, C1), lambda i: (i, 0)),
                       pl.BlockSpec((tm, C2), lambda i: (i, 0))),
        ),
        compiler_params=pltpu.CompilerParams(
            dimension_semantics=("parallel",),
            vmem_limit_bytes=_vmem_limit_bytes()),
        cost_estimate=pl.CostEstimate(
            flops=2 * Mp * Cin * (C1 + C2),
            transcendentals=Mp * (C1 + C2),
            bytes_accessed=2 * Mp * (Cin + C1 + C2) + 2 * Cin * (C1 + C2)
            + 8 * (C1 + C2)),
    )(xp,
      w1.astype(jnp.bfloat16), s1.reshape(1, -1).astype(jnp.float32),
      b1.reshape(1, -1).astype(jnp.float32),
      w2.astype(jnp.bfloat16), s2.reshape(1, -1).astype(jnp.float32),
      b2.reshape(1, -1).astype(jnp.float32))
    if Mp != M:
        a, b = a[:M], b[:M]
    return a, b


def cbl_cat_1x1(a2, b2, w, scale, bias, out_dtype=jnp.float32, tm_target=1024):
    M, Ca = a2.shape
    Cb = b2.shape[-1]
    Cout = w.shape[-1]
    tm, Mp = _row_tiling(M, tm_target)
    ap = _pad_rows(a2, Mp)
    bp = _pad_rows(b2, Mp)
    out = pl.pallas_call(
        _cbl_cat_1x1_kernel,
        out_shape=jax.ShapeDtypeStruct((Mp, Cout), out_dtype),
        grid_spec=pltpu.PrefetchScalarGridSpec(
            num_scalar_prefetch=0,
            grid=(Mp // tm,),
            in_specs=[
                pl.BlockSpec((tm, Ca), lambda i: (i, 0)),
                pl.BlockSpec((tm, Cb), lambda i: (i, 0)),
                pl.BlockSpec((Ca, Cout), lambda i: (0, 0)),
                pl.BlockSpec((Cb, Cout), lambda i: (0, 0)),
                pl.BlockSpec((1, Cout), lambda i: (0, 0)),
                pl.BlockSpec((1, Cout), lambda i: (0, 0)),
            ],
            out_specs=pl.BlockSpec((tm, Cout), lambda i: (i, 0)),
        ),
        compiler_params=pltpu.CompilerParams(
            dimension_semantics=("parallel",),
            vmem_limit_bytes=_vmem_limit_bytes()),
        cost_estimate=pl.CostEstimate(
            flops=2 * Mp * (Ca + Cb) * Cout,
            transcendentals=Mp * Cout,
            bytes_accessed=2 * Mp * (Ca + Cb) + 4 * Mp * Cout
            + 2 * (Ca + Cb) * Cout),
    )(ap, bp, w[:Ca].astype(jnp.bfloat16), w[Ca:].astype(jnp.bfloat16),
      scale.reshape(1, -1).astype(jnp.float32),
      bias.reshape(1, -1).astype(jnp.float32))
    return out[:M] if Mp != M else out


# ----------------------------------------------------------------------------
# Fused Bottleneck kernel:  out = SiLU(BN(conv3x3(SiLU(BN(y @ w1))))) + y
# grid = (N, H // TH); the 1x1 is computed in-kernel and staged (with a 1-row
# halo) into a padded bf16 VMEM scratch; 9 bf16 MXU matmuls accumulate into a
# single f32 accumulator; column halos handled by masking the patch.
# ----------------------------------------------------------------------------
def _make_bottleneck_kernel(H, W, TH, nH, ZG, rows):
    THW = TH * W
    staged = (TH + 2) * W          # halo row + TH rows + halo row
    tail = rows - ZG - staged
    gcd = _pow2_divisor(THW)

    def kernel(y_ref, w1_ref, s1_ref, b1_ref, w3_ref, s3_ref, b3_ref,
               o_ref, tp_ref):
        c = o_ref.shape[-1]
        h = pl.program_id(1)
        row0 = pl.multiple_of(h * THW, gcd)

        def cbl1(v):
            t = jnp.dot(v, w1_ref[...], preferred_element_type=jnp.float32)
            return _silu(t * s1_ref[...] + b1_ref[...]).astype(jnp.bfloat16)

        # Guard rows: only ever read under a zero mask -> must be finite.
        tp_ref[pl.ds(0, ZG), :] = jnp.zeros((ZG, c), jnp.bfloat16)
        tp_ref[pl.ds(ZG + staged, tail), :] = jnp.zeros((tail, c), jnp.bfloat16)

        # --- fused 1x1 CBL: interior rows of the tile ---
        y_mid = y_ref[pl.ds(row0, THW), :]
        tp_ref[pl.ds(ZG + W, THW), :] = cbl1(y_mid)

        # --- 1-row top/bottom halos (zeros at the image edge) ---
        top, bot = ZG, ZG + (TH + 1) * W
        if nH == 1:
            tp_ref[pl.ds(top, W), :] = jnp.zeros((W, c), jnp.bfloat16)
            tp_ref[pl.ds(bot, W), :] = jnp.zeros((W, c), jnp.bfloat16)
        else:
            @pl.when(h == 0)
            def _():
                tp_ref[pl.ds(top, W), :] = jnp.zeros((W, c), jnp.bfloat16)

            @pl.when(h > 0)
            def _():
                tp_ref[pl.ds(top, W), :] = cbl1(y_ref[pl.ds(row0 - W, W), :])

            @pl.when(h == nH - 1)
            def _():
                tp_ref[pl.ds(bot, W), :] = jnp.zeros((W, c), jnp.bfloat16)

            @pl.when(h < nH - 1)
            def _():
                tp_ref[pl.ds(bot, W), :] = cbl1(y_ref[pl.ds(row0 + THW, W), :])

        # --- 3x3 conv: single f32 accumulator over 9 bf16 taps ---
        col = lax.broadcasted_iota(jnp.int32, (THW, 1), 0) % W
        not_left = col > 0            # kw = -1 neighbour exists
        not_right = col < (W - 1)     # kw = +1 neighbour exists

        acc = jnp.zeros((THW, c), jnp.float32)
        for kh in range(3):
            base = ZG + kh * W
            for kw, mask in ((0, not_left), (1, None), (2, not_right)):
                patch = tp_ref[pl.ds(base + kw - 1, THW), :]
                if mask is not None:
                    patch = jnp.where(mask, patch, jnp.zeros_like(patch))
                acc = acc + jnp.dot(patch, w3_ref[kh, kw],
                                    preferred_element_type=jnp.float32)

        out = _silu(acc * s3_ref[...] + b3_ref[...]) + y_mid.astype(jnp.float32)
        o_ref[...] = out.astype(o_ref.dtype)

    return kernel


def bottleneck_fused(y2, p1, p3, N, H, W, tile_rows=4096):
    # y2: (N*H*W, c_) bf16 slab; p1 = 1x1 params, p3 = 3x3 params.
    c = y2.shape[-1]
    w1, s1, b1 = p1
    w3, s3, b3 = p3
    HW = H * W
    TH = _pick_th(H, W, tile_rows)
    nH = H // TH
    THW = TH * W
    ZG = 16
    staged = (TH + 2) * W
    rows = ZG + _round_up(staged, 8) + 8
    y3 = y2.reshape(N, HW, c)

    out = pl.pallas_call(
        _make_bottleneck_kernel(H, W, TH, nH, ZG, rows),
        out_shape=jax.ShapeDtypeStruct((N, HW, c), jnp.bfloat16),
        grid_spec=pltpu.PrefetchScalarGridSpec(
            num_scalar_prefetch=0,
            grid=(N, nH),
            in_specs=[
                # full image, indexed only by n -> stays resident across h
                pl.BlockSpec((None, HW, c), lambda n, h: (n, 0, 0)),
                pl.BlockSpec((c, c), lambda n, h: (0, 0)),
                pl.BlockSpec((1, c), lambda n, h: (0, 0)),
                pl.BlockSpec((1, c), lambda n, h: (0, 0)),
                pl.BlockSpec((3, 3, c, c), lambda n, h: (0, 0, 0, 0)),
                pl.BlockSpec((1, c), lambda n, h: (0, 0)),
                pl.BlockSpec((1, c), lambda n, h: (0, 0)),
            ],
            out_specs=pl.BlockSpec((None, THW, c), lambda n, h: (n, h, 0)),
            scratch_shapes=[pltpu.VMEM((rows, c), jnp.bfloat16)],
        ),
        compiler_params=pltpu.CompilerParams(
            dimension_semantics=("parallel", "arbitrary"),
            vmem_limit_bytes=_vmem_limit_bytes()),
        cost_estimate=pl.CostEstimate(
            flops=2 * N * HW * c * c * 10,          # 1x1 + 9 taps
            transcendentals=2 * N * HW * c,
            bytes_accessed=4 * N * HW * c + 20 * c * c + 16 * c),
    )(y3,
      w1.astype(jnp.bfloat16), s1.reshape(1, -1).astype(jnp.float32),
      b1.reshape(1, -1).astype(jnp.float32),
      w3.astype(jnp.bfloat16), s3.reshape(1, -1).astype(jnp.float32),
      b3.reshape(1, -1).astype(jnp.float32))
    return out.reshape(N * HW, c)


# ----------------------------------------------------------------------------
# Deterministic parameter construction (BN folded into scale/bias, eps=1e-3)
# ----------------------------------------------------------------------------
def init_cbl_params(key, cin, cout, ksize):
    kw_, kg, kb, km, kv = jax.random.split(key, 5)
    if ksize == 1:
        w = jax.random.normal(kw_, (cin, cout), jnp.float32) / jnp.sqrt(cin)
    else:
        w = jax.random.normal(kw_, (ksize, ksize, cin, cout), jnp.float32) / jnp.sqrt(
            cin * ksize * ksize)
    gamma = jax.random.uniform(kg, (cout,), jnp.float32, 0.8, 1.2)
    beta = jax.random.normal(kb, (cout,), jnp.float32) * 0.1
    mean = jax.random.normal(km, (cout,), jnp.float32) * 0.1
    var = jax.random.uniform(kv, (cout,), jnp.float32, 0.5, 1.5)
    eps = 1e-3
    scale = gamma / jnp.sqrt(var + eps)
    bias = beta - mean * scale
    return w, scale, bias


def c3_init(key, in_channels, out_channels, width_multiple=1, depth=1):
    c_ = int(width_multiple * in_channels)
    keys = jax.random.split(key, 3 + 2 * depth)
    return {
        "c1": init_cbl_params(keys[0], in_channels, c_, 1),
        "c_skipped": init_cbl_params(keys[1], in_channels, c_, 1),
        "seq": [
            (init_cbl_params(keys[2 + 2 * i], c_, c_, 1),
             init_cbl_params(keys[3 + 2 * i], c_, c_, 3))
            for i in range(depth)
        ],
        "c_out": init_cbl_params(keys[2 + 2 * depth], c_ * 2, out_channels, 1),
    }


# ----------------------------------------------------------------------------
# C3 forward (backbone=True): cat([seq(c1(x)), c_skipped(x)], ch) -> c_out
# ----------------------------------------------------------------------------
def c3_forward(x_nchw, params):
    # TODO(synk): BatchNorm is modeled in inference (running-stats) mode and
    # folded into the conv; PyTorch train-mode batch statistics are not modeled.
    N, Cin, H, W = x_nchw.shape
    x2 = jnp.transpose(x_nchw, (0, 2, 3, 1)).astype(jnp.bfloat16)
    x2 = x2.reshape(N * H * W, Cin)

    y2, skip2 = cbl_dual_1x1(x2, params["c1"], params["c_skipped"])
    for (p1, p3) in params["seq"]:           # Bottleneck: c2(c1(y)) + y, fused
        y2 = bottleneck_fused(y2, p1, p3, N, H, W)
    out2 = cbl_cat_1x1(y2, skip2, *params["c_out"], out_dtype=jnp.float32)

    out = out2.reshape(N, H, W, -1)
    return jnp.transpose(out, (0, 3, 1, 2)).astype(jnp.float32)


# ----------------------------------------------------------------------------
# Pure-JAX reference mirroring the kernel's bf16 storage points
# ----------------------------------------------------------------------------
def c3_ref(x_nchw, params):
    N, Cin, H, W = x_nchw.shape
    x2 = jnp.transpose(x_nchw, (0, 2, 3, 1)).astype(jnp.bfloat16)
    x2 = x2.reshape(N * H * W, Cin)

    def cbl1(xv, w, s, b):
        y = jnp.dot(xv.astype(jnp.float32),
                    w.astype(jnp.bfloat16).astype(jnp.float32))
        return _silu_ref(y * s.reshape(1, -1) + b.reshape(1, -1))

    a2 = cbl1(x2, *params["c1"]).astype(jnp.bfloat16)
    skip2 = cbl1(x2, *params["c_skipped"]).astype(jnp.bfloat16)
    y2 = a2
    for (p1, p3) in params["seq"]:
        t2 = cbl1(y2, *p1).astype(jnp.bfloat16)
        w3, s3, b3 = p3
        t = t2.astype(jnp.float32).reshape(N, H, W, -1)
        c = jax.lax.conv_general_dilated(
            t, w3.astype(jnp.bfloat16).astype(jnp.float32), (1, 1), "SAME",
            dimension_numbers=("NHWC", "HWIO", "NHWC"))
        c = c * s3.reshape(1, 1, 1, -1) + b3.reshape(1, 1, 1, -1)
        y2 = (_silu_ref(c).reshape(N * H * W, -1)
              + y2.astype(jnp.float32)).astype(jnp.bfloat16)

    w, s, b = params["c_out"]
    c_ = y2.shape[-1]
    y = (jnp.dot(y2.astype(jnp.float32),
                 w[:c_].astype(jnp.bfloat16).astype(jnp.float32))
         + jnp.dot(skip2.astype(jnp.float32),
                   w[c_:].astype(jnp.bfloat16).astype(jnp.float32)))
    y = _silu_ref(y * s.reshape(1, -1) + b.reshape(1, -1))
    out = y.reshape(N, H, W, -1)
    return jnp.transpose(out, (0, 3, 1, 2)).astype(jnp.float32)


if __name__ == "__main__":
    key = jax.random.PRNGKey(0)
    kx, kp = jax.random.split(key)

    # Small shapes consistent with the module: N=2, in_channels=8, 16x16
    # spatial, out_channels=16, width_multiple=1, depth=1, backbone=True.
    N, Cin, H, W = 2, 8, 16, 16
    Cout = 16
    x = jax.random.normal(kx, (N, Cin, H, W), jnp.float32)
    params = c3_init(kp, Cin, Cout, width_multiple=1, depth=1)

    out = jax.jit(c3_forward)(x, params)
    out = jax.block_until_ready(out)
    assert out.shape == (N, Cout, H, W), out.shape

    ref = c3_ref(x, params)
    err = float(jnp.max(jnp.abs(out - ref)))
    assert jnp.allclose(out, ref, atol=5e-2, rtol=5e-2), f"max abs err {err}"

    print("KERNEL_OK")
</pallas_src>

<mosaic_0001>
module attributes {stable_mosaic.version = 11 : i64} {
  func.func @_cbl_dual_1x1_kernel(%arg0: i32, %arg1: memref<512x8xbf16, #tpu.memory_space<vmem>>, %arg2: memref<8x8xbf16, #tpu.memory_space<vmem>>, %arg3: memref<1x8xf32, #tpu.memory_space<vmem>>, %arg4: memref<1x8xf32, #tpu.memory_space<vmem>>, %arg5: memref<8x8xbf16, #tpu.memory_space<vmem>>, %arg6: memref<1x8xf32, #tpu.memory_space<vmem>>, %arg7: memref<1x8xf32, #tpu.memory_space<vmem>>, %arg8: memref<512x8xbf16, #tpu.memory_space<vmem>>, %arg9: memref<512x8xbf16, #tpu.memory_space<vmem>>) attributes {dimension_semantics = [#tpu.dimension_semantics<parallel>], iteration_bounds = array<i64: 1>, scalar_prefetch = 0 : i64, scratch_operands = 0 : i64, tpu.core_type = #tpu.core_type<tc>, window_params = [{transform_indices = @transform_0, window_bounds = array<i64: 512, 8>}, {pipeline_mode = #tpu.pipeline_mode<synchronous>, transform_indices = @transform_1, window_bounds = array<i64: 8, 8>}, {pipeline_mode = #tpu.pipeline_mode<synchronous>, transform_indices = @transform_2, window_bounds = array<i64: 1, 8>}, {pipeline_mode = #tpu.pipeline_mode<synchronous>, transform_indices = @transform_3, window_bounds = array<i64: 1, 8>}, {pipeline_mode = #tpu.pipeline_mode<synchronous>, transform_indices = @transform_4, window_bounds = array<i64: 8, 8>}, {pipeline_mode = #tpu.pipeline_mode<synchronous>, transform_indices = @transform_5, window_bounds = array<i64: 1, 8>}, {pipeline_mode = #tpu.pipeline_mode<synchronous>, transform_indices = @transform_6, window_bounds = array<i64: 1, 8>}, {transform_indices = @transform_7, window_bounds = array<i64: 512, 8>}, {transform_indices = @transform_8, window_bounds = array<i64: 512, 8>}]} {
    %c0 = arith.constant 0 : index
    %c0_0 = arith.constant 0 : index
    %0 = vector.load %arg1[%c0, %c0_0] : memref<512x8xbf16, #tpu.memory_space<vmem>>, vector<512x8xbf16>
    %c0_1 = arith.constant 0 : index
    %c0_2 = arith.constant 0 : index
    %1 = vector.load %arg2[%c0_1, %c0_2] : memref<8x8xbf16, #tpu.memory_space<vmem>>, vector<8x8xbf16>
    %cst = arith.constant dense<0.000000e+00> : vector<512x8xf32>
    %2 = tpu.matmul %0, %1, %cst {dimension_numbers = #tpu.dot_dimension_numbers<[1], [0], [0], [1], [0, 0, 1, 1], [], []>} : vector<512x8xbf16>, vector<8x8xbf16>, vector<512x8xf32> -> vector<512x8xf32>
    %c0_3 = arith.constant 0 : index
    %c0_4 = arith.constant 0 : index
    %3 = vector.load %arg3[%c0_3, %c0_4] : memref<1x8xf32, #tpu.memory_space<vmem>>, vector<1x8xf32>
    %4 = vector.broadcast %3 : vector<1x8xf32> to vector<512x8xf32>
    %5 = arith.mulf %2, %4 : vector<512x8xf32>
    %c0_5 = arith.constant 0 : index
    %c0_6 = arith.constant 0 : index
    %6 = vector.load %arg4[%c0_5, %c0_6] : memref<1x8xf32, #tpu.memory_space<vmem>>, vector<1x8xf32>
    %7 = vector.broadcast %6 : vector<1x8xf32> to vector<512x8xf32>
    %8 = arith.addf %5, %7 : vector<512x8xf32>
    %cst_7 = arith.constant 0.000000e+00 : f32
    %9 = vector.broadcast %cst_7 : f32 to vector<512x8xf32>
    %10 = arith.subf %9, %8 : vector<512x8xf32>
    %11 = math.exp %10 : vector<512x8xf32>
    %cst_8 = arith.constant 1.000000e+00 : f32
    %12 = vector.broadcast %cst_8 : f32 to vector<512x8xf32>
    %13 = arith.addf %12, %11 : vector<512x8xf32>
    %14 = tpu.reciprocal %13 {approx = true} : vector<512x8xf32> -> vector<512x8xf32>
    %15 = arith.mulf %8, %14 : vector<512x8xf32>
    %16 = arith.truncf %15 : vector<512x8xf32> to vector<512x8xbf16>
    %c0_9 = arith.constant 0 : index
    %c0_10 = arith.constant 0 : index
    %17 = vector.load %arg8[%c0_9, %c0_10] : memref<512x8xbf16, #tpu.memory_space<vmem>>, vector<512x8xbf16>
    tpu.vector_store %arg8[%c0_9, %c0_10], %16 {strides = array<i32>} : memref<512x8xbf16, #tpu.memory_space<vmem>>, vector<512x8xbf16>,
    %c0_11 = arith.constant 0 : index
    %c0_12 = arith.constant 0 : index
    %18 = vector.load %arg5[%c0_11, %c0_12] : memref<8x8xbf16, #tpu.memory_space<vmem>>, vector<8x8xbf16>
    %cst_13 = arith.constant dense<0.000000e+00> : vector<512x8xf32>
    %19 = tpu.matmul %0, %18, %cst_13 {dimension_numbers = #tpu.dot_dimension_numbers<[1], [0], [0], [1], [0, 0, 1, 1], [], []>} : vector<512x8xbf16>, vector<8x8xbf16>, vector<512x8xf32> -> vector<512x8xf32>
    %c0_14 = arith.constant 0 : index
    %c0_15 = arith.constant 0 : index
    %20 = vector.load %arg6[%c0_14, %c0_15] : memref<1x8xf32, #tpu.memory_space<vmem>>, vector<1x8xf32>
    %21 = vector.broadcast %20 : vector<1x8xf32> to vector<512x8xf32>
    %22 = arith.mulf %19, %21 : vector<512x8xf32>
    %c0_16 = arith.constant 0 : index
    %c0_17 = arith.constant 0 : index
    %23 = vector.load %arg7[%c0_16, %c0_17] : memref<1x8xf32, #tpu.memory_space<vmem>>, vector<1x8xf32>
    %24 = vector.broadcast %23 : vector<1x8xf32> to vector<512x8xf32>
    %25 = arith.addf %22, %24 : vector<512x8xf32>
    %cst_18 = arith.constant 0.000000e+00 : f32
    %26 = vector.broadcast %cst_18 : f32 to vector<512x8xf32>
    %27 = arith.subf %26, %25 : vector<512x8xf32>
    %28 = math.exp %27 : vector<512x8xf32>
    %cst_19 = arith.constant 1.000000e+00 : f32
    %29 = vector.broadcast %cst_19 : f32 to vector<512x8xf32>
    %30 = arith.addf %29, %28 : vector<512x8xf32>
    %31 = tpu.reciprocal %30 {approx = true} : vector<512x8xf32> -> vector<512x8xf32>
    %32 = arith.mulf %25, %31 : vector<512x8xf32>
    %33 = arith.truncf %32 : vector<512x8xf32> to vector<512x8xbf16>
    %c0_20 = arith.constant 0 : index
    %c0_21 = arith.constant 0 : index
    %34 = vector.load %arg9[%c0_20, %c0_21] : memref<512x8xbf16, #tpu.memory_space<vmem>>, vector<512x8xbf16>
    tpu.vector_store %arg9[%c0_20, %c0_21], %33 {strides = array<i32>} : memref<512x8xbf16, #tpu.memory_space<vmem>>, vector<512x8xbf16>,
    return
  }
  func.func @transform_0(%arg0: i32) -> (i32, i32) {
    %c0_i32 = arith.constant 0 : i32
    %c0_i32_0 = arith.constant 0 : i32
    return %arg0, %c0_i32 : i32, i32
  }
  func.func @transform_1(%arg0: i32) -> (i32, i32) {
    %c0_i32 = arith.constant 0 : i32
    %c0_i32_0 = arith.constant 0 : i32
    %c0_i32_1 = arith.constant 0 : i32
    return %c0_i32, %c0_i32_0 : i32, i32
  }
  func.func @transform_2(%arg0: i32) -> (i32, i32) {
    %c0_i32 = arith.constant 0 : i32
    %c0_i32_0 = arith.constant 0 : i32
    %c0_i32_1 = arith.constant 0 : i32
    return %c0_i32, %c0_i32_0 : i32, i32
  }
  func.func @transform_3(%arg0: i32) -> (i32, i32) {
    %c0_i32 = arith.constant 0 : i32
    %c0_i32_0 = arith.constant 0 : i32
    %c0_i32_1 = arith.constant 0 : i32
    return %c0_i32, %c0_i32_0 : i32, i32
  }
  func.func @transform_4(%arg0: i32) -> (i32, i32) {
    %c0_i32 = arith.constant 0 : i32
    %c0_i32_0 = arith.constant 0 : i32
    %c0_i32_1 = arith.constant 0 : i32
    return %c0_i32, %c0_i32_0 : i32, i32
  }
  func.func @transform_5(%arg0: i32) -> (i32, i32) {
    %c0_i32 = arith.constant 0 : i32
    %c0_i32_0 = arith.constant 0 : i32
    %c0_i32_1 = arith.constant 0 : i32
    return %c0_i32, %c0_i32_0 : i32, i32
  }
  func.func @transform_6(%arg0: i32) -> (i32, i32) {
    %c0_i32 = arith.constant 0 : i32
    %c0_i32_0 = arith.constant 0 : i32
    %c0_i32_1 = arith.constant 0 : i32
    return %c0_i32, %c0_i32_0 : i32, i32
  }
  func.func @transform_7(%arg0: i32) -> (i32, i32) {
    %c0_i32 = arith.constant 0 : i32
    %c0_i32_0 = arith.constant 0 : i32
    return %arg0, %c0_i32 : i32, i32
  }
  func.func @transform_8(%arg0: i32) -> (i32, i32) {
    %c0_i32 = arith.constant 0 : i32
    %c0_i32_0 = arith.constant 0 : i32
    return %arg0, %c0_i32 : i32, i32
  }
}

module attributes {stable_mosaic.version = 11 : i64} {
  func.func @_cbl_cat_1x1_kernel(%arg0: i32, %arg1: memref<512x8xbf16, #tpu.memory_space<vmem>>, %arg2: memref<512x8xbf16, #tpu.memory_space<vmem>>, %arg3: memref<8x16xbf16, #tpu.memory_space<vmem>>, %arg4: memref<8x16xbf16, #tpu.memory_space<vmem>>, %arg5: memref<1x16xf32, #tpu.memory_space<vmem>>, %arg6: memref<1x16xf32, #tpu.memory_space<vmem>>, %arg7: memref<512x16xf32, #tpu.memory_space<vmem>>) attributes {dimension_semantics = [#tpu.dimension_semantics<parallel>], iteration_bounds = array<i64: 1>, scalar_prefetch = 0 : i64, scratch_operands = 0 : i64, tpu.core_type = #tpu.core_type<tc>, window_params = [{transform_indices = @transform_0, window_bounds = array<i64: 512, 8>}, {transform_indices = @transform_1, window_bounds = array<i64: 512, 8>}, {pipeline_mode = #tpu.pipeline_mode<synchronous>, transform_indices = @transform_2, window_bounds = array<i64: 8, 16>}, {pipeline_mode = #tpu.pipeline_mode<synchronous>, transform_indices = @transform_3, window_bounds = array<i64: 8, 16>}, {pipeline_mode = #tpu.pipeline_mode<synchronous>, transform_indices = @transform_4, window_bounds = array<i64: 1, 16>}, {pipeline_mode = #tpu.pipeline_mode<synchronous>, transform_indices = @transform_5, window_bounds = array<i64: 1, 16>}, {transform_indices = @transform_6, window_bounds = array<i64: 512, 16>}]} {
    %c0 = arith.constant 0 : index
    %c0_0 = arith.constant 0 : index
    %0 = vector.load %arg1[%c0, %c0_0] : memref<512x8xbf16, #tpu.memory_space<vmem>>, vector<512x8xbf16>
    %c0_1 = arith.constant 0 : index
    %c0_2 = arith.constant 0 : index
    %1 = vector.load %arg3[%c0_1, %c0_2] : memref<8x16xbf16, #tpu.memory_space<vmem>>, vector<8x16xbf16>
    %cst = arith.constant dense<0.000000e+00> : vector<512x16xf32>
    %2 = tpu.matmul %0, %1, %cst {dimension_numbers = #tpu.dot_dimension_numbers<[1], [0], [0], [1], [0, 0, 1, 1], [], []>} : vector<512x8xbf16>, vector<8x16xbf16>, vector<512x16xf32> -> vector<512x16xf32>
    %c0_3 = arith.constant 0 : index
    %c0_4 = arith.constant 0 : index
    %3 = vector.load %arg2[%c0_3, %c0_4] : memref<512x8xbf16, #tpu.memory_space<vmem>>, vector<512x8xbf16>
    %c0_5 = arith.constant 0 : index
    %c0_6 = arith.constant 0 : index
    %4 = vector.load %arg4[%c0_5, %c0_6] : memref<8x16xbf16, #tpu.memory_space<vmem>>, vector<8x16xbf16>
    %cst_7 = arith.constant dense<0.000000e+00> : vector<512x16xf32>
    %5 = tpu.matmul %3, %4, %cst_7 {dimension_numbers = #tpu.dot_dimension_numbers<[1], [0], [0], [1], [0, 0, 1, 1], [], []>} : vector<512x8xbf16>, vector<8x16xbf16>, vector<512x16xf32> -> vector<512x16xf32>
    %6 = arith.addf %2, %5 : vector<512x16xf32>
    %c0_8 = arith.constant 0 : index
    %c0_9 = arith.constant 0 : index
    %7 = vector.load %arg5[%c0_8, %c0_9] : memref<1x16xf32, #tpu.memory_space<vmem>>, vector<1x16xf32>
    %8 = vector.broadcast %7 : vector<1x16xf32> to vector<512x16xf32>
    %9 = arith.mulf %6, %8 : vector<512x16xf32>
    %c0_10 = arith.constant 0 : index
    %c0_11 = arith.constant 0 : index
    %10 = vector.load %arg6[%c0_10, %c0_11] : memref<1x16xf32, #tpu.memory_space<vmem>>, vector<1x16xf32>
    %11 = vector.broadcast %10 : vector<1x16xf32> to vector<512x16xf32>
    %12 = arith.addf %9, %11 : vector<512x16xf32>
    %cst_12 = arith.constant 0.000000e+00 : f32
    %13 = vector.broadcast %cst_12 : f32 to vector<512x16xf32>
    %14 = arith.subf %13, %12 : vector<512x16xf32>
    %15 = math.exp %14 : vector<512x16xf32>
    %cst_13 = arith.constant 1.000000e+00 : f32
    %16 = vector.broadcast %cst_13 : f32 to vector<512x16xf32>
    %17 = arith.addf %16, %15 : vector<512x16xf32>
    %18 = tpu.reciprocal %17 {approx = true} : vector<512x16xf32> -> vector<512x16xf32>
    %19 = arith.mulf %12, %18 : vector<512x16xf32>
    %c0_14 = arith.constant 0 : index
    %c0_15 = arith.constant 0 : index
    %20 = vector.load %arg7[%c0_14, %c0_15] : memref<512x16xf32, #tpu.memory_space<vmem>>, vector<512x16xf32>
    tpu.vector_store %arg7[%c0_14, %c0_15], %19 {strides = array<i32>} : memref<512x16xf32, #tpu.memory_space<vmem>>, vector<512x16xf32>,
    return
  }
  func.func @transform_0(%arg0: i32) -> (i32, i32) {
    %c0_i32 = arith.constant 0 : i32
    %c0_i32_0 = arith.constant 0 : i32
    return %arg0, %c0_i32 : i32, i32
  }
  func.func @transform_1(%arg0: i32) -> (i32, i32) {
    %c0_i32 = arith.constant 0 : i32
    %c0_i32_0 = arith.constant 0 : i32
    return %arg0, %c0_i32 : i32, i32
  }
  func.func @transform_2(%arg0: i32) -> (i32, i32) {
    %c0_i32 = arith.constant 0 : i32
    %c0_i32_0 = arith.constant 0 : i32
    %c0_i32_1 = arith.constant 0 : i32
    return %c0_i32, %c0_i32_0 : i32, i32
  }
  func.func @transform_3(%arg0: i32) -> (i32, i32) {
    %c0_i32 = arith.constant 0 : i32
    %c0_i32_0 = arith.constant 0 : i32
    %c0_i32_1 = arith.constant 0 : i32
    return %c0_i32, %c0_i32_0 : i32, i32
  }
  func.func @transform_4(%arg0: i32) -> (i32, i32) {
    %c0_i32 = arith.constant 0 : i32
    %c0_i32_0 = arith.constant 0 : i32
    %c0_i32_1 = arith.constant 0 : i32
    return %c0_i32, %c0_i32_0 : i32, i32
  }
  func.func @transform_5(%arg0: i32) -> (i32, i32) {
    %c0_i32 = arith.constant 0 : i32
    %c0_i32_0 = arith.constant 0 : i32
    %c0_i32_1 = arith.constant 0 : i32
    return %c0_i32, %c0_i32_0 : i32, i32
  }
  func.func @transform_6(%arg0: i32) -> (i32, i32) {
    %c0_i32 = arith.constant 0 : i32
    %c0_i32_0 = arith.constant 0 : i32
    return %arg0, %c0_i32 : i32, i32
  }
}

module attributes {stable_mosaic.version = 11 : i64} {
  func.func @kernel(%arg0: i32, %arg1: i32, %arg2: memref<1x256x8xbf16, #tpu.memory_space<vmem>>, %arg3: memref<8x8xbf16, #tpu.memory_space<vmem>>, %arg4: memref<1x8xf32, #tpu.memory_space<vmem>>, %arg5: memref<1x8xf32, #tpu.memory_space<vmem>>, %arg6: memref<3x3x8x8xbf16, #tpu.memory_space<vmem>>, %arg7: memref<1x8xf32, #tpu.memory_space<vmem>>, %arg8: memref<1x8xf32, #tpu.memory_space<vmem>>, %arg9: memref<1x256x8xbf16, #tpu.memory_space<vmem>>, %arg10: memref<312x8xbf16, #tpu.memory_space<vmem>>) attributes {dimension_semantics = [#tpu.dimension_semantics<parallel>, #tpu.dimension_semantics<arbitrary>], iteration_bounds = array<i64: 2, 1>, scalar_prefetch = 0 : i64, scratch_operands = 1 : i64, tpu.core_type = #tpu.core_type<tc>, window_params = [{transform_indices = @transform_0, window_bounds = array<i64: 1, 256, 8>}, {pipeline_mode = #tpu.pipeline_mode<synchronous>, transform_indices = @transform_1, window_bounds = array<i64: 8, 8>}, {pipeline_mode = #tpu.pipeline_mode<synchronous>, transform_indices = @transform_2, window_bounds = array<i64: 1, 8>}, {pipeline_mode = #tpu.pipeline_mode<synchronous>, transform_indices = @transform_3, window_bounds = array<i64: 1, 8>}, {pipeline_mode = #tpu.pipeline_mode<synchronous>, transform_indices = @transform_4, window_bounds = array<i64: 3, 3, 8, 8>}, {pipeline_mode = #tpu.pipeline_mode<synchronous>, transform_indices = @transform_5, window_bounds = array<i64: 1, 8>}, {pipeline_mode = #tpu.pipeline_mode<synchronous>, transform_indices = @transform_6, window_bounds = array<i64: 1, 8>}, {transform_indices = @transform_7, window_bounds = array<i64: 1, 256, 8>}]} {
    %c256_i32 = arith.constant 256 : i32
    %0 = arith.muli %arg1, %c256_i32 : i32
    %1 = tpu.assume_multiple %0, 256 : i32
    %cst = arith.constant 0.000000e+00 : bf16
    %2 = vector.broadcast %cst : bf16 to vector<16x8xbf16>
    %c0 = arith.constant 0 : index
    %c0_0 = arith.constant 0 : index
    %3 = vector.load %arg10[%c0, %c0_0] : memref<312x8xbf16, #tpu.memory_space<vmem>>, vector<16x8xbf16>
    tpu.vector_store %arg10[%c0, %c0_0], %2 {strides = array<i32>} : memref<312x8xbf16, #tpu.memory_space<vmem>>, vector<16x8xbf16>,
    %cst_1 = arith.constant 0.000000e+00 : bf16
    %4 = vector.broadcast %cst_1 : bf16 to vector<8x8xbf16>
    %c304 = arith.constant 304 : index
    %c0_2 = arith.constant 0 : index
    %5 = vector.load %arg10[%c304, %c0_2] : memref<312x8xbf16, #tpu.memory_space<vmem>>, vector<8x8xbf16>
    tpu.vector_store %arg10[%c304, %c0_2], %4 {strides = array<i32>} : memref<312x8xbf16, #tpu.memory_space<vmem>>, vector<8x8xbf16>,
    %c0_3 = arith.constant 0 : index
    %6 = arith.index_cast %1 : i32 to index
    %c0_4 = arith.constant 0 : index
    %7 = vector.load %arg2[%c0_3, %6, %c0_4] : memref<1x256x8xbf16, #tpu.memory_space<vmem>>, vector<1x256x8xbf16>
    %8 = vector.shape_cast %7 : vector<1x256x8xbf16> to vector<256x8xbf16>
    %c0_5 = arith.constant 0 : index
    %c0_6 = arith.constant 0 : index
    %9 = vector.load %arg3[%c0_5, %c0_6] : memref<8x8xbf16, #tpu.memory_space<vmem>>, vector<8x8xbf16>
    %cst_7 = arith.constant dense<0.000000e+00> : vector<256x8xf32>
    %10 = tpu.matmul %8, %9, %cst_7 {dimension_numbers = #tpu.dot_dimension_numbers<[1], [0], [0], [1], [0, 0, 1, 1], [], []>} : vector<256x8xbf16>, vector<8x8xbf16>, vector<256x8xf32> -> vector<256x8xf32>
    %c0_8 = arith.constant 0 : index
    %c0_9 = arith.constant 0 : index
    %11 = vector.load %arg4[%c0_8, %c0_9] : memref<1x8xf32, #tpu.memory_space<vmem>>, vector<1x8xf32>
    %12 = vector.broadcast %11 : vector<1x8xf32> to vector<256x8xf32>
    %13 = arith.mulf %10, %12 : vector<256x8xf32>
    %c0_10 = arith.constant 0 : index
    %c0_11 = arith.constant 0 : index
    %14 = vector.load %arg5[%c0_10, %c0_11] : memref<1x8xf32, #tpu.memory_space<vmem>>, vector<1x8xf32>
    %15 = vector.broadcast %14 : vector<1x8xf32> to vector<256x8xf32>
    %16 = arith.addf %13, %15 : vector<256x8xf32>
    %cst_12 = arith.constant 0.000000e+00 : f32
    %17 = vector.broadcast %cst_12 : f32 to vector<256x8xf32>
    %18 = arith.subf %17, %16 : vector<256x8xf32>
    %19 = math.exp %18 : vector<256x8xf32>
    %cst_13 = arith.constant 1.000000e+00 : f32
    %20 = vector.broadcast %cst_13 : f32 to vector<256x8xf32>
    %21 = arith.addf %20, %19 : vector<256x8xf32>
    %22 = tpu.reciprocal %21 {approx = true} : vector<256x8xf32> -> vector<256x8xf32>
    %23 = arith.mulf %16, %22 : vector<256x8xf32>
    %24 = arith.truncf %23 : vector<256x8xf32> to vector<256x8xbf16>
    %c32 = arith.constant 32 : index
    %c0_14 = arith.constant 0 : index
    %25 = vector.load %arg10[%c32, %c0_14] : memref<312x8xbf16, #tpu.memory_space<vmem>>, vector<256x8xbf16>
    tpu.vector_store %arg10[%c32, %c0_14], %24 {strides = array<i32>} : memref<312x8xbf16, #tpu.memory_space<vmem>>, vector<256x8xbf16>,
    %cst_15 = arith.constant 0.000000e+00 : bf16
    %26 = vector.broadcast %cst_15 : bf16 to vector<16x8xbf16>
    %c16 = arith.constant 16 : index
    %c0_16 = arith.constant 0 : index
    %27 = vector.load %arg10[%c16, %c0_16] : memref<312x8xbf16, #tpu.memory_space<vmem>>, vector<16x8xbf16>
    tpu.vector_store %arg10[%c16, %c0_16], %26 {strides = array<i32>} : memref<312x8xbf16, #tpu.memory_space<vmem>>, vector<16x8xbf16>,
    %cst_17 = arith.constant 0.000000e+00 : bf16
    %28 = vector.broadcast %cst_17 : bf16 to vector<16x8xbf16>
    %c288 = arith.constant 288 : index
    %c0_18 = arith.constant 0 : index
    %29 = vector.load %arg10[%c288, %c0_18] : memref<312x8xbf16, #tpu.memory_space<vmem>>, vector<16x8xbf16>
    tpu.vector_store %arg10[%c288, %c0_18], %28 {strides = array<i32>} : memref<312x8xbf16, #tpu.memory_space<vmem>>, vector<16x8xbf16>,
    %30 = tpu.iota {dimensions = array<i32: 0>} : vector<256x1xi32>
    %c16_i32 = arith.constant 16 : i32
    %c0_i32 = arith.constant 0 : i32
    %31 = arith.cmpi eq, %c16_i32, %c0_i32 : i32
    %c1_i32 = arith.constant 1 : i32
    %32 = arith.select %31, %c1_i32, %c16_i32 : i32
    %33 = vector.broadcast %32 : i32 to vector<256x1xi32>
    %34 = arith.remsi %30, %33 : vector<256x1xi32>
    %c0_i32_19 = arith.constant 0 : i32
    %35 = vector.broadcast %c0_i32_19 : i32 to vector<256x1xi32>
    %36 = arith.cmpi ne, %34, %35 : vector<256x1xi32>
    %c0_i32_20 = arith.constant 0 : i32
    %37 = vector.broadcast %c0_i32_20 : i32 to vector<256x1xi32>
    %38 = arith.cmpi slt, %34, %37 : vector<256x1xi32>
    %c0_i32_21 = arith.constant 0 : i32
    %39 = arith.cmpi slt, %32, %c0_i32_21 : i32
    %40 = vector.broadcast %39 : i1 to vector<256x1xi1>
    %41 = vector.broadcast %40 : vector<256x1xi1> to vector<256x1xi1>
    %42 = arith.xori %38, %41 : vector<256x1xi1>
    %43 = arith.andi %42, %36 : vector<256x1xi1>
    %44 = vector.broadcast %32 : i32 to vector<256x1xi32>
    %45 = arith.addi %34, %44 : vector<256x1xi32>
    %46 = arith.select %43, %45, %34 : vector<256x1xi1>, vector<256x1xi32>
    %c0_i32_22 = arith.constant 0 : i32
    %47 = vector.broadcast %c0_i32_22 : i32 to vector<256x1xi32>
    %48 = arith.cmpi sgt, %46, %47 : vector<256x1xi32>
    %c15_i32 = arith.constant 15 : i32
    %49 = vector.broadcast %c15_i32 : i32 to vector<256x1xi32>
    %50 = arith.cmpi slt, %46, %49 : vector<256x1xi32>
    %cst_23 = arith.constant 0.000000e+00 : f32
    %51 = vector.broadcast %cst_23 : f32 to vector<256x8xf32>
    %c15 = arith.constant 15 : index
    %c0_24 = arith.constant 0 : index
    %52 = vector.load %arg10[%c15, %c0_24] : memref<312x8xbf16, #tpu.memory_space<vmem>>, vector<256x8xbf16>
    %cst_25 = arith.constant 0.000000e+00 : bf16
    %53 = vector.broadcast %cst_25 : bf16 to vector<256x8xbf16>
    %54 = vector.shape_cast %48 : vector<256x1xi1> to vector<256x1xi1>
    %55 = vector.broadcast %54 : vector<256x1xi1> to vector<256x8xi1>
    %56 = arith.select %55, %52, %53 : vector<256x8xi1>, vector<256x8xbf16>
    %c0_26 = arith.constant 0 : index
    %c0_27 = arith.constant 0 : index
    %c0_28 = arith.constant 0 : index
    %c0_29 = arith.constant 0 : index
    %57 = vector.load %arg6[%c0_26, %c0_27, %c0_28, %c0_29] : memref<3x3x8x8xbf16, #tpu.memory_space<vmem>>, vector<1x1x8x8xbf16>
    %58 = vector.shape_cast %57 : vector<1x1x8x8xbf16> to vector<8x8xbf16>
    %cst_30 = arith.constant dense<0.000000e+00> : vector<256x8xf32>
    %59 = tpu.matmul %56, %58, %cst_30 {dimension_numbers = #tpu.dot_dimension_numbers<[1], [0], [0], [1], [0, 0, 1, 1], [], []>} : vector<256x8xbf16>, vector<8x8xbf16>, vector<256x8xf32> -> vector<256x8xf32>
    %60 = arith.addf %51, %59 : vector<256x8xf32>
    %c16_31 = arith.constant 16 : index
    %c0_32 = arith.constant 0 : index
    %61 = vector.load %arg10[%c16_31, %c0_32] : memref<312x8xbf16, #tpu.memory_space<vmem>>, vector<256x8xbf16>
    %c0_33 = arith.constant 0 : index
    %c1 = arith.constant 1 : index
    %c0_34 = arith.constant 0 : index
    %c0_35 = arith.constant 0 : index
    %62 = vector.load %arg6[%c0_33, %c1, %c0_34, %c0_35] : memref<3x3x8x8xbf16, #tpu.memory_space<vmem>>, vector<1x1x8x8xbf16>
    %63 = vector.shape_cast %62 : vector<1x1x8x8xbf16> to vector<8x8xbf16>
    %cst_36 = arith.constant dense<0.000000e+00> : vector<256x8xf32>
    %64 = tpu.matmul %61, %63, %cst_36 {dimension_numbers = #tpu.dot_dimension_numbers<[1], [0], [0], [1], [0, 0, 1, 1], [], []>} : vector<256x8xbf16>, vector<8x8xbf16>, vector<256x8xf32> -> vector<256x8xf32>
    %65 = arith.addf %60, %64 : vector<256x8xf32>
    %c17 = arith.constant 17 : index
    %c0_37 = arith.constant 0 : index
    %66 = vector.load %arg10[%c17, %c0_37] : memref<312x8xbf16, #tpu.memory_space<vmem>>, vector<256x8xbf16>
    %cst_38 = arith.constant 0.000000e+00 : bf16
    %67 = vector.broadcast %cst_38 : bf16 to vector<256x8xbf16>
    %68 = vector.shape_cast %50 : vector<256x1xi1> to vector<256x1xi1>
    %69 = vector.broadcast %68 : vector<256x1xi1> to vector<256x8xi1>
    %70 = arith.select %69, %66, %67 : vector<256x8xi1>, vector<256x8xbf16>
    %c0_39 = arith.constant 0 : index
    %c2 = arith.constant 2 : index
    %c0_40 = arith.constant 0 : index
    %c0_41 = arith.constant 0 : index
    %71 = vector.load %arg6[%c0_39, %c2, %c0_40, %c0_41] : memref<3x3x8x8xbf16, #tpu.memory_space<vmem>>, vector<1x1x8x8xbf16>
    %72 = vector.shape_cast %71 : vector<1x1x8x8xbf16> to vector<8x8xbf16>
    %cst_42 = arith.constant dense<0.000000e+00> : vector<256x8xf32>
    %73 = tpu.matmul %70, %72, %cst_42 {dimension_numbers = #tpu.dot_dimension_numbers<[1], [0], [0], [1], [0, 0, 1, 1], [], []>} : vector<256x8xbf16>, vector<8x8xbf16>, vector<256x8xf32> -> vector<256x8xf32>
    %74 = arith.addf %65, %73 : vector<256x8xf32>
    %c31 = arith.constant 31 : index
    %c0_43 = arith.constant 0 : index
    %75 = vector.load %arg10[%c31, %c0_43] : memref<312x8xbf16, #tpu.memory_space<vmem>>, vector<256x8xbf16>
    %cst_44 = arith.constant 0.000000e+00 : bf16
    %76 = vector.broadcast %cst_44 : bf16 to vector<256x8xbf16>
    %77 = vector.shape_cast %48 : vector<256x1xi1> to vector<256x1xi1>
    %78 = vector.broadcast %77 : vector<256x1xi1> to vector<256x8xi1>
    %79 = arith.select %78, %75, %76 : vector<256x8xi1>, vector<256x8xbf16>
    %c1_45 = arith.constant 1 : index
    %c0_46 = arith.constant 0 : index
    %c0_47 = arith.constant 0 : index
    %c0_48 = arith.constant 0 : index
    %80 = vector.load %arg6[%c1_45, %c0_46, %c0_47, %c0_48] : memref<3x3x8x8xbf16, #tpu.memory_space<vmem>>, vector<1x1x8x8xbf16>
    %81 = vector.shape_cast %80 : vector<1x1x8x8xbf16> to vector<8x8xbf16>
    %cst_49 = arith.constant dense<0.000000e+00> : vector<256x8xf32>
    %82 = tpu.matmul %79, %81, %cst_49 {dimension_numbers = #tpu.dot_dimension_numbers<[1], [0], [0], [1], [0, 0, 1, 1], [], []>} : vector<256x8xbf16>, vector<8x8xbf16>, vector<256x8xf32> -> vector<256x8xf32>
    %83 = arith.addf %74, %82 : vector<256x8xf32>
    %c32_50 = arith.constant 32 : index
    %c0_51 = arith.constant 0 : index
    %84 = vector.load %arg10[%c32_50, %c0_51] : memref<312x8xbf16, #tpu.memory_space<vmem>>, vector<256x8xbf16>
    %c1_52 = arith.constant 1 : index
    %c1_53 = arith.constant 1 : index
    %c0_54 = arith.constant 0 : index
    %c0_55 = arith.constant 0 : index
    %85 = vector.load %arg6[%c1_52, %c1_53, %c0_54, %c0_55] : memref<3x3x8x8xbf16, #tpu.memory_space<vmem>>, vector<1x1x8x8xbf16>
    %86 = vector.shape_cast %85 : vector<1x1x8x8xbf16> to vector<8x8xbf16>
    %cst_56 = arith.constant dense<0.000000e+00> : vector<256x8xf32>
    %87 = tpu.matmul %84, %86, %cst_56 {dimension_numbers = #tpu.dot_dimension_numbers<[1], [0], [0], [1], [0, 0, 1, 1], [], []>} : vector<256x8xbf16>, vector<8x8xbf16>, vector<256x8xf32> -> vector<256x8xf32>
    %88 = arith.addf %83, %87 : vector<256x8xf32>
    %c33 = arith.constant 33 : index
    %c0_57 = arith.constant 0 : index
    %89 = vector.load %arg10[%c33, %c0_57] : memref<312x8xbf16, #tpu.memory_space<vmem>>, vector<256x8xbf16>
    %cst_58 = arith.constant 0.000000e+00 : bf16
    %90 = vector.broadcast %cst_58 : bf16 to vector<256x8xbf16>
    %91 = vector.shape_cast %50 : vector<256x1xi1> to vector<256x1xi1>
    %92 = vector.broadcast %91 : vector<256x1xi1> to vector<256x8xi1>
    %93 = arith.select %92, %89, %90 : vector<256x8xi1>, vector<256x8xbf16>
    %c1_59 = arith.constant 1 : index
    %c2_60 = arith.constant 2 : index
    %c0_61 = arith.constant 0 : index
    %c0_62 = arith.constant 0 : index
    %94 = vector.load %arg6[%c1_59, %c2_60, %c0_61, %c0_62] : memref<3x3x8x8xbf16, #tpu.memory_space<vmem>>, vector<1x1x8x8xbf16>
    %95 = vector.shape_cast %94 : vector<1x1x8x8xbf16> to vector<8x8xbf16>
    %cst_63 = arith.constant dense<0.000000e+00> : vector<256x8xf32>
    %96 = tpu.matmul %93, %95, %cst_63 {dimension_numbers = #tpu.dot_dimension_numbers<[1], [0], [0], [1], [0, 0, 1, 1], [], []>} : vector<256x8xbf16>, vector<8x8xbf16>, vector<256x8xf32> -> vector<256x8xf32>
    %97 = arith.addf %88, %96 : vector<256x8xf32>
    %c47 = arith.constant 47 : index
    %c0_64 = arith.constant 0 : index
    %98 = vector.load %arg10[%c47, %c0_64] : memref<312x8xbf16, #tpu.memory_space<vmem>>, vector<256x8xbf16>
    %cst_65 = arith.constant 0.000000e+00 : bf16
    %99 = vector.broadcast %cst_65 : bf16 to vector<256x8xbf16>
    %100 = vector.shape_cast %48 : vector<256x1xi1> to vector<256x1xi1>
    %101 = vector.broadcast %100 : vector<256x1xi1> to vector<256x8xi1>
    %102 = arith.select %101, %98, %99 : vector<256x8xi1>, vector<256x8xbf16>
    %c2_66 = arith.constant 2 : index
    %c0_67 = arith.constant 0 : index
    %c0_68 = arith.constant 0 : index
    %c0_69 = arith.constant 0 : index
    %103 = vector.load %arg6[%c2_66, %c0_67, %c0_68, %c0_69] : memref<3x3x8x8xbf16, #tpu.memory_space<vmem>>, vector<1x1x8x8xbf16>
    %104 = vector.shape_cast %103 : vector<1x1x8x8xbf16> to vector<8x8xbf16>
    %cst_70 = arith.constant dense<0.000000e+00> : vector<256x8xf32>
    %105 = tpu.matmul %102, %104, %cst_70 {dimension_numbers = #tpu.dot_dimension_numbers<[1], [0], [0], [1], [0, 0, 1, 1], [], []>} : vector<256x8xbf16>, vector<8x8xbf16>, vector<256x8xf32> -> vector<256x8xf32>
    %106 = arith.addf %97, %105 : vector<256x8xf32>
    %c48 = arith.constant 48 : index
    %c0_71 = arith.constant 0 : index
    %107 = vector.load %arg10[%c48, %c0_71] : memref<312x8xbf16, #tpu.memory_space<vmem>>, vector<256x8xbf16>
    %c2_72 = arith.constant 2 : index
    %c1_73 = arith.constant 1 : index
    %c0_74 = arith.constant 0 : index
    %c0_75 = arith.constant 0 : index
    %108 = vector.load %arg6[%c2_72, %c1_73, %c0_74, %c0_75] : memref<3x3x8x8xbf16, #tpu.memory_space<vmem>>, vector<1x1x8x8xbf16>
    %109 = vector.shape_cast %108 : vector<1x1x8x8xbf16> to vector<8x8xbf16>
    %cst_76 = arith.constant dense<0.000000e+00> : vector<256x8xf32>
    %110 = tpu.matmul %107, %109, %cst_76 {dimension_numbers = #tpu.dot_dimension_numbers<[1], [0], [0], [1], [0, 0, 1, 1], [], []>} : vector<256x8xbf16>, vector<8x8xbf16>, vector<256x8xf32> -> vector<256x8xf32>
    %111 = arith.addf %106, %110 : vector<256x8xf32>
    %c49 = arith.constant 49 : index
    %c0_77 = arith.constant 0 : index
    %112 = vector.load %arg10[%c49, %c0_77] : memref<312x8xbf16, #tpu.memory_space<vmem>>, vector<256x8xbf16>
    %cst_78 = arith.constant 0.000000e+00 : bf16
    %113 = vector.broadcast %cst_78 : bf16 to vector<256x8xbf16>
    %114 = vector.shape_cast %50 : vector<256x1xi1> to vector<256x1xi1>
    %115 = vector.broadcast %114 : vector<256x1xi1> to vector<256x8xi1>
    %116 = arith.select %115, %112, %113 : vector<256x8xi1>, vector<256x8xbf16>
    %c2_79 = arith.constant 2 : index
    %c2_80 = arith.constant 2 : index
    %c0_81 = arith.constant 0 : index
    %c0_82 = arith.constant 0 : index
    %117 = vector.load %arg6[%c2_79, %c2_80, %c0_81, %c0_82] : memref<3x3x8x8xbf16, #tpu.memory_space<vmem>>, vector<1x1x8x8xbf16>
    %118 = vector.shape_cast %117 : vector<1x1x8x8xbf16> to vector<8x8xbf16>
    %cst_83 = arith.constant dense<0.000000e+00> : vector<256x8xf32>
    %119 = tpu.matmul %116, %118, %cst_83 {dimension_numbers = #tpu.dot_dimension_numbers<[1], [0], [0], [1], [0, 0, 1, 1], [], []>} : vector<256x8xbf16>, vector<8x8xbf16>, vector<256x8xf32> -> vector<256x8xf32>
    %120 = arith.addf %111, %119 : vector<256x8xf32>
    %c0_84 = arith.constant 0 : index
    %c0_85 = arith.constant 0 : index
    %121 = vector.load %arg7[%c0_84, %c0_85] : memref<1x8xf32, #tpu.memory_space<vmem>>, vector<1x8xf32>
    %122 = vector.broadcast %121 : vector<1x8xf32> to vector<256x8xf32>
    %123 = arith.mulf %120, %122 : vector<256x8xf32>
    %c0_86 = arith.constant 0 : index
    %c0_87 = arith.constant 0 : index
    %124 = vector.load %arg8[%c0_86, %c0_87] : memref<1x8xf32, #tpu.memory_space<vmem>>, vector<1x8xf32>
    %125 = vector.broadcast %124 : vector<1x8xf32> to vector<256x8xf32>
    %126 = arith.addf %123, %125 : vector<256x8xf32>
    %cst_88 = arith.constant 0.000000e+00 : f32
    %127 = vector.broadcast %cst_88 : f32 to vector<256x8xf32>
    %128 = arith.subf %127, %126 : vector<256x8xf32>
    %129 = math.exp %128 : vector<256x8xf32>
    %cst_89 = arith.constant 1.000000e+00 : f32
    %130 = vector.broadcast %cst_89 : f32 to vector<256x8xf32>
    %131 = arith.addf %130, %129 : vector<256x8xf32>
    %132 = tpu.reciprocal %131 {approx = true} : vector<256x8xf32> -> vector<256x8xf32>
    %133 = arith.mulf %126, %132 : vector<256x8xf32>
    %134 = arith.extf %8 : vector<256x8xbf16> to vector<256x8xf32>
    %135 = arith.addf %133, %134 : vector<256x8xf32>
    %136 = arith.truncf %135 : vector<256x8xf32> to vector<256x8xbf16>
    %c0_90 = arith.constant 0 : index
    %c0_91 = arith.constant 0 : index
    %c0_92 = arith.constant 0 : index
    %137 = vector.load %arg9[%c0_90, %c0_91, %c0_92] : memref<1x256x8xbf16, #tpu.memory_space<vmem>>, vector<1x256x8xbf16>
    %138 = vector.shape_cast %137 : vector<1x256x8xbf16> to vector<256x8xbf16>
    %139 = vector.shape_cast %136 : vector<256x8xbf16> to vector<1x256x8xbf16>
    tpu.vector_store %arg9[%c0_90, %c0_91, %c0_92], %139 {strides = array<i32>} : memref<1x256x8xbf16, #tpu.memory_space<vmem>>, vector<1x256x8xbf16>,
    return
  }
  func.func @transform_0(%arg0: i32, %arg1: i32) -> (i32, i32, i32) {
    %c0_i32 = arith.constant 0 : i32
    %c0_i32_0 = arith.constant 0 : i32
    %c0_i32_1 = arith.constant 0 : i32
    return %arg0, %c0_i32, %c0_i32_0 : i32, i32, i32
  }
  func.func @transform_1(%arg0: i32, %arg1: i32) -> (i32, i32) {
    %c0_i32 = arith.constant 0 : i32
    %c0_i32_0 = arith.constant 0 : i32
    %c0_i32_1 = arith.constant 0 : i32
    return %c0_i32, %c0_i32_0 : i32, i32
  }
  func.func @transform_2(%arg0: i32, %arg1: i32) -> (i32, i32) {
    %c0_i32 = arith.constant 0 : i32
    %c0_i32_0 = arith.constant 0 : i32
    %c0_i32_1 = arith.constant 0 : i32
    return %c0_i32, %c0_i32_0 : i32, i32
  }
  func.func @transform_3(%arg0: i32, %arg1: i32) -> (i32, i32) {
    %c0_i32 = arith.constant 0 : i32
    %c0_i32_0 = arith.constant 0 : i32
    %c0_i32_1 = arith.constant 0 : i32
    return %c0_i32, %c0_i32_0 : i32, i32
  }
  func.func @transform_4(%arg0: i32, %arg1: i32) -> (i32, i32, i32, i32) {
    %c0_i32 = arith.constant 0 : i32
    %c0_i32_0 = arith.constant 0 : i32
    %c0_i32_1 = arith.constant 0 : i32
    %c0_i32_2 = arith.constant 0 : i32
    %c0_i32_3 = arith.constant 0 : i32
    return %c0_i32, %c0_i32_0, %c0_i32_1, %c0_i32_2 : i32, i32, i32, i32
  }
  func.func @transform_5(%arg0: i32, %arg1: i32) -> (i32, i32) {
    %c0_i32 = arith.constant 0 : i32
    %c0_i32_0 = arith.constant 0 : i32
    %c0_i32_1 = arith.constant 0 : i32
    return %c0_i32, %c0_i32_0 : i32, i32
  }
  func.func @transform_6(%arg0: i32, %arg1: i32) -> (i32, i32) {
    %c0_i32 = arith.constant 0 : i32
    %c0_i32_0 = arith.constant 0 : i32
    %c0_i32_1 = arith.constant 0 : i32
    return %c0_i32, %c0_i32_0 : i32, i32
  }
  func.func @transform_7(%arg0: i32, %arg1: i32) -> (i32, i32, i32) {
    %c0_i32 = arith.constant 0 : i32
    %c0_i32_0 = arith.constant 0 : i32
    return %arg0, %arg1, %c0_i32 : i32, i32, i32
  }
}

</mosaic_0001>

<llo_original>
// kernel: c3_forward.5
$region0: #{c3_forward.5}
  #allocation0 [shape = 'u32[]', space=smem, size = 0x4, offset = 0x4, fixed_abs, tag = 'smem constant byte address 0x4 - core index']
  #allocation1 [shape = 'u32[144,128]{1,0:T(1,128)}', space=vmem, size = 0x12000, scoped, tag = 'internal scratch']
  %s0 = inlined_call_operand.vmem [shape: bf16[512,8], index: 0, kind: input, shape index: {}]
  %s1 = inlined_call_operand.vmem [shape: bf16[512,8], index: 1, kind: input, shape index: {}]
  %s2 = inlined_call_operand.vmem [shape: bf16[8,16], index: 2, kind: input, shape index: {}]
  %s3 = inlined_call_operand.vmem [shape: bf16[8,16], index: 3, kind: input, shape index: {}]
  %s4 = inlined_call_operand.vmem [shape: f32[1,16], index: 4, kind: input, shape index: {}]
  %s5 = inlined_call_operand.vmem [shape: f32[1,16], index: 5, kind: input, shape index: {}]
  %s6 = inlined_call_operand.vmem [shape: f32[512,16], index: 6, kind: output, shape index: {}]
  %s7 = sld [smem:[#allocation0]]
  $region34: #{c3_forward.5} parent=0
    _
  %s9 = ssub.s32 1, %s7
  %s10 = scalar_select 0, %s9, %s7
  // Predicated region
  $region2: #{c3_forward.5} parent=0 // pred_check
    _
  $region3: #{c3_forward.5} parent=0 // pred_check_branch
    %12 = sbr.rel (0) target = $region5
  $region4: #{c3_forward.5} parent=0 // pred_region
    _
  $region5: #{c3_forward.5} parent=0 // pred_fallthru
    _
  // Predicated region
  $region6: #{c3_forward.5} parent=0 // pred_check
    _
  $region7: #{c3_forward.5} parent=0 // pred_check_branch
    %14 = sbr.rel (0) target = $region9
  $region8: #{c3_forward.5} parent=0 // pred_region
    _
  $region9: #{c3_forward.5} parent=0 // pred_fallthru
    _
  // Predicated region
  $region10: #{c3_forward.5} parent=0 // pred_check
    _
  $region11: #{c3_forward.5} parent=0 // pred_check_branch
    %16 = sbr.rel (0) target = $region13
  $region12: #{c3_forward.5} parent=0 // pred_region
    _
  $region13: #{c3_forward.5} parent=0 // pred_fallthru
    _
  // Predicated region
  $region14: #{c3_forward.5} parent=0 // pred_check
    _
  $region15: #{c3_forward.5} parent=0 // pred_check_branch
    %18 = sbr.rel (0) target = $region17
  $region16: #{c3_forward.5} parent=0 // pred_region
    _
  $region17: #{c3_forward.5} parent=0 // pred_fallthru
    _
  // Predicated region
  $region18: #{c3_forward.5} parent=0 // pred_check
    _
  $region19: #{c3_forward.5} parent=0 // pred_check_branch
    %20 = sbr.rel (0) target = $region21
  $region20: #{c3_forward.5} parent=0 // pred_region
    _
  $region21: #{c3_forward.5} parent=0 // pred_fallthru
    _
  // Predicated region
  $region22: #{c3_forward.5} parent=0 // pred_check
    _
  $region23: #{c3_forward.5} parent=0 // pred_check_branch
    %22 = sbr.rel (0) target = $region25
  $region24: #{c3_forward.5} parent=0 // pred_region
    _
  $region25: #{c3_forward.5} parent=0 // pred_fallthru
    _
  %v24 = vld [vmem:[%s0] sm:$0xf]
  %v25 = vld [vmem:[%s0 + $0x4] sm:$0xf]
  %v26 = vld [vmem:[%s0 + $0x8] sm:$0xf]
  %v27 = vld [vmem:[%s0 + $0xc] sm:$0xf]
  %v28 = vld [vmem:[%s0 + $0x10] sm:$0xf]
  %v29 = vld [vmem:[%s0 + $0x14] sm:$0xf]
  %v30 = vld [vmem:[%s0 + $0x18] sm:$0xf]
  %v31 = vld [vmem:[%s0 + $0x1c] sm:$0xf]
  %v32 = vld [vmem:[%s0 + $0x20] sm:$0xf]
  %v33 = vld [vmem:[%s0 + $0x24] sm:$0xf]
  %v34 = vld [vmem:[%s0 + $0x28] sm:$0xf]
  %v35 = vld [vmem:[%s0 + $0x2c] sm:$0xf]
  %v36 = vld [vmem:[%s0 + $0x30] sm:$0xf]
  %v37 = vld [vmem:[%s0 + $0x34] sm:$0xf]
  %v38 = vld [vmem:[%s0 + $0x38] sm:$0xf]
  %v39 = vld [vmem:[%s0 + $0x3c] sm:$0xf]
  %v40 = vld [vmem:[%s0 + $0x40] sm:$0xf]
  %v41 = vld [vmem:[%s0 + $0x44] sm:$0xf]
  %v42 = vld [vmem:[%s0 + $0x48] sm:$0xf]
  %v43 = vld [vmem:[%s0 + $0x4c] sm:$0xf]
  %v44 = vld [vmem:[%s0 + $0x50] sm:$0xf]
  %v45 = vld [vmem:[%s0 + $0x54] sm:$0xf]
  %v46 = vld [vmem:[%s0 + $0x58] sm:$0xf]
  %v47 = vld [vmem:[%s0 + $0x5c] sm:$0xf]
  %v48 = vld [vmem:[%s0 + $0x60] sm:$0xf]
  %v49 = vld [vmem:[%s0 + $0x64] sm:$0xf]
  %v50 = vld [vmem:[%s0 + $0x68] sm:$0xf]
  %v51 = vld [vmem:[%s0 + $0x6c] sm:$0xf]
  %v52 = vld [vmem:[%s0 + $0x70] sm:$0xf]
  %v53 = vld [vmem:[%s0 + $0x74] sm:$0xf]
  %v54 = vld [vmem:[%s0 + $0x78] sm:$0xf]
  %v55 = vld [vmem:[%s0 + $0x7c] sm:$0xf]
  %v56 = vld [vmem:[%s0 + $0x80] sm:$0xf]
  %v57 = vld [vmem:[%s0 + $0x84] sm:$0xf]
  %v58 = vld [vmem:[%s0 + $0x88] sm:$0xf]
  %v59 = vld [vmem:[%s0 + $0x8c] sm:$0xf]
  %v60 = vld [vmem:[%s0 + $0x90] sm:$0xf]
  %v61 = vld [vmem:[%s0 + $0x94] sm:$0xf]
  %v62 = vld [vmem:[%s0 + $0x98] sm:$0xf]
  %v63 = vld [vmem:[%s0 + $0x9c] sm:$0xf]
  %v64 = vld [vmem:[%s0 + $0xa0] sm:$0xf]
  %v65 = vld [vmem:[%s0 + $0xa4] sm:$0xf]
  %v66 = vld [vmem:[%s0 + $0xa8] sm:$0xf]
  %v67 = vld [vmem:[%s0 + $0xac] sm:$0xf]
  %v68 = vld [vmem:[%s0 + $0xb0] sm:$0xf]
  %v69 = vld [vmem:[%s0 + $0xb4] sm:$0xf]
  %v70 = vld [vmem:[%s0 + $0xb8] sm:$0xf]
  %v71 = vld [vmem:[%s0 + $0xbc] sm:$0xf]
  %v72 = vld [vmem:[%s0 + $0xc0] sm:$0xf]
  %v73 = vld [vmem:[%s0 + $0xc4] sm:$0xf]
  %v74 = vld [vmem:[%s0 + $0xc8] sm:$0xf]
  %v75 = vld [vmem:[%s0 + $0xcc] sm:$0xf]
  %v76 = vld [vmem:[%s0 + $0xd0] sm:$0xf]
  %v77 = vld [vmem:[%s0 + $0xd4] sm:$0xf]
  %v78 = vld [vmem:[%s0 + $0xd8] sm:$0xf]
  %v79 = vld [vmem:[%s0 + $0xdc] sm:$0xf]
  %v80 = vld [vmem:[%s0 + $0xe0] sm:$0xf]
  %v81 = vld [vmem:[%s0 + $0xe4] sm:$0xf]
  %v82 = vld [vmem:[%s0 + $0xe8] sm:$0xf]
  %v83 = vld [vmem:[%s0 + $0xec] sm:$0xf]
  %v84 = vld [vmem:[%s0 + $0xf0] sm:$0xf]
  %v85 = vld [vmem:[%s0 + $0xf4] sm:$0xf]
  %v86 = vld [vmem:[%s0 + $0xf8] sm:$0xf]
  %v87 = vld [vmem:[%s0 + $0xfc] sm:$0xf]
  %v88 = vld [vmem:[%s2] sm:$0xf]
  %v89 = vld [vmem:[%s1] sm:$0xf]
  %v90 = vld [vmem:[%s1 + $0x4] sm:$0xf]
  %v91 = vld [vmem:[%s1 + $0x8] sm:$0xf]
  %v92 = vld [vmem:[%s1 + $0xc] sm:$0xf]
  %v93 = vld [vmem:[%s1 + $0x10] sm:$0xf]
  %v94 = vld [vmem:[%s1 + $0x14] sm:$0xf]
  %v95 = vld [vmem:[%s1 + $0x18] sm:$0xf]
  %v96 = vld [vmem:[%s1 + $0x1c] sm:$0xf]
  %v97 = vld [vmem:[%s1 + $0x20] sm:$0xf]
  %v98 = vld [vmem:[%s1 + $0x24] sm:$0xf]
  %v99 = vld [vmem:[%s1 + $0x28] sm:$0xf]
  %v100 = vld [vmem:[%s1 + $0x2c] sm:$0xf]
  %v101 = vld [vmem:[%s1 + $0x30] sm:$0xf]
  %v102 = vld [vmem:[%s1 + $0x34] sm:$0xf]
  %v103 = vld [vmem:[%s1 + $0x38] sm:$0xf]
  %v104 = vld [vmem:[%s1 + $0x3c] sm:$0xf]
  %v105 = vld [vmem:[%s1 + $0x40] sm:$0xf]
  %v106 = vld [vmem:[%s1 + $0x44] sm:$0xf]
  %v107 = vld [vmem:[%s1 + $0x48] sm:$0xf]
  %v108 = vld [vmem:[%s1 + $0x4c] sm:$0xf]
  %v109 = vld [vmem:[%s1 + $0x50] sm:$0xf]
  %v110 = vld [vmem:[%s1 + $0x54] sm:$0xf]
  %v111 = vld [vmem:[%s1 + $0x58] sm:$0xf]
  %v112 = vld [vmem:[%s1 + $0x5c] sm:$0xf]
  %v113 = vld [vmem:[%s1 + $0x60] sm:$0xf]
  %v114 = vld [vmem:[%s1 + $0x64] sm:$0xf]
  %v115 = vld [vmem:[%s1 + $0x68] sm:$0xf]
  %v116 = vld [vmem:[%s1 + $0x6c] sm:$0xf]
  %v117 = vld [vmem:[%s1 + $0x70] sm:$0xf]
  %v118 = vld [vmem:[%s1 + $0x74] sm:$0xf]
  %v119 = vld [vmem:[%s1 + $0x78] sm:$0xf]
  %v120 = vld [vmem:[%s1 + $0x7c] sm:$0xf]
  %v121 = vld [vmem:[%s1 + $0x80] sm:$0xf]
  %v122 = vld [vmem:[%s1 + $0x84] sm:$0xf]
  %v123 = vld [vmem:[%s1 + $0x88] sm:$0xf]
  %v124 = vld [vmem:[%s1 + $0x8c] sm:$0xf]
  %v125 = vld [vmem:[%s1 + $0x90] sm:$0xf]
  %v126 = vld [vmem:[%s1 + $0x94] sm:$0xf]
  %v127 = vld [vmem:[%s1 + $0x98] sm:$0xf]
  %v128 = vld [vmem:[%s1 + $0x9c] sm:$0xf]
  %v129 = vld [vmem:[%s1 + $0xa0] sm:$0xf]
  %v130 = vld [vmem:[%s1 + $0xa4] sm:$0xf]
  %v131 = vld [vmem:[%s1 + $0xa8] sm:$0xf]
  %v132 = vld [vmem:[%s1 + $0xac] sm:$0xf]
  %v133 = vld [vmem:[%s1 + $0xb0] sm:$0xf]
  %v134 = vld [vmem:[%s1 + $0xb4] sm:$0xf]
  %v135 = vld [vmem:[%s1 + $0xb8] sm:$0xf]
  %v136 = vld [vmem:[%s1 + $0xbc] sm:$0xf]
  %v137 = vld [vmem:[%s1 + $0xc0] sm:$0xf]
  %v138 = vld [vmem:[%s1 + $0xc4] sm:$0xf]
  %v139 = vld [vmem:[%s1 + $0xc8] sm:$0xf]
  %v140 = vld [vmem:[%s1 + $0xcc] sm:$0xf]
  %v141 = vld [vmem:[%s1 + $0xd0] sm:$0xf]
  %v142 = vld [vmem:[%s1 + $0xd4] sm:$0xf]
  %v143 = vld [vmem:[%s1 + $0xd8] sm:$0xf]
  %v144 = vld [vmem:[%s1 + $0xdc] sm:$0xf]
  %v145 = vld [vmem:[%s1 + $0xe0] sm:$0xf]
  %v146 = vld [vmem:[%s1 + $0xe4] sm:$0xf]
  %v147 = vld [vmem:[%s1 + $0xe8] sm:$0xf]
  %v148 = vld [vmem:[%s1 + $0xec] sm:$0xf]
  %v149 = vld [vmem:[%s1 + $0xf0] sm:$0xf]
  %v150 = vld [vmem:[%s1 + $0xf4] sm:$0xf]
  %v151 = vld [vmem:[%s1 + $0xf8] sm:$0xf]
  %v152 = vld [vmem:[%s1 + $0xfc] sm:$0xf]
  %v153 = vld [vmem:[%s3] sm:$0xf]
  %v218 = vunpack.c.l.b16 %v89
  %v219 = vunpack.c.l.b16 %v90
  %v220 = vunpack.c.l.b16 %v91
  %v221 = vunpack.c.l.b16 %v92
  %v222 = vunpack.c.l.b16 %v93
  %v223 = vunpack.c.l.b16 %v94
  %v224 = vunpack.c.l.b16 %v95
  %v225 = vunpack.c.l.b16 %v96
  %v226 = vunpack.c.l.b16 %v97
  %v227 = vunpack.c.l.b16 %v98
  %v228 = vunpack.c.l.b16 %v99
  %v229 = vunpack.c.l.b16 %v100
  %v230 = vunpack.c.l.b16 %v101
  %v231 = vunpack.c.l.b16 %v102
  %v232 = vunpack.c.l.b16 %v103
  %v233 = vunpack.c.l.b16 %v104
  %v234 = vunpack.c.l.b16 %v105
  %v235 = vunpack.c.l.b16 %v106
  %v236 = vunpack.c.l.b16 %v107
  %v237 = vunpack.c.l.b16 %v108
  %v238 = vunpack.c.l.b16 %v109
  %v239 = vunpack.c.l.b16 %v110
  %v240 = vunpack.c.l.b16 %v111
  %v241 = vunpack.c.l.b16 %v112
  %v242 = vunpack.c.l.b16 %v113
  %v243 = vunpack.c.l.b16 %v114
  %v244 = vunpack.c.l.b16 %v115
  %v245 = vunpack.c.l.b16 %v116
  %v246 = vunpack.c.l.b16 %v117
  %v247 = vunpack.c.l.b16 %v118
  %v248 = vunpack.c.l.b16 %v119
  %v249 = vunpack.c.l.b16 %v120
  %v250 = vunpack.c.l.b16 %v121
  %v251 = vunpack.c.l.b16 %v122
  %v252 = vunpack.c.l.b16 %v123
  %v253 = vunpack.c.l.b16 %v124
  %v254 = vunpack.c.l.b16 %v125
  %v255 = vunpack.c.l.b16 %v126
  %v256 = vunpack.c.l.b16 %v127
  %v257 = vunpack.c.l.b16 %v128
  %v258 = vunpack.c.l.b16 %v129
  %v259 = vunpack.c.l.b16 %v130
  %v260 = vunpack.c.l.b16 %v131
  %v261 = vunpack.c.l.b16 %v132
  %v262 = vunpack.c.l.b16 %v133
  %v263 = vunpack.c.l.b16 %v134
  %v264 = vunpack.c.l.b16 %v135
  %v265 = vunpack.c.l.b16 %v136
  %v266 = vunpack.c.l.b16 %v137
  %v267 = vunpack.c.l.b16 %v138
  %v268 = vunpack.c.l.b16 %v139
  %v269 = vunpack.c.l.b16 %v140
  %v270 = vunpack.c.l.b16 %v141
  %v271 = vunpack.c.l.b16 %v142
  %v272 = vunpack.c.l.b16 %v143
  %v273 = vunpack.c.l.b16 %v144
  %v274 = vunpack.c.l.b16 %v145
  %v275 = vunpack.c.l.b16 %v146
  %v276 = vunpack.c.l.b16 %v147
  %v277 = vunpack.c.l.b16 %v148
  %v278 = vunpack.c.l.b16 %v149
  %v279 = vunpack.c.l.b16 %v150
  %v280 = vunpack.c.l.b16 %v151
  %v281 = vunpack.c.l.b16 %v152
  %v282 = vpack.c.b16 %v219, %v218
  %v283 = vpack.c.b16 %v221, %v220
  %v284 = vpack.c.b16 %v223, %v222
  %v285 = vpack.c.b16 %v225, %v224
  %v286 = vpack.c.b16 %v227, %v226
  %v287 = vpack.c.b16 %v229, %v228
  %v288 = vpack.c.b16 %v231, %v230
  %v289 = vpack.c.b16 %v233, %v232
  %v290 = vpack.c.b16 %v235, %v234
  %v291 = vpack.c.b16 %v237, %v236
  %v292 = vpack.c.b16 %v239, %v238
  %v293 = vpack.c.b16 %v241, %v240
  %v294 = vpack.c.b16 %v243, %v242
  %v295 = vpack.c.b16 %v245, %v244
  %v296 = vpack.c.b16 %v247, %v246
  %v297 = vpack.c.b16 %v249, %v248
  %v298 = vpack.c.b16 %v251, %v250
  %v299 = vpack.c.b16 %v253, %v252
  %v300 = vpack.c.b16 %v255, %v254
  %v301 = vpack.c.b16 %v257, %v256
  %v302 = vpack.c.b16 %v259, %v258
  %v303 = vpack.c.b16 %v261, %v260
  %v304 = vpack.c.b16 %v263, %v262
  %v305 = vpack.c.b16 %v265, %v264
  %v306 = vpack.c.b16 %v267, %v266
  %v307 = vpack.c.b16 %v269, %v268
  %v308 = vpack.c.b16 %v271, %v270
  %v309 = vpack.c.b16 %v273, %v272
  %v310 = vpack.c.b16 %v275, %v274
  %v311 = vpack.c.b16 %v277, %v276
  %v312 = vpack.c.b16 %v279, %v278
  %v313 = vpack.c.b16 %v281, %v280
  %vm314 = vcmask 64512
  %v316 = vsel %vm314, %v282, 0
  %v319 = vsel %vm314, %v283, 0
  %v322 = vsel %vm314, %v284, 0
  %v325 = vsel %vm314, %v285, 0
  %v328 = vsel %vm314, %v286, 0
  %v331 = vsel %vm314, %v287, 0
  %v334 = vsel %vm314, %v288, 0
  %v337 = vsel %vm314, %v289, 0
  %v340 = vsel %vm314, %v290, 0
  %v343 = vsel %vm314, %v291, 0
  %v346 = vsel %vm314, %v292, 0
  %v349 = vsel %vm314, %v293, 0
  %v352 = vsel %vm314, %v294, 0
  %v355 = vsel %vm314, %v295, 0
  %v358 = vsel %vm314, %v296, 0
  %v361 = vsel %vm314, %v297, 0
  %v364 = vsel %vm314, %v298, 0
  %v367 = vsel %vm314, %v299, 0
  %v370 = vsel %vm314, %v300, 0
  %v373 = vsel %vm314, %v301, 0
  %v376 = vsel %vm314, %v302, 0
  %v379 = vsel %vm314, %v303, 0
  %v382 = vsel %vm314, %v304, 0
  %v385 = vsel %vm314, %v305, 0
  %v388 = vsel %vm314, %v306, 0
  %v391 = vsel %vm314, %v307, 0
  %v394 = vsel %vm314, %v308, 0
  %v397 = vsel %vm314, %v309, 0
  %v400 = vsel %vm314, %v310, 0
  %v403 = vsel %vm314, %v311, 0
  %v406 = vsel %vm314, %v312, 0
  %v409 = vsel %vm314, %v313, 0
  %vm411 = vcmask 1043456
  %v413 = vsel %vm411, %v153, 0
  %415 = vmatprep.subr.bf16.mxu0 0
  %416 = vmatpush1.bf16.msra.mxu0 %v413
  %417 = vmatprep.subr.bf16.mxu0 0
  %418 = vmatpush1.bf16.msra.mxu0 0
  %419 = vmatprep.subr.bf16.mxu0 0
  %420 = vmatpush1.bf16.msra.mxu0 0
  %421 = vmatprep.subr.bf16.mxu0 0
  %422 = vmatpush1.bf16.msra.mxu0 0
  %423 = vmatprep.subr.bf16.mxu0 0
  %424 = vmatpush1.bf16.msra.mxu0 0
  %425 = vmatprep.subr.bf16.mxu0 0
  %426 = vmatpush1.bf16.msra.mxu0 0
  %427 = vmatprep.subr.bf16.mxu0 0
  %428 = vmatpush1.bf16.msra.mxu0 0
  %429 = vmatprep.subr.bf16.mxu0 0
  %430 = vmatpush1.bf16.msra.mxu0 0
  %431 = vmatprep.subr.bf16.mxu0 0
  %432 = vmatpush1.bf16.msra.mxu0 0
  %433 = vmatprep.subr.bf16.mxu0 0
  %434 = vmatpush1.bf16.msra.mxu0 0
  %435 = vmatprep.subr.bf16.mxu0 0
  %436 = vmatpush1.bf16.msra.mxu0 0
  %437 = vmatprep.subr.bf16.mxu0 0
  %438 = vmatpush1.bf16.msra.mxu0 0
  %439 = vmatprep.subr.bf16.mxu0 0
  %440 = vmatpush1.bf16.msra.mxu0 0
  %441 = vmatprep.subr.bf16.mxu0 0
  %442 = vmatpush1.bf16.msra.mxu0 0
  %443 = vmatprep.subr.bf16.mxu0 0
  %444 = vmatpush1.bf16.msra.mxu0 0
  %445 = vmatprep.subr.bf16.mxu0 0
  %446 = vmatpush1.bf16.msra.mxu0 0
  %447 = vmatprep.mubr.bf16.mxu0 0
  %448 = vmatmul.mubr.bf16.gmra.mrb[0].mxu0 %v316
  %v449 = vpop.f32.mrb[0].mxu0
  %v450 = vadd.f32 0.0, %v449
  %v451 = vpop.f32.mrb[0].mxu0
  %v452 = vpop.f32.mrb[0].mxu0
  %v453 = vadd.f32 0.0, %v452
  %v454 = vpop.f32.mrb[0].mxu0
  %455 = vmatprep.mubr.bf16.mxu0 0
  %456 = vmatmul.mubr.bf16.gmra.mrb[0].mxu0 %v319
  %v457 = vpop.f32.mrb[0].mxu0
  %v458 = vadd.f32 0.0, %v457
  %v459 = vpop.f32.mrb[0].mxu0
  %v460 = vpop.f32.mrb[0].mxu0
  %v461 = vadd.f32 0.0, %v460
  %v462 = vpop.f32.mrb[0].mxu0
  %463 = vmatprep.mubr.bf16.mxu0 0
  %464 = vmatmul.mubr.bf16.gmra.mrb[0].mxu0 %v322
  %v465 = vpop.f32.mrb[0].mxu0
  %v466 = vadd.f32 0.0, %v465
  %v467 = vpop.f32.mrb[0].mxu0
  %v468 = vpop.f32.mrb[0].mxu0
  %v469 = vadd.f32 0.0, %v468
  %v470 = vpop.f32.mrb[0].mxu0
  %471 = vmatprep.mubr.bf16.mxu0 0
  %472 = vmatmul.mubr.bf16.gmra.mrb[0].mxu0 %v325
  %v473 = vpop.f32.mrb[0].mxu0
  %v474 = vadd.f32 0.0, %v473
  %v475 = vpop.f32.mrb[0].mxu0
  %v476 = vpop.f32.mrb[0].mxu0
  %v477 = vadd.f32 0.0, %v476
  %v478 = vpop.f32.mrb[0].mxu0
  %479 = vmatprep.mubr.bf16.mxu0 0
  %480 = vmatmul.mubr.bf16.gmra.mrb[0].mxu0 %v328
  %v481 = vpop.f32.mrb[0].mxu0
  %v482 = vadd.f32 0.0, %v481
  %v483 = vpop.f32.mrb[0].mxu0
  %v484 = vpop.f32.mrb[0].mxu0
  %v485 = vadd.f32 0.0, %v484
  %v486 = vpop.f32.mrb[0].mxu0
  %487 = vmatprep.mubr.bf16.mxu0 0
  %488 = vmatmul.mubr.bf16.gmra.mrb[0].mxu0 %v331
  %v489 = vpop.f32.mrb[0].mxu0
  %v490 = vadd.f32 0.0, %v489
  %v491 = vpop.f32.mrb[0].mxu0
  %v492 = vpop.f32.mrb[0].mxu0
  %v493 = vadd.f32 0.0, %v492
  %v494 = vpop.f32.mrb[0].mxu0
  %495 = vmatprep.mubr.bf16.mxu0 0
  %496 = vmatmul.mubr.bf16.gmra.mrb[0].mxu0 %v334
  %v497 = vpop.f32.mrb[0].mxu0
  %v498 = vadd.f32 0.0, %v497
  %v499 = vpop.f32.mrb[0].mxu0
  %v500 = vpop.f32.mrb[0].mxu0
  %v501 = vadd.f32 0.0, %v500
  %v502 = vpop.f32.mrb[0].mxu0
  %503 = vmatprep.mubr.bf16.mxu0 0
  %504 = vmatmul.mubr.bf16.gmra.mrb[0].mxu0 %v337
  %v505 = vpop.f32.mrb[0].mxu0
  %v506 = vadd.f32 0.0, %v505
  %v507 = vpop.f32.mrb[0].mxu0
  %v508 = vpop.f32.mrb[0].mxu0
  %v509 = vadd.f32 0.0, %v508
  %v510 = vpop.f32.mrb[0].mxu0
  %511 = vmatprep.mubr.bf16.mxu0 0
  %512 = vmatmul.mubr.bf16.gmra.mrb[0].mxu0 %v340
  %v513 = vpop.f32.mrb[0].mxu0
  %v514 = vadd.f32 0.0, %v513
  %v515 = vpop.f32.mrb[0].mxu0
  %v516 = vpop.f32.mrb[0].mxu0
  %v517 = vadd.f32 0.0, %v516
  %v518 = vpop.f32.mrb[0].mxu0
  %519 = vmatprep.mubr.bf16.mxu0 0
  %520 = vmatmul.mubr.bf16.gmra.mrb[0].mxu0 %v343
  %v521 = vpop.f32.mrb[0].mxu0
  %v522 = vadd.f32 0.0, %v521
  %v523 = vpop.f32.mrb[0].mxu0
  %v524 = vpop.f32.mrb[0].mxu0
  %v525 = vadd.f32 0.0, %v524
  %v526 = vpop.f32.mrb[0].mxu0
  %527 = vmatprep.mubr.bf16.mxu0 0
  %528 = vmatmul.mubr.bf16.gmra.mrb[0].mxu0 %v346
  %v529 = vpop.f32.mrb[0].mxu0
  %v530 = vadd.f32 0.0, %v529
  %v531 = vpop.f32.mrb[0].mxu0
  %v532 = vpop.f32.mrb[0].mxu0
  %v533 = vadd.f32 0.0, %v532
  %v534 = vpop.f32.mrb[0].mxu0
  %535 = vmatprep.mubr.bf16.mxu0 0
  %536 = vmatmul.mubr.bf16.gmra.mrb[0].mxu0 %v349
  %v537 = vpop.f32.mrb[0].mxu0
  %v538 = vadd.f32 0.0, %v537
  %v539 = vpop.f32.mrb[0].mxu0
  %v540 = vpop.f32.mrb[0].mxu0
  %v541 = vadd.f32 0.0, %v540
  %v542 = vpop.f32.mrb[0].mxu0
  %543 = vmatprep.mubr.bf16.mxu0 0
  %544 = vmatmul.mubr.bf16.gmra.mrb[0].mxu0 %v352
  %v545 = vpop.f32.mrb[0].mxu0
  %v546 = vadd.f32 0.0, %v545
  %v547 = vpop.f32.mrb[0].mxu0
  %v548 = vpop.f32.mrb[0].mxu0
  %v549 = vadd.f32 0.0, %v548
  %v550 = vpop.f32.mrb[0].mxu0
  %551 = vmatprep.mubr.bf16.mxu0 0
  %552 = vmatmul.mubr.bf16.gmra.mrb[0].mxu0 %v355
  %v553 = vpop.f32.mrb[0].mxu0
  %v554 = vadd.f32 0.0, %v553
  %v555 = vpop.f32.mrb[0].mxu0
  %v556 = vpop.f32.mrb[0].mxu0
  %v557 = vadd.f32 0.0, %v556
  %v558 = vpop.f32.mrb[0].mxu0
  %559 = vmatprep.mubr.bf16.mxu0 0
  %560 = vmatmul.mubr.bf16.gmra.mrb[0].mxu0 %v358
  %v561 = vpop.f32.mrb[0].mxu0
  %v562 = vadd.f32 0.0, %v561
  %v563 = vpop.f32.mrb[0].mxu0
  %v564 = vpop.f32.mrb[0].mxu0
  %v565 = vadd.f32 0.0, %v564
  %v566 = vpop.f32.mrb[0].mxu0
  %567 = vmatprep.mubr.bf16.mxu0 0
  %568 = vmatmul.mubr.bf16.gmra.mrb[0].mxu0 %v361
  %v569 = vpop.f32.mrb[0].mxu0
  %v570 = vadd.f32 0.0, %v569
  %v571 = vpop.f32.mrb[0].mxu0
  %v572 = vpop.f32.mrb[0].mxu0
  %v573 = vadd.f32 0.0, %v572
  %v574 = vpop.f32.mrb[0].mxu0
  %575 = vmatprep.mubr.bf16.mxu0 0
  %576 = vmatmul.mubr.bf16.gmra.mrb[0].mxu0 %v364
  %v577 = vpop.f32.mrb[0].mxu0
  %v578 = vadd.f32 0.0, %v577
  %v579 = vpop.f32.mrb[0].mxu0
  %v580 = vpop.f32.mrb[0].mxu0
  %v581 = vadd.f32 0.0, %v580
  %v582 = vpop.f32.mrb[0].mxu0
  %583 = vmatprep.mubr.bf16.mxu0 0
  %584 = vmatmul.mubr.bf16.gmra.mrb[0].mxu0 %v367
  %v585 = vpop.f32.mrb[0].mxu0
  %v586 = vadd.f32 0.0, %v585
  %v587 = vpop.f32.mrb[0].mxu0
  %v588 = vpop.f32.mrb[0].mxu0
  %v589 = vadd.f32 0.0, %v588
  %v590 = vpop.f32.mrb[0].mxu0
  %591 = vmatprep.mubr.bf16.mxu0 0
  %592 = vmatmul.mubr.bf16.gmra.mrb[0].mxu0 %v370
  %v593 = vpop.f32.mrb[0].mxu0
  %v594 = vadd.f32 0.0, %v593
  %v595 = vpop.f32.mrb[0].mxu0
  %v596 = vpop.f32.mrb[0].mxu0
  %v597 = vadd.f32 0.0, %v596
  %v598 = vpop.f32.mrb[0].mxu0
  %599 = vmatprep.mubr.bf16.mxu0 0
  %600 = vmatmul.mubr.bf16.gmra.mrb[0].mxu0 %v373
  %v601 = vpop.f32.mrb[0].mxu0
  %v602 = vadd.f32 0.0, %v601
  %v603 = vpop.f32.mrb[0].mxu0
  %v604 = vpop.f32.mrb[0].mxu0
  %v605 = vadd.f32 0.0, %v604
  %v606 = vpop.f32.mrb[0].mxu0
  %607 = vmatprep.mubr.bf16.mxu0 0
  %608 = vmatmul.mubr.bf16.gmra.mrb[0].mxu0 %v376
  %v609 = vpop.f32.mrb[0].mxu0
  %v610 = vadd.f32 0.0, %v609
  %v611 = vpop.f32.mrb[0].mxu0
  %v612 = vpop.f32.mrb[0].mxu0
  %v613 = vadd.f32 0.0, %v612
  %v614 = vpop.f32.mrb[0].mxu0
  %615 = vmatprep.mubr.bf16.mxu0 0
  %616 = vmatmul.mubr.bf16.gmra.mrb[0].mxu0 %v379
  %v617 = vpop.f32.mrb[0].mxu0
  %v618 = vadd.f32 0.0, %v617
  %v619 = vpop.f32.mrb[0].mxu0
  %v620 = vpop.f32.mrb[0].mxu0
  %v621 = vadd.f32 0.0, %v620
  %v622 = vpop.f32.mrb[0].mxu0
  %623 = vmatprep.mubr.bf16.mxu0 0
  %624 = vmatmul.mubr.bf16.gmra.mrb[0].mxu0 %v382
  %v625 = vpop.f32.mrb[0].mxu0
  %v626 = vadd.f32 0.0, %v625
  %v627 = vpop.f32.mrb[0].mxu0
  %v628 = vpop.f32.mrb[0].mxu0
  %v629 = vadd.f32 0.0, %v628
  %v630 = vpop.f32.mrb[0].mxu0
  %631 = vmatprep.mubr.bf16.mxu0 0
  %632 = vmatmul.mubr.bf16.gmra.mrb[0].mxu0 %v385
  %v633 = vpop.f32.mrb[0].mxu0
  %v634 = vadd.f32 0.0, %v633
  %v635 = vpop.f32.mrb[0].mxu0
  %v636 = vpop.f32.mrb[0].mxu0
  %v637 = vadd.f32 0.0, %v636
  %v638 = vpop.f32.mrb[0].mxu0
  %639 = vmatprep.mubr.bf16.mxu0 0
  %640 = vmatmul.mubr.bf16.gmra.mrb[0].mxu0 %v388
  %v641 = vpop.f32.mrb[0].mxu0
  %v642 = vadd.f32 0.0, %v641
  %v643 = vpop.f32.mrb[0].mxu0
  %v644 = vpop.f32.mrb[0].mxu0
  %v645 = vadd.f32 0.0, %v644
  %v646 = vpop.f32.mrb[0].mxu0
  %647 = vmatprep.mubr.bf16.mxu0 0
  %648 = vmatmul.mubr.bf16.gmra.mrb[0].mxu0 %v391
  %v649 = vpop.f32.mrb[0].mxu0
  %v650 = vadd.f32 0.0, %v649
  %v651 = vpop.f32.mrb[0].mxu0
  %v652 = vpop.f32.mrb[0].mxu0
  %v653 = vadd.f32 0.0, %v652
  %v654 = vpop.f32.mrb[0].mxu0
  %655 = vmatprep.mubr.bf16.mxu0 0
  %656 = vmatmul.mubr.bf16.gmra.mrb[0].mxu0 %v394
  %v657 = vpop.f32.mrb[0].mxu0
  %v658 = vadd.f32 0.0, %v657
  %v659 = vpop.f32.mrb[0].mxu0
  %v660 = vpop.f32.mrb[0].mxu0
  %v661 = vadd.f32 0.0, %v660
  %v662 = vpop.f32.mrb[0].mxu0
  %663 = vmatprep.mubr.bf16.mxu0 0
  %664 = vmatmul.mubr.bf16.gmra.mrb[0].mxu0 %v397
  %v665 = vpop.f32.mrb[0].mxu0
  %v666 = vadd.f32 0.0, %v665
  %v667 = vpop.f32.mrb[0].mxu0
  %v668 = vpop.f32.mrb[0].mxu0
  %v669 = vadd.f32 0.0, %v668
  %v670 = vpop.f32.mrb[0].mxu0
  %671 = vmatprep.mubr.bf16.mxu0 0
  %672 = vmatmul.mubr.bf16.gmra.mrb[0].mxu0 %v400
  %v673 = vpop.f32.mrb[0].mxu0
  %v674 = vadd.f32 0.0, %v673
  %v675 = vpop.f32.mrb[0].mxu0
  %v676 = vpop.f32.mrb[0].mxu0
  %v677 = vadd.f32 0.0, %v676
  %v678 = vpop.f32.mrb[0].mxu0
  %679 = vmatprep.mubr.bf16.mxu0 0
  %680 = vmatmul.mubr.bf16.gmra.mrb[0].mxu0 %v403
  %v681 = vpop.f32.mrb[0].mxu0
  %v682 = vadd.f32 0.0, %v681
  %v683 = vpop.f32.mrb[0].mxu0
  %v684 = vpop.f32.mrb[0].mxu0
  %v685 = vadd.f32 0.0, %v684
  %v686 = vpop.f32.mrb[0].mxu0
  %687 = vmatprep.mubr.bf16.mxu0 0
  %688 = vmatmul.mubr.bf16.gmra.mrb[0].mxu0 %v406
  %v689 = vpop.f32.mrb[0].mxu0
  %v690 = vadd.f32 0.0, %v689
  %v691 = vpop.f32.mrb[0].mxu0
  %v692 = vpop.f32.mrb[0].mxu0
  %v693 = vadd.f32 0.0, %v692
  %v694 = vpop.f32.mrb[0].mxu0
  %695 = vmatprep.mubr.bf16.mxu0 0
  %696 = vmatmul.mubr.bf16.gmra.mrb[0].mxu0 %v409
  %v697 = vpop.f32.mrb[0].mxu0
  %v698 = vadd.f32 0.0, %v697
  %v699 = vpop.f32.mrb[0].mxu0
  %v700 = vpop.f32.mrb[0].mxu0
  %v701 = vadd.f32 0.0, %v700
  %v702 = vpop.f32.mrb[0].mxu0
  %703 = vdwg.mxu0
  %v768 = vunpack.c.l.b16 %v24
  %v769 = vunpack.c.l.b16 %v25
  %v770 = vunpack.c.l.b16 %v26
  %v771 = vunpack.c.l.b16 %v27
  %v772 = vunpack.c.l.b16 %v28
  %v773 = vunpack.c.l.b16 %v29
  %v774 = vunpack.c.l.b16 %v30
  %v775 = vunpack.c.l.b16 %v31
  %v776 = vunpack.c.l.b16 %v32
  %v777 = vunpack.c.l.b16 %v33
  %v778 = vunpack.c.l.b16 %v34
  %v779 = vunpack.c.l.b16 %v35
  %v780 = vunpack.c.l.b16 %v36
  %v781 = vunpack.c.l.b16 %v37
  %v782 = vunpack.c.l.b16 %v38
  %v783 = vunpack.c.l.b16 %v39
  %v784 = vunpack.c.l.b16 %v40
  %v785 = vunpack.c.l.b16 %v41
  %v786 = vunpack.c.l.b16 %v42
  %v787 = vunpack.c.l.b16 %v43
  %v788 = vunpack.c.l.b16 %v44
  %v789 = vunpack.c.l.b16 %v45
  %v790 = vunpack.c.l.b16 %v46
  %v791 = vunpack.c.l.b16 %v47
  %v792 = vunpack.c.l.b16 %v48
  %v793 = vunpack.c.l.b16 %v49
  %v794 = vunpack.c.l.b16 %v50
  %v795 = vunpack.c.l.b16 %v51
  %v796 = vunpack.c.l.b16 %v52
  %v797 = vunpack.c.l.b16 %v53
  %v798 = vunpack.c.l.b16 %v54
  %v799 = vunpack.c.l.b16 %v55
  %v800 = vunpack.c.l.b16 %v56
  %v801 = vunpack.c.l.b16 %v57
  %v802 = vunpack.c.l.b16 %v58
  %v803 = vunpack.c.l.b16 %v59
  %v804 = vunpack.c.l.b16 %v60
  %v805 = vunpack.c.l.b16 %v61
  %v806 = vunpack.c.l.b16 %v62
  %v807 = vunpack.c.l.b16 %v63
  %v808 = vunpack.c.l.b16 %v64
  %v809 = vunpack.c.l.b16 %v65
  %v810 = vunpack.c.l.b16 %v66
  %v811 = vunpack.c.l.b16 %v67
  %v812 = vunpack.c.l.b16 %v68
  %v813 = vunpack.c.l.b16 %v69
  %v814 = vunpack.c.l.b16 %v70
  %v815 = vunpack.c.l.b16 %v71
  %v816 = vunpack.c.l.b16 %v72
  %v817 = vunpack.c.l.b16 %v73
  %v818 = vunpack.c.l.b16 %v74
  %v819 = vunpack.c.l.b16 %v75
  %v820 = vunpack.c.l.b16 %v76
  %v821 = vunpack.c.l.b16 %v77
  %v822 = vunpack.c.l.b16 %v78
  %v823 = vunpack.c.l.b16 %v79
  %v824 = vunpack.c.l.b16 %v80
  %v825 = vunpack.c.l.b16 %v81
  %v826 = vunpack.c.l.b16 %v82
  %v827 = vunpack.c.l.b16 %v83
  %v828 = vunpack.c.l.b16 %v84
  %v829 = vunpack.c.l.b16 %v85
  %v830 = vunpack.c.l.b16 %v86
  %v831 = vunpack.c.l.b16 %v87
  %v832 = vpack.c.b16 %v769, %v768
  %v833 = vpack.c.b16 %v771, %v770
  %v834 = vpack.c.b16 %v773, %v772
  %v835 = vpack.c.b16 %v775, %v774
  %v836 = vpack.c.b16 %v777, %v776
  %v837 = vpack.c.b16 %v779, %v778
  %v838 = vpack.c.b16 %v781, %v780
  %v839 = vpack.c.b16 %v783, %v782
  %v840 = vpack.c.b16 %v785, %v784
  %v841 = vpack.c.b16 %v787, %v786
  %v842 = vpack.c.b16 %v789, %v788
  %v843 = vpack.c.b16 %v791, %v790
  %v844 = vpack.c.b16 %v793, %v792
  %v845 = vpack.c.b16 %v795, %v794
  %v846 = vpack.c.b16 %v797, %v796
  %v847 = vpack.c.b16 %v799, %v798
  %v848 = vpack.c.b16 %v801, %v800
  %v849 = vpack.c.b16 %v803, %v802
  %v850 = vpack.c.b16 %v805, %v804
  %v851 = vpack.c.b16 %v807, %v806
  %v852 = vpack.c.b16 %v809, %v808
  %v853 = vpack.c.b16 %v811, %v810
  %v854 = vpack.c.b16 %v813, %v812
  %v855 = vpack.c.b16 %v815, %v814
  %v856 = vpack.c.b16 %v817, %v816
  %v857 = vpack.c.b16 %v819, %v818
  %v858 = vpack.c.b16 %v821, %v820
  %v859 = vpack.c.b16 %v823, %v822
  %v860 = vpack.c.b16 %v825, %v824
  %v861 = vpack.c.b16 %v827, %v826
  %v862 = vpack.c.b16 %v829, %v828
  %v863 = vpack.c.b16 %v831, %v830
  %v865 = vsel %vm314, %v832, 0
  %v868 = vsel %vm314, %v833, 0
  %v871 = vsel %vm314, %v834, 0
  %v874 = vsel %vm314, %v835, 0
  %v877 = vsel %vm314, %v836, 0
  %v880 = vsel %vm314, %v837, 0
  %v883 = vsel %vm314, %v838, 0
  %v886 = vsel %vm314, %v839, 0
  %v889 = vsel %vm314, %v840, 0
  %v892 = vsel %vm314, %v841, 0
  %v895 = vsel %vm314, %v842, 0
  %v898 = vsel %vm314, %v843, 0
  %v901 = vsel %vm314, %v844, 0
  %v904 = vsel %vm314, %v845, 0
  %v907 = vsel %vm314, %v846, 0
  %v910 = vsel %vm314, %v847, 0
  %v913 = vsel %vm314, %v848, 0
  %v916 = vsel %vm314, %v849, 0
  %v919 = vsel %vm314, %v850, 0
  %v922 = vsel %vm314, %v851, 0
  %v925 = vsel %vm314, %v852, 0
  %v928 = vsel %vm314, %v853, 0
  %v931 = vsel %vm314, %v854, 0
  %v934 = vsel %vm314, %v855, 0
  %v937 = vsel %vm314, %v856, 0
  %v940 = vsel %vm314, %v857, 0
  %v943 = vsel %vm314, %v858, 0
  %v946 = vsel %vm314, %v859, 0
  %v949 = vsel %vm314, %v860, 0
  %v952 = vsel %vm314, %v861, 0
  %v955 = vsel %vm314, %v862, 0
  %v958 = vsel %vm314, %v863, 0
  %v961 = vsel %vm411, %v88, 0
  %963 = vmatprep.subr.bf16.mxu0 0
  %964 = vmatpush1.bf16.msra.mxu0 %v961
  %965 = vmatprep.subr.bf16.mxu0 0
  %966 = vmatpush1.bf16.msra.mxu0 0
  %967 = vmatprep.subr.bf16.mxu0 0
  %968 = vmatpush1.bf16.msra.mxu0 0
  %969 = vmatprep.subr.bf16.mxu0 0
  %970 = vmatpush1.bf16.msra.mxu0 0
  %971 = vmatprep.subr.bf16.mxu0 0
  %972 = vmatpush1.bf16.msra.mxu0 0
  %973 = vmatprep.subr.bf16.mxu0 0
  %974 = vmatpush1.bf16.msra.mxu0 0
  %975 = vmatprep.subr.bf16.mxu0 0
  %976 = vmatpush1.bf16.msra.mxu0 0
  %977 = vmatprep.subr.bf16.mxu0 0
  %978 = vmatpush1.bf16.msra.mxu0 0
  %979 = vmatprep.subr.bf16.mxu0 0
  %980 = vmatpush1.bf16.msra.mxu0 0
  %981 = vmatprep.subr.bf16.mxu0 0
  %982 = vmatpush1.bf16.msra.mxu0 0
  %983 = vmatprep.subr.bf16.mxu0 0
  %984 = vmatpush1.bf16.msra.mxu0 0
  %985 = vmatprep.subr.bf16.mxu0 0
  %986 = vmatpush1.bf16.msra.mxu0 0
  %987 = vmatprep.subr.bf16.mxu0 0
  %988 = vmatpush1.bf16.msra.mxu0 0
  %989 = vmatprep.subr.bf16.mxu0 0
  %990 = vmatpush1.bf16.msra.mxu0 0
  %991 = vmatprep.subr.bf16.mxu0 0
  %992 = vmatpush1.bf16.msra.mxu0 0
  %993 = vmatprep.subr.bf16.mxu0 0
  %994 = vmatpush1.bf16.msra.mxu0 0
  %995 = vmatprep.mubr.bf16.mxu0 0
  %996 = vmatmul.mubr.bf16.gmra.mrb[0].mxu0 %v865
  %v997 = vpop.f32.mrb[0].mxu0
  %v998 = vadd.f32 %v450, %v997
  %v999 = vpop.f32.mrb[0].mxu0
  %v1000 = vpop.f32.mrb[0].mxu0
  %v1001 = vadd.f32 %v453, %v1000
  %v1002 = vpop.f32.mrb[0].mxu0
  %1003 = vmatprep.mubr.bf16.mxu0 0
  %1004 = vmatmul.mubr.bf16.gmra.mrb[0].mxu0 %v868
  %v1005 = vpop.f32.mrb[0].mxu0
  %v1006 = vadd.f32 %v458, %v1005
  %v1007 = vpop.f32.mrb[0].mxu0
  %v1008 = vpop.f32.mrb[0].mxu0
  %v1009 = vadd.f32 %v461, %v1008
  %v1010 = vpop.f32.mrb[0].mxu0
  %1011 = vmatprep.mubr.bf16.mxu0 0
  %1012 = vmatmul.mubr.bf16.gmra.mrb[0].mxu0 %v871
  %v1013 = vpop.f32.mrb[0].mxu0
  %v1014 = vadd.f32 %v466, %v1013
  %v1015 = vpop.f32.mrb[0].mxu0
  %v1016 = vpop.f32.mrb[0].mxu0
  %v1017 = vadd.f32 %v469, %v1016
  %v1018 = vpop.f32.mrb[0].mxu0
  %1019 = vmatprep.mubr.bf16.mxu0 0
  %1020 = vmatmul.mubr.bf16.gmra.mrb[0].mxu0 %v874
  %v1021 = vpop.f32.mrb[0].mxu0
  %v1022 = vadd.f32 %v474, %v1021
  %v1023 = vpop.f32.mrb[0].mxu0
  %v1024 = vpop.f32.mrb[0].mxu0
  %v1025 = vadd.f32 %v477, %v1024
  %v1026 = vpop.f32.mrb[0].mxu0
  %1027 = vmatprep.mubr.bf16.mxu0 0
  %1028 = vmatmul.mubr.bf16.gmra.mrb[0].mxu0 %v877
  %v1029 = vpop.f32.mrb[0].mxu0
  %v1030 = vadd.f32 %v482, %v1029
  %v1031 = vpop.f32.mrb[0].mxu0
  %v1032 = vpop.f32.mrb[0].mxu0
  %v1033 = vadd.f32 %v485, %v1032
  %v1034 = vpop.f32.mrb[0].mxu0
  %1035 = vmatprep.mubr.bf16.mxu0 0
  %1036 = vmatmul.mubr.bf16.gmra.mrb[0].mxu0 %v880
  %v1037 = vpop.f32.mrb[0].mxu0
  %v1038 = vadd.f32 %v490, %v1037
  %v1039 = vpop.f32.mrb[0].mxu0
  %v1040 = vpop.f32.mrb[0].mxu0
  %v1041 = vadd.f32 %v493, %v1040
  %v1042 = vpop.f32.mrb[0].mxu0
  %1043 = vmatprep.mubr.bf16.mxu0 0
  %1044 = vmatmul.mubr.bf16.gmra.mrb[0].mxu0 %v883
  %v1045 = vpop.f32.mrb[0].mxu0
  %v1046 = vadd.f32 %v498, %v1045
  %v1047 = vpop.f32.mrb[0].mxu0
  %v1048 = vpop.f32.mrb[0].mxu0
  %v1049 = vadd.f32 %v501, %v1048
  %v1050 = vpop.f32.mrb[0].mxu0
  %1051 = vmatprep.mubr.bf16.mxu0 0
  %1052 = vmatmul.mubr.bf16.gmra.mrb[0].mxu0 %v886
  %v1053 = vpop.f32.mrb[0].mxu0
  %v1054 = vadd.f32 %v506, %v1053
  %v1055 = vpop.f32.mrb[0].mxu0
  %v1056 = vpop.f32.mrb[0].mxu0
  %v1057 = vadd.f32 %v509, %v1056
  %v1058 = vpop.f32.mrb[0].mxu0
  %1059 = vmatprep.mubr.bf16.mxu0 0
  %1060 = vmatmul.mubr.bf16.gmra.mrb[0].mxu0 %v889
  %v1061 = vpop.f32.mrb[0].mxu0
  %v1062 = vadd.f32 %v514, %v1061
  %v1063 = vpop.f32.mrb[0].mxu0
  %v1064 = vpop.f32.mrb[0].mxu0
  %v1065 = vadd.f32 %v517, %v1064
  %v1066 = vpop.f32.mrb[0].mxu0
  %1067 = vmatprep.mubr.bf16.mxu0 0
  %1068 = vmatmul.mubr.bf16.gmra.mrb[0].mxu0 %v892
  %v1069 = vpop.f32.mrb[0].mxu0
  %v1070 = vadd.f32 %v522, %v1069
  %v1071 = vpop.f32.mrb[0].mxu0
  %v1072 = vpop.f32.mrb[0].mxu0
  %v1073 = vadd.f32 %v525, %v1072
  %v1074 = vpop.f32.mrb[0].mxu0
  %1075 = vmatprep.mubr.bf16.mxu0 0
  %1076 = vmatmul.mubr.bf16.gmra.mrb[0].mxu0 %v895
  %v1077 = vpop.f32.mrb[0].mxu0
  %v1078 = vadd.f32 %v530, %v1077
  %v1079 = vpop.f32.mrb[0].mxu0
  %v1080 = vpop.f32.mrb[0].mxu0
  %v1081 = vadd.f32 %v533, %v1080
  %v1082 = vpop.f32.mrb[0].mxu0
  %1083 = vmatprep.mubr.bf16.mxu0 0
  %1084 = vmatmul.mubr.bf16.gmra.mrb[0].mxu0 %v898
  %v1085 = vpop.f32.mrb[0].mxu0
  %v1086 = vadd.f32 %v538, %v1085
  %v1087 = vpop.f32.mrb[0].mxu0
  %v1088 = vpop.f32.mrb[0].mxu0
  %v1089 = vadd.f32 %v541, %v1088
  %v1090 = vpop.f32.mrb[0].mxu0
  %1091 = vmatprep.mubr.bf16.mxu0 0
  %1092 = vmatmul.mubr.bf16.gmra.mrb[0].mxu0 %v901
  %v1093 = vpop.f32.mrb[0].mxu0
  %v1094 = vadd.f32 %v546, %v1093
  %v1095 = vpop.f32.mrb[0].mxu0
  %v1096 = vpop.f32.mrb[0].mxu0
  %v1097 = vadd.f32 %v549, %v1096
  %v1098 = vpop.f32.mrb[0].mxu0
  %1099 = vmatprep.mubr.bf16.mxu0 0
  %1100 = vmatmul.mubr.bf16.gmra.mrb[0].mxu0 %v904
  %v1101 = vpop.f32.mrb[0].mxu0
  %v1102 = vadd.f32 %v554, %v1101
  %v1103 = vpop.f32.mrb[0].mxu0
  %v1104 = vpop.f32.mrb[0].mxu0
  %v1105 = vadd.f32 %v557, %v1104
  %v1106 = vpop.f32.mrb[0].mxu0
  %1107 = vmatprep.mubr.bf16.mxu0 0
  %1108 = vmatmul.mubr.bf16.gmra.mrb[0].mxu0 %v907
  %v1109 = vpop.f32.mrb[0].mxu0
  %v1110 = vadd.f32 %v562, %v1109
  %v1111 = vpop.f32.mrb[0].mxu0
  %v1112 = vpop.f32.mrb[0].mxu0
  %v1113 = vadd.f32 %v565, %v1112
  %v1114 = vpop.f32.mrb[0].mxu0
  %1115 = vmatprep.mubr.bf16.mxu0 0
  %1116 = vmatmul.mubr.bf16.gmra.mrb[0].mxu0 %v910
  %v1117 = vpop.f32.mrb[0].mxu0
  %v1118 = vadd.f32 %v570, %v1117
  %v1119 = vpop.f32.mrb[0].mxu0
  %v1120 = vpop.f32.mrb[0].mxu0
  %v1121 = vadd.f32 %v573, %v1120
  %v1122 = vpop.f32.mrb[0].mxu0
  %1123 = vmatprep.mubr.bf16.mxu0 0
  %1124 = vmatmul.mubr.bf16.gmra.mrb[0].mxu0 %v913
  %v1125 = vpop.f32.mrb[0].mxu0
  %v1126 = vadd.f32 %v578, %v1125
  %v1127 = vpop.f32.mrb[0].mxu0
  %v1128 = vpop.f32.mrb[0].mxu0
  %v1129 = vadd.f32 %v581, %v1128
  %v1130 = vpop.f32.mrb[0].mxu0
  %1131 = vmatprep.mubr.bf16.mxu0 0
  %1132 = vmatmul.mubr.bf16.gmra.mrb[0].mxu0 %v916
  %v1133 = vpop.f32.mrb[0].mxu0
  %v1134 = vadd.f32 %v586, %v1133
  %v1135 = vpop.f32.mrb[0].mxu0
  %v1136 = vpop.f32.mrb[0].mxu0
  %v1137 = vadd.f32 %v589, %v1136
  %v1138 = vpop.f32.mrb[0].mxu0
  %1139 = vmatprep.mubr.bf16.mxu0 0
  %1140 = vmatmul.mubr.bf16.gmra.mrb[0].mxu0 %v919
  %v1141 = vpop.f32.mrb[0].mxu0
  %v1142 = vadd.f32 %v594, %v1141
  %v1143 = vpop.f32.mrb[0].mxu0
  %v1144 = vpop.f32.mrb[0].mxu0
  %v1145 = vadd.f32 %v597, %v1144
  %v1146 = vpop.f32.mrb[0].mxu0
  %1147 = vmatprep.mubr.bf16.mxu0 0
  %1148 = vmatmul.mubr.bf16.gmra.mrb[0].mxu0 %v922
  %v1149 = vpop.f32.mrb[0].mxu0
  %v1150 = vadd.f32 %v602, %v1149
  %v1151 = vpop.f32.mrb[0].mxu0
  %v1152 = vpop.f32.mrb[0].mxu0
  %v1153 = vadd.f32 %v605, %v1152
  %v1154 = vpop.f32.mrb[0].mxu0
  %1155 = vmatprep.mubr.bf16.mxu0 0
  %1156 = vmatmul.mubr.bf16.gmra.mrb[0].mxu0 %v925
  %v1157 = vpop.f32.mrb[0].mxu0
  %v1158 = vadd.f32 %v610, %v1157
  %v1159 = vpop.f32.mrb[0].mxu0
  %v1160 = vpop.f32.mrb[0].mxu0
  %v1161 = vadd.f32 %v613, %v1160
  %v1162 = vpop.f32.mrb[0].mxu0
  %1163 = vmatprep.mubr.bf16.mxu0 0
  %1164 = vmatmul.mubr.bf16.gmra.mrb[0].mxu0 %v928
  %v1165 = vpop.f32.mrb[0].mxu0
  %v1166 = vadd.f32 %v618, %v1165
  %v1167 = vpop.f32.mrb[0].mxu0
  %v1168 = vpop.f32.mrb[0].mxu0
  %v1169 = vadd.f32 %v621, %v1168
  %v1170 = vpop.f32.mrb[0].mxu0
  %1171 = vmatprep.mubr.bf16.mxu0 0
  %1172 = vmatmul.mubr.bf16.gmra.mrb[0].mxu0 %v931
  %v1173 = vpop.f32.mrb[0].mxu0
  %v1174 = vadd.f32 %v626, %v1173
  %v1175 = vpop.f32.mrb[0].mxu0
  %v1176 = vpop.f32.mrb[0].mxu0
  %v1177 = vadd.f32 %v629, %v1176
  %v1178 = vpop.f32.mrb[0].mxu0
  %1179 = vmatprep.mubr.bf16.mxu0 0
  %1180 = vmatmul.mubr.bf16.gmra.mrb[0].mxu0 %v934
  %v1181 = vpop.f32.mrb[0].mxu0
  %v1182 = vadd.f32 %v634, %v1181
  %v1183 = vpop.f32.mrb[0].mxu0
  %v1184 = vpop.f32.mrb[0].mxu0
  %v1185 = vadd.f32 %v637, %v1184
  %v1186 = vpop.f32.mrb[0].mxu0
  %1187 = vmatprep.mubr.bf16.mxu0 0
  %1188 = vmatmul.mubr.bf16.gmra.mrb[0].mxu0 %v937
  %v1189 = vpop.f32.mrb[0].mxu0
  %v1190 = vadd.f32 %v642, %v1189
  %v1191 = vpop.f32.mrb[0].mxu0
  %v1192 = vpop.f32.mrb[0].mxu0
  %v1193 = vadd.f32 %v645, %v1192
  %v1194 = vpop.f32.mrb[0].mxu0
  %1195 = vmatprep.mubr.bf16.mxu0 0
  %1196 = vmatmul.mubr.bf16.gmra.mrb[0].mxu0 %v940
  %v1197 = vpop.f32.mrb[0].mxu0
  %v1198 = vadd.f32 %v650, %v1197
  %v1199 = vpop.f32.mrb[0].mxu0
  %v1200 = vpop.f32.mrb[0].mxu0
  %v1201 = vadd.f32 %v653, %v1200
  %v1202 = vpop.f32.mrb[0].mxu0
  %1203 = vmatprep.mubr.bf16.mxu0 0
  %1204 = vmatmul.mubr.bf16.gmra.mrb[0].mxu0 %v943
  %v1205 = vpop.f32.mrb[0].mxu0
  %v1206 = vadd.f32 %v658, %v1205
  %v1207 = vpop.f32.mrb[0].mxu0
  %v1208 = vpop.f32.mrb[0].mxu0
  %v1209 = vadd.f32 %v661, %v1208
  %v1210 = vpop.f32.mrb[0].mxu0
  %1211 = vmatprep.mubr.bf16.mxu0 0
  %1212 = vmatmul.mubr.bf16.gmra.mrb[0].mxu0 %v946
  %v1213 = vpop.f32.mrb[0].mxu0
  %v1214 = vadd.f32 %v666, %v1213
  %v1215 = vpop.f32.mrb[0].mxu0
  %v1216 = vpop.f32.mrb[0].mxu0
  %v1217 = vadd.f32 %v669, %v1216
  %v1218 = vpop.f32.mrb[0].mxu0
  %1219 = vmatprep.mubr.bf16.mxu0 0
  %1220 = vmatmul.mubr.bf16.gmra.mrb[0].mxu0 %v949
  %v1221 = vpop.f32.mrb[0].mxu0
  %v1222 = vadd.f32 %v674, %v1221
  %v1223 = vpop.f32.mrb[0].mxu0
  %v1224 = vpop.f32.mrb[0].mxu0
  %v1225 = vadd.f32 %v677, %v1224
  %v1226 = vpop.f32.mrb[0].mxu0
  %1227 = vmatprep.mubr.bf16.mxu0 0
  %1228 = vmatmul.mubr.bf16.gmra.mrb[0].mxu0 %v952
  %v1229 = vpop.f32.mrb[0].mxu0
  %v1230 = vadd.f32 %v682, %v1229
  %v1231 = vpop.f32.mrb[0].mxu0
  %v1232 = vpop.f32.mrb[0].mxu0
  %v1233 = vadd.f32 %v685, %v1232
  %v1234 = vpop.f32.mrb[0].mxu0
  %1235 = vmatprep.mubr.bf16.mxu0 0
  %1236 = vmatmul.mubr.bf16.gmra.mrb[0].mxu0 %v955
  %v1237 = vpop.f32.mrb[0].mxu0
  %v1238 = vadd.f32 %v690, %v1237
  %v1239 = vpop.f32.mrb[0].mxu0
  %v1240 = vpop.f32.mrb[0].mxu0
  %v1241 = vadd.f32 %v693, %v1240
  %v1242 = vpop.f32.mrb[0].mxu0
  %1243 = vmatprep.mubr.bf16.mxu0 0
  %1244 = vmatmul.mubr.bf16.gmra.mrb[0].mxu0 %v958
  %v1245 = vpop.f32.mrb[0].mxu0
  %v1246 = vadd.f32 %v698, %v1245
  %v1247 = vpop.f32.mrb[0].mxu0
  %v1248 = vpop.f32.mrb[0].mxu0
  %v1249 = vadd.f32 %v701, %v1248
  %v1250 = vpop.f32.mrb[0].mxu0
  %1251 = vdwg.mxu0
  %v1252 = vld [vmem:[%s4] sm:$0x1]
  %v1254 = vlaneseq
  %v1255 = vshrl.u32 %v1254, 7
  %v1256 = vsub.s32 0, %v1255
  %v1257 = vrot.slane %v1252, %v1256
  %v1259 = vmul.f32 %v998, %v1257
  %v1260 = vmul.f32 %v1001, %v1257
  %v1261 = vmul.f32 %v1006, %v1257
  %v1262 = vmul.f32 %v1009, %v1257
  %v1263 = vmul.f32 %v1014, %v1257
  %v1264 = vmul.f32 %v1017, %v1257
  %v1265 = vmul.f32 %v1022, %v1257
  %v1266 = vmul.f32 %v1025, %v1257
  %v1267 = vmul.f32 %v1030, %v1257
  %v1268 = vmul.f32 %v1033, %v1257
  %v1269 = vmul.f32 %v1038, %v1257
  %v1270 = vmul.f32 %v1041, %v1257
  %v1271 = vmul.f32 %v1046, %v1257
  %v1272 = vmul.f32 %v1049, %v1257
  %v1273 = vmul.f32 %v1054, %v1257
  %v1274 = vmul.f32 %v1057, %v1257
  %v1275 = vmul.f32 %v1062, %v1257
  %v1276 = vmul.f32 %v1065, %v1257
  %v1277 = vmul.f32 %v1070, %v1257
  %v1278 = vmul.f32 %v1073, %v1257
  %v1279 = vmul.f32 %v1078, %v1257
  %v1280 = vmul.f32 %v1081, %v1257
  %v1281 = vmul.f32 %v1086, %v1257
  %v1282 = vmul.f32 %v1089, %v1257
  %v1283 = vmul.f32 %v1094, %v1257
  %v1284 = vmul.f32 %v1097, %v1257
  %v1285 = vmul.f32 %v1102, %v1257
  %v1286 = vmul.f32 %v1105, %v1257
  %v1287 = vmul.f32 %v1110, %v1257
  %v1288 = vmul.f32 %v1113, %v1257
  %v1289 = vmul.f32 %v1118, %v1257
  %v1290 = vmul.f32 %v1121, %v1257
  %v1291 = vmul.f32 %v1126, %v1257
  %v1292 = vmul.f32 %v1129, %v1257
  %v1293 = vmul.f32 %v1134, %v1257
  %v1294 = vmul.f32 %v1137, %v1257
  %v1295 = vmul.f32 %v1142, %v1257
  %v1296 = vmul.f32 %v1145, %v1257
  %v1297 = vmul.f32 %v1150, %v1257
  %v1298 = vmul.f32 %v1153, %v1257
  %v1299 = vmul.f32 %v1158, %v1257
  %v1300 = vmul.f32 %v1161, %v1257
  %v1301 = vmul.f32 %v1166, %v1257
  %v1302 = vmul.f32 %v1169, %v1257
  %v1303 = vmul.f32 %v1174, %v1257
  %v1304 = vmul.f32 %v1177, %v1257
  %v1305 = vmul.f32 %v1182, %v1257
  %v1306 = vmul.f32 %v1185, %v1257
  %v1307 = vmul.f32 %v1190, %v1257
  %v1308 = vmul.f32 %v1193, %v1257
  %v1309 = vmul.f32 %v1198, %v1257
  %v1310 = vmul.f32 %v1201, %v1257
  %v1311 = vmul.f32 %v1206, %v1257
  %v1312 = vmul.f32 %v1209, %v1257
  %v1313 = vmul.f32 %v1214, %v1257
  %v1314 = vmul.f32 %v1217, %v1257
  %v1315 = vmul.f32 %v1222, %v1257
  %v1316 = vmul.f32 %v1225, %v1257
  %v1317 = vmul.f32 %v1230, %v1257
  %v1318 = vmul.f32 %v1233, %v1257
  %v1319 = vmul.f32 %v1238, %v1257
  %v1320 = vmul.f32 %v1241, %v1257
  %v1321 = vmul.f32 %v1246, %v1257
  %v1322 = vmul.f32 %v1249, %v1257
  %v1323 = vld [vmem:[%s5] sm:$0x1]
  %v1325 = vlaneseq
  %v1326 = vshrl.u32 %v1325, 7
  %v1327 = vsub.s32 0, %v1326
  %v1328 = vrot.slane %v1323, %v1327
  %v1330 = vadd.f32 %v1259, %v1328
  %v1331 = vadd.f32 %v1260, %v1328
  %v1332 = vadd.f32 %v1261, %v1328
  %v1333 = vadd.f32 %v1262, %v1328
  %v1334 = vadd.f32 %v1263, %v1328
  %v1335 = vadd.f32 %v1264, %v1328
  %v1336 = vadd.f32 %v1265, %v1328
  %v1337 = vadd.f32 %v1266, %v1328
  %v1338 = vadd.f32 %v1267, %v1328
  %v1339 = vadd.f32 %v1268, %v1328
  %v1340 = vadd.f32 %v1269, %v1328
  %v1341 = vadd.f32 %v1270, %v1328
  %v1342 = vadd.f32 %v1271, %v1328
  %v1343 = vadd.f32 %v1272, %v1328
  %v1344 = vadd.f32 %v1273, %v1328
  %v1345 = vadd.f32 %v1274, %v1328
  %v1346 = vadd.f32 %v1275, %v1328
  %v1347 = vadd.f32 %v1276, %v1328
  %v1348 = vadd.f32 %v1277, %v1328
  %v1349 = vadd.f32 %v1278, %v1328
  %v1350 = vadd.f32 %v1279, %v1328
  %v1351 = vadd.f32 %v1280, %v1328
  %v1352 = vadd.f32 %v1281, %v1328
  %v1353 = vadd.f32 %v1282, %v1328
  %v1354 = vadd.f32 %v1283, %v1328
  %v1355 = vadd.f32 %v1284, %v1328
  %v1356 = vadd.f32 %v1285, %v1328
  %v1357 = vadd.f32 %v1286, %v1328
  %v1358 = vadd.f32 %v1287, %v1328
  %v1359 = vadd.f32 %v1288, %v1328
  %v1360 = vadd.f32 %v1289, %v1328
  %v1361 = vadd.f32 %v1290, %v1328
  %v1362 = vadd.f32 %v1291, %v1328
  %v1363 = vadd.f32 %v1292, %v1328
  %v1364 = vadd.f32 %v1293, %v1328
  %v1365 = vadd.f32 %v1294, %v1328
  %v1366 = vadd.f32 %v1295, %v1328
  %v1367 = vadd.f32 %v1296, %v1328
  %v1368 = vadd.f32 %v1297, %v1328
  %v1369 = vadd.f32 %v1298, %v1328
  %v1370 = vadd.f32 %v1299, %v1328
  %v1371 = vadd.f32 %v1300, %v1328
  %v1372 = vadd.f32 %v1301, %v1328
  %v1373 = vadd.f32 %v1302, %v1328
  %v1374 = vadd.f32 %v1303, %v1328
  %v1375 = vadd.f32 %v1304, %v1328
  %v1376 = vadd.f32 %v1305, %v1328
  %v1377 = vadd.f32 %v1306, %v1328
  %v1378 = vadd.f32 %v1307, %v1328
  %v1379 = vadd.f32 %v1308, %v1328
  %v1380 = vadd.f32 %v1309, %v1328
  %v1381 = vadd.f32 %v1310, %v1328
  %v1382 = vadd.f32 %v1311, %v1328
  %v1383 = vadd.f32 %v1312, %v1328
  %v1384 = vadd.f32 %v1313, %v1328
  %v1385 = vadd.f32 %v1314, %v1328
  %v1386 = vadd.f32 %v1315, %v1328
  %v1387 = vadd.f32 %v1316, %v1328
  %v1388 = vadd.f32 %v1317, %v1328
  %v1389 = vadd.f32 %v1318, %v1328
  %v1390 = vadd.f32 %v1319, %v1328
  %v1391 = vadd.f32 %v1320, %v1328
  %v1392 = vadd.f32 %v1321, %v1328
  %v1393 = vadd.f32 %v1322, %v1328
  %v1394 = vsub.f32 0.0, %v1330
  %v1395 = vsub.f32 0.0, %v1331
  %v1396 = vsub.f32 0.0, %v1332
  %v1397 = vsub.f32 0.0, %v1333
  %v1398 = vsub.f32 0.0, %v1334
  %v1399 = vsub.f32 0.0, %v1335
  %v1400 = vsub.f32 0.0, %v1336
  %v1401 = vsub.f32 0.0, %v1337
  %v1402 = vsub.f32 0.0, %v1338
  %v1403 = vsub.f32 0.0, %v1339
  %v1404 = vsub.f32 0.0, %v1340
  %v1405 = vsub.f32 0.0, %v1341
  %v1406 = vsub.f32 0.0, %v1342
  %v1407 = vsub.f32 0.0, %v1343
  %v1408 = vsub.f32 0.0, %v1344
  %v1409 = vsub.f32 0.0, %v1345
  %v1410 = vsub.f32 0.0, %v1346
  %v1411 = vsub.f32 0.0, %v1347
  %v1412 = vsub.f32 0.0, %v1348
  %v1413 = vsub.f32 0.0, %v1349
  %v1414 = vsub.f32 0.0, %v1350
  %v1415 = vsub.f32 0.0, %v1351
  %v1416 = vsub.f32 0.0, %v1352
  %v1417 = vsub.f32 0.0, %v1353
  %v1418 = vsub.f32 0.0, %v1354
  %v1419 = vsub.f32 0.0, %v1355
  %v1420 = vsub.f32 0.0, %v1356
  %v1421 = vsub.f32 0.0, %v1357
  %v1422 = vsub.f32 0.0, %v1358
  %v1423 = vsub.f32 0.0, %v1359
  %v1424 = vsub.f32 0.0, %v1360
  %v1425 = vsub.f32 0.0, %v1361
  %v1426 = vsub.f32 0.0, %v1362
  %v1427 = vsub.f32 0.0, %v1363
  %v1428 = vsub.f32 0.0, %v1364
  %v1429 = vsub.f32 0.0, %v1365
  %v1430 = vsub.f32 0.0, %v1366
  %v1431 = vsub.f32 0.0, %v1367
  %v1432 = vsub.f32 0.0, %v1368
  %v1433 = vsub.f32 0.0, %v1369
  %v1434 = vsub.f32 0.0, %v1370
  %v1435 = vsub.f32 0.0, %v1371
  %v1436 = vsub.f32 0.0, %v1372
  %v1437 = vsub.f32 0.0, %v1373
  %v1438 = vsub.f32 0.0, %v1374
  %v1439 = vsub.f32 0.0, %v1375
  %v1440 = vsub.f32 0.0, %v1376
  %v1441 = vsub.f32 0.0, %v1377
  %v1442 = vsub.f32 0.0, %v1378
  %v1443 = vsub.f32 0.0, %v1379
  %v1444 = vsub.f32 0.0, %v1380
  %v1445 = vsub.f32 0.0, %v1381
  %v1446 = vsub.f32 0.0, %v1382
  %v1447 = vsub.f32 0.0, %v1383
  %v1448 = vsub.f32 0.0, %v1384
  %v1449 = vsub.f32 0.0, %v1385
  %v1450 = vsub.f32 0.0, %v1386
  %v1451 = vsub.f32 0.0, %v1387
  %v1452 = vsub.f32 0.0, %v1388
  %v1453 = vsub.f32 0.0, %v1389
  %v1454 = vsub.f32 0.0, %v1390
  %v1455 = vsub.f32 0.0, %v1391
  %v1456 = vsub.f32 0.0, %v1392
  %v1457 = vsub.f32 0.0, %v1393
  %v1458 = vmul.f32 %v1394, 1.442695
  %v1459 = vpow.pop %v1458
  %v1460 = vmul.f32 %v1395, 1.442695
  %v1461 = vpow.pop %v1460
  %v1462 = vmul.f32 %v1396, 1.442695
  %v1463 = vpow.pop %v1462
  %v1464 = vmul.f32 %v1397, 1.442695
  %v1465 = vpow.pop %v1464
  %v1466 = vmul.f32 %v1398, 1.442695
  %v1467 = vpow.pop %v1466
  %v1468 = vmul.f32 %v1399, 1.442695
  %v1469 = vpow.pop %v1468
  %v1470 = vmul.f32 %v1400, 1.442695
  %v1471 = vpow.pop %v1470
  %v1472 = vmul.f32 %v1401, 1.442695
  %v1473 = vpow.pop %v1472
  %v1474 = vmul.f32 %v1402, 1.442695
  %v1475 = vpow.pop %v1474
  %v1476 = vmul.f32 %v1403, 1.442695
  %v1477 = vpow.pop %v1476
  %v1478 = vmul.f32 %v1404, 1.442695
  %v1479 = vpow.pop %v1478
  %v1480 = vmul.f32 %v1405, 1.442695
  %v1481 = vpow.pop %v1480
  %v1482 = vmul.f32 %v1406, 1.442695
  %v1483 = vpow.pop %v1482
  %v1484 = vmul.f32 %v1407, 1.442695
  %v1485 = vpow.pop %v1484
  %v1486 = vmul.f32 %v1408, 1.442695
  %v1487 = vpow.pop %v1486
  %v1488 = vmul.f32 %v1409, 1.442695
  %v1489 = vpow.pop %v1488
  %v1490 = vmul.f32 %v1410, 1.442695
  %v1491 = vpow.pop %v1490
  %v1492 = vmul.f32 %v1411, 1.442695
  %v1493 = vpow.pop %v1492
  %v1494 = vmul.f32 %v1412, 1.442695
  %v1495 = vpow.pop %v1494
  %v1496 = vmul.f32 %v1413, 1.442695
  %v1497 = vpow.pop %v1496
  %v1498 = vmul.f32 %v1414, 1.442695
  %v1499 = vpow.pop %v1498
  %v1500 = vmul.f32 %v1415, 1.442695
  %v1501 = vpow.pop %v1500
  %v1502 = vmul.f32 %v1416, 1.442695
  %v1503 = vpow.pop %v1502
  %v1504 = vmul.f32 %v1417, 1.442695
  %v1505 = vpow.pop %v1504
  %v1506 = vmul.f32 %v1418, 1.442695
  %v1507 = vpow.pop %v1506
  %v1508 = vmul.f32 %v1419, 1.442695
  %v1509 = vpow.pop %v1508
  %v1510 = vmul.f32 %v1420, 1.442695
  %v1511 = vpow.pop %v1510
  %v1512 = vmul.f32 %v1421, 1.442695
  %v1513 = vpow.pop %v1512
  %v1514 = vmul.f32 %v1422, 1.442695
  %v1515 = vpow.pop %v1514
  %v1516 = vmul.f32 %v1423, 1.442695
  %v1517 = vpow.pop %v1516
  %v1518 = vmul.f32 %v1424, 1.442695
  %v1519 = vpow.pop %v1518
  %v1520 = vmul.f32 %v1425, 1.442695
  %v1521 = vpow.pop %v1520
  %v1522 = vmul.f32 %v1426, 1.442695
  %v1523 = vpow.pop %v1522
  %v1524 = vmul.f32 %v1427, 1.442695
  %v1525 = vpow.pop %v1524
  %v1526 = vmul.f32 %v1428, 1.442695
  %v1527 = vpow.pop %v1526
  %v1528 = vmul.f32 %v1429, 1.442695
  %v1529 = vpow.pop %v1528
  %v1530 = vmul.f32 %v1430, 1.442695
  %v1531 = vpow.pop %v1530
  %v1532 = vmul.f32 %v1431, 1.442695
  %v1533 = vpow.pop %v1532
  %v1534 = vmul.f32 %v1432, 1.442695
  %v1535 = vpow.pop %v1534
  %v1536 = vmul.f32 %v1433, 1.442695
  %v1537 = vpow.pop %v1536
  %v1538 = vmul.f32 %v1434, 1.442695
  %v1539 = vpow.pop %v1538
  %v1540 = vmul.f32 %v1435, 1.442695
  %v1541 = vpow.pop %v1540
  %v1542 = vmul.f32 %v1436, 1.442695
  %v1543 = vpow.pop %v1542
  %v1544 = vmul.f32 %v1437, 1.442695
  %v1545 = vpow.pop %v1544
  %v1546 = vmul.f32 %v1438, 1.442695
  %v1547 = vpow.pop %v1546
  %v1548 = vmul.f32 %v1439, 1.442695
  %v1549 = vpow.pop %v1548
  %v1550 = vmul.f32 %v1440, 1.442695
  %v1551 = vpow.pop %v1550
  %v1552 = vmul.f32 %v1441, 1.442695
  %v1553 = vpow.pop %v1552
  %v1554 = vmul.f32 %v1442, 1.442695
  %v1555 = vpow.pop %v1554
  %v1556 = vmul.f32 %v1443, 1.442695
  %v1557 = vpow.pop %v1556
  %v1558 = vmul.f32 %v1444, 1.442695
  %v1559 = vpow.pop %v1558
  %v1560 = vmul.f32 %v1445, 1.442695
  %v1561 = vpow.pop %v1560
  %v1562 = vmul.f32 %v1446, 1.442695
  %v1563 = vpow.pop %v1562
  %v1564 = vmul.f32 %v1447, 1.442695
  %v1565 = vpow.pop %v1564
  %v1566 = vmul.f32 %v1448, 1.442695
  %v1567 = vpow.pop %v1566
  %v1568 = vmul.f32 %v1449, 1.442695
  %v1569 = vpow.pop %v1568
  %v1570 = vmul.f32 %v1450, 1.442695
  %v1571 = vpow.pop %v1570
  %v1572 = vmul.f32 %v1451, 1.442695
  %v1573 = vpow.pop %v1572
  %v1574 = vmul.f32 %v1452, 1.442695
  %v1575 = vpow.pop %v1574
  %v1576 = vmul.f32 %v1453, 1.442695
  %v1577 = vpow.pop %v1576
  %v1578 = vmul.f32 %v1454, 1.442695
  %v1579 = vpow.pop %v1578
  %v1580 = vmul.f32 %v1455, 1.442695
  %v1581 = vpow.pop %v1580
  %v1582 = vmul.f32 %v1456, 1.442695
  %v1583 = vpow.pop %v1582
  %v1584 = vmul.f32 %v1457, 1.442695
  %v1585 = vpow.pop %v1584
  %v1586 = vadd.f32 %v1459, 1.0
  %v1587 = vadd.f32 %v1461, 1.0
  %v1588 = vadd.f32 %v1463, 1.0
  %v1589 = vadd.f32 %v1465, 1.0
  %v1590 = vadd.f32 %v1467, 1.0
  %v1591 = vadd.f32 %v1469, 1.0
  %v1592 = vadd.f32 %v1471, 1.0
  %v1593 = vadd.f32 %v1473, 1.0
  %v1594 = vadd.f32 %v1475, 1.0
  %v1595 = vadd.f32 %v1477, 1.0
  %v1596 = vadd.f32 %v1479, 1.0
  %v1597 = vadd.f32 %v1481, 1.0
  %v1598 = vadd.f32 %v1483, 1.0
  %v1599 = vadd.f32 %v1485, 1.0
  %v1600 = vadd.f32 %v1487, 1.0
  %v1601 = vadd.f32 %v1489, 1.0
  %v1602 = vadd.f32 %v1491, 1.0
  %v1603 = vadd.f32 %v1493, 1.0
  %v1604 = vadd.f32 %v1495, 1.0
  %v1605 = vadd.f32 %v1497, 1.0
  %v1606 = vadd.f32 %v1499, 1.0
  %v1607 = vadd.f32 %v1501, 1.0
  %v1608 = vadd.f32 %v1503, 1.0
  %v1609 = vadd.f32 %v1505, 1.0
  %v1610 = vadd.f32 %v1507, 1.0
  %v1611 = vadd.f32 %v1509, 1.0
  %v1612 = vadd.f32 %v1511, 1.0
  %v1613 = vadd.f32 %v1513, 1.0
  %v1614 = vadd.f32 %v1515, 1.0
  %v1615 = vadd.f32 %v1517, 1.0
  %v1616 = vadd.f32 %v1519, 1.0
  %v1617 = vadd.f32 %v1521, 1.0
  %v1618 = vadd.f32 %v1523, 1.0
  %v1619 = vadd.f32 %v1525, 1.0
  %v1620 = vadd.f32 %v1527, 1.0
  %v1621 = vadd.f32 %v1529, 1.0
  %v1622 = vadd.f32 %v1531, 1.0
  %v1623 = vadd.f32 %v1533, 1.0
  %v1624 = vadd.f32 %v1535, 1.0
  %v1625 = vadd.f32 %v1537, 1.0
  %v1626 = vadd.f32 %v1539, 1.0
  %v1627 = vadd.f32 %v1541, 1.0
  %v1628 = vadd.f32 %v1543, 1.0
  %v1629 = vadd.f32 %v1545, 1.0
  %v1630 = vadd.f32 %v1547, 1.0
  %v1631 = vadd.f32 %v1549, 1.0
  %v1632 = vadd.f32 %v1551, 1.0
  %v1633 = vadd.f32 %v1553, 1.0
  %v1634 = vadd.f32 %v1555, 1.0
  %v1635 = vadd.f32 %v1557, 1.0
  %v1636 = vadd.f32 %v1559, 1.0
  %v1637 = vadd.f32 %v1561, 1.0
  %v1638 = vadd.f32 %v1563, 1.0
  %v1639 = vadd.f32 %v1565, 1.0
  %v1640 = vadd.f32 %v1567, 1.0
  %v1641 = vadd.f32 %v1569, 1.0
  %v1642 = vadd.f32 %v1571, 1.0
  %v1643 = vadd.f32 %v1573, 1.0
  %v1644 = vadd.f32 %v1575, 1.0
  %v1645 = vadd.f32 %v1577, 1.0
  %v1646 = vadd.f32 %v1579, 1.0
  %v1647 = vadd.f32 %v1581, 1.0
  %v1648 = vadd.f32 %v1583, 1.0
  %v1649 = vadd.f32 %v1585, 1.0
  %v1650 = vrcp.pop %v1586
  %v1651 = vrcp.pop %v1587
  %v1652 = vrcp.pop %v1588
  %v1653 = vrcp.pop %v1589
  %v1654 = vrcp.pop %v1590
  %v1655 = vrcp.pop %v1591
  %v1656 = vrcp.pop %v1592
  %v1657 = vrcp.pop %v1593
  %v1658 = vrcp.pop %v1594
  %v1659 = vrcp.pop %v1595
  %v1660 = vrcp.pop %v1596
  %v1661 = vrcp.pop %v1597
  %v1662 = vrcp.pop %v1598
  %v1663 = vrcp.pop %v1599
  %v1664 = vrcp.pop %v1600
  %v1665 = vrcp.pop %v1601
  %v1666 = vrcp.pop %v1602
  %v1667 = vrcp.pop %v1603
  %v1668 = vrcp.pop %v1604
  %v1669 = vrcp.pop %v1605
  %v1670 = vrcp.pop %v1606
  %v1671 = vrcp.pop %v1607
  %v1672 = vrcp.pop %v1608
  %v1673 = vrcp.pop %v1609
  %v1674 = vrcp.pop %v1610
  %v1675 = vrcp.pop %v1611
  %v1676 = vrcp.pop %v1612
  %v1677 = vrcp.pop %v1613
  %v1678 = vrcp.pop %v1614
  %v1679 = vrcp.pop %v1615
  %v1680 = vrcp.pop %v1616
  %v1681 = vrcp.pop %v1617
  %v1682 = vrcp.pop %v1618
  %v1683 = vrcp.pop %v1619
  %v1684 = vrcp.pop %v1620
  %v1685 = vrcp.pop %v1621
  %v1686 = vrcp.pop %v1622
  %v1687 = vrcp.pop %v1623
  %v1688 = vrcp.pop %v1624
  %v1689 = vrcp.pop %v1625
  %v1690 = vrcp.pop %v1626
  %v1691 = vrcp.pop %v1627
  %v1692 = vrcp.pop %v1628
  %v1693 = vrcp.pop %v1629
  %v1694 = vrcp.pop %v1630
  %v1695 = vrcp.pop %v1631
  %v1696 = vrcp.pop %v1632
  %v1697 = vrcp.pop %v1633
  %v1698 = vrcp.pop %v1634
  %v1699 = vrcp.pop %v1635
  %v1700 = vrcp.pop %v1636
  %v1701 = vrcp.pop %v1637
  %v1702 = vrcp.pop %v1638
  %v1703 = vrcp.pop %v1639
  %v1704 = vrcp.pop %v1640
  %v1705 = vrcp.pop %v1641
  %v1706 = vrcp.pop %v1642
  %v1707 = vrcp.pop %v1643
  %v1708 = vrcp.pop %v1644
  %v1709 = vrcp.pop %v1645
  %v1710 = vrcp.pop %v1646
  %v1711 = vrcp.pop %v1647
  %v1712 = vrcp.pop %v1648
  %v1713 = vrcp.pop %v1649
  %v1714 = vmul.f32 %v1330, %v1650
  %v1715 = vmul.f32 %v1331, %v1651
  %v1716 = vmul.f32 %v1332, %v1652
  %v1717 = vmul.f32 %v1333, %v1653
  %v1718 = vmul.f32 %v1334, %v1654
  %v1719 = vmul.f32 %v1335, %v1655
  %v1720 = vmul.f32 %v1336, %v1656
  %v1721 = vmul.f32 %v1337, %v1657
  %v1722 = vmul.f32 %v1338, %v1658
  %v1723 = vmul.f32 %v1339, %v1659
  %v1724 = vmul.f32 %v1340, %v1660
  %v1725 = vmul.f32 %v1341, %v1661
  %v1726 = vmul.f32 %v1342, %v1662
  %v1727 = vmul.f32 %v1343, %v1663
  %v1728 = vmul.f32 %v1344, %v1664
  %v1729 = vmul.f32 %v1345, %v1665
  %v1730 = vmul.f32 %v1346, %v1666
  %v1731 = vmul.f32 %v1347, %v1667
  %v1732 = vmul.f32 %v1348, %v1668
  %v1733 = vmul.f32 %v1349, %v1669
  %v1734 = vmul.f32 %v1350, %v1670
  %v1735 = vmul.f32 %v1351, %v1671
  %v1736 = vmul.f32 %v1352, %v1672
  %v1737 = vmul.f32 %v1353, %v1673
  %v1738 = vmul.f32 %v1354, %v1674
  %v1739 = vmul.f32 %v1355, %v1675
  %v1740 = vmul.f32 %v1356, %v1676
  %v1741 = vmul.f32 %v1357, %v1677
  %v1742 = vmul.f32 %v1358, %v1678
  %v1743 = vmul.f32 %v1359, %v1679
  %v1744 = vmul.f32 %v1360, %v1680
  %v1745 = vmul.f32 %v1361, %v1681
  %v1746 = vmul.f32 %v1362, %v1682
  %v1747 = vmul.f32 %v1363, %v1683
  %v1748 = vmul.f32 %v1364, %v1684
  %v1749 = vmul.f32 %v1365, %v1685
  %v1750 = vmul.f32 %v1366, %v1686
  %v1751 = vmul.f32 %v1367, %v1687
  %v1752 = vmul.f32 %v1368, %v1688
  %v1753 = vmul.f32 %v1369, %v1689
  %v1754 = vmul.f32 %v1370, %v1690
  %v1755 = vmul.f32 %v1371, %v1691
  %v1756 = vmul.f32 %v1372, %v1692
  %v1757 = vmul.f32 %v1373, %v1693
  %v1758 = vmul.f32 %v1374, %v1694
  %v1759 = vmul.f32 %v1375, %v1695
  %v1760 = vmul.f32 %v1376, %v1696
  %v1761 = vmul.f32 %v1377, %v1697
  %v1762 = vmul.f32 %v1378, %v1698
  %v1763 = vmul.f32 %v1379, %v1699
  %v1764 = vmul.f32 %v1380, %v1700
  %v1765 = vmul.f32 %v1381, %v1701
  %v1766 = vmul.f32 %v1382, %v1702
  %v1767 = vmul.f32 %v1383, %v1703
  %v1768 = vmul.f32 %v1384, %v1704
  %v1769 = vmul.f32 %v1385, %v1705
  %v1770 = vmul.f32 %v1386, %v1706
  %v1771 = vmul.f32 %v1387, %v1707
  %v1772 = vmul.f32 %v1388, %v1708
  %v1773 = vmul.f32 %v1389, %v1709
  %v1774 = vmul.f32 %v1390, %v1710
  %v1775 = vmul.f32 %v1391, %v1711
  %v1776 = vmul.f32 %v1392, %v1712
  %v1777 = vmul.f32 %v1393, %v1713
  %vm1778 = vcmask 130048
  %1779 = vst.msk [vmem:[%s6] sm:$0xff] %vm1778, %v1714
  %1780 = vst.msk [vmem:[%s6 + $0x8] sm:$0xff] %vm1778, %v1715
  %1781 = vst.msk [vmem:[%s6 + $0x10] sm:$0xff] %vm1778, %v1716
  %1782 = vst.msk [vmem:[%s6 + $0x18] sm:$0xff] %vm1778, %v1717
  %1783 = vst.msk [vmem:[%s6 + $0x20] sm:$0xff] %vm1778, %v1718
  %1784 = vst.msk [vmem:[%s6 + $0x28] sm:$0xff] %vm1778, %v1719
  %1785 = vst.msk [vmem:[%s6 + $0x30] sm:$0xff] %vm1778, %v1720
  %1786 = vst.msk [vmem:[%s6 + $0x38] sm:$0xff] %vm1778, %v1721
  %1787 = vst.msk [vmem:[%s6 + $0x40] sm:$0xff] %vm1778, %v1722
  %1788 = vst.msk [vmem:[%s6 + $0x48] sm:$0xff] %vm1778, %v1723
  %1789 = vst.msk [vmem:[%s6 + $0x50] sm:$0xff] %vm1778, %v1724
  %1790 = vst.msk [vmem:[%s6 + $0x58] sm:$0xff] %vm1778, %v1725
  %1791 = vst.msk [vmem:[%s6 + $0x60] sm:$0xff] %vm1778, %v1726
  %1792 = vst.msk [vmem:[%s6 + $0x68] sm:$0xff] %vm1778, %v1727
  %1793 = vst.msk [vmem:[%s6 + $0x70] sm:$0xff] %vm1778, %v1728
  %1794 = vst.msk [vmem:[%s6 + $0x78] sm:$0xff] %vm1778, %v1729
  %1795 = vst.msk [vmem:[%s6 + $0x80] sm:$0xff] %vm1778, %v1730
  %1796 = vst.msk [vmem:[%s6 + $0x88] sm:$0xff] %vm1778, %v1731
  %1797 = vst.msk [vmem:[%s6 + $0x90] sm:$0xff] %vm1778, %v1732
  %1798 = vst.msk [vmem:[%s6 + $0x98] sm:$0xff] %vm1778, %v1733
  %1799 = vst.msk [vmem:[%s6 + $0xa0] sm:$0xff] %vm1778, %v1734
  %1800 = vst.msk [vmem:[%s6 + $0xa8] sm:$0xff] %vm1778, %v1735
  %1801 = vst.msk [vmem:[%s6 + $0xb0] sm:$0xff] %vm1778, %v1736
  %1802 = vst.msk [vmem:[%s6 + $0xb8] sm:$0xff] %vm1778, %v1737
  %1803 = vst.msk [vmem:[%s6 + $0xc0] sm:$0xff] %vm1778, %v1738
  %1804 = vst.msk [vmem:[%s6 + $0xc8] sm:$0xff] %vm1778, %v1739
  %1805 = vst.msk [vmem:[%s6 + $0xd0] sm:$0xff] %vm1778, %v1740
  %1806 = vst.msk [vmem:[%s6 + $0xd8] sm:$0xff] %vm1778, %v1741
  %1807 = vst.msk [vmem:[%s6 + $0xe0] sm:$0xff] %vm1778, %v1742
  %1808 = vst.msk [vmem:[%s6 + $0xe8] sm:$0xff] %vm1778, %v1743
  %1809 = vst.msk [vmem:[%s6 + $0xf0] sm:$0xff] %vm1778, %v1744
  %1810 = vst.msk [vmem:[%s6 + $0xf8] sm:$0xff] %vm1778, %v1745
  %1811 = vst.msk [vmem:[%s6 + $0x100] sm:$0xff] %vm1778, %v1746
  %1812 = vst.msk [vmem:[%s6 + $0x108] sm:$0xff] %vm1778, %v1747
  %1813 = vst.msk [vmem:[%s6 + $0x110] sm:$0xff] %vm1778, %v1748
  %1814 = vst.msk [vmem:[%s6 + $0x118] sm:$0xff] %vm1778, %v1749
  %1815 = vst.msk [vmem:[%s6 + $0x120] sm:$0xff] %vm1778, %v1750
  %1816 = vst.msk [vmem:[%s6 + $0x128] sm:$0xff] %vm1778, %v1751
  %1817 = vst.msk [vmem:[%s6 + $0x130] sm:$0xff] %vm1778, %v1752
  %1818 = vst.msk [vmem:[%s6 + $0x138] sm:$0xff] %vm1778, %v1753
  %1819 = vst.msk [vmem:[%s6 + $0x140] sm:$0xff] %vm1778, %v1754
  %1820 = vst.msk [vmem:[%s6 + $0x148] sm:$0xff] %vm1778, %v1755
  %1821 = vst.msk [vmem:[%s6 + $0x150] sm:$0xff] %vm1778, %v1756
  %1822 = vst.msk [vmem:[%s6 + $0x158] sm:$0xff] %vm1778, %v1757
  %1823 = vst.msk [vmem:[%s6 + $0x160] sm:$0xff] %vm1778, %v1758
  %1824 = vst.msk [vmem:[%s6 + $0x168] sm:$0xff] %vm1778, %v1759
  %1825 = vst.msk [vmem:[%s6 + $0x170] sm:$0xff] %vm1778, %v1760
  %1826 = vst.msk [vmem:[%s6 + $0x178] sm:$0xff] %vm1778, %v1761
  %1827 = vst.msk [vmem:[%s6 + $0x180] sm:$0xff] %vm1778, %v1762
  %1828 = vst.msk [vmem:[%s6 + $0x188] sm:$0xff] %vm1778, %v1763
  %1829 = vst.msk [vmem:[%s6 + $0x190] sm:$0xff] %vm1778, %v1764
  %1830 = vst.msk [vmem:[%s6 + $0x198] sm:$0xff] %vm1778, %v1765
  %1831 = vst.msk [vmem:[%s6 + $0x1a0] sm:$0xff] %vm1778, %v1766
  %1832 = vst.msk [vmem:[%s6 + $0x1a8] sm:$0xff] %vm1778, %v1767
  %1833 = vst.msk [vmem:[%s6 + $0x1b0] sm:$0xff] %vm1778, %v1768
  %1834 = vst.msk [vmem:[%s6 + $0x1b8] sm:$0xff] %vm1778, %v1769
  %1835 = vst.msk [vmem:[%s6 + $0x1c0] sm:$0xff] %vm1778, %v1770
  %1836 = vst.msk [vmem:[%s6 + $0x1c8] sm:$0xff] %vm1778, %v1771
  %1837 = vst.msk [vmem:[%s6 + $0x1d0] sm:$0xff] %vm1778, %v1772
  %1838 = vst.msk [vmem:[%s6 + $0x1d8] sm:$0xff] %vm1778, %v1773
  %1839 = vst.msk [vmem:[%s6 + $0x1e0] sm:$0xff] %vm1778, %v1774
  %1840 = vst.msk [vmem:[%s6 + $0x1e8] sm:$0xff] %vm1778, %v1775
  %1841 = vst.msk [vmem:[%s6 + $0x1f0] sm:$0xff] %vm1778, %v1776
  %1842 = vst.msk [vmem:[%s6 + $0x1f8] sm:$0xff] %vm1778, %v1777
  // Predicated region
  $region26: #{c3_forward.5} parent=0 // pred_check
    _
  $region27: #{c3_forward.5} parent=0 // pred_check_branch
    %1844 = sbr.rel (0) target = $region29
  $region28: #{c3_forward.5} parent=0 // pred_region
    _
  $region29: #{c3_forward.5} parent=0 // pred_fallthru
    _
  // Predicated region
  $region30: #{c3_forward.5} parent=0 // pred_check
    _
  $region31: #{c3_forward.5} parent=0 // pred_check_branch
    %1846 = sbr.rel (0) target = $region33
  $region32: #{c3_forward.5} parent=0 // pred_region
    _
  $region33: #{c3_forward.5} parent=0 // pred_fallthru
    _

// kernel: c3_forward.3
$region0: #{c3_forward.3}
  #allocation0 [shape = 'u32[]', space=smem, size = 0x4, offset = 0x4, fixed_abs, tag = 'smem constant byte address 0x4 - core index']
  #allocation1 [shape = 'u32[144,128]{1,0:T(1,128)}', space=vmem, size = 0x12000, scoped, tag = 'internal scratch']
  %s0 = inlined_call_operand.vmem [shape: bf16[512,8], index: 0, kind: input, shape index: {}]
  %s1 = inlined_call_operand.vmem [shape: bf16[8,8], index: 1, kind: input, shape index: {}]
  %s2 = inlined_call_operand.vmem [shape: f32[1,8], index: 2, kind: input, shape index: {}]
  %s3 = inlined_call_operand.vmem [shape: f32[1,8], index: 3, kind: input, shape index: {}]
  %s4 = inlined_call_operand.vmem [shape: bf16[8,8], index: 4, kind: input, shape index: {}]
  %s5 = inlined_call_operand.vmem [shape: f32[1,8], index: 5, kind: input, shape index: {}]
  %s6 = inlined_call_operand.vmem [shape: f32[1,8], index: 6, kind: input, shape index: {}]
  %s7 = inlined_call_operand.vmem [shape: bf16[512,8], index: 7, kind: output, shape index: {0}]
  %s8 = inlined_call_operand.vmem [shape: bf16[512,8], index: 8, kind: output, shape index: {1}]
  %9 = xla_tuple %s7, %s8
  %s10 = sld [smem:[#allocation0]]
  $region46: #{c3_forward.3} parent=0
    _
  %s12 = ssub.s32 1, %s10
  %s13 = scalar_select 0, %s12, %s10
  // Predicated region
  $region2: #{c3_forward.3} parent=0 // pred_check
    _
  $region3: #{c3_forward.3} parent=0 // pred_check_branch
    %15 = sbr.rel (0) target = $region5
  $region4: #{c3_forward.3} parent=0 // pred_region
    _
  $region5: #{c3_forward.3} parent=0 // pred_fallthru
    _
  // Predicated region
  $region6: #{c3_forward.3} parent=0 // pred_check
    _
  $region7: #{c3_forward.3} parent=0 // pred_check_branch
    %17 = sbr.rel (0) target = $region9
  $region8: #{c3_forward.3} parent=0 // pred_region
    _
  $region9: #{c3_forward.3} parent=0 // pred_fallthru
    _
  // Predicated region
  $region10: #{c3_forward.3} parent=0 // pred_check
    _
  $region11: #{c3_forward.3} parent=0 // pred_check_branch
    %19 = sbr.rel (0) target = $region13
  $region12: #{c3_forward.3} parent=0 // pred_region
    _
  $region13: #{c3_forward.3} parent=0 // pred_fallthru
    _
  // Predicated region
  $region14: #{c3_forward.3} parent=0 // pred_check
    _
  $region15: #{c3_forward.3} parent=0 // pred_check_branch
    %21 = sbr.rel (0) target = $region17
  $region16: #{c3_forward.3} parent=0 // pred_region
    _
  $region17: #{c3_forward.3} parent=0 // pred_fallthru
    _
  // Predicated region
  $region18: #{c3_forward.3} parent=0 // pred_check
    _
  $region19: #{c3_forward.3} parent=0 // pred_check_branch
    %23 = sbr.rel (0) target = $region21
  $region20: #{c3_forward.3} parent=0 // pred_region
    _
  $region21: #{c3_forward.3} parent=0 // pred_fallthru
    _
  // Predicated region
  $region22: #{c3_forward.3} parent=0 // pred_check
    _
  $region23: #{c3_forward.3} parent=0 // pred_check_branch
    %25 = sbr.rel (0) target = $region25
  $region24: #{c3_forward.3} parent=0 // pred_region
    _
  $region25: #{c3_forward.3} parent=0 // pred_fallthru
    _
  // Predicated region
  $region26: #{c3_forward.3} parent=0 // pred_check
    _
  $region27: #{c3_forward.3} parent=0 // pred_check_branch
    %27 = sbr.rel (0) target = $region29
  $region28: #{c3_forward.3} parent=0 // pred_region
    _
  $region29: #{c3_forward.3} parent=0 // pred_fallthru
    _
  %v29 = vld [vmem:[%s0] sm:$0xf]
  %v30 = vld [vmem:[%s0 + $0x4] sm:$0xf]
  %v31 = vld [vmem:[%s0 + $0x8] sm:$0xf]
  %v32 = vld [vmem:[%s0 + $0xc] sm:$0xf]
  %v33 = vld [vmem:[%s0 + $0x10] sm:$0xf]
  %v34 = vld [vmem:[%s0 + $0x14] sm:$0xf]
  %v35 = vld [vmem:[%s0 + $0x18] sm:$0xf]
  %v36 = vld [vmem:[%s0 + $0x1c] sm:$0xf]
  %v37 = vld [vmem:[%s0 + $0x20] sm:$0xf]
  %v38 = vld [vmem:[%s0 + $0x24] sm:$0xf]
  %v39 = vld [vmem:[%s0 + $0x28] sm:$0xf]
  %v40 = vld [vmem:[%s0 + $0x2c] sm:$0xf]
  %v41 = vld [vmem:[%s0 + $0x30] sm:$0xf]
  %v42 = vld [vmem:[%s0 + $0x34] sm:$0xf]
  %v43 = vld [vmem:[%s0 + $0x38] sm:$0xf]
  %v44 = vld [vmem:[%s0 + $0x3c] sm:$0xf]
  %v45 = vld [vmem:[%s0 + $0x40] sm:$0xf]
  %v46 = vld [vmem:[%s0 + $0x44] sm:$0xf]
  %v47 = vld [vmem:[%s0 + $0x48] sm:$0xf]
  %v48 = vld [vmem:[%s0 + $0x4c] sm:$0xf]
  %v49 = vld [vmem:[%s0 + $0x50] sm:$0xf]
  %v50 = vld [vmem:[%s0 + $0x54] sm:$0xf]
  %v51 = vld [vmem:[%s0 + $0x58] sm:$0xf]
  %v52 = vld [vmem:[%s0 + $0x5c] sm:$0xf]
  %v53 = vld [vmem:[%s0 + $0x60] sm:$0xf]
  %v54 = vld [vmem:[%s0 + $0x64] sm:$0xf]
  %v55 = vld [vmem:[%s0 + $0x68] sm:$0xf]
  %v56 = vld [vmem:[%s0 + $0x6c] sm:$0xf]
  %v57 = vld [vmem:[%s0 + $0x70] sm:$0xf]
  %v58 = vld [vmem:[%s0 + $0x74] sm:$0xf]
  %v59 = vld [vmem:[%s0 + $0x78] sm:$0xf]
  %v60 = vld [vmem:[%s0 + $0x7c] sm:$0xf]
  %v61 = vld [vmem:[%s0 + $0x80] sm:$0xf]
  %v62 = vld [vmem:[%s0 + $0x84] sm:$0xf]
  %v63 = vld [vmem:[%s0 + $0x88] sm:$0xf]
  %v64 = vld [vmem:[%s0 + $0x8c] sm:$0xf]
  %v65 = vld [vmem:[%s0 + $0x90] sm:$0xf]
  %v66 = vld [vmem:[%s0 + $0x94] sm:$0xf]
  %v67 = vld [vmem:[%s0 + $0x98] sm:$0xf]
  %v68 = vld [vmem:[%s0 + $0x9c] sm:$0xf]
  %v69 = vld [vmem:[%s0 + $0xa0] sm:$0xf]
  %v70 = vld [vmem:[%s0 + $0xa4] sm:$0xf]
  %v71 = vld [vmem:[%s0 + $0xa8] sm:$0xf]
  %v72 = vld [vmem:[%s0 + $0xac] sm:$0xf]
  %v73 = vld [vmem:[%s0 + $0xb0] sm:$0xf]
  %v74 = vld [vmem:[%s0 + $0xb4] sm:$0xf]
  %v75 = vld [vmem:[%s0 + $0xb8] sm:$0xf]
  %v76 = vld [vmem:[%s0 + $0xbc] sm:$0xf]
  %v77 = vld [vmem:[%s0 + $0xc0] sm:$0xf]
  %v78 = vld [vmem:[%s0 + $0xc4] sm:$0xf]
  %v79 = vld [vmem:[%s0 + $0xc8] sm:$0xf]
  %v80 = vld [vmem:[%s0 + $0xcc] sm:$0xf]
  %v81 = vld [vmem:[%s0 + $0xd0] sm:$0xf]
  %v82 = vld [vmem:[%s0 + $0xd4] sm:$0xf]
  %v83 = vld [vmem:[%s0 + $0xd8] sm:$0xf]
  %v84 = vld [vmem:[%s0 + $0xdc] sm:$0xf]
  %v85 = vld [vmem:[%s0 + $0xe0] sm:$0xf]
  %v86 = vld [vmem:[%s0 + $0xe4] sm:$0xf]
  %v87 = vld [vmem:[%s0 + $0xe8] sm:$0xf]
  %v88 = vld [vmem:[%s0 + $0xec] sm:$0xf]
  %v89 = vld [vmem:[%s0 + $0xf0] sm:$0xf]
  %v90 = vld [vmem:[%s0 + $0xf4] sm:$0xf]
  %v91 = vld [vmem:[%s0 + $0xf8] sm:$0xf]
  %v92 = vld [vmem:[%s0 + $0xfc] sm:$0xf]
  %v93 = vld [vmem:[%s1] sm:$0xf]
  %v158 = vunpack.c.l.b16 %v29
  %v159 = vunpack.c.l.b16 %v30
  %v160 = vunpack.c.l.b16 %v31
  %v161 = vunpack.c.l.b16 %v32
  %v162 = vunpack.c.l.b16 %v33
  %v163 = vunpack.c.l.b16 %v34
  %v164 = vunpack.c.l.b16 %v35
  %v165 = vunpack.c.l.b16 %v36
  %v166 = vunpack.c.l.b16 %v37
  %v167 = vunpack.c.l.b16 %v38
  %v168 = vunpack.c.l.b16 %v39
  %v169 = vunpack.c.l.b16 %v40
  %v170 = vunpack.c.l.b16 %v41
  %v171 = vunpack.c.l.b16 %v42
  %v172 = vunpack.c.l.b16 %v43
  %v173 = vunpack.c.l.b16 %v44
  %v174 = vunpack.c.l.b16 %v45
  %v175 = vunpack.c.l.b16 %v46
  %v176 = vunpack.c.l.b16 %v47
  %v177 = vunpack.c.l.b16 %v48
  %v178 = vunpack.c.l.b16 %v49
  %v179 = vunpack.c.l.b16 %v50
  %v180 = vunpack.c.l.b16 %v51
  %v181 = vunpack.c.l.b16 %v52
  %v182 = vunpack.c.l.b16 %v53
  %v183 = vunpack.c.l.b16 %v54
  %v184 = vunpack.c.l.b16 %v55
  %v185 = vunpack.c.l.b16 %v56
  %v186 = vunpack.c.l.b16 %v57
  %v187 = vunpack.c.l.b16 %v58
  %v188 = vunpack.c.l.b16 %v59
  %v189 = vunpack.c.l.b16 %v60
  %v190 = vunpack.c.l.b16 %v61
  %v191 = vunpack.c.l.b16 %v62
  %v192 = vunpack.c.l.b16 %v63
  %v193 = vunpack.c.l.b16 %v64
  %v194 = vunpack.c.l.b16 %v65
  %v195 = vunpack.c.l.b16 %v66
  %v196 = vunpack.c.l.b16 %v67
  %v197 = vunpack.c.l.b16 %v68
  %v198 = vunpack.c.l.b16 %v69
  %v199 = vunpack.c.l.b16 %v70
  %v200 = vunpack.c.l.b16 %v71
  %v201 = vunpack.c.l.b16 %v72
  %v202 = vunpack.c.l.b16 %v73
  %v203 = vunpack.c.l.b16 %v74
  %v204 = vunpack.c.l.b16 %v75
  %v205 = vunpack.c.l.b16 %v76
  %v206 = vunpack.c.l.b16 %v77
  %v207 = vunpack.c.l.b16 %v78
  %v208 = vunpack.c.l.b16 %v79
  %v209 = vunpack.c.l.b16 %v80
  %v210 = vunpack.c.l.b16 %v81
  %v211 = vunpack.c.l.b16 %v82
  %v212 = vunpack.c.l.b16 %v83
  %v213 = vunpack.c.l.b16 %v84
  %v214 = vunpack.c.l.b16 %v85
  %v215 = vunpack.c.l.b16 %v86
  %v216 = vunpack.c.l.b16 %v87
  %v217 = vunpack.c.l.b16 %v88
  %v218 = vunpack.c.l.b16 %v89
  %v219 = vunpack.c.l.b16 %v90
  %v220 = vunpack.c.l.b16 %v91
  %v221 = vunpack.c.l.b16 %v92
  %v222 = vpack.c.b16 %v159, %v158
  %v223 = vpack.c.b16 %v161, %v160
  %v224 = vpack.c.b16 %v163, %v162
  %v225 = vpack.c.b16 %v165, %v164
  %v226 = vpack.c.b16 %v167, %v166
  %v227 = vpack.c.b16 %v169, %v168
  %v228 = vpack.c.b16 %v171, %v170
  %v229 = vpack.c.b16 %v173, %v172
  %v230 = vpack.c.b16 %v175, %v174
  %v231 = vpack.c.b16 %v177, %v176
  %v232 = vpack.c.b16 %v179, %v178
  %v233 = vpack.c.b16 %v181, %v180
  %v234 = vpack.c.b16 %v183, %v182
  %v235 = vpack.c.b16 %v185, %v184
  %v236 = vpack.c.b16 %v187, %v186
  %v237 = vpack.c.b16 %v189, %v188
  %v238 = vpack.c.b16 %v191, %v190
  %v239 = vpack.c.b16 %v193, %v192
  %v240 = vpack.c.b16 %v195, %v194
  %v241 = vpack.c.b16 %v197, %v196
  %v242 = vpack.c.b16 %v199, %v198
  %v243 = vpack.c.b16 %v201, %v200
  %v244 = vpack.c.b16 %v203, %v202
  %v245 = vpack.c.b16 %v205, %v204
  %v246 = vpack.c.b16 %v207, %v206
  %v247 = vpack.c.b16 %v209, %v208
  %v248 = vpack.c.b16 %v211, %v210
  %v249 = vpack.c.b16 %v213, %v212
  %v250 = vpack.c.b16 %v215, %v214
  %v251 = vpack.c.b16 %v217, %v216
  %v252 = vpack.c.b16 %v219, %v218
  %v253 = vpack.c.b16 %v221, %v220
  %vm254 = vcmask 64512
  %v256 = vsel %vm254, %v222, 0
  %v259 = vsel %vm254, %v223, 0
  %v262 = vsel %vm254, %v224, 0
  %v265 = vsel %vm254, %v225, 0
  %v268 = vsel %vm254, %v226, 0
  %v271 = vsel %vm254, %v227, 0
  %v274 = vsel %vm254, %v228, 0
  %v277 = vsel %vm254, %v229, 0
  %v280 = vsel %vm254, %v230, 0
  %v283 = vsel %vm254, %v231, 0
  %v286 = vsel %vm254, %v232, 0
  %v289 = vsel %vm254, %v233, 0
  %v292 = vsel %vm254, %v234, 0
  %v295 = vsel %vm254, %v235, 0
  %v298 = vsel %vm254, %v236, 0
  %v301 = vsel %vm254, %v237, 0
  %v304 = vsel %vm254, %v238, 0
  %v307 = vsel %vm254, %v239, 0
  %v310 = vsel %vm254, %v240, 0
  %v313 = vsel %vm254, %v241, 0
  %v316 = vsel %vm254, %v242, 0
  %v319 = vsel %vm254, %v243, 0
  %v322 = vsel %vm254, %v244, 0
  %v325 = vsel %vm254, %v245, 0
  %v328 = vsel %vm254, %v246, 0
  %v331 = vsel %vm254, %v247, 0
  %v334 = vsel %vm254, %v248, 0
  %v337 = vsel %vm254, %v249, 0
  %v340 = vsel %vm254, %v250, 0
  %v343 = vsel %vm254, %v251, 0
  %v346 = vsel %vm254, %v252, 0
  %v349 = vsel %vm254, %v253, 0
  %vm351 = vcmask 1043456
  %v353 = vsel %vm351, %v93, 0
  %355 = vmatprep.subr.bf16.mxu0 0
  %356 = vmatpush1.bf16.msra.mxu0 %v353
  %357 = vmatprep.subr.bf16.mxu0 0
  %358 = vmatpush1.bf16.msra.mxu0 0
  %359 = vmatprep.subr.bf16.mxu0 0
  %360 = vmatpush1.bf16.msra.mxu0 0
  %361 = vmatprep.subr.bf16.mxu0 0
  %362 = vmatpush1.bf16.msra.mxu0 0
  %363 = vmatprep.subr.bf16.mxu0 0
  %364 = vmatpush1.bf16.msra.mxu0 0
  %365 = vmatprep.subr.bf16.mxu0 0
  %366 = vmatpush1.bf16.msra.mxu0 0
  %367 = vmatprep.subr.bf16.mxu0 0
  %368 = vmatpush1.bf16.msra.mxu0 0
  %369 = vmatprep.subr.bf16.mxu0 0
  %370 = vmatpush1.bf16.msra.mxu0 0
  %371 = vmatprep.subr.bf16.mxu0 0
  %372 = vmatpush1.bf16.msra.mxu0 0
  %373 = vmatprep.subr.bf16.mxu0 0
  %374 = vmatpush1.bf16.msra.mxu0 0
  %375 = vmatprep.subr.bf16.mxu0 0
  %376 = vmatpush1.bf16.msra.mxu0 0
  %377 = vmatprep.subr.bf16.mxu0 0
  %378 = vmatpush1.bf16.msra.mxu0 0
  %379 = vmatprep.subr.bf16.mxu0 0
  %380 = vmatpush1.bf16.msra.mxu0 0
  %381 = vmatprep.subr.bf16.mxu0 0
  %382 = vmatpush1.bf16.msra.mxu0 0
  %383 = vmatprep.subr.bf16.mxu0 0
  %384 = vmatpush1.bf16.msra.mxu0 0
  %385 = vmatprep.subr.bf16.mxu0 0
  %386 = vmatpush1.bf16.msra.mxu0 0
  %387 = vmatprep.mubr.bf16.mxu0 0
  %388 = vmatmul.mubr.bf16.gmra.mrb[0].mxu0 %v256
  %v389 = vpop.f32.mrb[0].mxu0
  %v390 = vadd.f32 0.0, %v389
  %v391 = vpop.f32.mrb[0].mxu0
  %v392 = vpop.f32.mrb[0].mxu0
  %v393 = vadd.f32 0.0, %v392
  %v394 = vpop.f32.mrb[0].mxu0
  %395 = vmatprep.mubr.bf16.mxu0 0
  %396 = vmatmul.mubr.bf16.gmra.mrb[0].mxu0 %v259
  %v397 = vpop.f32.mrb[0].mxu0
  %v398 = vadd.f32 0.0, %v397
  %v399 = vpop.f32.mrb[0].mxu0
  %v400 = vpop.f32.mrb[0].mxu0
  %v401 = vadd.f32 0.0, %v400
  %v402 = vpop.f32.mrb[0].mxu0
  %403 = vmatprep.mubr.bf16.mxu0 0
  %404 = vmatmul.mubr.bf16.gmra.mrb[0].mxu0 %v262
  %v405 = vpop.f32.mrb[0].mxu0
  %v406 = vadd.f32 0.0, %v405
  %v407 = vpop.f32.mrb[0].mxu0
  %v408 = vpop.f32.mrb[0].mxu0
  %v409 = vadd.f32 0.0, %v408
  %v410 = vpop.f32.mrb[0].mxu0
  %411 = vmatprep.mubr.bf16.mxu0 0
  %412 = vmatmul.mubr.bf16.gmra.mrb[0].mxu0 %v265
  %v413 = vpop.f32.mrb[0].mxu0
  %v414 = vadd.f32 0.0, %v413
  %v415 = vpop.f32.mrb[0].mxu0
  %v416 = vpop.f32.mrb[0].mxu0
  %v417 = vadd.f32 0.0, %v416
  %v418 = vpop.f32.mrb[0].mxu0
  %419 = vmatprep.mubr.bf16.mxu0 0
  %420 = vmatmul.mubr.bf16.gmra.mrb[0].mxu0 %v268
  %v421 = vpop.f32.mrb[0].mxu0
  %v422 = vadd.f32 0.0, %v421
  %v423 = vpop.f32.mrb[0].mxu0
  %v424 = vpop.f32.mrb[0].mxu0
  %v425 = vadd.f32 0.0, %v424
  %v426 = vpop.f32.mrb[0].mxu0
  %427 = vmatprep.mubr.bf16.mxu0 0
  %428 = vmatmul.mubr.bf16.gmra.mrb[0].mxu0 %v271
  %v429 = vpop.f32.mrb[0].mxu0
  %v430 = vadd.f32 0.0, %v429
  %v431 = vpop.f32.mrb[0].mxu0
  %v432 = vpop.f32.mrb[0].mxu0
  %v433 = vadd.f32 0.0, %v432
  %v434 = vpop.f32.mrb[0].mxu0
  %435 = vmatprep.mubr.bf16.mxu0 0
  %436 = vmatmul.mubr.bf16.gmra.mrb[0].mxu0 %v274
  %v437 = vpop.f32.mrb[0].mxu0
  %v438 = vadd.f32 0.0, %v437
  %v439 = vpop.f32.mrb[0].mxu0
  %v440 = vpop.f32.mrb[0].mxu0
  %v441 = vadd.f32 0.0, %v440
  %v442 = vpop.f32.mrb[0].mxu0
  %443 = vmatprep.mubr.bf16.mxu0 0
  %444 = vmatmul.mubr.bf16.gmra.mrb[0].mxu0 %v277
  %v445 = vpop.f32.mrb[0].mxu0
  %v446 = vadd.f32 0.0, %v445
  %v447 = vpop.f32.mrb[0].mxu0
  %v448 = vpop.f32.mrb[0].mxu0
  %v449 = vadd.f32 0.0, %v448
  %v450 = vpop.f32.mrb[0].mxu0
  %451 = vmatprep.mubr.bf16.mxu0 0
  %452 = vmatmul.mubr.bf16.gmra.mrb[0].mxu0 %v280
  %v453 = vpop.f32.mrb[0].mxu0
  %v454 = vadd.f32 0.0, %v453
  %v455 = vpop.f32.mrb[0].mxu0
  %v456 = vpop.f32.mrb[0].mxu0
  %v457 = vadd.f32 0.0, %v456
  %v458 = vpop.f32.mrb[0].mxu0
  %459 = vmatprep.mubr.bf16.mxu0 0
  %460 = vmatmul.mubr.bf16.gmra.mrb[0].mxu0 %v283
  %v461 = vpop.f32.mrb[0].mxu0
  %v462 = vadd.f32 0.0, %v461
  %v463 = vpop.f32.mrb[0].mxu0
  %v464 = vpop.f32.mrb[0].mxu0
  %v465 = vadd.f32 0.0, %v464
  %v466 = vpop.f32.mrb[0].mxu0
  %467 = vmatprep.mubr.bf16.mxu0 0
  %468 = vmatmul.mubr.bf16.gmra.mrb[0].mxu0 %v286
  %v469 = vpop.f32.mrb[0].mxu0
  %v470 = vadd.f32 0.0, %v469
  %v471 = vpop.f32.mrb[0].mxu0
  %v472 = vpop.f32.mrb[0].mxu0
  %v473 = vadd.f32 0.0, %v472
  %v474 = vpop.f32.mrb[0].mxu0
  %475 = vmatprep.mubr.bf16.mxu0 0
  %476 = vmatmul.mubr.bf16.gmra.mrb[0].mxu0 %v289
  %v477 = vpop.f32.mrb[0].mxu0
  %v478 = vadd.f32 0.0, %v477
  %v479 = vpop.f32.mrb[0].mxu0
  %v480 = vpop.f32.mrb[0].mxu0
  %v481 = vadd.f32 0.0, %v480
  %v482 = vpop.f32.mrb[0].mxu0
  %483 = vmatprep.mubr.bf16.mxu0 0
  %484 = vmatmul.mubr.bf16.gmra.mrb[0].mxu0 %v292
  %v485 = vpop.f32.mrb[0].mxu0
  %v486 = vadd.f32 0.0, %v485
  %v487 = vpop.f32.mrb[0].mxu0
  %v488 = vpop.f32.mrb[0].mxu0
  %v489 = vadd.f32 0.0, %v488
  %v490 = vpop.f32.mrb[0].mxu0
  %491 = vmatprep.mubr.bf16.mxu0 0
  %492 = vmatmul.mubr.bf16.gmra.mrb[0].mxu0 %v295
  %v493 = vpop.f32.mrb[0].mxu0
  %v494 = vadd.f32 0.0, %v493
  %v495 = vpop.f32.mrb[0].mxu0
  %v496 = vpop.f32.mrb[0].mxu0
  %v497 = vadd.f32 0.0, %v496
  %v498 = vpop.f32.mrb[0].mxu0
  %499 = vmatprep.mubr.bf16.mxu0 0
  %500 = vmatmul.mubr.bf16.gmra.mrb[0].mxu0 %v298
  %v501 = vpop.f32.mrb[0].mxu0
  %v502 = vadd.f32 0.0, %v501
  %v503 = vpop.f32.mrb[0].mxu0
  %v504 = vpop.f32.mrb[0].mxu0
  %v505 = vadd.f32 0.0, %v504
  %v506 = vpop.f32.mrb[0].mxu0
  %507 = vmatprep.mubr.bf16.mxu0 0
  %508 = vmatmul.mubr.bf16.gmra.mrb[0].mxu0 %v301
  %v509 = vpop.f32.mrb[0].mxu0
  %v510 = vadd.f32 0.0, %v509
  %v511 = vpop.f32.mrb[0].mxu0
  %v512 = vpop.f32.mrb[0].mxu0
  %v513 = vadd.f32 0.0, %v512
  %v514 = vpop.f32.mrb[0].mxu0
  %515 = vmatprep.mubr.bf16.mxu0 0
  %516 = vmatmul.mubr.bf16.gmra.mrb[0].mxu0 %v304
  %v517 = vpop.f32.mrb[0].mxu0
  %v518 = vadd.f32 0.0, %v517
  %v519 = vpop.f32.mrb[0].mxu0
  %v520 = vpop.f32.mrb[0].mxu0
  %v521 = vadd.f32 0.0, %v520
  %v522 = vpop.f32.mrb[0].mxu0
  %523 = vmatprep.mubr.bf16.mxu0 0
  %524 = vmatmul.mubr.bf16.gmra.mrb[0].mxu0 %v307
  %v525 = vpop.f32.mrb[0].mxu0
  %v526 = vadd.f32 0.0, %v525
  %v527 = vpop.f32.mrb[0].mxu0
  %v528 = vpop.f32.mrb[0].mxu0
  %v529 = vadd.f32 0.0, %v528
  %v530 = vpop.f32.mrb[0].mxu0
  %531 = vmatprep.mubr.bf16.mxu0 0
  %532 = vmatmul.mubr.bf16.gmra.mrb[0].mxu0 %v310
  %v533 = vpop.f32.mrb[0].mxu0
  %v534 = vadd.f32 0.0, %v533
  %v535 = vpop.f32.mrb[0].mxu0
  %v536 = vpop.f32.mrb[0].mxu0
  %v537 = vadd.f32 0.0, %v536
  %v538 = vpop.f32.mrb[0].mxu0
  %539 = vmatprep.mubr.bf16.mxu0 0
  %540 = vmatmul.mubr.bf16.gmra.mrb[0].mxu0 %v313
  %v541 = vpop.f32.mrb[0].mxu0
  %v542 = vadd.f32 0.0, %v541
  %v543 = vpop.f32.mrb[0].mxu0
  %v544 = vpop.f32.mrb[0].mxu0
  %v545 = vadd.f32 0.0, %v544
  %v546 = vpop.f32.mrb[0].mxu0
  %547 = vmatprep.mubr.bf16.mxu0 0
  %548 = vmatmul.mubr.bf16.gmra.mrb[0].mxu0 %v316
  %v549 = vpop.f32.mrb[0].mxu0
  %v550 = vadd.f32 0.0, %v549
  %v551 = vpop.f32.mrb[0].mxu0
  %v552 = vpop.f32.mrb[0].mxu0
  %v553 = vadd.f32 0.0, %v552
  %v554 = vpop.f32.mrb[0].mxu0
  %555 = vmatprep.mubr.bf16.mxu0 0
  %556 = vmatmul.mubr.bf16.gmra.mrb[0].mxu0 %v319
  %v557 = vpop.f32.mrb[0].mxu0
  %v558 = vadd.f32 0.0, %v557
  %v559 = vpop.f32.mrb[0].mxu0
  %v560 = vpop.f32.mrb[0].mxu0
  %v561 = vadd.f32 0.0, %v560
  %v562 = vpop.f32.mrb[0].mxu0
  %563 = vmatprep.mubr.bf16.mxu0 0
  %564 = vmatmul.mubr.bf16.gmra.mrb[0].mxu0 %v322
  %v565 = vpop.f32.mrb[0].mxu0
  %v566 = vadd.f32 0.0, %v565
  %v567 = vpop.f32.mrb[0].mxu0
  %v568 = vpop.f32.mrb[0].mxu0
  %v569 = vadd.f32 0.0, %v568
  %v570 = vpop.f32.mrb[0].mxu0
  %571 = vmatprep.mubr.bf16.mxu0 0
  %572 = vmatmul.mubr.bf16.gmra.mrb[0].mxu0 %v325
  %v573 = vpop.f32.mrb[0].mxu0
  %v574 = vadd.f32 0.0, %v573
  %v575 = vpop.f32.mrb[0].mxu0
  %v576 = vpop.f32.mrb[0].mxu0
  %v577 = vadd.f32 0.0, %v576
  %v578 = vpop.f32.mrb[0].mxu0
  %579 = vmatprep.mubr.bf16.mxu0 0
  %580 = vmatmul.mubr.bf16.gmra.mrb[0].mxu0 %v328
  %v581 = vpop.f32.mrb[0].mxu0
  %v582 = vadd.f32 0.0, %v581
  %v583 = vpop.f32.mrb[0].mxu0
  %v584 = vpop.f32.mrb[0].mxu0
  %v585 = vadd.f32 0.0, %v584
  %v586 = vpop.f32.mrb[0].mxu0
  %587 = vmatprep.mubr.bf16.mxu0 0
  %588 = vmatmul.mubr.bf16.gmra.mrb[0].mxu0 %v331
  %v589 = vpop.f32.mrb[0].mxu0
  %v590 = vadd.f32 0.0, %v589
  %v591 = vpop.f32.mrb[0].mxu0
  %v592 = vpop.f32.mrb[0].mxu0
  %v593 = vadd.f32 0.0, %v592
  %v594 = vpop.f32.mrb[0].mxu0
  %595 = vmatprep.mubr.bf16.mxu0 0
  %596 = vmatmul.mubr.bf16.gmra.mrb[0].mxu0 %v334
  %v597 = vpop.f32.mrb[0].mxu0
  %v598 = vadd.f32 0.0, %v597
  %v599 = vpop.f32.mrb[0].mxu0
  %v600 = vpop.f32.mrb[0].mxu0
  %v601 = vadd.f32 0.0, %v600
  %v602 = vpop.f32.mrb[0].mxu0
  %603 = vmatprep.mubr.bf16.mxu0 0
  %604 = vmatmul.mubr.bf16.gmra.mrb[0].mxu0 %v337
  %v605 = vpop.f32.mrb[0].mxu0
  %v606 = vadd.f32 0.0, %v605
  %v607 = vpop.f32.mrb[0].mxu0
  %v608 = vpop.f32.mrb[0].mxu0
  %v609 = vadd.f32 0.0, %v608
  %v610 = vpop.f32.mrb[0].mxu0
  %611 = vmatprep.mubr.bf16.mxu0 0
  %612 = vmatmul.mubr.bf16.gmra.mrb[0].mxu0 %v340
  %v613 = vpop.f32.mrb[0].mxu0
  %v614 = vadd.f32 0.0, %v613
  %v615 = vpop.f32.mrb[0].mxu0
  %v616 = vpop.f32.mrb[0].mxu0
  %v617 = vadd.f32 0.0, %v616
  %v618 = vpop.f32.mrb[0].mxu0
  %619 = vmatprep.mubr.bf16.mxu0 0
  %620 = vmatmul.mubr.bf16.gmra.mrb[0].mxu0 %v343
  %v621 = vpop.f32.mrb[0].mxu0
  %v622 = vadd.f32 0.0, %v621
  %v623 = vpop.f32.mrb[0].mxu0
  %v624 = vpop.f32.mrb[0].mxu0
  %v625 = vadd.f32 0.0, %v624
  %v626 = vpop.f32.mrb[0].mxu0
  %627 = vmatprep.mubr.bf16.mxu0 0
  %628 = vmatmul.mubr.bf16.gmra.mrb[0].mxu0 %v346
  %v629 = vpop.f32.mrb[0].mxu0
  %v630 = vadd.f32 0.0, %v629
  %v631 = vpop.f32.mrb[0].mxu0
  %v632 = vpop.f32.mrb[0].mxu0
  %v633 = vadd.f32 0.0, %v632
  %v634 = vpop.f32.mrb[0].mxu0
  %635 = vmatprep.mubr.bf16.mxu0 0
  %636 = vmatmul.mubr.bf16.gmra.mrb[0].mxu0 %v349
  %v637 = vpop.f32.mrb[0].mxu0
  %v638 = vadd.f32 0.0, %v637
  %v639 = vpop.f32.mrb[0].mxu0
  %v640 = vpop.f32.mrb[0].mxu0
  %v641 = vadd.f32 0.0, %v640
  %v642 = vpop.f32.mrb[0].mxu0
  %643 = vdwg.mxu0
  %v644 = vld [vmem:[%s2] sm:$0x1]
  %v646 = vlaneseq
  %v647 = vshrl.u32 %v646, 7
  %v648 = vsub.s32 0, %v647
  %v649 = vrot.slane %v644, %v648
  %v651 = vmul.f32 %v390, %v649
  %v652 = vmul.f32 %v393, %v649
  %v653 = vmul.f32 %v398, %v649
  %v654 = vmul.f32 %v401, %v649
  %v655 = vmul.f32 %v406, %v649
  %v656 = vmul.f32 %v409, %v649
  %v657 = vmul.f32 %v414, %v649
  %v658 = vmul.f32 %v417, %v649
  %v659 = vmul.f32 %v422, %v649
  %v660 = vmul.f32 %v425, %v649
  %v661 = vmul.f32 %v430, %v649
  %v662 = vmul.f32 %v433, %v649
  %v663 = vmul.f32 %v438, %v649
  %v664 = vmul.f32 %v441, %v649
  %v665 = vmul.f32 %v446, %v649
  %v666 = vmul.f32 %v449, %v649
  %v667 = vmul.f32 %v454, %v649
  %v668 = vmul.f32 %v457, %v649
  %v669 = vmul.f32 %v462, %v649
  %v670 = vmul.f32 %v465, %v649
  %v671 = vmul.f32 %v470, %v649
  %v672 = vmul.f32 %v473, %v649
  %v673 = vmul.f32 %v478, %v649
  %v674 = vmul.f32 %v481, %v649
  %v675 = vmul.f32 %v486, %v649
  %v676 = vmul.f32 %v489, %v649
  %v677 = vmul.f32 %v494, %v649
  %v678 = vmul.f32 %v497, %v649
  %v679 = vmul.f32 %v502, %v649
  %v680 = vmul.f32 %v505, %v649
  %v681 = vmul.f32 %v510, %v649
  %v682 = vmul.f32 %v513, %v649
  %v683 = vmul.f32 %v518, %v649
  %v684 = vmul.f32 %v521, %v649
  %v685 = vmul.f32 %v526, %v649
  %v686 = vmul.f32 %v529, %v649
  %v687 = vmul.f32 %v534, %v649
  %v688 = vmul.f32 %v537, %v649
  %v689 = vmul.f32 %v542, %v649
  %v690 = vmul.f32 %v545, %v649
  %v691 = vmul.f32 %v550, %v649
  %v692 = vmul.f32 %v553, %v649
  %v693 = vmul.f32 %v558, %v649
  %v694 = vmul.f32 %v561, %v649
  %v695 = vmul.f32 %v566, %v649
  %v696 = vmul.f32 %v569, %v649
  %v697 = vmul.f32 %v574, %v649
  %v698 = vmul.f32 %v577, %v649
  %v699 = vmul.f32 %v582, %v649
  %v700 = vmul.f32 %v585, %v649
  %v701 = vmul.f32 %v590, %v649
  %v702 = vmul.f32 %v593, %v649
  %v703 = vmul.f32 %v598, %v649
  %v704 = vmul.f32 %v601, %v649
  %v705 = vmul.f32 %v606, %v649
  %v706 = vmul.f32 %v609, %v649
  %v707 = vmul.f32 %v614, %v649
  %v708 = vmul.f32 %v617, %v649
  %v709 = vmul.f32 %v622, %v649
  %v710 = vmul.f32 %v625, %v649
  %v711 = vmul.f32 %v630, %v649
  %v712 = vmul.f32 %v633, %v649
  %v713 = vmul.f32 %v638, %v649
  %v714 = vmul.f32 %v641, %v649
  %v715 = vld [vmem:[%s3] sm:$0x1]
  %v717 = vlaneseq
  %v718 = vshrl.u32 %v717, 7
  %v719 = vsub.s32 0, %v718
  %v720 = vrot.slane %v715, %v719
  %v722 = vadd.f32 %v651, %v720
  %v723 = vadd.f32 %v652, %v720
  %v724 = vadd.f32 %v653, %v720
  %v725 = vadd.f32 %v654, %v720
  %v726 = vadd.f32 %v655, %v720
  %v727 = vadd.f32 %v656, %v720
  %v728 = vadd.f32 %v657, %v720
  %v729 = vadd.f32 %v658, %v720
  %v730 = vadd.f32 %v659, %v720
  %v731 = vadd.f32 %v660, %v720
  %v732 = vadd.f32 %v661, %v720
  %v733 = vadd.f32 %v662, %v720
  %v734 = vadd.f32 %v663, %v720
  %v735 = vadd.f32 %v664, %v720
  %v736 = vadd.f32 %v665, %v720
  %v737 = vadd.f32 %v666, %v720
  %v738 = vadd.f32 %v667, %v720
  %v739 = vadd.f32 %v668, %v720
  %v740 = vadd.f32 %v669, %v720
  %v741 = vadd.f32 %v670, %v720
  %v742 = vadd.f32 %v671, %v720
  %v743 = vadd.f32 %v672, %v720
  %v744 = vadd.f32 %v673, %v720
  %v745 = vadd.f32 %v674, %v720
  %v746 = vadd.f32 %v675, %v720
  %v747 = vadd.f32 %v676, %v720
  %v748 = vadd.f32 %v677, %v720
  %v749 = vadd.f32 %v678, %v720
  %v750 = vadd.f32 %v679, %v720
  %v751 = vadd.f32 %v680, %v720
  %v752 = vadd.f32 %v681, %v720
  %v753 = vadd.f32 %v682, %v720
  %v754 = vadd.f32 %v683, %v720
  %v755 = vadd.f32 %v684, %v720
  %v756 = vadd.f32 %v685, %v720
  %v757 = vadd.f32 %v686, %v720
  %v758 = vadd.f32 %v687, %v720
  %v759 = vadd.f32 %v688, %v720
  %v760 = vadd.f32 %v689, %v720
  %v761 = vadd.f32 %v690, %v720
  %v762 = vadd.f32 %v691, %v720
  %v763 = vadd.f32 %v692, %v720
  %v764 = vadd.f32 %v693, %v720
  %v765 = vadd.f32 %v694, %v720
  %v766 = vadd.f32 %v695, %v720
  %v767 = vadd.f32 %v696, %v720
  %v768 = vadd.f32 %v697, %v720
  %v769 = vadd.f32 %v698, %v720
  %v770 = vadd.f32 %v699, %v720
  %v771 = vadd.f32 %v700, %v720
  %v772 = vadd.f32 %v701, %v720
  %v773 = vadd.f32 %v702, %v720
  %v774 = vadd.f32 %v703, %v720
  %v775 = vadd.f32 %v704, %v720
  %v776 = vadd.f32 %v705, %v720
  %v777 = vadd.f32 %v706, %v720
  %v778 = vadd.f32 %v707, %v720
  %v779 = vadd.f32 %v708, %v720
  %v780 = vadd.f32 %v709, %v720
  %v781 = vadd.f32 %v710, %v720
  %v782 = vadd.f32 %v711, %v720
  %v783 = vadd.f32 %v712, %v720
  %v784 = vadd.f32 %v713, %v720
  %v785 = vadd.f32 %v714, %v720
  %v786 = vsub.f32 0.0, %v722
  %v787 = vsub.f32 0.0, %v723
  %v788 = vsub.f32 0.0, %v724
  %v789 = vsub.f32 0.0, %v725
  %v790 = vsub.f32 0.0, %v726
  %v791 = vsub.f32 0.0, %v727
  %v792 = vsub.f32 0.0, %v728
  %v793 = vsub.f32 0.0, %v729
  %v794 = vsub.f32 0.0, %v730
  %v795 = vsub.f32 0.0, %v731
  %v796 = vsub.f32 0.0, %v732
  %v797 = vsub.f32 0.0, %v733
  %v798 = vsub.f32 0.0, %v734
  %v799 = vsub.f32 0.0, %v735
  %v800 = vsub.f32 0.0, %v736
  %v801 = vsub.f32 0.0, %v737
  %v802 = vsub.f32 0.0, %v738
  %v803 = vsub.f32 0.0, %v739
  %v804 = vsub.f32 0.0, %v740
  %v805 = vsub.f32 0.0, %v741
  %v806 = vsub.f32 0.0, %v742
  %v807 = vsub.f32 0.0, %v743
  %v808 = vsub.f32 0.0, %v744
  %v809 = vsub.f32 0.0, %v745
  %v810 = vsub.f32 0.0, %v746
  %v811 = vsub.f32 0.0, %v747
  %v812 = vsub.f32 0.0, %v748
  %v813 = vsub.f32 0.0, %v749
  %v814 = vsub.f32 0.0, %v750
  %v815 = vsub.f32 0.0, %v751
  %v816 = vsub.f32 0.0, %v752
  %v817 = vsub.f32 0.0, %v753
  %v818 = vsub.f32 0.0, %v754
  %v819 = vsub.f32 0.0, %v755
  %v820 = vsub.f32 0.0, %v756
  %v821 = vsub.f32 0.0, %v757
  %v822 = vsub.f32 0.0, %v758
  %v823 = vsub.f32 0.0, %v759
  %v824 = vsub.f32 0.0, %v760
  %v825 = vsub.f32 0.0, %v761
  %v826 = vsub.f32 0.0, %v762
  %v827 = vsub.f32 0.0, %v763
  %v828 = vsub.f32 0.0, %v764
  %v829 = vsub.f32 0.0, %v765
  %v830 = vsub.f32 0.0, %v766
  %v831 = vsub.f32 0.0, %v767
  %v832 = vsub.f32 0.0, %v768
  %v833 = vsub.f32 0.0, %v769
  %v834 = vsub.f32 0.0, %v770
  %v835 = vsub.f32 0.0, %v771
  %v836 = vsub.f32 0.0, %v772
  %v837 = vsub.f32 0.0, %v773
  %v838 = vsub.f32 0.0, %v774
  %v839 = vsub.f32 0.0, %v775
  %v840 = vsub.f32 0.0, %v776
  %v841 = vsub.f32 0.0, %v777
  %v842 = vsub.f32 0.0, %v778
  %v843 = vsub.f32 0.0, %v779
  %v844 = vsub.f32 0.0, %v780
  %v845 = vsub.f32 0.0, %v781
  %v846 = vsub.f32 0.0, %v782
  %v847 = vsub.f32 0.0, %v783
  %v848 = vsub.f32 0.0, %v784
  %v849 = vsub.f32 0.0, %v785
  %v850 = vmul.f32 %v786, 1.442695
  %v851 = vpow.pop %v850
  %v852 = vmul.f32 %v787, 1.442695
  %v853 = vpow.pop %v852
  %v854 = vmul.f32 %v788, 1.442695
  %v855 = vpow.pop %v854
  %v856 = vmul.f32 %v789, 1.442695
  %v857 = vpow.pop %v856
  %v858 = vmul.f32 %v790, 1.442695
  %v859 = vpow.pop %v858
  %v860 = vmul.f32 %v791, 1.442695
  %v861 = vpow.pop %v860
  %v862 = vmul.f32 %v792, 1.442695
  %v863 = vpow.pop %v862
  %v864 = vmul.f32 %v793, 1.442695
  %v865 = vpow.pop %v864
  %v866 = vmul.f32 %v794, 1.442695
  %v867 = vpow.pop %v866
  %v868 = vmul.f32 %v795, 1.442695
  %v869 = vpow.pop %v868
  %v870 = vmul.f32 %v796, 1.442695
  %v871 = vpow.pop %v870
  %v872 = vmul.f32 %v797, 1.442695
  %v873 = vpow.pop %v872
  %v874 = vmul.f32 %v798, 1.442695
  %v875 = vpow.pop %v874
  %v876 = vmul.f32 %v799, 1.442695
  %v877 = vpow.pop %v876
  %v878 = vmul.f32 %v800, 1.442695
  %v879 = vpow.pop %v878
  %v880 = vmul.f32 %v801, 1.442695
  %v881 = vpow.pop %v880
  %v882 = vmul.f32 %v802, 1.442695
  %v883 = vpow.pop %v882
  %v884 = vmul.f32 %v803, 1.442695
  %v885 = vpow.pop %v884
  %v886 = vmul.f32 %v804, 1.442695
  %v887 = vpow.pop %v886
  %v888 = vmul.f32 %v805, 1.442695
  %v889 = vpow.pop %v888
  %v890 = vmul.f32 %v806, 1.442695
  %v891 = vpow.pop %v890
  %v892 = vmul.f32 %v807, 1.442695
  %v893 = vpow.pop %v892
  %v894 = vmul.f32 %v808, 1.442695
  %v895 = vpow.pop %v894
  %v896 = vmul.f32 %v809, 1.442695
  %v897 = vpow.pop %v896
  %v898 = vmul.f32 %v810, 1.442695
  %v899 = vpow.pop %v898
  %v900 = vmul.f32 %v811, 1.442695
  %v901 = vpow.pop %v900
  %v902 = vmul.f32 %v812, 1.442695
  %v903 = vpow.pop %v902
  %v904 = vmul.f32 %v813, 1.442695
  %v905 = vpow.pop %v904
  %v906 = vmul.f32 %v814, 1.442695
  %v907 = vpow.pop %v906
  %v908 = vmul.f32 %v815, 1.442695
  %v909 = vpow.pop %v908
  %v910 = vmul.f32 %v816, 1.442695
  %v911 = vpow.pop %v910
  %v912 = vmul.f32 %v817, 1.442695
  %v913 = vpow.pop %v912
  %v914 = vmul.f32 %v818, 1.442695
  %v915 = vpow.pop %v914
  %v916 = vmul.f32 %v819, 1.442695
  %v917 = vpow.pop %v916
  %v918 = vmul.f32 %v820, 1.442695
  %v919 = vpow.pop %v918
  %v920 = vmul.f32 %v821, 1.442695
  %v921 = vpow.pop %v920
  %v922 = vmul.f32 %v822, 1.442695
  %v923 = vpow.pop %v922
  %v924 = vmul.f32 %v823, 1.442695
  %v925 = vpow.pop %v924
  %v926 = vmul.f32 %v824, 1.442695
  %v927 = vpow.pop %v926
  %v928 = vmul.f32 %v825, 1.442695
  %v929 = vpow.pop %v928
  %v930 = vmul.f32 %v826, 1.442695
  %v931 = vpow.pop %v930
  %v932 = vmul.f32 %v827, 1.442695
  %v933 = vpow.pop %v932
  %v934 = vmul.f32 %v828, 1.442695
  %v935 = vpow.pop %v934
  %v936 = vmul.f32 %v829, 1.442695
  %v937 = vpow.pop %v936
  %v938 = vmul.f32 %v830, 1.442695
  %v939 = vpow.pop %v938
  %v940 = vmul.f32 %v831, 1.442695
  %v941 = vpow.pop %v940
  %v942 = vmul.f32 %v832, 1.442695
  %v943 = vpow.pop %v942
  %v944 = vmul.f32 %v833, 1.442695
  %v945 = vpow.pop %v944
  %v946 = vmul.f32 %v834, 1.442695
  %v947 = vpow.pop %v946
  %v948 = vmul.f32 %v835, 1.442695
  %v949 = vpow.pop %v948
  %v950 = vmul.f32 %v836, 1.442695
  %v951 = vpow.pop %v950
  %v952 = vmul.f32 %v837, 1.442695
  %v953 = vpow.pop %v952
  %v954 = vmul.f32 %v838, 1.442695
  %v955 = vpow.pop %v954
  %v956 = vmul.f32 %v839, 1.442695
  %v957 = vpow.pop %v956
  %v958 = vmul.f32 %v840, 1.442695
  %v959 = vpow.pop %v958
  %v960 = vmul.f32 %v841, 1.442695
  %v961 = vpow.pop %v960
  %v962 = vmul.f32 %v842, 1.442695
  %v963 = vpow.pop %v962
  %v964 = vmul.f32 %v843, 1.442695
  %v965 = vpow.pop %v964
  %v966 = vmul.f32 %v844, 1.442695
  %v967 = vpow.pop %v966
  %v968 = vmul.f32 %v845, 1.442695
  %v969 = vpow.pop %v968
  %v970 = vmul.f32 %v846, 1.442695
  %v971 = vpow.pop %v970
  %v972 = vmul.f32 %v847, 1.442695
  %v973 = vpow.pop %v972
  %v974 = vmul.f32 %v848, 1.442695
  %v975 = vpow.pop %v974
  %v976 = vmul.f32 %v849, 1.442695
  %v977 = vpow.pop %v976
  %v978 = vadd.f32 %v851, 1.0
  %v979 = vadd.f32 %v853, 1.0
  %v980 = vadd.f32 %v855, 1.0
  %v981 = vadd.f32 %v857, 1.0
  %v982 = vadd.f32 %v859, 1.0
  %v983 = vadd.f32 %v861, 1.0
  %v984 = vadd.f32 %v863, 1.0
  %v985 = vadd.f32 %v865, 1.0
  %v986 = vadd.f32 %v867, 1.0
  %v987 = vadd.f32 %v869, 1.0
  %v988 = vadd.f32 %v871, 1.0
  %v989 = vadd.f32 %v873, 1.0
  %v990 = vadd.f32 %v875, 1.0
  %v991 = vadd.f32 %v877, 1.0
  %v992 = vadd.f32 %v879, 1.0
  %v993 = vadd.f32 %v881, 1.0
  %v994 = vadd.f32 %v883, 1.0
  %v995 = vadd.f32 %v885, 1.0
  %v996 = vadd.f32 %v887, 1.0
  %v997 = vadd.f32 %v889, 1.0
  %v998 = vadd.f32 %v891, 1.0
  %v999 = vadd.f32 %v893, 1.0
  %v1000 = vadd.f32 %v895, 1.0
  %v1001 = vadd.f32 %v897, 1.0
  %v1002 = vadd.f32 %v899, 1.0
  %v1003 = vadd.f32 %v901, 1.0
  %v1004 = vadd.f32 %v903, 1.0
  %v1005 = vadd.f32 %v905, 1.0
  %v1006 = vadd.f32 %v907, 1.0
  %v1007 = vadd.f32 %v909, 1.0
  %v1008 = vadd.f32 %v911, 1.0
  %v1009 = vadd.f32 %v913, 1.0
  %v1010 = vadd.f32 %v915, 1.0
  %v1011 = vadd.f32 %v917, 1.0
  %v1012 = vadd.f32 %v919, 1.0
  %v1013 = vadd.f32 %v921, 1.0
  %v1014 = vadd.f32 %v923, 1.0
  %v1015 = vadd.f32 %v925, 1.0
  %v1016 = vadd.f32 %v927, 1.0
  %v1017 = vadd.f32 %v929, 1.0
  %v1018 = vadd.f32 %v931, 1.0
  %v1019 = vadd.f32 %v933, 1.0
  %v1020 = vadd.f32 %v935, 1.0
  %v1021 = vadd.f32 %v937, 1.0
  %v1022 = vadd.f32 %v939, 1.0
  %v1023 = vadd.f32 %v941, 1.0
  %v1024 = vadd.f32 %v943, 1.0
  %v1025 = vadd.f32 %v945, 1.0
  %v1026 = vadd.f32 %v947, 1.0
  %v1027 = vadd.f32 %v949, 1.0
  %v1028 = vadd.f32 %v951, 1.0
  %v1029 = vadd.f32 %v953, 1.0
  %v1030 = vadd.f32 %v955, 1.0
  %v1031 = vadd.f32 %v957, 1.0
  %v1032 = vadd.f32 %v959, 1.0
  %v1033 = vadd.f32 %v961, 1.0
  %v1034 = vadd.f32 %v963, 1.0
  %v1035 = vadd.f32 %v965, 1.0
  %v1036 = vadd.f32 %v967, 1.0
  %v1037 = vadd.f32 %v969, 1.0
  %v1038 = vadd.f32 %v971, 1.0
  %v1039 = vadd.f32 %v973, 1.0
  %v1040 = vadd.f32 %v975, 1.0
  %v1041 = vadd.f32 %v977, 1.0
  %v1042 = vrcp.pop %v978
  %v1043 = vrcp.pop %v979
  %v1044 = vrcp.pop %v980
  %v1045 = vrcp.pop %v981
  %v1046 = vrcp.pop %v982
  %v1047 = vrcp.pop %v983
  %v1048 = vrcp.pop %v984
  %v1049 = vrcp.pop %v985
  %v1050 = vrcp.pop %v986
  %v1051 = vrcp.pop %v987
  %v1052 = vrcp.pop %v988
  %v1053 = vrcp.pop %v989
  %v1054 = vrcp.pop %v990
  %v1055 = vrcp.pop %v991
  %v1056 = vrcp.pop %v992
  %v1057 = vrcp.pop %v993
  %v1058 = vrcp.pop %v994
  %v1059 = vrcp.pop %v995
  %v1060 = vrcp.pop %v996
  %v1061 = vrcp.pop %v997
  %v1062 = vrcp.pop %v998
  %v1063 = vrcp.pop %v999
  %v1064 = vrcp.pop %v1000
  %v1065 = vrcp.pop %v1001
  %v1066 = vrcp.pop %v1002
  %v1067 = vrcp.pop %v1003
  %v1068 = vrcp.pop %v1004
  %v1069 = vrcp.pop %v1005
  %v1070 = vrcp.pop %v1006
  %v1071 = vrcp.pop %v1007
  %v1072 = vrcp.pop %v1008
  %v1073 = vrcp.pop %v1009
  %v1074 = vrcp.pop %v1010
  %v1075 = vrcp.pop %v1011
  %v1076 = vrcp.pop %v1012
  %v1077 = vrcp.pop %v1013
  %v1078 = vrcp.pop %v1014
  %v1079 = vrcp.pop %v1015
  %v1080 = vrcp.pop %v1016
  %v1081 = vrcp.pop %v1017
  %v1082 = vrcp.pop %v1018
  %v1083 = vrcp.pop %v1019
  %v1084 = vrcp.pop %v1020
  %v1085 = vrcp.pop %v1021
  %v1086 = vrcp.pop %v1022
  %v1087 = vrcp.pop %v1023
  %v1088 = vrcp.pop %v1024
  %v1089 = vrcp.pop %v1025
  %v1090 = vrcp.pop %v1026
  %v1091 = vrcp.pop %v1027
  %v1092 = vrcp.pop %v1028
  %v1093 = vrcp.pop %v1029
  %v1094 = vrcp.pop %v1030
  %v1095 = vrcp.pop %v1031
  %v1096 = vrcp.pop %v1032
  %v1097 = vrcp.pop %v1033
  %v1098 = vrcp.pop %v1034
  %v1099 = vrcp.pop %v1035
  %v1100 = vrcp.pop %v1036
  %v1101 = vrcp.pop %v1037
  %v1102 = vrcp.pop %v1038
  %v1103 = vrcp.pop %v1039
  %v1104 = vrcp.pop %v1040
  %v1105 = vrcp.pop %v1041
  %v1106 = vmul.f32 %v722, %v1042
  %v1107 = vmul.f32 %v723, %v1043
  %v1108 = vmul.f32 %v724, %v1044
  %v1109 = vmul.f32 %v725, %v1045
  %v1110 = vmul.f32 %v726, %v1046
  %v1111 = vmul.f32 %v727, %v1047
  %v1112 = vmul.f32 %v728, %v1048
  %v1113 = vmul.f32 %v729, %v1049
  %v1114 = vmul.f32 %v730, %v1050
  %v1115 = vmul.f32 %v731, %v1051
  %v1116 = vmul.f32 %v732, %v1052
  %v1117 = vmul.f32 %v733, %v1053
  %v1118 = vmul.f32 %v734, %v1054
  %v1119 = vmul.f32 %v735, %v1055
  %v1120 = vmul.f32 %v736, %v1056
  %v1121 = vmul.f32 %v737, %v1057
  %v1122 = vmul.f32 %v738, %v1058
  %v1123 = vmul.f32 %v739, %v1059
  %v1124 = vmul.f32 %v740, %v1060
  %v1125 = vmul.f32 %v741, %v1061
  %v1126 = vmul.f32 %v742, %v1062
  %v1127 = vmul.f32 %v743, %v1063
  %v1128 = vmul.f32 %v744, %v1064
  %v1129 = vmul.f32 %v745, %v1065
  %v1130 = vmul.f32 %v746, %v1066
  %v1131 = vmul.f32 %v747, %v1067
  %v1132 = vmul.f32 %v748, %v1068
  %v1133 = vmul.f32 %v749, %v1069
  %v1134 = vmul.f32 %v750, %v1070
  %v1135 = vmul.f32 %v751, %v1071
  %v1136 = vmul.f32 %v752, %v1072
  %v1137 = vmul.f32 %v753, %v1073
  %v1138 = vmul.f32 %v754, %v1074
  %v1139 = vmul.f32 %v755, %v1075
  %v1140 = vmul.f32 %v756, %v1076
  %v1141 = vmul.f32 %v757, %v1077
  %v1142 = vmul.f32 %v758, %v1078
  %v1143 = vmul.f32 %v759, %v1079
  %v1144 = vmul.f32 %v760, %v1080
  %v1145 = vmul.f32 %v761, %v1081
  %v1146 = vmul.f32 %v762, %v1082
  %v1147 = vmul.f32 %v763, %v1083
  %v1148 = vmul.f32 %v764, %v1084
  %v1149 = vmul.f32 %v765, %v1085
  %v1150 = vmul.f32 %v766, %v1086
  %v1151 = vmul.f32 %v767, %v1087
  %v1152 = vmul.f32 %v768, %v1088
  %v1153 = vmul.f32 %v769, %v1089
  %v1154 = vmul.f32 %v770, %v1090
  %v1155 = vmul.f32 %v771, %v1091
  %v1156 = vmul.f32 %v772, %v1092
  %v1157 = vmul.f32 %v773, %v1093
  %v1158 = vmul.f32 %v774, %v1094
  %v1159 = vmul.f32 %v775, %v1095
  %v1160 = vmul.f32 %v776, %v1096
  %v1161 = vmul.f32 %v777, %v1097
  %v1162 = vmul.f32 %v778, %v1098
  %v1163 = vmul.f32 %v779, %v1099
  %v1164 = vmul.f32 %v780, %v1100
  %v1165 = vmul.f32 %v781, %v1101
  %v1166 = vmul.f32 %v782, %v1102
  %v1167 = vmul.f32 %v783, %v1103
  %v1168 = vmul.f32 %v784, %v1104
  %v1169 = vmul.f32 %v785, %v1105
  %v1170 = vpack.c.bf16 %v1107, %v1106
  %v1171 = vpack.c.bf16 %v1109, %v1108
  %v1172 = vpack.c.bf16 %v1111, %v1110
  %v1173 = vpack.c.bf16 %v1113, %v1112
  %v1174 = vpack.c.bf16 %v1115, %v1114
  %v1175 = vpack.c.bf16 %v1117, %v1116
  %v1176 = vpack.c.bf16 %v1119, %v1118
  %v1177 = vpack.c.bf16 %v1121, %v1120
  %v1178 = vpack.c.bf16 %v1123, %v1122
  %v1179 = vpack.c.bf16 %v1125, %v1124
  %v1180 = vpack.c.bf16 %v1127, %v1126
  %v1181 = vpack.c.bf16 %v1129, %v1128
  %v1182 = vpack.c.bf16 %v1131, %v1130
  %v1183 = vpack.c.bf16 %v1133, %v1132
  %v1184 = vpack.c.bf16 %v1135, %v1134
  %v1185 = vpack.c.bf16 %v1137, %v1136
  %v1186 = vpack.c.bf16 %v1139, %v1138
  %v1187 = vpack.c.bf16 %v1141, %v1140
  %v1188 = vpack.c.bf16 %v1143, %v1142
  %v1189 = vpack.c.bf16 %v1145, %v1144
  %v1190 = vpack.c.bf16 %v1147, %v1146
  %v1191 = vpack.c.bf16 %v1149, %v1148
  %v1192 = vpack.c.bf16 %v1151, %v1150
  %v1193 = vpack.c.bf16 %v1153, %v1152
  %v1194 = vpack.c.bf16 %v1155, %v1154
  %v1195 = vpack.c.bf16 %v1157, %v1156
  %v1196 = vpack.c.bf16 %v1159, %v1158
  %v1197 = vpack.c.bf16 %v1161, %v1160
  %v1198 = vpack.c.bf16 %v1163, %v1162
  %v1199 = vpack.c.bf16 %v1165, %v1164
  %v1200 = vpack.c.bf16 %v1167, %v1166
  %v1201 = vpack.c.bf16 %v1169, %v1168
  %v1234 = vunpack.c.l.b16 %v1170
  %v1235 = vunpack.c.h.b16 %v1170
  %v1236 = vunpack.c.l.b16 %v1171
  %v1237 = vunpack.c.h.b16 %v1171
  %v1238 = vunpack.c.l.b16 %v1172
  %v1239 = vunpack.c.h.b16 %v1172
  %v1240 = vunpack.c.l.b16 %v1173
  %v1241 = vunpack.c.h.b16 %v1173
  %v1242 = vunpack.c.l.b16 %v1174
  %v1243 = vunpack.c.h.b16 %v1174
  %v1244 = vunpack.c.l.b16 %v1175
  %v1245 = vunpack.c.h.b16 %v1175
  %v1246 = vunpack.c.l.b16 %v1176
  %v1247 = vunpack.c.h.b16 %v1176
  %v1248 = vunpack.c.l.b16 %v1177
  %v1249 = vunpack.c.h.b16 %v1177
  %v1250 = vunpack.c.l.b16 %v1178
  %v1251 = vunpack.c.h.b16 %v1178
  %v1252 = vunpack.c.l.b16 %v1179
  %v1253 = vunpack.c.h.b16 %v1179
  %v1254 = vunpack.c.l.b16 %v1180
  %v1255 = vunpack.c.h.b16 %v1180
  %v1256 = vunpack.c.l.b16 %v1181
  %v1257 = vunpack.c.h.b16 %v1181
  %v1258 = vunpack.c.l.b16 %v1182
  %v1259 = vunpack.c.h.b16 %v1182
  %v1260 = vunpack.c.l.b16 %v1183
  %v1261 = vunpack.c.h.b16 %v1183
  %v1262 = vunpack.c.l.b16 %v1184
  %v1263 = vunpack.c.h.b16 %v1184
  %v1264 = vunpack.c.l.b16 %v1185
  %v1265 = vunpack.c.h.b16 %v1185
  %v1266 = vunpack.c.l.b16 %v1186
  %v1267 = vunpack.c.h.b16 %v1186
  %v1268 = vunpack.c.l.b16 %v1187
  %v1269 = vunpack.c.h.b16 %v1187
  %v1270 = vunpack.c.l.b16 %v1188
  %v1271 = vunpack.c.h.b16 %v1188
  %v1272 = vunpack.c.l.b16 %v1189
  %v1273 = vunpack.c.h.b16 %v1189
  %v1274 = vunpack.c.l.b16 %v1190
  %v1275 = vunpack.c.h.b16 %v1190
  %v1276 = vunpack.c.l.b16 %v1191
  %v1277 = vunpack.c.h.b16 %v1191
  %v1278 = vunpack.c.l.b16 %v1192
  %v1279 = vunpack.c.h.b16 %v1192
  %v1280 = vunpack.c.l.b16 %v1193
  %v1281 = vunpack.c.h.b16 %v1193
  %v1282 = vunpack.c.l.b16 %v1194
  %v1283 = vunpack.c.h.b16 %v1194
  %v1284 = vunpack.c.l.b16 %v1195
  %v1285 = vunpack.c.h.b16 %v1195
  %v1286 = vunpack.c.l.b16 %v1196
  %v1287 = vunpack.c.h.b16 %v1196
  %v1288 = vunpack.c.l.b16 %v1197
  %v1289 = vunpack.c.h.b16 %v1197
  %v1290 = vunpack.c.l.b16 %v1198
  %v1291 = vunpack.c.h.b16 %v1198
  %v1292 = vunpack.c.l.b16 %v1199
  %v1293 = vunpack.c.h.b16 %v1199
  %v1294 = vunpack.c.l.b16 %v1200
  %v1295 = vunpack.c.h.b16 %v1200
  %v1296 = vunpack.c.l.b16 %v1201
  %v1297 = vunpack.c.h.b16 %v1201
  %v1298 = vpack.c.b16 %v1234, %v1234
  %v1299 = vpack.c.b16 %v1235, %v1235
  %v1300 = vpack.c.b16 %v1236, %v1236
  %v1301 = vpack.c.b16 %v1237, %v1237
  %v1302 = vpack.c.b16 %v1238, %v1238
  %v1303 = vpack.c.b16 %v1239, %v1239
  %v1304 = vpack.c.b16 %v1240, %v1240
  %v1305 = vpack.c.b16 %v1241, %v1241
  %v1306 = vpack.c.b16 %v1242, %v1242
  %v1307 = vpack.c.b16 %v1243, %v1243
  %v1308 = vpack.c.b16 %v1244, %v1244
  %v1309 = vpack.c.b16 %v1245, %v1245
  %v1310 = vpack.c.b16 %v1246, %v1246
  %v1311 = vpack.c.b16 %v1247, %v1247
  %v1312 = vpack.c.b16 %v1248, %v1248
  %v1313 = vpack.c.b16 %v1249, %v1249
  %v1314 = vpack.c.b16 %v1250, %v1250
  %v1315 = vpack.c.b16 %v1251, %v1251
  %v1316 = vpack.c.b16 %v1252, %v1252
  %v1317 = vpack.c.b16 %v1253, %v1253
  %v1318 = vpack.c.b16 %v1254, %v1254
  %v1319 = vpack.c.b16 %v1255, %v1255
  %v1320 = vpack.c.b16 %v1256, %v1256
  %v1321 = vpack.c.b16 %v1257, %v1257
  %v1322 = vpack.c.b16 %v1258, %v1258
  %v1323 = vpack.c.b16 %v1259, %v1259
  %v1324 = vpack.c.b16 %v1260, %v1260
  %v1325 = vpack.c.b16 %v1261, %v1261
  %v1326 = vpack.c.b16 %v1262, %v1262
  %v1327 = vpack.c.b16 %v1263, %v1263
  %v1328 = vpack.c.b16 %v1264, %v1264
  %v1329 = vpack.c.b16 %v1265, %v1265
  %v1330 = vpack.c.b16 %v1266, %v1266
  %v1331 = vpack.c.b16 %v1267, %v1267
  %v1332 = vpack.c.b16 %v1268, %v1268
  %v1333 = vpack.c.b16 %v1269, %v1269
  %v1334 = vpack.c.b16 %v1270, %v1270
  %v1335 = vpack.c.b16 %v1271, %v1271
  %v1336 = vpack.c.b16 %v1272, %v1272
  %v1337 = vpack.c.b16 %v1273, %v1273
  %v1338 = vpack.c.b16 %v1274, %v1274
  %v1339 = vpack.c.b16 %v1275, %v1275
  %v1340 = vpack.c.b16 %v1276, %v1276
  %v1341 = vpack.c.b16 %v1277, %v1277
  %v1342 = vpack.c.b16 %v1278, %v1278
  %v1343 = vpack.c.b16 %v1279, %v1279
  %v1344 = vpack.c.b16 %v1280, %v1280
  %v1345 = vpack.c.b16 %v1281, %v1281
  %v1346 = vpack.c.b16 %v1282, %v1282
  %v1347 = vpack.c.b16 %v1283, %v1283
  %v1348 = vpack.c.b16 %v1284, %v1284
  %v1349 = vpack.c.b16 %v1285, %v1285
  %v1350 = vpack.c.b16 %v1286, %v1286
  %v1351 = vpack.c.b16 %v1287, %v1287
  %v1352 = vpack.c.b16 %v1288, %v1288
  %v1353 = vpack.c.b16 %v1289, %v1289
  %v1354 = vpack.c.b16 %v1290, %v1290
  %v1355 = vpack.c.b16 %v1291, %v1291
  %v1356 = vpack.c.b16 %v1292, %v1292
  %v1357 = vpack.c.b16 %v1293, %v1293
  %v1358 = vpack.c.b16 %v1294, %v1294
  %v1359 = vpack.c.b16 %v1295, %v1295
  %v1360 = vpack.c.b16 %v1296, %v1296
  %v1361 = vpack.c.b16 %v1297, %v1297
  %vm1426 = vcmask 60416
  %1427 = vst.msk [vmem:[%s7] sm:$0xf] %vm1426, %v1298
  %1428 = vst.msk [vmem:[%s7 + $0x4] sm:$0xf] %vm1426, %v1299
  %1429 = vst.msk [vmem:[%s7 + $0x8] sm:$0xf] %vm1426, %v1300
  %1430 = vst.msk [vmem:[%s7 + $0xc] sm:$0xf] %vm1426, %v1301
  %1431 = vst.msk [vmem:[%s7 + $0x10] sm:$0xf] %vm1426, %v1302
  %1432 = vst.msk [vmem:[%s7 + $0x14] sm:$0xf] %vm1426, %v1303
  %1433 = vst.msk [vmem:[%s7 + $0x18] sm:$0xf] %vm1426, %v1304
  %1434 = vst.msk [vmem:[%s7 + $0x1c] sm:$0xf] %vm1426, %v1305
  %1435 = vst.msk [vmem:[%s7 + $0x20] sm:$0xf] %vm1426, %v1306
  %1436 = vst.msk [vmem:[%s7 + $0x24] sm:$0xf] %vm1426, %v1307
  %1437 = vst.msk [vmem:[%s7 + $0x28] sm:$0xf] %vm1426, %v1308
  %1438 = vst.msk [vmem:[%s7 + $0x2c] sm:$0xf] %vm1426, %v1309
  %1439 = vst.msk [vmem:[%s7 + $0x30] sm:$0xf] %vm1426, %v1310
  %1440 = vst.msk [vmem:[%s7 + $0x34] sm:$0xf] %vm1426, %v1311
  %1441 = vst.msk [vmem:[%s7 + $0x38] sm:$0xf] %vm1426, %v1312
  %1442 = vst.msk [vmem:[%s7 + $0x3c] sm:$0xf] %vm1426, %v1313
  %1443 = vst.msk [vmem:[%s7 + $0x40] sm:$0xf] %vm1426, %v1314
  %1444 = vst.msk [vmem:[%s7 + $0x44] sm:$0xf] %vm1426, %v1315
  %1445 = vst.msk [vmem:[%s7 + $0x48] sm:$0xf] %vm1426, %v1316
  %1446 = vst.msk [vmem:[%s7 + $0x4c] sm:$0xf] %vm1426, %v1317
  %1447 = vst.msk [vmem:[%s7 + $0x50] sm:$0xf] %vm1426, %v1318
  %1448 = vst.msk [vmem:[%s7 + $0x54] sm:$0xf] %vm1426, %v1319
  %1449 = vst.msk [vmem:[%s7 + $0x58] sm:$0xf] %vm1426, %v1320
  %1450 = vst.msk [vmem:[%s7 + $0x5c] sm:$0xf] %vm1426, %v1321
  %1451 = vst.msk [vmem:[%s7 + $0x60] sm:$0xf] %vm1426, %v1322
  %1452 = vst.msk [vmem:[%s7 + $0x64] sm:$0xf] %vm1426, %v1323
  %1453 = vst.msk [vmem:[%s7 + $0x68] sm:$0xf] %vm1426, %v1324
  %1454 = vst.msk [vmem:[%s7 + $0x6c] sm:$0xf] %vm1426, %v1325
  %1455 = vst.msk [vmem:[%s7 + $0x70] sm:$0xf] %vm1426, %v1326
  %1456 = vst.msk [vmem:[%s7 + $0x74] sm:$0xf] %vm1426, %v1327
  %1457 = vst.msk [vmem:[%s7 + $0x78] sm:$0xf] %vm1426, %v1328
  %1458 = vst.msk [vmem:[%s7 + $0x7c] sm:$0xf] %vm1426, %v1329
  %1459 = vst.msk [vmem:[%s7 + $0x80] sm:$0xf] %vm1426, %v1330
  %1460 = vst.msk [vmem:[%s7 + $0x84] sm:$0xf] %vm1426, %v1331
  %1461 = vst.msk [vmem:[%s7 + $0x88] sm:$0xf] %vm1426, %v1332
  %1462 = vst.msk [vmem:[%s7 + $0x8c] sm:$0xf] %vm1426, %v1333
  %1463 = vst.msk [vmem:[%s7 + $0x90] sm:$0xf] %vm1426, %v1334
  %1464 = vst.msk [vmem:[%s7 + $0x94] sm:$0xf] %vm1426, %v1335
  %1465 = vst.msk [vmem:[%s7 + $0x98] sm:$0xf] %vm1426, %v1336
  %1466 = vst.msk [vmem:[%s7 + $0x9c] sm:$0xf] %vm1426, %v1337
  %1467 = vst.msk [vmem:[%s7 + $0xa0] sm:$0xf] %vm1426, %v1338
  %1468 = vst.msk [vmem:[%s7 + $0xa4] sm:$0xf] %vm1426, %v1339
  %1469 = vst.msk [vmem:[%s7 + $0xa8] sm:$0xf] %vm1426, %v1340
  %1470 = vst.msk [vmem:[%s7 + $0xac] sm:$0xf] %vm1426, %v1341
  %1471 = vst.msk [vmem:[%s7 + $0xb0] sm:$0xf] %vm1426, %v1342
  %1472 = vst.msk [vmem:[%s7 + $0xb4] sm:$0xf] %vm1426, %v1343
  %1473 = vst.msk [vmem:[%s7 + $0xb8] sm:$0xf] %vm1426, %v1344
  %1474 = vst.msk [vmem:[%s7 + $0xbc] sm:$0xf] %vm1426, %v1345
  %1475 = vst.msk [vmem:[%s7 + $0xc0] sm:$0xf] %vm1426, %v1346
  %1476 = vst.msk [vmem:[%s7 + $0xc4] sm:$0xf] %vm1426, %v1347
  %1477 = vst.msk [vmem:[%s7 + $0xc8] sm:$0xf] %vm1426, %v1348
  %1478 = vst.msk [vmem:[%s7 + $0xcc] sm:$0xf] %vm1426, %v1349
  %1479 = vst.msk [vmem:[%s7 + $0xd0] sm:$0xf] %vm1426, %v1350
  %1480 = vst.msk [vmem:[%s7 + $0xd4] sm:$0xf] %vm1426, %v1351
  %1481 = vst.msk [vmem:[%s7 + $0xd8] sm:$0xf] %vm1426, %v1352
  %1482 = vst.msk [vmem:[%s7 + $0xdc] sm:$0xf] %vm1426, %v1353
  %1483 = vst.msk [vmem:[%s7 + $0xe0] sm:$0xf] %vm1426, %v1354
  %1484 = vst.msk [vmem:[%s7 + $0xe4] sm:$0xf] %vm1426, %v1355
  %1485 = vst.msk [vmem:[%s7 + $0xe8] sm:$0xf] %vm1426, %v1356
  %1486 = vst.msk [vmem:[%s7 + $0xec] sm:$0xf] %vm1426, %v1357
  %1487 = vst.msk [vmem:[%s7 + $0xf0] sm:$0xf] %vm1426, %v1358
  %1488 = vst.msk [vmem:[%s7 + $0xf4] sm:$0xf] %vm1426, %v1359
  %1489 = vst.msk [vmem:[%s7 + $0xf8] sm:$0xf] %vm1426, %v1360
  %1490 = vst.msk [vmem:[%s7 + $0xfc] sm:$0xf] %vm1426, %v1361
  %v1491 = vld [vmem:[%s4] sm:$0xf]
  %v1493 = vsel %vm351, %v1491, 0
  %1495 = vmatprep.subr.bf16.mxu0 0
  %1496 = vmatpush1.bf16.msra.mxu0 %v1493
  %1497 = vmatprep.subr.bf16.mxu0 0
  %1498 = vmatpush1.bf16.msra.mxu0 0
  %1499 = vmatprep.subr.bf16.mxu0 0
  %1500 = vmatpush1.bf16.msra.mxu0 0
  %1501 = vmatprep.subr.bf16.mxu0 0
  %1502 = vmatpush1.bf16.msra.mxu0 0
  %1503 = vmatprep.subr.bf16.mxu0 0
  %1504 = vmatpush1.bf16.msra.mxu0 0
  %1505 = vmatprep.subr.bf16.mxu0 0
  %1506 = vmatpush1.bf16.msra.mxu0 0
  %1507 = vmatprep.subr.bf16.mxu0 0
  %1508 = vmatpush1.bf16.msra.mxu0 0
  %1509 = vmatprep.subr.bf16.mxu0 0
  %1510 = vmatpush1.bf16.msra.mxu0 0
  %1511 = vmatprep.subr.bf16.mxu0 0
  %1512 = vmatpush1.bf16.msra.mxu0 0
  %1513 = vmatprep.subr.bf16.mxu0 0
  %1514 = vmatpush1.bf16.msra.mxu0 0
  %1515 = vmatprep.subr.bf16.mxu0 0
  %1516 = vmatpush1.bf16.msra.mxu0 0
  %1517 = vmatprep.subr.bf16.mxu0 0
  %1518 = vmatpush1.bf16.msra.mxu0 0
  %1519 = vmatprep.subr.bf16.mxu0 0
  %1520 = vmatpush1.bf16.msra.mxu0 0
  %1521 = vmatprep.subr.bf16.mxu0 0
  %1522 = vmatpush1.bf16.msra.mxu0 0
  %1523 = vmatprep.subr.bf16.mxu0 0
  %1524 = vmatpush1.bf16.msra.mxu0 0
  %1525 = vmatprep.subr.bf16.mxu0 0
  %1526 = vmatpush1.bf16.msra.mxu0 0
  %1527 = vmatprep.mubr.bf16.mxu0 0
  %1528 = vmatmul.mubr.bf16.gmra.mrb[0].mxu0 %v256
  %v1529 = vpop.f32.mrb[0].mxu0
  %v1530 = vadd.f32 0.0, %v1529
  %v1531 = vpop.f32.mrb[0].mxu0
  %v1532 = vpop.f32.mrb[0].mxu0
  %v1533 = vadd.f32 0.0, %v1532
  %v1534 = vpop.f32.mrb[0].mxu0
  %1535 = vmatprep.mubr.bf16.mxu0 0
  %1536 = vmatmul.mubr.bf16.gmra.mrb[0].mxu0 %v259
  %v1537 = vpop.f32.mrb[0].mxu0
  %v1538 = vadd.f32 0.0, %v1537
  %v1539 = vpop.f32.mrb[0].mxu0
  %v1540 = vpop.f32.mrb[0].mxu0
  %v1541 = vadd.f32 0.0, %v1540
  %v1542 = vpop.f32.mrb[0].mxu0
  %1543 = vmatprep.mubr.bf16.mxu0 0
  %1544 = vmatmul.mubr.bf16.gmra.mrb[0].mxu0 %v262
  %v1545 = vpop.f32.mrb[0].mxu0
  %v1546 = vadd.f32 0.0, %v1545
  %v1547 = vpop.f32.mrb[0].mxu0
  %v1548 = vpop.f32.mrb[0].mxu0
  %v1549 = vadd.f32 0.0, %v1548
  %v1550 = vpop.f32.mrb[0].mxu0
  %1551 = vmatprep.mubr.bf16.mxu0 0
  %1552 = vmatmul.mubr.bf16.gmra.mrb[0].mxu0 %v265
  %v1553 = vpop.f32.mrb[0].mxu0
  %v1554 = vadd.f32 0.0, %v1553
  %v1555 = vpop.f32.mrb[0].mxu0
  %v1556 = vpop.f32.mrb[0].mxu0
  %v1557 = vadd.f32 0.0, %v1556
  %v1558 = vpop.f32.mrb[0].mxu0
  %1559 = vmatprep.mubr.bf16.mxu0 0
  %1560 = vmatmul.mubr.bf16.gmra.mrb[0].mxu0 %v268
  %v1561 = vpop.f32.mrb[0].mxu0
  %v1562 = vadd.f32 0.0, %v1561
  %v1563 = vpop.f32.mrb[0].mxu0
  %v1564 = vpop.f32.mrb[0].mxu0
  %v1565 = vadd.f32 0.0, %v1564
  %v1566 = vpop.f32.mrb[0].mxu0
  %1567 = vmatprep.mubr.bf16.mxu0 0
  %1568 = vmatmul.mubr.bf16.gmra.mrb[0].mxu0 %v271
  %v1569 = vpop.f32.mrb[0].mxu0
  %v1570 = vadd.f32 0.0, %v1569
  %v1571 = vpop.f32.mrb[0].mxu0
  %v1572 = vpop.f32.mrb[0].mxu0
  %v1573 = vadd.f32 0.0, %v1572
  %v1574 = vpop.f32.mrb[0].mxu0
  %1575 = vmatprep.mubr.bf16.mxu0 0
  %1576 = vmatmul.mubr.bf16.gmra.mrb[0].mxu0 %v274
  %v1577 = vpop.f32.mrb[0].mxu0
  %v1578 = vadd.f32 0.0, %v1577
  %v1579 = vpop.f32.mrb[0].mxu0
  %v1580 = vpop.f32.mrb[0].mxu0
  %v1581 = vadd.f32 0.0, %v1580
  %v1582 = vpop.f32.mrb[0].mxu0
  %1583 = vmatprep.mubr.bf16.mxu0 0
  %1584 = vmatmul.mubr.bf16.gmra.mrb[0].mxu0 %v277
  %v1585 = vpop.f32.mrb[0].mxu0
  %v1586 = vadd.f32 0.0, %v1585
  %v1587 = vpop.f32.mrb[0].mxu0
  %v1588 = vpop.f32.mrb[0].mxu0
  %v1589 = vadd.f32 0.0, %v1588
  %v1590 = vpop.f32.mrb[0].mxu0
  %1591 = vmatprep.mubr.bf16.mxu0 0
  %1592 = vmatmul.mubr.bf16.gmra.mrb[0].mxu0 %v280
  %v1593 = vpop.f32.mrb[0].mxu0
  %v1594 = vadd.f32 0.0, %v1593
  %v1595 = vpop.f32.mrb[0].mxu0
  %v1596 = vpop.f32.mrb[0].mxu0
  %v1597 = vadd.f32 0.0, %v1596
  %v1598 = vpop.f32.mrb[0].mxu0
  %1599 = vmatprep.mubr.bf16.mxu0 0
  %1600 = vmatmul.mubr.bf16.gmra.mrb[0].mxu0 %v283
  %v1601 = vpop.f32.mrb[0].mxu0
  %v1602 = vadd.f32 0.0, %v1601
  %v1603 = vpop.f32.mrb[0].mxu0
  %v1604 = vpop.f32.mrb[0].mxu0
  %v1605 = vadd.f32 0.0, %v1604
  %v1606 = vpop.f32.mrb[0].mxu0
  %1607 = vmatprep.mubr.bf16.mxu0 0
  %1608 = vmatmul.mubr.bf16.gmra.mrb[0].mxu0 %v286
  %v1609 = vpop.f32.mrb[0].mxu0
  %v1610 = vadd.f32 0.0, %v1609
  %v1611 = vpop.f32.mrb[0].mxu0
  %v1612 = vpop.f32.mrb[0].mxu0
  %v1613 = vadd.f32 0.0, %v1612
  %v1614 = vpop.f32.mrb[0].mxu0
  %1615 = vmatprep.mubr.bf16.mxu0 0
  %1616 = vmatmul.mubr.bf16.gmra.mrb[0].mxu0 %v289
  %v1617 = vpop.f32.mrb[0].mxu0
  %v1618 = vadd.f32 0.0, %v1617
  %v1619 = vpop.f32.mrb[0].mxu0
  %v1620 = vpop.f32.mrb[0].mxu0
  %v1621 = vadd.f32 0.0, %v1620
  %v1622 = vpop.f32.mrb[0].mxu0
  %1623 = vmatprep.mubr.bf16.mxu0 0
  %1624 = vmatmul.mubr.bf16.gmra.mrb[0].mxu0 %v292
  %v1625 = vpop.f32.mrb[0].mxu0
  %v1626 = vadd.f32 0.0, %v1625
  %v1627 = vpop.f32.mrb[0].mxu0
  %v1628 = vpop.f32.mrb[0].mxu0
  %v1629 = vadd.f32 0.0, %v1628
  %v1630 = vpop.f32.mrb[0].mxu0
  %1631 = vmatprep.mubr.bf16.mxu0 0
  %1632 = vmatmul.mubr.bf16.gmra.mrb[0].mxu0 %v295
  %v1633 = vpop.f32.mrb[0].mxu0
  %v1634 = vadd.f32 0.0, %v1633
  %v1635 = vpop.f32.mrb[0].mxu0
  %v1636 = vpop.f32.mrb[0].mxu0
  %v1637 = vadd.f32 0.0, %v1636
  %v1638 = vpop.f32.mrb[0].mxu0
  %1639 = vmatprep.mubr.bf16.mxu0 0
  %1640 = vmatmul.mubr.bf16.gmra.mrb[0].mxu0 %v298
  %v1641 = vpop.f32.mrb[0].mxu0
  %v1642 = vadd.f32 0.0, %v1641
  %v1643 = vpop.f32.mrb[0].mxu0
  %v1644 = vpop.f32.mrb[0].mxu0
  %v1645 = vadd.f32 0.0, %v1644
  %v1646 = vpop.f32.mrb[0].mxu0
  %1647 = vmatprep.mubr.bf16.mxu0 0
  %1648 = vmatmul.mubr.bf16.gmra.mrb[0].mxu0 %v301
  %v1649 = vpop.f32.mrb[0].mxu0
  %v1650 = vadd.f32 0.0, %v1649
  %v1651 = vpop.f32.mrb[0].mxu0
  %v1652 = vpop.f32.mrb[0].mxu0
  %v1653 = vadd.f32 0.0, %v1652
  %v1654 = vpop.f32.mrb[0].mxu0
  %1655 = vmatprep.mubr.bf16.mxu0 0
  %1656 = vmatmul.mubr.bf16.gmra.mrb[0].mxu0 %v304
  %v1657 = vpop.f32.mrb[0].mxu0
  %v1658 = vadd.f32 0.0, %v1657
  %v1659 = vpop.f32.mrb[0].mxu0
  %v1660 = vpop.f32.mrb[0].mxu0
  %v1661 = vadd.f32 0.0, %v1660
  %v1662 = vpop.f32.mrb[0].mxu0
  %1663 = vmatprep.mubr.bf16.mxu0 0
  %1664 = vmatmul.mubr.bf16.gmra.mrb[0].mxu0 %v307
  %v1665 = vpop.f32.mrb[0].mxu0
  %v1666 = vadd.f32 0.0, %v1665
  %v1667 = vpop.f32.mrb[0].mxu0
  %v1668 = vpop.f32.mrb[0].mxu0
  %v1669 = vadd.f32 0.0, %v1668
  %v1670 = vpop.f32.mrb[0].mxu0
  %1671 = vmatprep.mubr.bf16.mxu0 0
  %1672 = vmatmul.mubr.bf16.gmra.mrb[0].mxu0 %v310
  %v1673 = vpop.f32.mrb[0].mxu0
  %v1674 = vadd.f32 0.0, %v1673
  %v1675 = vpop.f32.mrb[0].mxu0
  %v1676 = vpop.f32.mrb[0].mxu0
  %v1677 = vadd.f32 0.0, %v1676
  %v1678 = vpop.f32.mrb[0].mxu0
  %1679 = vmatprep.mubr.bf16.mxu0 0
  %1680 = vmatmul.mubr.bf16.gmra.mrb[0].mxu0 %v313
  %v1681 = vpop.f32.mrb[0].mxu0
  %v1682 = vadd.f32 0.0, %v1681
  %v1683 = vpop.f32.mrb[0].mxu0
  %v1684 = vpop.f32.mrb[0].mxu0
  %v1685 = vadd.f32 0.0, %v1684
  %v1686 = vpop.f32.mrb[0].mxu0
  %1687 = vmatprep.mubr.bf16.mxu0 0
  %1688 = vmatmul.mubr.bf16.gmra.mrb[0].mxu0 %v316
  %v1689 = vpop.f32.mrb[0].mxu0
  %v1690 = vadd.f32 0.0, %v1689
  %v1691 = vpop.f32.mrb[0].mxu0
  %v1692 = vpop.f32.mrb[0].mxu0
  %v1693 = vadd.f32 0.0, %v1692
  %v1694 = vpop.f32.mrb[0].mxu0
  %1695 = vmatprep.mubr.bf16.mxu0 0
  %1696 = vmatmul.mubr.bf16.gmra.mrb[0].mxu0 %v319
  %v1697 = vpop.f32.mrb[0].mxu0
  %v1698 = vadd.f32 0.0, %v1697
  %v1699 = vpop.f32.mrb[0].mxu0
  %v1700 = vpop.f32.mrb[0].mxu0
  %v1701 = vadd.f32 0.0, %v1700
  %v1702 = vpop.f32.mrb[0].mxu0
  %1703 = vmatprep.mubr.bf16.mxu0 0
  %1704 = vmatmul.mubr.bf16.gmra.mrb[0].mxu0 %v322
  %v1705 = vpop.f32.mrb[0].mxu0
  %v1706 = vadd.f32 0.0, %v1705
  %v1707 = vpop.f32.mrb[0].mxu0
  %v1708 = vpop.f32.mrb[0].mxu0
  %v1709 = vadd.f32 0.0, %v1708
  %v1710 = vpop.f32.mrb[0].mxu0
  %1711 = vmatprep.mubr.bf16.mxu0 0
  %1712 = vmatmul.mubr.bf16.gmra.mrb[0].mxu0 %v325
  %v1713 = vpop.f32.mrb[0].mxu0
  %v1714 = vadd.f32 0.0, %v1713
  %v1715 = vpop.f32.mrb[0].mxu0
  %v1716 = vpop.f32.mrb[0].mxu0
  %v1717 = vadd.f32 0.0, %v1716
  %v1718 = vpop.f32.mrb[0].mxu0
  %1719 = vmatprep.mubr.bf16.mxu0 0
  %1720 = vmatmul.mubr.bf16.gmra.mrb[0].mxu0 %v328
  %v1721 = vpop.f32.mrb[0].mxu0
  %v1722 = vadd.f32 0.0, %v1721
  %v1723 = vpop.f32.mrb[0].mxu0
  %v1724 = vpop.f32.mrb[0].mxu0
  %v1725 = vadd.f32 0.0, %v1724
  %v1726 = vpop.f32.mrb[0].mxu0
  %1727 = vmatprep.mubr.bf16.mxu0 0
  %1728 = vmatmul.mubr.bf16.gmra.mrb[0].mxu0 %v331
  %v1729 = vpop.f32.mrb[0].mxu0
  %v1730 = vadd.f32 0.0, %v1729
  %v1731 = vpop.f32.mrb[0].mxu0
  %v1732 = vpop.f32.mrb[0].mxu0
  %v1733 = vadd.f32 0.0, %v1732
  %v1734 = vpop.f32.mrb[0].mxu0
  %1735 = vmatprep.mubr.bf16.mxu0 0
  %1736 = vmatmul.mubr.bf16.gmra.mrb[0].mxu0 %v334
  %v1737 = vpop.f32.mrb[0].mxu0
  %v1738 = vadd.f32 0.0, %v1737
  %v1739 = vpop.f32.mrb[0].mxu0
  %v1740 = vpop.f32.mrb[0].mxu0
  %v1741 = vadd.f32 0.0, %v1740
  %v1742 = vpop.f32.mrb[0].mxu0
  %1743 = vmatprep.mubr.bf16.mxu0 0
  %1744 = vmatmul.mubr.bf16.gmra.mrb[0].mxu0 %v337
  %v1745 = vpop.f32.mrb[0].mxu0
  %v1746 = vadd.f32 0.0, %v1745
  %v1747 = vpop.f32.mrb[0].mxu0
  %v1748 = vpop.f32.mrb[0].mxu0
  %v1749 = vadd.f32 0.0, %v1748
  %v1750 = vpop.f32.mrb[0].mxu0
  %1751 = vmatprep.mubr.bf16.mxu0 0
  %1752 = vmatmul.mubr.bf16.gmra.mrb[0].mxu0 %v340
  %v1753 = vpop.f32.mrb[0].mxu0
  %v1754 = vadd.f32 0.0, %v1753
  %v1755 = vpop.f32.mrb[0].mxu0
  %v1756 = vpop.f32.mrb[0].mxu0
  %v1757 = vadd.f32 0.0, %v1756
  %v1758 = vpop.f32.mrb[0].mxu0
  %1759 = vmatprep.mubr.bf16.mxu0 0
  %1760 = vmatmul.mubr.bf16.gmra.mrb[0].mxu0 %v343
  %v1761 = vpop.f32.mrb[0].mxu0
  %v1762 = vadd.f32 0.0, %v1761
  %v1763 = vpop.f32.mrb[0].mxu0
  %v1764 = vpop.f32.mrb[0].mxu0
  %v1765 = vadd.f32 0.0, %v1764
  %v1766 = vpop.f32.mrb[0].mxu0
  %1767 = vmatprep.mubr.bf16.mxu0 0
  %1768 = vmatmul.mubr.bf16.gmra.mrb[0].mxu0 %v346
  %v1769 = vpop.f32.mrb[0].mxu0
  %v1770 = vadd.f32 0.0, %v1769
  %v1771 = vpop.f32.mrb[0].mxu0
  %v1772 = vpop.f32.mrb[0].mxu0
  %v1773 = vadd.f32 0.0, %v1772
  %v1774 = vpop.f32.mrb[0].mxu0
  %1775 = vmatprep.mubr.bf16.mxu0 0
  %1776 = vmatmul.mubr.bf16.gmra.mrb[0].mxu0 %v349
  %v1777 = vpop.f32.mrb[0].mxu0
  %v1778 = vadd.f32 0.0, %v1777
  %v1779 = vpop.f32.mrb[0].mxu0
  %v1780 = vpop.f32.mrb[0].mxu0
  %v1781 = vadd.f32 0.0, %v1780
  %v1782 = vpop.f32.mrb[0].mxu0
  %1783 = vdwg.mxu0
  %v1784 = vld [vmem:[%s5] sm:$0x1]
  %v1786 = vlaneseq
  %v1787 = vshrl.u32 %v1786, 7
  %v1788 = vsub.s32 0, %v1787
  %v1789 = vrot.slane %v1784, %v1788
  %v1791 = vmul.f32 %v1530, %v1789
  %v1792 = vmul.f32 %v1533, %v1789
  %v1793 = vmul.f32 %v1538, %v1789
  %v1794 = vmul.f32 %v1541, %v1789
  %v1795 = vmul.f32 %v1546, %v1789
  %v1796 = vmul.f32 %v1549, %v1789
  %v1797 = vmul.f32 %v1554, %v1789
  %v1798 = vmul.f32 %v1557, %v1789
  %v1799 = vmul.f32 %v1562, %v1789
  %v1800 = vmul.f32 %v1565, %v1789
  %v1801 = vmul.f32 %v1570, %v1789
  %v1802 = vmul.f32 %v1573, %v1789
  %v1803 = vmul.f32 %v1578, %v1789
  %v1804 = vmul.f32 %v1581, %v1789
  %v1805 = vmul.f32 %v1586, %v1789
  %v1806 = vmul.f32 %v1589, %v1789
  %v1807 = vmul.f32 %v1594, %v1789
  %v1808 = vmul.f32 %v1597, %v1789
  %v1809 = vmul.f32 %v1602, %v1789
  %v1810 = vmul.f32 %v1605, %v1789
  %v1811 = vmul.f32 %v1610, %v1789
  %v1812 = vmul.f32 %v1613, %v1789
  %v1813 = vmul.f32 %v1618, %v1789
  %v1814 = vmul.f32 %v1621, %v1789
  %v1815 = vmul.f32 %v1626, %v1789
  %v1816 = vmul.f32 %v1629, %v1789
  %v1817 = vmul.f32 %v1634, %v1789
  %v1818 = vmul.f32 %v1637, %v1789
  %v1819 = vmul.f32 %v1642, %v1789
  %v1820 = vmul.f32 %v1645, %v1789
  %v1821 = vmul.f32 %v1650, %v1789
  %v1822 = vmul.f32 %v1653, %v1789
  %v1823 = vmul.f32 %v1658, %v1789
  %v1824 = vmul.f32 %v1661, %v1789
  %v1825 = vmul.f32 %v1666, %v1789
  %v1826 = vmul.f32 %v1669, %v1789
  %v1827 = vmul.f32 %v1674, %v1789
  %v1828 = vmul.f32 %v1677, %v1789
  %v1829 = vmul.f32 %v1682, %v1789
  %v1830 = vmul.f32 %v1685, %v1789
  %v1831 = vmul.f32 %v1690, %v1789
  %v1832 = vmul.f32 %v1693, %v1789
  %v1833 = vmul.f32 %v1698, %v1789
  %v1834 = vmul.f32 %v1701, %v1789
  %v1835 = vmul.f32 %v1706, %v1789
  %v1836 = vmul.f32 %v1709, %v1789
  %v1837 = vmul.f32 %v1714, %v1789
  %v1838 = vmul.f32 %v1717, %v1789
  %v1839 = vmul.f32 %v1722, %v1789
  %v1840 = vmul.f32 %v1725, %v1789
  %v1841 = vmul.f32 %v1730, %v1789
  %v1842 = vmul.f32 %v1733, %v1789
  %v1843 = vmul.f32 %v1738, %v1789
  %v1844 = vmul.f32 %v1741, %v1789
  %v1845 = vmul.f32 %v1746, %v1789
  %v1846 = vmul.f32 %v1749, %v1789
  %v1847 = vmul.f32 %v1754, %v1789
  %v1848 = vmul.f32 %v1757, %v1789
  %v1849 = vmul.f32 %v1762, %v1789
  %v1850 = vmul.f32 %v1765, %v1789
  %v1851 = vmul.f32 %v1770, %v1789
  %v1852 = vmul.f32 %v1773, %v1789
  %v1853 = vmul.f32 %v1778, %v1789
  %v1854 = vmul.f32 %v1781, %v1789
  %v1855 = vld [vmem:[%s6] sm:$0x1]
  %v1857 = vlaneseq
  %v1858 = vshrl.u32 %v1857, 7
  %v1859 = vsub.s32 0, %v1858
  %v1860 = vrot.slane %v1855, %v1859
  %v1862 = vadd.f32 %v1791, %v1860
  %v1863 = vadd.f32 %v1792, %v1860
  %v1864 = vadd.f32 %v1793, %v1860
  %v1865 = vadd.f32 %v1794, %v1860
  %v1866 = vadd.f32 %v1795, %v1860
  %v1867 = vadd.f32 %v1796, %v1860
  %v1868 = vadd.f32 %v1797, %v1860
  %v1869 = vadd.f32 %v1798, %v1860
  %v1870 = vadd.f32 %v1799, %v1860
  %v1871 = vadd.f32 %v1800, %v1860
  %v1872 = vadd.f32 %v1801, %v1860
  %v1873 = vadd.f32 %v1802, %v1860
  %v1874 = vadd.f32 %v1803, %v1860
  %v1875 = vadd.f32 %v1804, %v1860
  %v1876 = vadd.f32 %v1805, %v1860
  %v1877 = vadd.f32 %v1806, %v1860
  %v1878 = vadd.f32 %v1807, %v1860
  %v1879 = vadd.f32 %v1808, %v1860
  %v1880 = vadd.f32 %v1809, %v1860
  %v1881 = vadd.f32 %v1810, %v1860
  %v1882 = vadd.f32 %v1811, %v1860
  %v1883 = vadd.f32 %v1812, %v1860
  %v1884 = vadd.f32 %v1813, %v1860
  %v1885 = vadd.f32 %v1814, %v1860
  %v1886 = vadd.f32 %v1815, %v1860
  %v1887 = vadd.f32 %v1816, %v1860
  %v1888 = vadd.f32 %v1817, %v1860
  %v1889 = vadd.f32 %v1818, %v1860
  %v1890 = vadd.f32 %v1819, %v1860
  %v1891 = vadd.f32 %v1820, %v1860
  %v1892 = vadd.f32 %v1821, %v1860
  %v1893 = vadd.f32 %v1822, %v1860
  %v1894 = vadd.f32 %v1823, %v1860
  %v1895 = vadd.f32 %v1824, %v1860
  %v1896 = vadd.f32 %v1825, %v1860
  %v1897 = vadd.f32 %v1826, %v1860
  %v1898 = vadd.f32 %v1827, %v1860
  %v1899 = vadd.f32 %v1828, %v1860
  %v1900 = vadd.f32 %v1829, %v1860
  %v1901 = vadd.f32 %v1830, %v1860
  %v1902 = vadd.f32 %v1831, %v1860
  %v1903 = vadd.f32 %v1832, %v1860
  %v1904 = vadd.f32 %v1833, %v1860
  %v1905 = vadd.f32 %v1834, %v1860
  %v1906 = vadd.f32 %v1835, %v1860
  %v1907 = vadd.f32 %v1836, %v1860
  %v1908 = vadd.f32 %v1837, %v1860
  %v1909 = vadd.f32 %v1838, %v1860
  %v1910 = vadd.f32 %v1839, %v1860
  %v1911 = vadd.f32 %v1840, %v1860
  %v1912 = vadd.f32 %v1841, %v1860
  %v1913 = vadd.f32 %v1842, %v1860
  %v1914 = vadd.f32 %v1843, %v1860
  %v1915 = vadd.f32 %v1844, %v1860
  %v1916 = vadd.f32 %v1845, %v1860
  %v1917 = vadd.f32 %v1846, %v1860
  %v1918 = vadd.f32 %v1847, %v1860
  %v1919 = vadd.f32 %v1848, %v1860
  %v1920 = vadd.f32 %v1849, %v1860
  %v1921 = vadd.f32 %v1850, %v1860
  %v1922 = vadd.f32 %v1851, %v1860
  %v1923 = vadd.f32 %v1852, %v1860
  %v1924 = vadd.f32 %v1853, %v1860
  %v1925 = vadd.f32 %v1854, %v1860
  %v1926 = vsub.f32 0.0, %v1862
  %v1927 = vsub.f32 0.0, %v1863
  %v1928 = vsub.f32 0.0, %v1864
  %v1929 = vsub.f32 0.0, %v1865
  %v1930 = vsub.f32 0.0, %v1866
  %v1931 = vsub.f32 0.0, %v1867
  %v1932 = vsub.f32 0.0, %v1868
  %v1933 = vsub.f32 0.0, %v1869
  %v1934 = vsub.f32 0.0, %v1870
  %v1935 = vsub.f32 0.0, %v1871
  %v1936 = vsub.f32 0.0, %v1872
  %v1937 = vsub.f32 0.0, %v1873
  %v1938 = vsub.f32 0.0, %v1874
  %v1939 = vsub.f32 0.0, %v1875
  %v1940 = vsub.f32 0.0, %v1876
  %v1941 = vsub.f32 0.0, %v1877
  %v1942 = vsub.f32 0.0, %v1878
  %v1943 = vsub.f32 0.0, %v1879
  %v1944 = vsub.f32 0.0, %v1880
  %v1945 = vsub.f32 0.0, %v1881
  %v1946 = vsub.f32 0.0, %v1882
  %v1947 = vsub.f32 0.0, %v1883
  %v1948 = vsub.f32 0.0, %v1884
  %v1949 = vsub.f32 0.0, %v1885
  %v1950 = vsub.f32 0.0, %v1886
  %v1951 = vsub.f32 0.0, %v1887
  %v1952 = vsub.f32 0.0, %v1888
  %v1953 = vsub.f32 0.0, %v1889
  %v1954 = vsub.f32 0.0, %v1890
  %v1955 = vsub.f32 0.0, %v1891
  %v1956 = vsub.f32 0.0, %v1892
  %v1957 = vsub.f32 0.0, %v1893
  %v1958 = vsub.f32 0.0, %v1894
  %v1959 = vsub.f32 0.0, %v1895
  %v1960 = vsub.f32 0.0, %v1896
  %v1961 = vsub.f32 0.0, %v1897
  %v1962 = vsub.f32 0.0, %v1898
  %v1963 = vsub.f32 0.0, %v1899
  %v1964 = vsub.f32 0.0, %v1900
  %v1965 = vsub.f32 0.0, %v1901
  %v1966 = vsub.f32 0.0, %v1902
  %v1967 = vsub.f32 0.0, %v1903
  %v1968 = vsub.f32 0.0, %v1904
  %v1969 = vsub.f32 0.0, %v1905
  %v1970 = vsub.f32 0.0, %v1906
  %v1971 = vsub.f32 0.0, %v1907
  %v1972 = vsub.f32 0.0, %v1908
  %v1973 = vsub.f32 0.0, %v1909
  %v1974 = vsub.f32 0.0, %v1910
  %v1975 = vsub.f32 0.0, %v1911
  %v1976 = vsub.f32 0.0, %v1912
  %v1977 = vsub.f32 0.0, %v1913
  %v1978 = vsub.f32 0.0, %v1914
  %v1979 = vsub.f32 0.0, %v1915
  %v1980 = vsub.f32 0.0, %v1916
  %v1981 = vsub.f32 0.0, %v1917
  %v1982 = vsub.f32 0.0, %v1918
  %v1983 = vsub.f32 0.0, %v1919
  %v1984 = vsub.f32 0.0, %v1920
  %v1985 = vsub.f32 0.0, %v1921
  %v1986 = vsub.f32 0.0, %v1922
  %v1987 = vsub.f32 0.0, %v1923
  %v1988 = vsub.f32 0.0, %v1924
  %v1989 = vsub.f32 0.0, %v1925
  %v1990 = vmul.f32 %v1926, 1.442695
  %v1991 = vpow.pop %v1990
  %v1992 = vmul.f32 %v1927, 1.442695
  %v1993 = vpow.pop %v1992
  %v1994 = vmul.f32 %v1928, 1.442695
  %v1995 = vpow.pop %v1994
  %v1996 = vmul.f32 %v1929, 1.442695
  %v1997 = vpow.pop %v1996
  %v1998 = vmul.f32 %v1930, 1.442695
  %v1999 = vpow.pop %v1998
  %v2000 = vmul.f32 %v1931, 1.442695
  %v2001 = vpow.pop %v2000
  %v2002 = vmul.f32 %v1932, 1.442695
  %v2003 = vpow.pop %v2002
  %v2004 = vmul.f32 %v1933, 1.442695
  %v2005 = vpow.pop %v2004
  %v2006 = vmul.f32 %v1934, 1.442695
  %v2007 = vpow.pop %v2006
  %v2008 = vmul.f32 %v1935, 1.442695
  %v2009 = vpow.pop %v2008
  %v2010 = vmul.f32 %v1936, 1.442695
  %v2011 = vpow.pop %v2010
  %v2012 = vmul.f32 %v1937, 1.442695
  %v2013 = vpow.pop %v2012
  %v2014 = vmul.f32 %v1938, 1.442695
  %v2015 = vpow.pop %v2014
  %v2016 = vmul.f32 %v1939, 1.442695
  %v2017 = vpow.pop %v2016
  %v2018 = vmul.f32 %v1940, 1.442695
  %v2019 = vpow.pop %v2018
  %v2020 = vmul.f32 %v1941, 1.442695
  %v2021 = vpow.pop %v2020
  %v2022 = vmul.f32 %v1942, 1.442695
  %v2023 = vpow.pop %v2022
  %v2024 = vmul.f32 %v1943, 1.442695
  %v2025 = vpow.pop %v2024
  %v2026 = vmul.f32 %v1944, 1.442695
  %v2027 = vpow.pop %v2026
  %v2028 = vmul.f32 %v1945, 1.442695
  %v2029 = vpow.pop %v2028
  %v2030 = vmul.f32 %v1946, 1.442695
  %v2031 = vpow.pop %v2030
  %v2032 = vmul.f32 %v1947, 1.442695
  %v2033 = vpow.pop %v2032
  %v2034 = vmul.f32 %v1948, 1.442695
  %v2035 = vpow.pop %v2034
  %v2036 = vmul.f32 %v1949, 1.442695
  %v2037 = vpow.pop %v2036
  %v2038 = vmul.f32 %v1950, 1.442695
  %v2039 = vpow.pop %v2038
  %v2040 = vmul.f32 %v1951, 1.442695
  %v2041 = vpow.pop %v2040
  %v2042 = vmul.f32 %v1952, 1.442695
  %v2043 = vpow.pop %v2042
  %v2044 = vmul.f32 %v1953, 1.442695
  %v2045 = vpow.pop %v2044
  %v2046 = vmul.f32 %v1954, 1.442695
  %v2047 = vpow.pop %v2046
  %v2048 = vmul.f32 %v1955, 1.442695
  %v2049 = vpow.pop %v2048
  %v2050 = vmul.f32 %v1956, 1.442695
  %v2051 = vpow.pop %v2050
  %v2052 = vmul.f32 %v1957, 1.442695
  %v2053 = vpow.pop %v2052
  %v2054 = vmul.f32 %v1958, 1.442695
  %v2055 = vpow.pop %v2054
  %v2056 = vmul.f32 %v1959, 1.442695
  %v2057 = vpow.pop %v2056
  %v2058 = vmul.f32 %v1960, 1.442695
  %v2059 = vpow.pop %v2058
  %v2060 = vmul.f32 %v1961, 1.442695
  %v2061 = vpow.pop %v2060
  %v2062 = vmul.f32 %v1962, 1.442695
  %v2063 = vpow.pop %v2062
  %v2064 = vmul.f32 %v1963, 1.442695
  %v2065 = vpow.pop %v2064
  %v2066 = vmul.f32 %v1964, 1.442695
  %v2067 = vpow.pop %v2066
  %v2068 = vmul.f32 %v1965, 1.442695
  %v2069 = vpow.pop %v2068
  %v2070 = vmul.f32 %v1966, 1.442695
  %v2071 = vpow.pop %v2070
  %v2072 = vmul.f32 %v1967, 1.442695
  %v2073 = vpow.pop %v2072
  %v2074 = vmul.f32 %v1968, 1.442695
  %v2075 = vpow.pop %v2074
  %v2076 = vmul.f32 %v1969, 1.442695
  %v2077 = vpow.pop %v2076
  %v2078 = vmul.f32 %v1970, 1.442695
  %v2079 = vpow.pop %v2078
  %v2080 = vmul.f32 %v1971, 1.442695
  %v2081 = vpow.pop %v2080
  %v2082 = vmul.f32 %v1972, 1.442695
  %v2083 = vpow.pop %v2082
  %v2084 = vmul.f32 %v1973, 1.442695
  %v2085 = vpow.pop %v2084
  %v2086 = vmul.f32 %v1974, 1.442695
  %v2087 = vpow.pop %v2086
  %v2088 = vmul.f32 %v1975, 1.442695
  %v2089 = vpow.pop %v2088
  %v2090 = vmul.f32 %v1976, 1.442695
  %v2091 = vpow.pop %v2090
  %v2092 = vmul.f32 %v1977, 1.442695
  %v2093 = vpow.pop %v2092
  %v2094 = vmul.f32 %v1978, 1.442695
  %v2095 = vpow.pop %v2094
  %v2096 = vmul.f32 %v1979, 1.442695
  %v2097 = vpow.pop %v2096
  %v2098 = vmul.f32 %v1980, 1.442695
  %v2099 = vpow.pop %v2098
  %v2100 = vmul.f32 %v1981, 1.442695
  %v2101 = vpow.pop %v2100
  %v2102 = vmul.f32 %v1982, 1.442695
  %v2103 = vpow.pop %v2102
  %v2104 = vmul.f32 %v1983, 1.442695
  %v2105 = vpow.pop %v2104
  %v2106 = vmul.f32 %v1984, 1.442695
  %v2107 = vpow.pop %v2106
  %v2108 = vmul.f32 %v1985, 1.442695
  %v2109 = vpow.pop %v2108
  %v2110 = vmul.f32 %v1986, 1.442695
  %v2111 = vpow.pop %v2110
  %v2112 = vmul.f32 %v1987, 1.442695
  %v2113 = vpow.pop %v2112
  %v2114 = vmul.f32 %v1988, 1.442695
  %v2115 = vpow.pop %v2114
  %v2116 = vmul.f32 %v1989, 1.442695
  %v2117 = vpow.pop %v2116
  %v2118 = vadd.f32 %v1991, 1.0
  %v2119 = vadd.f32 %v1993, 1.0
  %v2120 = vadd.f32 %v1995, 1.0
  %v2121 = vadd.f32 %v1997, 1.0
  %v2122 = vadd.f32 %v1999, 1.0
  %v2123 = vadd.f32 %v2001, 1.0
  %v2124 = vadd.f32 %v2003, 1.0
  %v2125 = vadd.f32 %v2005, 1.0
  %v2126 = vadd.f32 %v2007, 1.0
  %v2127 = vadd.f32 %v2009, 1.0
  %v2128 = vadd.f32 %v2011, 1.0
  %v2129 = vadd.f32 %v2013, 1.0
  %v2130 = vadd.f32 %v2015, 1.0
  %v2131 = vadd.f32 %v2017, 1.0
  %v2132 = vadd.f32 %v2019, 1.0
  %v2133 = vadd.f32 %v2021, 1.0
  %v2134 = vadd.f32 %v2023, 1.0
  %v2135 = vadd.f32 %v2025, 1.0
  %v2136 = vadd.f32 %v2027, 1.0
  %v2137 = vadd.f32 %v2029, 1.0
  %v2138 = vadd.f32 %v2031, 1.0
  %v2139 = vadd.f32 %v2033, 1.0
  %v2140 = vadd.f32 %v2035, 1.0
  %v2141 = vadd.f32 %v2037, 1.0
  %v2142 = vadd.f32 %v2039, 1.0
  %v2143 = vadd.f32 %v2041, 1.0
  %v2144 = vadd.f32 %v2043, 1.0
  %v2145 = vadd.f32 %v2045, 1.0
  %v2146 = vadd.f32 %v2047, 1.0
  %v2147 = vadd.f32 %v2049, 1.0
  %v2148 = vadd.f32 %v2051, 1.0
  %v2149 = vadd.f32 %v2053, 1.0
  %v2150 = vadd.f32 %v2055, 1.0
  %v2151 = vadd.f32 %v2057, 1.0
  %v2152 = vadd.f32 %v2059, 1.0
  %v2153 = vadd.f32 %v2061, 1.0
  %v2154 = vadd.f32 %v2063, 1.0
  %v2155 = vadd.f32 %v2065, 1.0
  %v2156 = vadd.f32 %v2067, 1.0
  %v2157 = vadd.f32 %v2069, 1.0
  %v2158 = vadd.f32 %v2071, 1.0
  %v2159 = vadd.f32 %v2073, 1.0
  %v2160 = vadd.f32 %v2075, 1.0
  %v2161 = vadd.f32 %v2077, 1.0
  %v2162 = vadd.f32 %v2079, 1.0
  %v2163 = vadd.f32 %v2081, 1.0
  %v2164 = vadd.f32 %v2083, 1.0
  %v2165 = vadd.f32 %v2085, 1.0
  %v2166 = vadd.f32 %v2087, 1.0
  %v2167 = vadd.f32 %v2089, 1.0
  %v2168 = vadd.f32 %v2091, 1.0
  %v2169 = vadd.f32 %v2093, 1.0
  %v2170 = vadd.f32 %v2095, 1.0
  %v2171 = vadd.f32 %v2097, 1.0
  %v2172 = vadd.f32 %v2099, 1.0
  %v2173 = vadd.f32 %v2101, 1.0
  %v2174 = vadd.f32 %v2103, 1.0
  %v2175 = vadd.f32 %v2105, 1.0
  %v2176 = vadd.f32 %v2107, 1.0
  %v2177 = vadd.f32 %v2109, 1.0
  %v2178 = vadd.f32 %v2111, 1.0
  %v2179 = vadd.f32 %v2113, 1.0
  %v2180 = vadd.f32 %v2115, 1.0
  %v2181 = vadd.f32 %v2117, 1.0
  %v2182 = vrcp.pop %v2118
  %v2183 = vrcp.pop %v2119
  %v2184 = vrcp.pop %v2120
  %v2185 = vrcp.pop %v2121
  %v2186 = vrcp.pop %v2122
  %v2187 = vrcp.pop %v2123
  %v2188 = vrcp.pop %v2124
  %v2189 = vrcp.pop %v2125
  %v2190 = vrcp.pop %v2126
  %v2191 = vrcp.pop %v2127
  %v2192 = vrcp.pop %v2128
  %v2193 = vrcp.pop %v2129
  %v2194 = vrcp.pop %v2130
  %v2195 = vrcp.pop %v2131
  %v2196 = vrcp.pop %v2132
  %v2197 = vrcp.pop %v2133
  %v2198 = vrcp.pop %v2134
  %v2199 = vrcp.pop %v2135
  %v2200 = vrcp.pop %v2136
  %v2201 = vrcp.pop %v2137
  %v2202 = vrcp.pop %v2138
  %v2203 = vrcp.pop %v2139
  %v2204 = vrcp.pop %v2140
  %v2205 = vrcp.pop %v2141
  %v2206 = vrcp.pop %v2142
  %v2207 = vrcp.pop %v2143
  %v2208 = vrcp.pop %v2144
  %v2209 = vrcp.pop %v2145
  %v2210 = vrcp.pop %v2146
  %v2211 = vrcp.pop %v2147
  %v2212 = vrcp.pop %v2148
  %v2213 = vrcp.pop %v2149
  %v2214 = vrcp.pop %v2150
  %v2215 = vrcp.pop %v2151
  %v2216 = vrcp.pop %v2152
  %v2217 = vrcp.pop %v2153
  %v2218 = vrcp.pop %v2154
  %v2219 = vrcp.pop %v2155
  %v2220 = vrcp.pop %v2156
  %v2221 = vrcp.pop %v2157
  %v2222 = vrcp.pop %v2158
  %v2223 = vrcp.pop %v2159
  %v2224 = vrcp.pop %v2160
  %v2225 = vrcp.pop %v2161
  %v2226 = vrcp.pop %v2162
  %v2227 = vrcp.pop %v2163
  %v2228 = vrcp.pop %v2164
  %v2229 = vrcp.pop %v2165
  %v2230 = vrcp.pop %v2166
  %v2231 = vrcp.pop %v2167
  %v2232 = vrcp.pop %v2168
  %v2233 = vrcp.pop %v2169
  %v2234 = vrcp.pop %v2170
  %v2235 = vrcp.pop %v2171
  %v2236 = vrcp.pop %v2172
  %v2237 = vrcp.pop %v2173
  %v2238 = vrcp.pop %v2174
  %v2239 = vrcp.pop %v2175
  %v2240 = vrcp.pop %v2176
  %v2241 = vrcp.pop %v2177
  %v2242 = vrcp.pop %v2178
  %v2243 = vrcp.pop %v2179
  %v2244 = vrcp.pop %v2180
  %v2245 = vrcp.pop %v2181
  %v2246 = vmul.f32 %v1862, %v2182
  %v2247 = vmul.f32 %v1863, %v2183
  %v2248 = vmul.f32 %v1864, %v2184
  %v2249 = vmul.f32 %v1865, %v2185
  %v2250 = vmul.f32 %v1866, %v2186
  %v2251 = vmul.f32 %v1867, %v2187
  %v2252 = vmul.f32 %v1868, %v2188
  %v2253 = vmul.f32 %v1869, %v2189
  %v2254 = vmul.f32 %v1870, %v2190
  %v2255 = vmul.f32 %v1871, %v2191
  %v2256 = vmul.f32 %v1872, %v2192
  %v2257 = vmul.f32 %v1873, %v2193
  %v2258 = vmul.f32 %v1874, %v2194
  %v2259 = vmul.f32 %v1875, %v2195
  %v2260 = vmul.f32 %v1876, %v2196
  %v2261 = vmul.f32 %v1877, %v2197
  %v2262 = vmul.f32 %v1878, %v2198
  %v2263 = vmul.f32 %v1879, %v2199
  %v2264 = vmul.f32 %v1880, %v2200
  %v2265 = vmul.f32 %v1881, %v2201
  %v2266 = vmul.f32 %v1882, %v2202
  %v2267 = vmul.f32 %v1883, %v2203
  %v2268 = vmul.f32 %v1884, %v2204
  %v2269 = vmul.f32 %v1885, %v2205
  %v2270 = vmul.f32 %v1886, %v2206
  %v2271 = vmul.f32 %v1887, %v2207
  %v2272 = vmul.f32 %v1888, %v2208
  %v2273 = vmul.f32 %v1889, %v2209
  %v2274 = vmul.f32 %v1890, %v2210
  %v2275 = vmul.f32 %v1891, %v2211
  %v2276 = vmul.f32 %v1892, %v2212
  %v2277 = vmul.f32 %v1893, %v2213
  %v2278 = vmul.f32 %v1894, %v2214
  %v2279 = vmul.f32 %v1895, %v2215
  %v2280 = vmul.f32 %v1896, %v2216
  %v2281 = vmul.f32 %v1897, %v2217
  %v2282 = vmul.f32 %v1898, %v2218
  %v2283 = vmul.f32 %v1899, %v2219
  %v2284 = vmul.f32 %v1900, %v2220
  %v2285 = vmul.f32 %v1901, %v2221
  %v2286 = vmul.f32 %v1902, %v2222
  %v2287 = vmul.f32 %v1903, %v2223
  %v2288 = vmul.f32 %v1904, %v2224
  %v2289 = vmul.f32 %v1905, %v2225
  %v2290 = vmul.f32 %v1906, %v2226
  %v2291 = vmul.f32 %v1907, %v2227
  %v2292 = vmul.f32 %v1908, %v2228
  %v2293 = vmul.f32 %v1909, %v2229
  %v2294 = vmul.f32 %v1910, %v2230
  %v2295 = vmul.f32 %v1911, %v2231
  %v2296 = vmul.f32 %v1912, %v2232
  %v2297 = vmul.f32 %v1913, %v2233
  %v2298 = vmul.f32 %v1914, %v2234
  %v2299 = vmul.f32 %v1915, %v2235
  %v2300 = vmul.f32 %v1916, %v2236
  %v2301 = vmul.f32 %v1917, %v2237
  %v2302 = vmul.f32 %v1918, %v2238
  %v2303 = vmul.f32 %v1919, %v2239
  %v2304 = vmul.f32 %v1920, %v2240
  %v2305 = vmul.f32 %v1921, %v2241
  %v2306 = vmul.f32 %v1922, %v2242
  %v2307 = vmul.f32 %v1923, %v2243
  %v2308 = vmul.f32 %v1924, %v2244
  %v2309 = vmul.f32 %v1925, %v2245
  %v2310 = vpack.c.bf16 %v2247, %v2246
  %v2311 = vpack.c.bf16 %v2249, %v2248
  %v2312 = vpack.c.bf16 %v2251, %v2250
  %v2313 = vpack.c.bf16 %v2253, %v2252
  %v2314 = vpack.c.bf16 %v2255, %v2254
  %v2315 = vpack.c.bf16 %v2257, %v2256
  %v2316 = vpack.c.bf16 %v2259, %v2258
  %v2317 = vpack.c.bf16 %v2261, %v2260
  %v2318 = vpack.c.bf16 %v2263, %v2262
  %v2319 = vpack.c.bf16 %v2265, %v2264
  %v2320 = vpack.c.bf16 %v2267, %v2266
  %v2321 = vpack.c.bf16 %v2269, %v2268
  %v2322 = vpack.c.bf16 %v2271, %v2270
  %v2323 = vpack.c.bf16 %v2273, %v2272
  %v2324 = vpack.c.bf16 %v2275, %v2274
  %v2325 = vpack.c.bf16 %v2277, %v2276
  %v2326 = vpack.c.bf16 %v2279, %v2278
  %v2327 = vpack.c.bf16 %v2281, %v2280
  %v2328 = vpack.c.bf16 %v2283, %v2282
  %v2329 = vpack.c.bf16 %v2285, %v2284
  %v2330 = vpack.c.bf16 %v2287, %v2286
  %v2331 = vpack.c.bf16 %v2289, %v2288
  %v2332 = vpack.c.bf16 %v2291, %v2290
  %v2333 = vpack.c.bf16 %v2293, %v2292
  %v2334 = vpack.c.bf16 %v2295, %v2294
  %v2335 = vpack.c.bf16 %v2297, %v2296
  %v2336 = vpack.c.bf16 %v2299, %v2298
  %v2337 = vpack.c.bf16 %v2301, %v2300
  %v2338 = vpack.c.bf16 %v2303, %v2302
  %v2339 = vpack.c.bf16 %v2305, %v2304
  %v2340 = vpack.c.bf16 %v2307, %v2306
  %v2341 = vpack.c.bf16 %v2309, %v2308
  %v2374 = vunpack.c.l.b16 %v2310
  %v2375 = vunpack.c.h.b16 %v2310
  %v2376 = vunpack.c.l.b16 %v2311
  %v2377 = vunpack.c.h.b16 %v2311
  %v2378 = vunpack.c.l.b16 %v2312
  %v2379 = vunpack.c.h.b16 %v2312
  %v2380 = vunpack.c.l.b16 %v2313
  %v2381 = vunpack.c.h.b16 %v2313
  %v2382 = vunpack.c.l.b16 %v2314
  %v2383 = vunpack.c.h.b16 %v2314
  %v2384 = vunpack.c.l.b16 %v2315
  %v2385 = vunpack.c.h.b16 %v2315
  %v2386 = vunpack.c.l.b16 %v2316
  %v2387 = vunpack.c.h.b16 %v2316
  %v2388 = vunpack.c.l.b16 %v2317
  %v2389 = vunpack.c.h.b16 %v2317
  %v2390 = vunpack.c.l.b16 %v2318
  %v2391 = vunpack.c.h.b16 %v2318
  %v2392 = vunpack.c.l.b16 %v2319
  %v2393 = vunpack.c.h.b16 %v2319
  %v2394 = vunpack.c.l.b16 %v2320
  %v2395 = vunpack.c.h.b16 %v2320
  %v2396 = vunpack.c.l.b16 %v2321
  %v2397 = vunpack.c.h.b16 %v2321
  %v2398 = vunpack.c.l.b16 %v2322
  %v2399 = vunpack.c.h.b16 %v2322
  %v2400 = vunpack.c.l.b16 %v2323
  %v2401 = vunpack.c.h.b16 %v2323
  %v2402 = vunpack.c.l.b16 %v2324
  %v2403 = vunpack.c.h.b16 %v2324
  %v2404 = vunpack.c.l.b16 %v2325
  %v2405 = vunpack.c.h.b16 %v2325
  %v2406 = vunpack.c.l.b16 %v2326
  %v2407 = vunpack.c.h.b16 %v2326
  %v2408 = vunpack.c.l.b16 %v2327
  %v2409 = vunpack.c.h.b16 %v2327
  %v2410 = vunpack.c.l.b16 %v2328
  %v2411 = vunpack.c.h.b16 %v2328
  %v2412 = vunpack.c.l.b16 %v2329
  %v2413 = vunpack.c.h.b16 %v2329
  %v2414 = vunpack.c.l.b16 %v2330
  %v2415 = vunpack.c.h.b16 %v2330
  %v2416 = vunpack.c.l.b16 %v2331
  %v2417 = vunpack.c.h.b16 %v2331
  %v2418 = vunpack.c.l.b16 %v2332
  %v2419 = vunpack.c.h.b16 %v2332
  %v2420 = vunpack.c.l.b16 %v2333
  %v2421 = vunpack.c.h.b16 %v2333
  %v2422 = vunpack.c.l.b16 %v2334
  %v2423 = vunpack.c.h.b16 %v2334
  %v2424 = vunpack.c.l.b16 %v2335
  %v2425 = vunpack.c.h.b16 %v2335
  %v2426 = vunpack.c.l.b16 %v2336
  %v2427 = vunpack.c.h.b16 %v2336
  %v2428 = vunpack.c.l.b16 %v2337
  %v2429 = vunpack.c.h.b16 %v2337
  %v2430 = vunpack.c.l.b16 %v2338
  %v2431 = vunpack.c.h.b16 %v2338
  %v2432 = vunpack.c.l.b16 %v2339
  %v2433 = vunpack.c.h.b16 %v2339
  %v2434 = vunpack.c.l.b16 %v2340
  %v2435 = vunpack.c.h.b16 %v2340
  %v2436 = vunpack.c.l.b16 %v2341
  %v2437 = vunpack.c.h.b16 %v2341
  %v2438 = vpack.c.b16 %v2374, %v2374
  %v2439 = vpack.c.b16 %v2375, %v2375
  %v2440 = vpack.c.b16 %v2376, %v2376
  %v2441 = vpack.c.b16 %v2377, %v2377
  %v2442 = vpack.c.b16 %v2378, %v2378
  %v2443 = vpack.c.b16 %v2379, %v2379
  %v2444 = vpack.c.b16 %v2380, %v2380
  %v2445 = vpack.c.b16 %v2381, %v2381
  %v2446 = vpack.c.b16 %v2382, %v2382
  %v2447 = vpack.c.b16 %v2383, %v2383
  %v2448 = vpack.c.b16 %v2384, %v2384
  %v2449 = vpack.c.b16 %v2385, %v2385
  %v2450 = vpack.c.b16 %v2386, %v2386
  %v2451 = vpack.c.b16 %v2387, %v2387
  %v2452 = vpack.c.b16 %v2388, %v2388
  %v2453 = vpack.c.b16 %v2389, %v2389
  %v2454 = vpack.c.b16 %v2390, %v2390
  %v2455 = vpack.c.b16 %v2391, %v2391
  %v2456 = vpack.c.b16 %v2392, %v2392
  %v2457 = vpack.c.b16 %v2393, %v2393
  %v2458 = vpack.c.b16 %v2394, %v2394
  %v2459 = vpack.c.b16 %v2395, %v2395
  %v2460 = vpack.c.b16 %v2396, %v2396
  %v2461 = vpack.c.b16 %v2397, %v2397
  %v2462 = vpack.c.b16 %v2398, %v2398
  %v2463 = vpack.c.b16 %v2399, %v2399
  %v2464 = vpack.c.b16 %v2400, %v2400
  %v2465 = vpack.c.b16 %v2401, %v2401
  %v2466 = vpack.c.b16 %v2402, %v2402
  %v2467 = vpack.c.b16 %v2403, %v2403
  %v2468 = vpack.c.b16 %v2404, %v2404
  %v2469 = vpack.c.b16 %v2405, %v2405
  %v2470 = vpack.c.b16 %v2406, %v2406
  %v2471 = vpack.c.b16 %v2407, %v2407
  %v2472 = vpack.c.b16 %v2408, %v2408
  %v2473 = vpack.c.b16 %v2409, %v2409
  %v2474 = vpack.c.b16 %v2410, %v2410
  %v2475 = vpack.c.b16 %v2411, %v2411
  %v2476 = vpack.c.b16 %v2412, %v2412
  %v2477 = vpack.c.b16 %v2413, %v2413
  %v2478 = vpack.c.b16 %v2414, %v2414
  %v2479 = vpack.c.b16 %v2415, %v2415
  %v2480 = vpack.c.b16 %v2416, %v2416
  %v2481 = vpack.c.b16 %v2417, %v2417
  %v2482 = vpack.c.b16 %v2418, %v2418
  %v2483 = vpack.c.b16 %v2419, %v2419
  %v2484 = vpack.c.b16 %v2420, %v2420
  %v2485 = vpack.c.b16 %v2421, %v2421
  %v2486 = vpack.c.b16 %v2422, %v2422
  %v2487 = vpack.c.b16 %v2423, %v2423
  %v2488 = vpack.c.b16 %v2424, %v2424
  %v2489 = vpack.c.b16 %v2425, %v2425
  %v2490 = vpack.c.b16 %v2426, %v2426
  %v2491 = vpack.c.b16 %v2427, %v2427
  %v2492 = vpack.c.b16 %v2428, %v2428
  %v2493 = vpack.c.b16 %v2429, %v2429
  %v2494 = vpack.c.b16 %v2430, %v2430
  %v2495 = vpack.c.b16 %v2431, %v2431
  %v2496 = vpack.c.b16 %v2432, %v2432
  %v2497 = vpack.c.b16 %v2433, %v2433
  %v2498 = vpack.c.b16 %v2434, %v2434
  %v2499 = vpack.c.b16 %v2435, %v2435
  %v2500 = vpack.c.b16 %v2436, %v2436
  %v2501 = vpack.c.b16 %v2437, %v2437
  %2566 = vst.msk [vmem:[%s8] sm:$0xf] %vm1426, %v2438
  %2567 = vst.msk [vmem:[%s8 + $0x4] sm:$0xf] %vm1426, %v2439
  %2568 = vst.msk [vmem:[%s8 + $0x8] sm:$0xf] %vm1426, %v2440
  %2569 = vst.msk [vmem:[%s8 + $0xc] sm:$0xf] %vm1426, %v2441
  %2570 = vst.msk [vmem:[%s8 + $0x10] sm:$0xf] %vm1426, %v2442
  %2571 = vst.msk [vmem:[%s8 + $0x14] sm:$0xf] %vm1426, %v2443
  %2572 = vst.msk [vmem:[%s8 + $0x18] sm:$0xf] %vm1426, %v2444
  %2573 = vst.msk [vmem:[%s8 + $0x1c] sm:$0xf] %vm1426, %v2445
  %2574 = vst.msk [vmem:[%s8 + $0x20] sm:$0xf] %vm1426, %v2446
  %2575 = vst.msk [vmem:[%s8 + $0x24] sm:$0xf] %vm1426, %v2447
  %2576 = vst.msk [vmem:[%s8 + $0x28] sm:$0xf] %vm1426, %v2448
  %2577 = vst.msk [vmem:[%s8 + $0x2c] sm:$0xf] %vm1426, %v2449
  %2578 = vst.msk [vmem:[%s8 + $0x30] sm:$0xf] %vm1426, %v2450
  %2579 = vst.msk [vmem:[%s8 + $0x34] sm:$0xf] %vm1426, %v2451
  %2580 = vst.msk [vmem:[%s8 + $0x38] sm:$0xf] %vm1426, %v2452
  %2581 = vst.msk [vmem:[%s8 + $0x3c] sm:$0xf] %vm1426, %v2453
  %2582 = vst.msk [vmem:[%s8 + $0x40] sm:$0xf] %vm1426, %v2454
  %2583 = vst.msk [vmem:[%s8 + $0x44] sm:$0xf] %vm1426, %v2455
  %2584 = vst.msk [vmem:[%s8 + $0x48] sm:$0xf] %vm1426, %v2456
  %2585 = vst.msk [vmem:[%s8 + $0x4c] sm:$0xf] %vm1426, %v2457
  %2586 = vst.msk [vmem:[%s8 + $0x50] sm:$0xf] %vm1426, %v2458
  %2587 = vst.msk [vmem:[%s8 + $0x54] sm:$0xf] %vm1426, %v2459
  %2588 = vst.msk [vmem:[%s8 + $0x58] sm:$0xf] %vm1426, %v2460
  %2589 = vst.msk [vmem:[%s8 + $0x5c] sm:$0xf] %vm1426, %v2461
  %2590 = vst.msk [vmem:[%s8 + $0x60] sm:$0xf] %vm1426, %v2462
  %2591 = vst.msk [vmem:[%s8 + $0x64] sm:$0xf] %vm1426, %v2463
  %2592 = vst.msk [vmem:[%s8 + $0x68] sm:$0xf] %vm1426, %v2464
  %2593 = vst.msk [vmem:[%s8 + $0x6c] sm:$0xf] %vm1426, %v2465
  %2594 = vst.msk [vmem:[%s8 + $0x70] sm:$0xf] %vm1426, %v2466
  %2595 = vst.msk [vmem:[%s8 + $0x74] sm:$0xf] %vm1426, %v2467
  %2596 = vst.msk [vmem:[%s8 + $0x78] sm:$0xf] %vm1426, %v2468
  %2597 = vst.msk [vmem:[%s8 + $0x7c] sm:$0xf] %vm1426, %v2469
  %2598 = vst.msk [vmem:[%s8 + $0x80] sm:$0xf] %vm1426, %v2470
  %2599 = vst.msk [vmem:[%s8 + $0x84] sm:$0xf] %vm1426, %v2471
  %2600 = vst.msk [vmem:[%s8 + $0x88] sm:$0xf] %vm1426, %v2472
  %2601 = vst.msk [vmem:[%s8 + $0x8c] sm:$0xf] %vm1426, %v2473
  %2602 = vst.msk [vmem:[%s8 + $0x90] sm:$0xf] %vm1426, %v2474
  %2603 = vst.msk [vmem:[%s8 + $0x94] sm:$0xf] %vm1426, %v2475
  %2604 = vst.msk [vmem:[%s8 + $0x98] sm:$0xf] %vm1426, %v2476
  %2605 = vst.msk [vmem:[%s8 + $0x9c] sm:$0xf] %vm1426, %v2477
  %2606 = vst.msk [vmem:[%s8 + $0xa0] sm:$0xf] %vm1426, %v2478
  %2607 = vst.msk [vmem:[%s8 + $0xa4] sm:$0xf] %vm1426, %v2479
  %2608 = vst.msk [vmem:[%s8 + $0xa8] sm:$0xf] %vm1426, %v2480
  %2609 = vst.msk [vmem:[%s8 + $0xac] sm:$0xf] %vm1426, %v2481
  %2610 = vst.msk [vmem:[%s8 + $0xb0] sm:$0xf] %vm1426, %v2482
  %2611 = vst.msk [vmem:[%s8 + $0xb4] sm:$0xf] %vm1426, %v2483
  %2612 = vst.msk [vmem:[%s8 + $0xb8] sm:$0xf] %vm1426, %v2484
  %2613 = vst.msk [vmem:[%s8 + $0xbc] sm:$0xf] %vm1426, %v2485
  %2614 = vst.msk [vmem:[%s8 + $0xc0] sm:$0xf] %vm1426, %v2486
  %2615 = vst.msk [vmem:[%s8 + $0xc4] sm:$0xf] %vm1426, %v2487
  %2616 = vst.msk [vmem:[%s8 + $0xc8] sm:$0xf] %vm1426, %v2488
  %2617 = vst.msk [vmem:[%s8 + $0xcc] sm:$0xf] %vm1426, %v2489
  %2618 = vst.msk [vmem:[%s8 + $0xd0] sm:$0xf] %vm1426, %v2490
  %2619 = vst.msk [vmem:[%s8 + $0xd4] sm:$0xf] %vm1426, %v2491
  %2620 = vst.msk [vmem:[%s8 + $0xd8] sm:$0xf] %vm1426, %v2492
  %2621 = vst.msk [vmem:[%s8 + $0xdc] sm:$0xf] %vm1426, %v2493
  %2622 = vst.msk [vmem:[%s8 + $0xe0] sm:$0xf] %vm1426, %v2494
  %2623 = vst.msk [vmem:[%s8 + $0xe4] sm:$0xf] %vm1426, %v2495
  %2624 = vst.msk [vmem:[%s8 + $0xe8] sm:$0xf] %vm1426, %v2496
  %2625 = vst.msk [vmem:[%s8 + $0xec] sm:$0xf] %vm1426, %v2497
  %2626 = vst.msk [vmem:[%s8 + $0xf0] sm:$0xf] %vm1426, %v2498
  %2627 = vst.msk [vmem:[%s8 + $0xf4] sm:$0xf] %vm1426, %v2499
  %2628 = vst.msk [vmem:[%s8 + $0xf8] sm:$0xf] %vm1426, %v2500
  %2629 = vst.msk [vmem:[%s8 + $0xfc] sm:$0xf] %vm1426, %v2501
  // Predicated region
  $region30: #{c3_forward.3} parent=0 // pred_check
    _
  $region31: #{c3_forward.3} parent=0 // pred_check_branch
    %2631 = sbr.rel (0) target = $region33
  $region32: #{c3_forward.3} parent=0 // pred_region
    _
  $region33: #{c3_forward.3} parent=0 // pred_fallthru
    _
  // Predicated region
  $region34: #{c3_forward.3} parent=0 // pred_check
    _
  $region35: #{c3_forward.3} parent=0 // pred_check_branch
    %2633 = sbr.rel (0) target = $region37
  $region36: #{c3_forward.3} parent=0 // pred_region
    _
  $region37: #{c3_forward.3} parent=0 // pred_fallthru
    _
  // Predicated region
  $region38: #{c3_forward.3} parent=0 // pred_check
    _
  $region39: #{c3_forward.3} parent=0 // pred_check_branch
    %2635 = sbr.rel (0) target = $region41
  $region40: #{c3_forward.3} parent=0 // pred_region
    _
  $region41: #{c3_forward.3} parent=0 // pred_fallthru
    _
  // Predicated region
  $region42: #{c3_forward.3} parent=0 // pred_check
    _
  $region43: #{c3_forward.3} parent=0 // pred_check_branch
    %2637 = sbr.rel (0) target = $region45
  $region44: #{c3_forward.3} parent=0 // pred_region
    _
  $region45: #{c3_forward.3} parent=0 // pred_fallthru
    _

// kernel: c3_forward.4
$region0: #{c3_forward.4}
  #allocation0 [shape = 'u32[]', space=smem, size = 0x4, offset = 0x4, fixed_abs, tag = 'smem constant byte address 0x4 - core index']
  #allocation1 [shape = 'u32[144,128]{1,0:T(1,128)}', space=vmem, size = 0x12000, scoped, tag = 'internal scratch']
  #allocation2 [shape = 'bf16[312,8]{1,0:T(8,128)(2,1)}', space=vmem, size = 0x13800, scoped, tag = 'scratch operand']
  %s0 = inlined_call_operand.vmem [shape: bf16[2,256,8], index: 0, kind: input, shape index: {}]
  %s1 = inlined_call_operand.vmem [shape: bf16[8,8], index: 1, kind: input, shape index: {}]
  %s2 = inlined_call_operand.vmem [shape: f32[1,8], index: 2, kind: input, shape index: {}]
  %s3 = inlined_call_operand.vmem [shape: f32[1,8], index: 3, kind: input, shape index: {}]
  %s4 = inlined_call_operand.vmem [shape: bf16[3,3,8,8], index: 4, kind: input, shape index: {}]
  %s5 = inlined_call_operand.vmem [shape: f32[1,8], index: 5, kind: input, shape index: {}]
  %s6 = inlined_call_operand.vmem [shape: f32[1,8], index: 6, kind: input, shape index: {}]
  %s7 = inlined_call_operand.vmem [shape: bf16[2,256,8], index: 7, kind: output, shape index: {}]
  %s8 = sld [smem:[#allocation0]]
  $region61: #{c3_forward.4} parent=0
    _
  %s10 = ssub.s32 1, %s8
  %s11 = scalar_select 0, %s10, %s8
  loop: start=0, step=1, limit=4
  $region2: #{c3_forward.4} parent=0 // loop_pre_header
    _
  $region3: #{c3_forward.4} parent=0 // loop_header
    %s13 = sphi 0, %s17
    %p14 = scmp.ge.s32.totalorder %s13, 4
    %s20 = sphi 0, %s32
    %s21 = sphi 0, %s28
    %s22 = sphi 0, %s20
    %s23 = sphi 0, %s21
    %s24 = sphi 0, %s22
    %s25 = sphi 0, %s23
    %s35 = sphi 0, %s37
    %s38 = sphi 0, %s35
    %s39 = sphi 0, %s38
    %s55 = sphi 0, %s39
    %s59 = sphi 0, %s59
    %s61 = sphi 0, %s59
    %s62 = sphi 0, %s61
    %s76 = sphi 0, %s62
    %s80 = sphi 0, %s80
    %s82 = sphi 0, %s80
    %s83 = sphi 0, %s82
    %s97 = sphi 0, %s83
    %s101 = sphi 0, %s101
    %s103 = sphi 0, %s101
    %s104 = sphi 0, %s103
    %s118 = sphi 0, %s104
    %s122 = sphi 0, %s122
    %s124 = sphi 0, %s122
    %s125 = sphi 0, %s124
    %s139 = sphi 0, %s125
    %s143 = sphi 0, %s143
    %s145 = sphi 0, %s143
    %s146 = sphi 0, %s145
    %s160 = sphi 0, %s146
    %s164 = sphi 0, %s164
    %s166 = sphi 0, %s164
    %s167 = sphi 0, %s166
    %s181 = sphi 0, %s167
    %s189 = sphi 0, %s191
    %s192 = sphi 0, %s189
    %s193 = sphi 0, %s192
    %s209 = sphi 0, %s193
  $region4: #{c3_forward.4} parent=0 // loop_header_branch
    %16 = sbr.rel (%p14) target = $region8
  $region5: #{c3_forward.4} parent=0 // loop_body
    %s18 = ssub.s32 %s13, 1
    %s19 = ssub.s32 %s13, 2
    %s26 = sadd.s32 1, %s21
    %p27 = scmp.ge.s32.totalorder %s26, 1
    %s28 = scalar_select %p27, 0, %s26
    %s29 = sadd.s32 1, %s20
    %s30 = scalar_select %p27, %s29, %s20
    %p31 = scmp.ge.s32.totalorder %s30, 2
    %s32 = scalar_select %p31, 0, %s30
    %s33 = ssub.s32 %s20, %s32
    %p34 = scmp.eq.s32.totalorder %s33, 0
    %s36 = sadd.s32 %s35, 1
    %s37 = scalar_select %p34, %s35, %s36
    %p40 = pneg %p34
    %p41 = scmp.eq.s32.totalorder %s13, 1
    %p42 = por %p40, %p41
    %p43 = scmp.ne.s32.totalorder %s35, %s38
    %p44 = scmp.eq.s32.totalorder %s13, 0
    %p45 = por %p43, %p44
    %p46 = scmp.ne.s32.totalorder %s35, %s38
    %p47 = scmp.eq.s32.totalorder %s18, 1
    %p48 = por %p46, %p47
    %p49 = scmp.ne.s32.totalorder %s38, %s39
    %p50 = scmp.eq.s32.totalorder %s18, 0
    %p51 = por %p49, %p50
    %p52 = scmp.ne.s32.totalorder %s38, %s39
    %p53 = scmp.eq.s32.totalorder %s19, 1
    %p54 = por %p52, %p53
    %p56 = scmp.ne.s32.totalorder %s39, %s55
    %p57 = scmp.eq.s32.totalorder %s19, 0
    %p58 = por %p56, %p57
    %s60 = sadd.s32 %s59, 1
    %p63 = scmp.eq.s32.totalorder %s13, 1
    %p64 = scmp.ne.s32.totalorder %s59, %s61
    %p65 = scmp.eq.s32.totalorder %s13, 0
    %p66 = por %p64, %p65
    %p67 = scmp.ne.s32.totalorder %s59, %s61
    %p68 = scmp.eq.s32.totalorder %s18, 1
    %p69 = por %p67, %p68
    %p70 = scmp.ne.s32.totalorder %s61, %s62
    %p71 = scmp.eq.s32.totalorder %s18, 0
    %p72 = por %p70, %p71
    %p73 = scmp.ne.s32.totalorder %s61, %s62
    %p74 = scmp.eq.s32.totalorder %s19, 1
    %p75 = por %p73, %p74
    %p77 = scmp.ne.s32.totalorder %s62, %s76
    %p78 = scmp.eq.s32.totalorder %s19, 0
    %p79 = por %p77, %p78
    %s81 = sadd.s32 %s80, 1
    %p84 = scmp.eq.s32.totalorder %s13, 1
    %p85 = scmp.ne.s32.totalorder %s80, %s82
    %p86 = scmp.eq.s32.totalorder %s13, 0
    %p87 = por %p85, %p86
    %p88 = scmp.ne.s32.totalorder %s80, %s82
    %p89 = scmp.eq.s32.totalorder %s18, 1
    %p90 = por %p88, %p89
    %p91 = scmp.ne.s32.totalorder %s82, %s83
    %p92 = scmp.eq.s32.totalorder %s18, 0
    %p93 = por %p91, %p92
    %p94 = scmp.ne.s32.totalorder %s82, %s83
    %p95 = scmp.eq.s32.totalorder %s19, 1
    %p96 = por %p94, %p95
    %p98 = scmp.ne.s32.totalorder %s83, %s97
    %p99 = scmp.eq.s32.totalorder %s19, 0
    %p100 = por %p98, %p99
    %s102 = sadd.s32 %s101, 1
    %p105 = scmp.eq.s32.totalorder %s13, 1
    %p106 = scmp.ne.s32.totalorder %s101, %s103
    %p107 = scmp.eq.s32.totalorder %s13, 0
    %p108 = por %p106, %p107
    %p109 = scmp.ne.s32.totalorder %s101, %s103
    %p110 = scmp.eq.s32.totalorder %s18, 1
    %p111 = por %p109, %p110
    %p112 = scmp.ne.s32.totalorder %s103, %s104
    %p113 = scmp.eq.s32.totalorder %s18, 0
    %p114 = por %p112, %p113
    %p115 = scmp.ne.s32.totalorder %s103, %s104
    %p116 = scmp.eq.s32.totalorder %s19, 1
    %p117 = por %p115, %p116
    %p119 = scmp.ne.s32.totalorder %s104, %s118
    %p120 = scmp.eq.s32.totalorder %s19, 0
    %p121 = por %p119, %p120
    %s123 = sadd.s32 %s122, 1
    %p126 = scmp.eq.s32.totalorder %s13, 1
    %p127 = scmp.ne.s32.totalorder %s122, %s124
    %p128 = scmp.eq.s32.totalorder %s13, 0
    %p129 = por %p127, %p128
    %p130 = scmp.ne.s32.totalorder %s122, %s124
    %p131 = scmp.eq.s32.totalorder %s18, 1
    %p132 = por %p130, %p131
    %p133 = scmp.ne.s32.totalorder %s124, %s125
    %p134 = scmp.eq.s32.totalorder %s18, 0
    %p135 = por %p133, %p134
    %p136 = scmp.ne.s32.totalorder %s124, %s125
    %p137 = scmp.eq.s32.totalorder %s19, 1
    %p138 = por %p136, %p137
    %p140 = scmp.ne.s32.totalorder %s125, %s139
    %p141 = scmp.eq.s32.totalorder %s19, 0
    %p142 = por %p140, %p141
    %s144 = sadd.s32 %s143, 1
    %p147 = scmp.eq.s32.totalorder %s13, 1
    %p148 = scmp.ne.s32.totalorder %s143, %s145
    %p149 = scmp.eq.s32.totalorder %s13, 0
    %p150 = por %p148, %p149
    %p151 = scmp.ne.s32.totalorder %s143, %s145
    %p152 = scmp.eq.s32.totalorder %s18, 1
    %p153 = por %p151, %p152
    %p154 = scmp.ne.s32.totalorder %s145, %s146
    %p155 = scmp.eq.s32.totalorder %s18, 0
    %p156 = por %p154, %p155
    %p157 = scmp.ne.s32.totalorder %s145, %s146
    %p158 = scmp.eq.s32.totalorder %s19, 1
    %p159 = por %p157, %p158
    %p161 = scmp.ne.s32.totalorder %s146, %s160
    %p162 = scmp.eq.s32.totalorder %s19, 0
    %p163 = por %p161, %p162
    %s165 = sadd.s32 %s164, 1
    %p168 = scmp.eq.s32.totalorder %s13, 1
    %p169 = scmp.ne.s32.totalorder %s164, %s166
    %p170 = scmp.eq.s32.totalorder %s13, 0
    %p171 = por %p169, %p170
    %p172 = scmp.ne.s32.totalorder %s164, %s166
    %p173 = scmp.eq.s32.totalorder %s18, 1
    %p174 = por %p172, %p173
    %p175 = scmp.ne.s32.totalorder %s166, %s167
    %p176 = scmp.eq.s32.totalorder %s18, 0
    %p177 = por %p175, %p176
    %p178 = scmp.ne.s32.totalorder %s166, %s167
    %p179 = scmp.eq.s32.totalorder %s19, 1
    %p180 = por %p178, %p179
    %p182 = scmp.ne.s32.totalorder %s167, %s181
    %p183 = scmp.eq.s32.totalorder %s19, 0
    %p184 = por %p182, %p183
    %s185 = ssub.s32 %s20, %s32
    %s186 = ssub.s32 %s21, %s28
    %s187 = sor.u32 %s185, %s186
    %p188 = scmp.eq.s32.totalorder %s187, 0
    %s190 = sadd.s32 %s189, 1
    %s191 = scalar_select %p188, %s189, %s190
    %p194 = pneg %p188
    %p195 = scmp.eq.s32.totalorder %s13, 1
    %p196 = por %p194, %p195
    %p197 = scmp.ne.s32.totalorder %s189, %s192
    %p198 = scmp.eq.s32.totalorder %s13, 0
    %p199 = por %p197, %p198
    %p200 = scmp.ne.s32.totalorder %s189, %s192
    %p201 = scmp.eq.s32.totalorder %s18, 1
    %p202 = por %p200, %p201
    %p203 = scmp.ne.s32.totalorder %s192, %s193
    %p204 = scmp.eq.s32.totalorder %s18, 0
    %p205 = por %p203, %p204
    %p206 = scmp.ne.s32.totalorder %s192, %s193
    %p207 = scmp.eq.s32.totalorder %s19, 1
    %p208 = por %p206, %p207
    %p210 = scmp.ne.s32.totalorder %s193, %s209
    %p211 = scmp.eq.s32.totalorder %s19, 0
    %p212 = por %p210, %p211
    %p213 = scmp.le.s32.totalorder 1, %s13
    %p214 = scmp.lt.s32.totalorder %s13, 3
    %p215 = pnand %p213, %p214
    %p216 = pneg %p215
    // Predicated region
    $region9: #{c3_forward.4} parent=5 // pred_check
      _
    $region10: #{c3_forward.4} parent=5 // pred_check_branch
      %218 = sbr.rel (%p215) target = $region12
    $region11: #{c3_forward.4} parent=5 // pred_region
      %s219 = ssub.s32 %s13, 1
      // Predicated region
      $region13: #{c3_forward.4} parent=11 // pred_check
        %p220 = pneg %p72
      $region14: #{c3_forward.4} parent=11 // pred_check_branch
        %222 = sbr.rel (%p220) target = $region16
      $region15: #{c3_forward.4} parent=11 // pred_region
        _
      $region16: #{c3_forward.4} parent=11 // pred_fallthru
        _
      // Predicated region
      $region17: #{c3_forward.4} parent=11 // pred_check
        %p223 = pneg %p93
      $region18: #{c3_forward.4} parent=11 // pred_check_branch
        %225 = sbr.rel (%p223) target = $region20
      $region19: #{c3_forward.4} parent=11 // pred_region
        _
      $region20: #{c3_forward.4} parent=11 // pred_fallthru
        _
      // Predicated region
      $region21: #{c3_forward.4} parent=11 // pred_check
        %p226 = pneg %p114
      $region22: #{c3_forward.4} parent=11 // pred_check_branch
        %228 = sbr.rel (%p226) target = $region24
      $region23: #{c3_forward.4} parent=11 // pred_region
        _
      $region24: #{c3_forward.4} parent=11 // pred_fallthru
        _
      // Predicated region
      $region25: #{c3_forward.4} parent=11 // pred_check
        %p229 = pneg %p135
      $region26: #{c3_forward.4} parent=11 // pred_check_branch
        %231 = sbr.rel (%p229) target = $region28
      $region27: #{c3_forward.4} parent=11 // pred_region
        _
      $region28: #{c3_forward.4} parent=11 // pred_fallthru
        _
      // Predicated region
      $region29: #{c3_forward.4} parent=11 // pred_check
        %p232 = pneg %p156
      $region30: #{c3_forward.4} parent=11 // pred_check_branch
        %234 = sbr.rel (%p232) target = $region32
      $region31: #{c3_forward.4} parent=11 // pred_region
        _
      $region32: #{c3_forward.4} parent=11 // pred_fallthru
        _
      // Predicated region
      $region33: #{c3_forward.4} parent=11 // pred_check
        %p235 = pneg %p177
      $region34: #{c3_forward.4} parent=11 // pred_check_branch
        %237 = sbr.rel (%p235) target = $region36
      $region35: #{c3_forward.4} parent=11 // pred_region
        _
      $region36: #{c3_forward.4} parent=11 // pred_fallthru
        _
    $region12: #{c3_forward.4} parent=5 // pred_fallthru
      _
    %p238 = scmp.lt.s32.totalorder %s13, 2
    // Predicated region
    $region37: #{c3_forward.4} parent=5 // pred_check
      %p239 = pneg %p238
    $region38: #{c3_forward.4} parent=5 // pred_check_branch
      %241 = sbr.rel (%p239) target = $region40
    $region39: #{c3_forward.4} parent=5 // pred_region
      // Predicated region
      $region41: #{c3_forward.4} parent=39 // pred_check
        %p242 = pneg %p45
      $region42: #{c3_forward.4} parent=39 // pred_check_branch
        %244 = sbr.rel (%p242) target = $region44
      $region43: #{c3_forward.4} parent=39 // pred_region
        %p245 = scmp.lt.s32.totalorder %s20, 1
        %s246 = scalar_select %p245, %s20, 1
        %s247 = smul.addr %s246, 32
        %s248 = smul.addr %s247, 4
        %s249 = scalar_lea.vmem %s0, %s248
      $region44: #{c3_forward.4} parent=39 // pred_fallthru
        _
    $region40: #{c3_forward.4} parent=5 // pred_fallthru
      _
    %p250 = scmp.le.s32.totalorder 1, %s13
    %p251 = scmp.lt.s32.totalorder %s13, 3
    %p252 = pnand %p250, %p251
    %p253 = pneg %p252
    // Predicated region
    $region45: #{c3_forward.4} parent=5 // pred_check
      _
    $region46: #{c3_forward.4} parent=5 // pred_check_branch
      %255 = sbr.rel (%p252) target = $region48
    $region47: #{c3_forward.4} parent=5 // pred_region
      %s256 = ssub.s32 %s13, 1
      %p257 = scmp.lt.s32.totalorder %s22, 1
      %s258 = scalar_select %p257, %s22, 1
      %s259 = smul.addr %s258, 32
      %s260 = smul.addr %s259, 4
      %s261 = scalar_lea.vmem %s0, %s260
      %p262 = pneg %p51
      %p263 = pneg %p48
      %p264 = pneg %p72
      %p265 = pneg %p69
      %p266 = pneg %p93
      %p267 = pneg %p90
      %p268 = pneg %p114
      %p269 = pneg %p111
      %p270 = pneg %p135
      %p271 = pneg %p132
      %p272 = pneg %p156
      %p273 = pneg %p153
      %p274 = pneg %p177
      %p275 = pneg %p174
      %p276 = pneg %p205
      %p277 = pneg %p202
      %s278 = smul.u32 32, %s23
      %p279 = scmp.lt.s32.totalorder %s22, 1
      %s280 = scalar_select %p279, %s22, 1
      %p281 = scmp.lt.s32.totalorder %s278, 31
      %s282 = scalar_select %p281, %s278, 31
      %s283 = smul.addr %s280, 32
      %s284 = sadd.s32 %s282, %s283
      %s285 = smul.addr %s284, 4
      %s286 = scalar_lea.vmem %s7, %s285
      %p287 = scmp.lt.s32.totalorder %s22, 1
      %s288 = scalar_select %p287, %s22, 1
      %s289 = smul.addr %s288, 32
      %s290 = smul.addr %s289, 4
      %s291 = scalar_lea.vmem %s0, %s290
      %s292 = smul.u32 32, %s23
      %p293 = scmp.lt.s32.totalorder %s22, 1
      %s294 = scalar_select %p293, %s22, 1
      %p295 = scmp.lt.s32.totalorder %s292, 31
      %s296 = scalar_select %p295, %s292, 31
      %s297 = smul.addr %s294, 32
      %s298 = sadd.s32 %s296, %s297
      %s299 = smul.addr %s298, 4
      %s300 = scalar_lea.vmem %s7, %s299
      %s301 = smul.u32 32, %s23
      %s305 = smul.u32 %s23, 256
      %vm306 = vcmask 60416
      %307 = vst.msk [vmem:[#allocation2] sm:$0xf] %vm306, 0
      %308 = vst.msk [vmem:[#allocation2 + $0x4] sm:$0xf] %vm306, 0
      %309 = vst.msk [vmem:[#allocation2 + $0x98] sm:$0xf] %vm306, 0
      %s310 = sshra.s32 %s305, 3
      %s311 = sand.u32 %s305, 7
      %s312 = smul.addr %s310, 4
      %s313 = scalar_lea.vmem %s291, %s312
      %v314 = vld [vmem:[%s313] sm:$0xf]
      %v315 = vld [vmem:[%s313 + $0x4] sm:$0xf]
      %v316 = vld [vmem:[%s313 + $0x8] sm:$0xf]
      %v317 = vld [vmem:[%s313 + $0xc] sm:$0xf]
      %v318 = vld [vmem:[%s313 + $0x10] sm:$0xf]
      %v319 = vld [vmem:[%s313 + $0x14] sm:$0xf]
      %v320 = vld [vmem:[%s313 + $0x18] sm:$0xf]
      %v321 = vld [vmem:[%s313 + $0x1c] sm:$0xf]
      %v322 = vld [vmem:[%s313 + $0x20] sm:$0xf]
      %v323 = vld [vmem:[%s313 + $0x24] sm:$0xf]
      %v324 = vld [vmem:[%s313 + $0x28] sm:$0xf]
      %v325 = vld [vmem:[%s313 + $0x2c] sm:$0xf]
      %v326 = vld [vmem:[%s313 + $0x30] sm:$0xf]
      %v327 = vld [vmem:[%s313 + $0x34] sm:$0xf]
      %v328 = vld [vmem:[%s313 + $0x38] sm:$0xf]
      %v329 = vld [vmem:[%s313 + $0x3c] sm:$0xf]
      %v330 = vld [vmem:[%s313 + $0x40] sm:$0xf]
      %v331 = vld [vmem:[%s313 + $0x44] sm:$0xf]
      %v332 = vld [vmem:[%s313 + $0x48] sm:$0xf]
      %v333 = vld [vmem:[%s313 + $0x4c] sm:$0xf]
      %v334 = vld [vmem:[%s313 + $0x50] sm:$0xf]
      %v335 = vld [vmem:[%s313 + $0x54] sm:$0xf]
      %v336 = vld [vmem:[%s313 + $0x58] sm:$0xf]
      %v337 = vld [vmem:[%s313 + $0x5c] sm:$0xf]
      %v338 = vld [vmem:[%s313 + $0x60] sm:$0xf]
      %v339 = vld [vmem:[%s313 + $0x64] sm:$0xf]
      %v340 = vld [vmem:[%s313 + $0x68] sm:$0xf]
      %v341 = vld [vmem:[%s313 + $0x6c] sm:$0xf]
      %v342 = vld [vmem:[%s313 + $0x70] sm:$0xf]
      %v343 = vld [vmem:[%s313 + $0x74] sm:$0xf]
      %v344 = vld [vmem:[%s313 + $0x78] sm:$0xf]
      %v345 = vld [vmem:[%s313 + $0x7c] sm:$0xf]
      %v346 = vld [vmem:[%s1] sm:$0xf]
      %v379 = vunpack.c.l.b16 %v314
      %v380 = vunpack.c.l.b16 %v315
      %v381 = vunpack.c.l.b16 %v316
      %v382 = vunpack.c.l.b16 %v317
      %v383 = vunpack.c.l.b16 %v318
      %v384 = vunpack.c.l.b16 %v319
      %v385 = vunpack.c.l.b16 %v320
      %v386 = vunpack.c.l.b16 %v321
      %v387 = vunpack.c.l.b16 %v322
      %v388 = vunpack.c.l.b16 %v323
      %v389 = vunpack.c.l.b16 %v324
      %v390 = vunpack.c.l.b16 %v325
      %v391 = vunpack.c.l.b16 %v326
      %v392 = vunpack.c.l.b16 %v327
      %v393 = vunpack.c.l.b16 %v328
      %v394 = vunpack.c.l.b16 %v329
      %v395 = vunpack.c.l.b16 %v330
      %v396 = vunpack.c.l.b16 %v331
      %v397 = vunpack.c.l.b16 %v332
      %v398 = vunpack.c.l.b16 %v333
      %v399 = vunpack.c.l.b16 %v334
      %v400 = vunpack.c.l.b16 %v335
      %v401 = vunpack.c.l.b16 %v336
      %v402 = vunpack.c.l.b16 %v337
      %v403 = vunpack.c.l.b16 %v338
      %v404 = vunpack.c.l.b16 %v339
      %v405 = vunpack.c.l.b16 %v340
      %v406 = vunpack.c.l.b16 %v341
      %v407 = vunpack.c.l.b16 %v342
      %v408 = vunpack.c.l.b16 %v343
      %v409 = vunpack.c.l.b16 %v344
      %v410 = vunpack.c.l.b16 %v345
      %v411 = vpack.c.b16 %v380, %v379
      %v412 = vpack.c.b16 %v382, %v381
      %v413 = vpack.c.b16 %v384, %v383
      %v414 = vpack.c.b16 %v386, %v385
      %v415 = vpack.c.b16 %v388, %v387
      %v416 = vpack.c.b16 %v390, %v389
      %v417 = vpack.c.b16 %v392, %v391
      %v418 = vpack.c.b16 %v394, %v393
      %v419 = vpack.c.b16 %v396, %v395
      %v420 = vpack.c.b16 %v398, %v397
      %v421 = vpack.c.b16 %v400, %v399
      %v422 = vpack.c.b16 %v402, %v401
      %v423 = vpack.c.b16 %v404, %v403
      %v424 = vpack.c.b16 %v406, %v405
      %v425 = vpack.c.b16 %v408, %v407
      %v426 = vpack.c.b16 %v410, %v409
      %vm427 = vcmask 64512
      %v429 = vsel %vm427, %v411, 0
      %v432 = vsel %vm427, %v412, 0
      %v435 = vsel %vm427, %v413, 0
      %v438 = vsel %vm427, %v414, 0
      %v441 = vsel %vm427, %v415, 0
      %v444 = vsel %vm427, %v416, 0
      %v447 = vsel %vm427, %v417, 0
      %v450 = vsel %vm427, %v418, 0
      %v453 = vsel %vm427, %v419, 0
      %v456 = vsel %vm427, %v420, 0
      %v459 = vsel %vm427, %v421, 0
      %v462 = vsel %vm427, %v422, 0
      %v465 = vsel %vm427, %v423, 0
      %v468 = vsel %vm427, %v424, 0
      %v471 = vsel %vm427, %v425, 0
      %v474 = vsel %vm427, %v426, 0
      %vm476 = vcmask 1043456
      %v478 = vsel %vm476, %v346, 0
      %480 = vmatprep.subr.bf16.mxu0 0
      %481 = vmatpush1.bf16.msra.mxu0 %v478
      %482 = vmatprep.subr.bf16.mxu0 0
      %483 = vmatpush1.bf16.msra.mxu0 0
      %484 = vmatprep.subr.bf16.mxu0 0
      %485 = vmatpush1.bf16.msra.mxu0 0
      %486 = vmatprep.subr.bf16.mxu0 0
      %487 = vmatpush1.bf16.msra.mxu0 0
      %488 = vmatprep.subr.bf16.mxu0 0
      %489 = vmatpush1.bf16.msra.mxu0 0
      %490 = vmatprep.subr.bf16.mxu0 0
      %491 = vmatpush1.bf16.msra.mxu0 0
      %492 = vmatprep.subr.bf16.mxu0 0
      %493 = vmatpush1.bf16.msra.mxu0 0
      %494 = vmatprep.subr.bf16.mxu0 0
      %495 = vmatpush1.bf16.msra.mxu0 0
      %496 = vmatprep.subr.bf16.mxu0 0
      %497 = vmatpush1.bf16.msra.mxu0 0
      %498 = vmatprep.subr.bf16.mxu0 0
      %499 = vmatpush1.bf16.msra.mxu0 0
      %500 = vmatprep.subr.bf16.mxu0 0
      %501 = vmatpush1.bf16.msra.mxu0 0
      %502 = vmatprep.subr.bf16.mxu0 0
      %503 = vmatpush1.bf16.msra.mxu0 0
      %504 = vmatprep.subr.bf16.mxu0 0
      %505 = vmatpush1.bf16.msra.mxu0 0
      %506 = vmatprep.subr.bf16.mxu0 0
      %507 = vmatpush1.bf16.msra.mxu0 0
      %508 = vmatprep.subr.bf16.mxu0 0
      %509 = vmatpush1.bf16.msra.mxu0 0
      %510 = vmatprep.subr.bf16.mxu0 0
      %511 = vmatpush1.bf16.msra.mxu0 0
      %512 = vmatprep.mubr.bf16.mxu0 0
      %513 = vmatmul.mubr.bf16.gmra.mrb[0].mxu0 %v429
      %v514 = vpop.f32.mrb[0].mxu0
      %v515 = vadd.f32 0.0, %v514
      %v516 = vpop.f32.mrb[0].mxu0
      %v517 = vpop.f32.mrb[0].mxu0
      %v518 = vadd.f32 0.0, %v517
      %v519 = vpop.f32.mrb[0].mxu0
      %520 = vmatprep.mubr.bf16.mxu0 0
      %521 = vmatmul.mubr.bf16.gmra.mrb[0].mxu0 %v432
      %v522 = vpop.f32.mrb[0].mxu0
      %v523 = vadd.f32 0.0, %v522
      %v524 = vpop.f32.mrb[0].mxu0
      %v525 = vpop.f32.mrb[0].mxu0
      %v526 = vadd.f32 0.0, %v525
      %v527 = vpop.f32.mrb[0].mxu0
      %528 = vmatprep.mubr.bf16.mxu0 0
      %529 = vmatmul.mubr.bf16.gmra.mrb[0].mxu0 %v435
      %v530 = vpop.f32.mrb[0].mxu0
      %v531 = vadd.f32 0.0, %v530
      %v532 = vpop.f32.mrb[0].mxu0
      %v533 = vpop.f32.mrb[0].mxu0
      %v534 = vadd.f32 0.0, %v533
      %v535 = vpop.f32.mrb[0].mxu0
      %536 = vmatprep.mubr.bf16.mxu0 0
      %537 = vmatmul.mubr.bf16.gmra.mrb[0].mxu0 %v438
      %v538 = vpop.f32.mrb[0].mxu0
      %v539 = vadd.f32 0.0, %v538
      %v540 = vpop.f32.mrb[0].mxu0
      %v541 = vpop.f32.mrb[0].mxu0
      %v542 = vadd.f32 0.0, %v541
      %v543 = vpop.f32.mrb[0].mxu0
      %544 = vmatprep.mubr.bf16.mxu0 0
      %545 = vmatmul.mubr.bf16.gmra.mrb[0].mxu0 %v441
      %v546 = vpop.f32.mrb[0].mxu0
      %v547 = vadd.f32 0.0, %v546
      %v548 = vpop.f32.mrb[0].mxu0
      %v549 = vpop.f32.mrb[0].mxu0
      %v550 = vadd.f32 0.0, %v549
      %v551 = vpop.f32.mrb[0].mxu0
      %552 = vmatprep.mubr.bf16.mxu0 0
      %553 = vmatmul.mubr.bf16.gmra.mrb[0].mxu0 %v444
      %v554 = vpop.f32.mrb[0].mxu0
      %v555 = vadd.f32 0.0, %v554
      %v556 = vpop.f32.mrb[0].mxu0
      %v557 = vpop.f32.mrb[0].mxu0
      %v558 = vadd.f32 0.0, %v557
      %v559 = vpop.f32.mrb[0].mxu0
      %560 = vmatprep.mubr.bf16.mxu0 0
      %561 = vmatmul.mubr.bf16.gmra.mrb[0].mxu0 %v447
      %v562 = vpop.f32.mrb[0].mxu0
      %v563 = vadd.f32 0.0, %v562
      %v564 = vpop.f32.mrb[0].mxu0
      %v565 = vpop.f32.mrb[0].mxu0
      %v566 = vadd.f32 0.0, %v565
      %v567 = vpop.f32.mrb[0].mxu0
      %568 = vmatprep.mubr.bf16.mxu0 0
      %569 = vmatmul.mubr.bf16.gmra.mrb[0].mxu0 %v450
      %v570 = vpop.f32.mrb[0].mxu0
      %v571 = vadd.f32 0.0, %v570
      %v572 = vpop.f32.mrb[0].mxu0
      %v573 = vpop.f32.mrb[0].mxu0
      %v574 = vadd.f32 0.0, %v573
      %v575 = vpop.f32.mrb[0].mxu0
      %576 = vmatprep.mubr.bf16.mxu0 0
      %577 = vmatmul.mubr.bf16.gmra.mrb[0].mxu0 %v453
      %v578 = vpop.f32.mrb[0].mxu0
      %v579 = vadd.f32 0.0, %v578
      %v580 = vpop.f32.mrb[0].mxu0
      %v581 = vpop.f32.mrb[0].mxu0
      %v582 = vadd.f32 0.0, %v581
      %v583 = vpop.f32.mrb[0].mxu0
      %584 = vmatprep.mubr.bf16.mxu0 0
      %585 = vmatmul.mubr.bf16.gmra.mrb[0].mxu0 %v456
      %v586 = vpop.f32.mrb[0].mxu0
      %v587 = vadd.f32 0.0, %v586
      %v588 = vpop.f32.mrb[0].mxu0
      %v589 = vpop.f32.mrb[0].mxu0
      %v590 = vadd.f32 0.0, %v589
      %v591 = vpop.f32.mrb[0].mxu0
      %592 = vmatprep.mubr.bf16.mxu0 0
      %593 = vmatmul.mubr.bf16.gmra.mrb[0].mxu0 %v459
      %v594 = vpop.f32.mrb[0].mxu0
      %v595 = vadd.f32 0.0, %v594
      %v596 = vpop.f32.mrb[0].mxu0
      %v597 = vpop.f32.mrb[0].mxu0
      %v598 = vadd.f32 0.0, %v597
      %v599 = vpop.f32.mrb[0].mxu0
      %600 = vmatprep.mubr.bf16.mxu0 0
      %601 = vmatmul.mubr.bf16.gmra.mrb[0].mxu0 %v462
      %v602 = vpop.f32.mrb[0].mxu0
      %v603 = vadd.f32 0.0, %v602
      %v604 = vpop.f32.mrb[0].mxu0
      %v605 = vpop.f32.mrb[0].mxu0
      %v606 = vadd.f32 0.0, %v605
      %v607 = vpop.f32.mrb[0].mxu0
      %608 = vmatprep.mubr.bf16.mxu0 0
      %609 = vmatmul.mubr.bf16.gmra.mrb[0].mxu0 %v465
      %v610 = vpop.f32.mrb[0].mxu0
      %v611 = vadd.f32 0.0, %v610
      %v612 = vpop.f32.mrb[0].mxu0
      %v613 = vpop.f32.mrb[0].mxu0
      %v614 = vadd.f32 0.0, %v613
      %v615 = vpop.f32.mrb[0].mxu0
      %616 = vmatprep.mubr.bf16.mxu0 0
      %617 = vmatmul.mubr.bf16.gmra.mrb[0].mxu0 %v468
      %v618 = vpop.f32.mrb[0].mxu0
      %v619 = vadd.f32 0.0, %v618
      %v620 = vpop.f32.mrb[0].mxu0
      %v621 = vpop.f32.mrb[0].mxu0
      %v622 = vadd.f32 0.0, %v621
      %v623 = vpop.f32.mrb[0].mxu0
      %624 = vmatprep.mubr.bf16.mxu0 0
      %625 = vmatmul.mubr.bf16.gmra.mrb[0].mxu0 %v471
      %v626 = vpop.f32.mrb[0].mxu0
      %v627 = vadd.f32 0.0, %v626
      %v628 = vpop.f32.mrb[0].mxu0
      %v629 = vpop.f32.mrb[0].mxu0
      %v630 = vadd.f32 0.0, %v629
      %v631 = vpop.f32.mrb[0].mxu0
      %632 = vmatprep.mubr.bf16.mxu0 0
      %633 = vmatmul.mubr.bf16.gmra.mrb[0].mxu0 %v474
      %v634 = vpop.f32.mrb[0].mxu0
      %v635 = vadd.f32 0.0, %v634
      %v636 = vpop.f32.mrb[0].mxu0
      %v637 = vpop.f32.mrb[0].mxu0
      %v638 = vadd.f32 0.0, %v637
      %v639 = vpop.f32.mrb[0].mxu0
      %640 = vdwg.mxu0
      %v641 = vld [vmem:[%s2] sm:$0x1]
      %v643 = vlaneseq
      %v644 = vshrl.u32 %v643, 7
      %v645 = vsub.s32 0, %v644
      %v646 = vrot.slane %v641, %v645
      %v648 = vmul.f32 %v515, %v646
      %v649 = vmul.f32 %v518, %v646
      %v650 = vmul.f32 %v523, %v646
      %v651 = vmul.f32 %v526, %v646
      %v652 = vmul.f32 %v531, %v646
      %v653 = vmul.f32 %v534, %v646
      %v654 = vmul.f32 %v539, %v646
      %v655 = vmul.f32 %v542, %v646
      %v656 = vmul.f32 %v547, %v646
      %v657 = vmul.f32 %v550, %v646
      %v658 = vmul.f32 %v555, %v646
      %v659 = vmul.f32 %v558, %v646
      %v660 = vmul.f32 %v563, %v646
      %v661 = vmul.f32 %v566, %v646
      %v662 = vmul.f32 %v571, %v646
      %v663 = vmul.f32 %v574, %v646
      %v664 = vmul.f32 %v579, %v646
      %v665 = vmul.f32 %v582, %v646
      %v666 = vmul.f32 %v587, %v646
      %v667 = vmul.f32 %v590, %v646
      %v668 = vmul.f32 %v595, %v646
      %v669 = vmul.f32 %v598, %v646
      %v670 = vmul.f32 %v603, %v646
      %v671 = vmul.f32 %v606, %v646
      %v672 = vmul.f32 %v611, %v646
      %v673 = vmul.f32 %v614, %v646
      %v674 = vmul.f32 %v619, %v646
      %v675 = vmul.f32 %v622, %v646
      %v676 = vmul.f32 %v627, %v646
      %v677 = vmul.f32 %v630, %v646
      %v678 = vmul.f32 %v635, %v646
      %v679 = vmul.f32 %v638, %v646
      %v680 = vld [vmem:[%s3] sm:$0x1]
      %v682 = vlaneseq
      %v683 = vshrl.u32 %v682, 7
      %v684 = vsub.s32 0, %v683
      %v685 = vrot.slane %v680, %v684
      %v687 = vadd.f32 %v648, %v685
      %v688 = vadd.f32 %v649, %v685
      %v689 = vadd.f32 %v650, %v685
      %v690 = vadd.f32 %v651, %v685
      %v691 = vadd.f32 %v652, %v685
      %v692 = vadd.f32 %v653, %v685
      %v693 = vadd.f32 %v654, %v685
      %v694 = vadd.f32 %v655, %v685
      %v695 = vadd.f32 %v656, %v685
      %v696 = vadd.f32 %v657, %v685
      %v697 = vadd.f32 %v658, %v685
      %v698 = vadd.f32 %v659, %v685
      %v699 = vadd.f32 %v660, %v685
      %v700 = vadd.f32 %v661, %v685
      %v701 = vadd.f32 %v662, %v685
      %v702 = vadd.f32 %v663, %v685
      %v703 = vadd.f32 %v664, %v685
      %v704 = vadd.f32 %v665, %v685
      %v705 = vadd.f32 %v666, %v685
      %v706 = vadd.f32 %v667, %v685
      %v707 = vadd.f32 %v668, %v685
      %v708 = vadd.f32 %v669, %v685
      %v709 = vadd.f32 %v670, %v685
      %v710 = vadd.f32 %v671, %v685
      %v711 = vadd.f32 %v672, %v685
      %v712 = vadd.f32 %v673, %v685
      %v713 = vadd.f32 %v674, %v685
      %v714 = vadd.f32 %v675, %v685
      %v715 = vadd.f32 %v676, %v685
      %v716 = vadd.f32 %v677, %v685
      %v717 = vadd.f32 %v678, %v685
      %v718 = vadd.f32 %v679, %v685
      %v719 = vsub.f32 0.0, %v687
      %v720 = vsub.f32 0.0, %v688
      %v721 = vsub.f32 0.0, %v689
      %v722 = vsub.f32 0.0, %v690
      %v723 = vsub.f32 0.0, %v691
      %v724 = vsub.f32 0.0, %v692
      %v725 = vsub.f32 0.0, %v693
      %v726 = vsub.f32 0.0, %v694
      %v727 = vsub.f32 0.0, %v695
      %v728 = vsub.f32 0.0, %v696
      %v729 = vsub.f32 0.0, %v697
      %v730 = vsub.f32 0.0, %v698
      %v731 = vsub.f32 0.0, %v699
      %v732 = vsub.f32 0.0, %v700
      %v733 = vsub.f32 0.0, %v701
      %v734 = vsub.f32 0.0, %v702
      %v735 = vsub.f32 0.0, %v703
      %v736 = vsub.f32 0.0, %v704
      %v737 = vsub.f32 0.0, %v705
      %v738 = vsub.f32 0.0, %v706
      %v739 = vsub.f32 0.0, %v707
      %v740 = vsub.f32 0.0, %v708
      %v741 = vsub.f32 0.0, %v709
      %v742 = vsub.f32 0.0, %v710
      %v743 = vsub.f32 0.0, %v711
      %v744 = vsub.f32 0.0, %v712
      %v745 = vsub.f32 0.0, %v713
      %v746 = vsub.f32 0.0, %v714
      %v747 = vsub.f32 0.0, %v715
      %v748 = vsub.f32 0.0, %v716
      %v749 = vsub.f32 0.0, %v717
      %v750 = vsub.f32 0.0, %v718
      %v751 = vmul.f32 %v719, 1.442695
      %v752 = vpow.pop %v751
      %v753 = vmul.f32 %v720, 1.442695
      %v754 = vpow.pop %v753
      %v755 = vmul.f32 %v721, 1.442695
      %v756 = vpow.pop %v755
      %v757 = vmul.f32 %v722, 1.442695
      %v758 = vpow.pop %v757
      %v759 = vmul.f32 %v723, 1.442695
      %v760 = vpow.pop %v759
      %v761 = vmul.f32 %v724, 1.442695
      %v762 = vpow.pop %v761
      %v763 = vmul.f32 %v725, 1.442695
      %v764 = vpow.pop %v763
      %v765 = vmul.f32 %v726, 1.442695
      %v766 = vpow.pop %v765
      %v767 = vmul.f32 %v727, 1.442695
      %v768 = vpow.pop %v767
      %v769 = vmul.f32 %v728, 1.442695
      %v770 = vpow.pop %v769
      %v771 = vmul.f32 %v729, 1.442695
      %v772 = vpow.pop %v771
      %v773 = vmul.f32 %v730, 1.442695
      %v774 = vpow.pop %v773
      %v775 = vmul.f32 %v731, 1.442695
      %v776 = vpow.pop %v775
      %v777 = vmul.f32 %v732, 1.442695
      %v778 = vpow.pop %v777
      %v779 = vmul.f32 %v733, 1.442695
      %v780 = vpow.pop %v779
      %v781 = vmul.f32 %v734, 1.442695
      %v782 = vpow.pop %v781
      %v783 = vmul.f32 %v735, 1.442695
      %v784 = vpow.pop %v783
      %v785 = vmul.f32 %v736, 1.442695
      %v786 = vpow.pop %v785
      %v787 = vmul.f32 %v737, 1.442695
      %v788 = vpow.pop %v787
      %v789 = vmul.f32 %v738, 1.442695
      %v790 = vpow.pop %v789
      %v791 = vmul.f32 %v739, 1.442695
      %v792 = vpow.pop %v791
      %v793 = vmul.f32 %v740, 1.442695
      %v794 = vpow.pop %v793
      %v795 = vmul.f32 %v741, 1.442695
      %v796 = vpow.pop %v795
      %v797 = vmul.f32 %v742, 1.442695
      %v798 = vpow.pop %v797
      %v799 = vmul.f32 %v743, 1.442695
      %v800 = vpow.pop %v799
      %v801 = vmul.f32 %v744, 1.442695
      %v802 = vpow.pop %v801
      %v803 = vmul.f32 %v745, 1.442695
      %v804 = vpow.pop %v803
      %v805 = vmul.f32 %v746, 1.442695
      %v806 = vpow.pop %v805
      %v807 = vmul.f32 %v747, 1.442695
      %v808 = vpow.pop %v807
      %v809 = vmul.f32 %v748, 1.442695
      %v810 = vpow.pop %v809
      %v811 = vmul.f32 %v749, 1.442695
      %v812 = vpow.pop %v811
      %v813 = vmul.f32 %v750, 1.442695
      %v814 = vpow.pop %v813
      %v815 = vadd.f32 %v752, 1.0
      %v816 = vadd.f32 %v754, 1.0
      %v817 = vadd.f32 %v756, 1.0
      %v818 = vadd.f32 %v758, 1.0
      %v819 = vadd.f32 %v760, 1.0
      %v820 = vadd.f32 %v762, 1.0
      %v821 = vadd.f32 %v764, 1.0
      %v822 = vadd.f32 %v766, 1.0
      %v823 = vadd.f32 %v768, 1.0
      %v824 = vadd.f32 %v770, 1.0
      %v825 = vadd.f32 %v772, 1.0
      %v826 = vadd.f32 %v774, 1.0
      %v827 = vadd.f32 %v776, 1.0
      %v828 = vadd.f32 %v778, 1.0
      %v829 = vadd.f32 %v780, 1.0
      %v830 = vadd.f32 %v782, 1.0
      %v831 = vadd.f32 %v784, 1.0
      %v832 = vadd.f32 %v786, 1.0
      %v833 = vadd.f32 %v788, 1.0
      %v834 = vadd.f32 %v790, 1.0
      %v835 = vadd.f32 %v792, 1.0
      %v836 = vadd.f32 %v794, 1.0
      %v837 = vadd.f32 %v796, 1.0
      %v838 = vadd.f32 %v798, 1.0
      %v839 = vadd.f32 %v800, 1.0
      %v840 = vadd.f32 %v802, 1.0
      %v841 = vadd.f32 %v804, 1.0
      %v842 = vadd.f32 %v806, 1.0
      %v843 = vadd.f32 %v808, 1.0
      %v844 = vadd.f32 %v810, 1.0
      %v845 = vadd.f32 %v812, 1.0
      %v846 = vadd.f32 %v814, 1.0
      %v847 = vrcp.pop %v815
      %v848 = vrcp.pop %v816
      %v849 = vrcp.pop %v817
      %v850 = vrcp.pop %v818
      %v851 = vrcp.pop %v819
      %v852 = vrcp.pop %v820
      %v853 = vrcp.pop %v821
      %v854 = vrcp.pop %v822
      %v855 = vrcp.pop %v823
      %v856 = vrcp.pop %v824
      %v857 = vrcp.pop %v825
      %v858 = vrcp.pop %v826
      %v859 = vrcp.pop %v827
      %v860 = vrcp.pop %v828
      %v861 = vrcp.pop %v829
      %v862 = vrcp.pop %v830
      %v863 = vrcp.pop %v831
      %v864 = vrcp.pop %v832
      %v865 = vrcp.pop %v833
      %v866 = vrcp.pop %v834
      %v867 = vrcp.pop %v835
      %v868 = vrcp.pop %v836
      %v869 = vrcp.pop %v837
      %v870 = vrcp.pop %v838
      %v871 = vrcp.pop %v839
      %v872 = vrcp.pop %v840
      %v873 = vrcp.pop %v841
      %v874 = vrcp.pop %v842
      %v875 = vrcp.pop %v843
      %v876 = vrcp.pop %v844
      %v877 = vrcp.pop %v845
      %v878 = vrcp.pop %v846
      %v879 = vmul.f32 %v687, %v847
      %v880 = vmul.f32 %v688, %v848
      %v881 = vmul.f32 %v689, %v849
      %v882 = vmul.f32 %v690, %v850
      %v883 = vmul.f32 %v691, %v851
      %v884 = vmul.f32 %v692, %v852
      %v885 = vmul.f32 %v693, %v853
      %v886 = vmul.f32 %v694, %v854
      %v887 = vmul.f32 %v695, %v855
      %v888 = vmul.f32 %v696, %v856
      %v889 = vmul.f32 %v697, %v857
      %v890 = vmul.f32 %v698, %v858
      %v891 = vmul.f32 %v699, %v859
      %v892 = vmul.f32 %v700, %v860
      %v893 = vmul.f32 %v701, %v861
      %v894 = vmul.f32 %v702, %v862
      %v895 = vmul.f32 %v703, %v863
      %v896 = vmul.f32 %v704, %v864
      %v897 = vmul.f32 %v705, %v865
      %v898 = vmul.f32 %v706, %v866
      %v899 = vmul.f32 %v707, %v867
      %v900 = vmul.f32 %v708, %v868
      %v901 = vmul.f32 %v709, %v869
      %v902 = vmul.f32 %v710, %v870
      %v903 = vmul.f32 %v711, %v871
      %v904 = vmul.f32 %v712, %v872
      %v905 = vmul.f32 %v713, %v873
      %v906 = vmul.f32 %v714, %v874
      %v907 = vmul.f32 %v715, %v875
      %v908 = vmul.f32 %v716, %v876
      %v909 = vmul.f32 %v717, %v877
      %v910 = vmul.f32 %v718, %v878
      %v911 = vpack.c.bf16 %v880, %v879
      %v912 = vpack.c.bf16 %v882, %v881
      %v913 = vpack.c.bf16 %v884, %v883
      %v914 = vpack.c.bf16 %v886, %v885
      %v915 = vpack.c.bf16 %v888, %v887
      %v916 = vpack.c.bf16 %v890, %v889
      %v917 = vpack.c.bf16 %v892, %v891
      %v918 = vpack.c.bf16 %v894, %v893
      %v919 = vpack.c.bf16 %v896, %v895
      %v920 = vpack.c.bf16 %v898, %v897
      %v921 = vpack.c.bf16 %v900, %v899
      %v922 = vpack.c.bf16 %v902, %v901
      %v923 = vpack.c.bf16 %v904, %v903
      %v924 = vpack.c.bf16 %v906, %v905
      %v925 = vpack.c.bf16 %v908, %v907
      %v926 = vpack.c.bf16 %v910, %v909
      %v943 = vunpack.c.l.b16 %v911
      %v944 = vunpack.c.h.b16 %v911
      %v945 = vunpack.c.l.b16 %v912
      %v946 = vunpack.c.h.b16 %v912
      %v947 = vunpack.c.l.b16 %v913
      %v948 = vunpack.c.h.b16 %v913
      %v949 = vunpack.c.l.b16 %v914
      %v950 = vunpack.c.h.b16 %v914
      %v951 = vunpack.c.l.b16 %v915
      %v952 = vunpack.c.h.b16 %v915
      %v953 = vunpack.c.l.b16 %v916
      %v954 = vunpack.c.h.b16 %v916
      %v955 = vunpack.c.l.b16 %v917
      %v956 = vunpack.c.h.b16 %v917
      %v957 = vunpack.c.l.b16 %v918
      %v958 = vunpack.c.h.b16 %v918
      %v959 = vunpack.c.l.b16 %v919
      %v960 = vunpack.c.h.b16 %v919
      %v961 = vunpack.c.l.b16 %v920
      %v962 = vunpack.c.h.b16 %v920
      %v963 = vunpack.c.l.b16 %v921
      %v964 = vunpack.c.h.b16 %v921
      %v965 = vunpack.c.l.b16 %v922
      %v966 = vunpack.c.h.b16 %v922
      %v967 = vunpack.c.l.b16 %v923
      %v968 = vunpack.c.h.b16 %v923
      %v969 = vunpack.c.l.b16 %v924
      %v970 = vunpack.c.h.b16 %v924
      %v971 = vunpack.c.l.b16 %v925
      %v972 = vunpack.c.h.b16 %v925
      %v973 = vunpack.c.l.b16 %v926
      %v974 = vunpack.c.h.b16 %v926
      %v975 = vpack.c.b16 %v943, %v943
      %v976 = vpack.c.b16 %v944, %v944
      %v977 = vpack.c.b16 %v945, %v945
      %v978 = vpack.c.b16 %v946, %v946
      %v979 = vpack.c.b16 %v947, %v947
      %v980 = vpack.c.b16 %v948, %v948
      %v981 = vpack.c.b16 %v949, %v949
      %v982 = vpack.c.b16 %v950, %v950
      %v983 = vpack.c.b16 %v951, %v951
      %v984 = vpack.c.b16 %v952, %v952
      %v985 = vpack.c.b16 %v953, %v953
      %v986 = vpack.c.b16 %v954, %v954
      %v987 = vpack.c.b16 %v955, %v955
      %v988 = vpack.c.b16 %v956, %v956
      %v989 = vpack.c.b16 %v957, %v957
      %v990 = vpack.c.b16 %v958, %v958
      %v991 = vpack.c.b16 %v959, %v959
      %v992 = vpack.c.b16 %v960, %v960
      %v993 = vpack.c.b16 %v961, %v961
      %v994 = vpack.c.b16 %v962, %v962
      %v995 = vpack.c.b16 %v963, %v963
      %v996 = vpack.c.b16 %v964, %v964
      %v997 = vpack.c.b16 %v965, %v965
      %v998 = vpack.c.b16 %v966, %v966
      %v999 = vpack.c.b16 %v967, %v967
      %v1000 = vpack.c.b16 %v968, %v968
      %v1001 = vpack.c.b16 %v969, %v969
      %v1002 = vpack.c.b16 %v970, %v970
      %v1003 = vpack.c.b16 %v971, %v971
      %v1004 = vpack.c.b16 %v972, %v972
      %v1005 = vpack.c.b16 %v973, %v973
      %v1006 = vpack.c.b16 %v974, %v974
      %1039 = vst.msk [vmem:[#allocation2 + $0x10] sm:$0xf] %vm306, %v975
      %1040 = vst.msk [vmem:[#allocation2 + $0x14] sm:$0xf] %vm306, %v976
      %1041 = vst.msk [vmem:[#allocation2 + $0x18] sm:$0xf] %vm306, %v977
      %1042 = vst.msk [vmem:[#allocation2 + $0x1c] sm:$0xf] %vm306, %v978
      %1043 = vst.msk [vmem:[#allocation2 + $0x20] sm:$0xf] %vm306, %v979
      %1044 = vst.msk [vmem:[#allocation2 + $0x24] sm:$0xf] %vm306, %v980
      %1045 = vst.msk [vmem:[#allocation2 + $0x28] sm:$0xf] %vm306, %v981
      %1046 = vst.msk [vmem:[#allocation2 + $0x2c] sm:$0xf] %vm306, %v982
      %1047 = vst.msk [vmem:[#allocation2 + $0x30] sm:$0xf] %vm306, %v983
      %1048 = vst.msk [vmem:[#allocation2 + $0x34] sm:$0xf] %vm306, %v984
      %1049 = vst.msk [vmem:[#allocation2 + $0x38] sm:$0xf] %vm306, %v985
      %1050 = vst.msk [vmem:[#allocation2 + $0x3c] sm:$0xf] %vm306, %v986
      %1051 = vst.msk [vmem:[#allocation2 + $0x40] sm:$0xf] %vm306, %v987
      %1052 = vst.msk [vmem:[#allocation2 + $0x44] sm:$0xf] %vm306, %v988
      %1053 = vst.msk [vmem:[#allocation2 + $0x48] sm:$0xf] %vm306, %v989
      %1054 = vst.msk [vmem:[#allocation2 + $0x4c] sm:$0xf] %vm306, %v990
      %1055 = vst.msk [vmem:[#allocation2 + $0x50] sm:$0xf] %vm306, %v991
      %1056 = vst.msk [vmem:[#allocation2 + $0x54] sm:$0xf] %vm306, %v992
      %1057 = vst.msk [vmem:[#allocation2 + $0x58] sm:$0xf] %vm306, %v993
      %1058 = vst.msk [vmem:[#allocation2 + $0x5c] sm:$0xf] %vm306, %v994
      %1059 = vst.msk [vmem:[#allocation2 + $0x60] sm:$0xf] %vm306, %v995
      %1060 = vst.msk [vmem:[#allocation2 + $0x64] sm:$0xf] %vm306, %v996
      %1061 = vst.msk [vmem:[#allocation2 + $0x68] sm:$0xf] %vm306, %v997
      %1062 = vst.msk [vmem:[#allocation2 + $0x6c] sm:$0xf] %vm306, %v998
      %1063 = vst.msk [vmem:[#allocation2 + $0x70] sm:$0xf] %vm306, %v999
      %1064 = vst.msk [vmem:[#allocation2 + $0x74] sm:$0xf] %vm306, %v1000
      %1065 = vst.msk [vmem:[#allocation2 + $0x78] sm:$0xf] %vm306, %v1001
      %1066 = vst.msk [vmem:[#allocation2 + $0x7c] sm:$0xf] %vm306, %v1002
      %1067 = vst.msk [vmem:[#allocation2 + $0x80] sm:$0xf] %vm306, %v1003
      %1068 = vst.msk [vmem:[#allocation2 + $0x84] sm:$0xf] %vm306, %v1004
      %1069 = vst.msk [vmem:[#allocation2 + $0x88] sm:$0xf] %vm306, %v1005
      %1070 = vst.msk [vmem:[#allocation2 + $0x8c] sm:$0xf] %vm306, %v1006
      %1071 = vst.msk [vmem:[#allocation2 + $0x8] sm:$0xf] %vm306, 0
      %1072 = vst.msk [vmem:[#allocation2 + $0xc] sm:$0xf] %vm306, 0
      %1073 = vst.msk [vmem:[#allocation2 + $0x90] sm:$0xf] %vm306, 0
      %1074 = vst.msk [vmem:[#allocation2 + $0x94] sm:$0xf] %vm306, 0
      %v1075 = vlaneseq
      %v1076 = vshrl.u32 %v1075, 7
      %v1077 = vadd.s32 %v1076, 8
      %v1078 = vadd.s32 %v1076, 16
      %v1079 = vadd.s32 %v1076, 24
      %v1080 = vadd.s32 %v1076, 32
      %v1081 = vadd.s32 %v1076, 40
      %v1082 = vadd.s32 %v1076, 48
      %v1083 = vadd.s32 %v1076, 56
      %v1084 = vadd.s32 %v1076, 64
      %v1085 = vadd.s32 %v1076, 72
      %v1086 = vadd.s32 %v1076, 80
      %v1087 = vadd.s32 %v1076, 88
      %v1088 = vadd.s32 %v1076, 96
      %v1089 = vadd.s32 %v1076, 104
      %v1090 = vadd.s32 %v1076, 112
      %v1091 = vadd.s32 %v1076, 120
      %v1092 = vadd.s32 %v1076, 128
      %v1093 = vadd.s32 %v1076, 136
      %v1094 = vadd.s32 %v1076, 144
      %v1095 = vadd.s32 %v1076, 152
      %v1096 = vadd.s32 %v1076, 160
      %v1097 = vadd.s32 %v1076, 168
      %v1098 = vadd.s32 %v1076, 176
      %v1099 = vadd.s32 %v1076, 184
      %v1100 = vadd.s32 %v1076, 192
      %v1101 = vadd.s32 %v1076, 200
      %v1102 = vadd.s32 %v1076, 208
      %v1103 = vadd.s32 %v1076, 216
      %v1104 = vadd.s32 %v1076, 224
      %v1105 = vadd.s32 %v1076, 232
      %v1106 = vadd.s32 %v1076, 240
      %v1107 = vadd.s32 %v1076, 248
      %vm1108 = vcmp.lt.s32.totalorder %v1076, 0
      %v1109 = vsub.s32 0, %v1076
      %v1110 = vsel %vm1108, %v1109, %v1076
      %v1111 = vshrl.u32 %v1110, 4
      %v1112 = vand.u32 %v1110, 15
      %v1113 = vsub.s32 0, %v1112
      %v1114 = vsel %vm1108, %v1113, %v1112
      %vm1115 = vcmp.lt.s32.totalorder %v1077, 0
      %v1116 = vsub.s32 0, %v1077
      %v1117 = vsel %vm1115, %v1116, %v1077
      %v1118 = vshrl.u32 %v1117, 4
      %v1119 = vand.u32 %v1117, 15
      %v1120 = vsub.s32 0, %v1119
      %v1121 = vsel %vm1115, %v1120, %v1119
      %vm1122 = vcmp.lt.s32.totalorder %v1078, 0
      %v1123 = vsub.s32 0, %v1078
      %v1124 = vsel %vm1122, %v1123, %v1078
      %v1125 = vshrl.u32 %v1124, 4
      %v1126 = vand.u32 %v1124, 15
      %v1127 = vsub.s32 0, %v1126
      %v1128 = vsel %vm1122, %v1127, %v1126
      %vm1129 = vcmp.lt.s32.totalorder %v1079, 0
      %v1130 = vsub.s32 0, %v1079
      %v1131 = vsel %vm1129, %v1130, %v1079
      %v1132 = vshrl.u32 %v1131, 4
      %v1133 = vand.u32 %v1131, 15
      %v1134 = vsub.s32 0, %v1133
      %v1135 = vsel %vm1129, %v1134, %v1133
      %vm1136 = vcmp.lt.s32.totalorder %v1080, 0
      %v1137 = vsub.s32 0, %v1080
      %v1138 = vsel %vm1136, %v1137, %v1080
      %v1139 = vshrl.u32 %v1138, 4
      %v1140 = vand.u32 %v1138, 15
      %v1141 = vsub.s32 0, %v1140
      %v1142 = vsel %vm1136, %v1141, %v1140
      %vm1143 = vcmp.lt.s32.totalorder %v1081, 0
      %v1144 = vsub.s32 0, %v1081
      %v1145 = vsel %vm1143, %v1144, %v1081
      %v1146 = vshrl.u32 %v1145, 4
      %v1147 = vand.u32 %v1145, 15
      %v1148 = vsub.s32 0, %v1147
      %v1149 = vsel %vm1143, %v1148, %v1147
      %vm1150 = vcmp.lt.s32.totalorder %v1082, 0
      %v1151 = vsub.s32 0, %v1082
      %v1152 = vsel %vm1150, %v1151, %v1082
      %v1153 = vshrl.u32 %v1152, 4
      %v1154 = vand.u32 %v1152, 15
      %v1155 = vsub.s32 0, %v1154
      %v1156 = vsel %vm1150, %v1155, %v1154
      %vm1157 = vcmp.lt.s32.totalorder %v1083, 0
      %v1158 = vsub.s32 0, %v1083
      %v1159 = vsel %vm1157, %v1158, %v1083
      %v1160 = vshrl.u32 %v1159, 4
      %v1161 = vand.u32 %v1159, 15
      %v1162 = vsub.s32 0, %v1161
      %v1163 = vsel %vm1157, %v1162, %v1161
      %vm1164 = vcmp.lt.s32.totalorder %v1084, 0
      %v1165 = vsub.s32 0, %v1084
      %v1166 = vsel %vm1164, %v1165, %v1084
      %v1167 = vshrl.u32 %v1166, 4
      %v1168 = vand.u32 %v1166, 15
      %v1169 = vsub.s32 0, %v1168
      %v1170 = vsel %vm1164, %v1169, %v1168
      %vm1171 = vcmp.lt.s32.totalorder %v1085, 0
      %v1172 = vsub.s32 0, %v1085
      %v1173 = vsel %vm1171, %v1172, %v1085
      %v1174 = vshrl.u32 %v1173, 4
      %v1175 = vand.u32 %v1173, 15
      %v1176 = vsub.s32 0, %v1175
      %v1177 = vsel %vm1171, %v1176, %v1175
      %vm1178 = vcmp.lt.s32.totalorder %v1086, 0
      %v1179 = vsub.s32 0, %v1086
      %v1180 = vsel %vm1178, %v1179, %v1086
      %v1181 = vshrl.u32 %v1180, 4
      %v1182 = vand.u32 %v1180, 15
      %v1183 = vsub.s32 0, %v1182
      %v1184 = vsel %vm1178, %v1183, %v1182
      %vm1185 = vcmp.lt.s32.totalorder %v1087, 0
      %v1186 = vsub.s32 0, %v1087
      %v1187 = vsel %vm1185, %v1186, %v1087
      %v1188 = vshrl.u32 %v1187, 4
      %v1189 = vand.u32 %v1187, 15
      %v1190 = vsub.s32 0, %v1189
      %v1191 = vsel %vm1185, %v1190, %v1189
      %vm1192 = vcmp.lt.s32.totalorder %v1088, 0
      %v1193 = vsub.s32 0, %v1088
      %v1194 = vsel %vm1192, %v1193, %v1088
      %v1195 = vshrl.u32 %v1194, 4
      %v1196 = vand.u32 %v1194, 15
      %v1197 = vsub.s32 0, %v1196
      %v1198 = vsel %vm1192, %v1197, %v1196
      %vm1199 = vcmp.lt.s32.totalorder %v1089, 0
      %v1200 = vsub.s32 0, %v1089
      %v1201 = vsel %vm1199, %v1200, %v1089
      %v1202 = vshrl.u32 %v1201, 4
      %v1203 = vand.u32 %v1201, 15
      %v1204 = vsub.s32 0, %v1203
      %v1205 = vsel %vm1199, %v1204, %v1203
      %vm1206 = vcmp.lt.s32.totalorder %v1090, 0
      %v1207 = vsub.s32 0, %v1090
      %v1208 = vsel %vm1206, %v1207, %v1090
      %v1209 = vshrl.u32 %v1208, 4
      %v1210 = vand.u32 %v1208, 15
      %v1211 = vsub.s32 0, %v1210
      %v1212 = vsel %vm1206, %v1211, %v1210
      %vm1213 = vcmp.lt.s32.totalorder %v1091, 0
      %v1214 = vsub.s32 0, %v1091
      %v1215 = vsel %vm1213, %v1214, %v1091
      %v1216 = vshrl.u32 %v1215, 4
      %v1217 = vand.u32 %v1215, 15
      %v1218 = vsub.s32 0, %v1217
      %v1219 = vsel %vm1213, %v1218, %v1217
      %vm1220 = vcmp.lt.s32.totalorder %v1092, 0
      %v1221 = vsub.s32 0, %v1092
      %v1222 = vsel %vm1220, %v1221, %v1092
      %v1223 = vshrl.u32 %v1222, 4
      %v1224 = vand.u32 %v1222, 15
      %v1225 = vsub.s32 0, %v1224
      %v1226 = vsel %vm1220, %v1225, %v1224
      %vm1227 = vcmp.lt.s32.totalorder %v1093, 0
      %v1228 = vsub.s32 0, %v1093
      %v1229 = vsel %vm1227, %v1228, %v1093
      %v1230 = vshrl.u32 %v1229, 4
      %v1231 = vand.u32 %v1229, 15
      %v1232 = vsub.s32 0, %v1231
      %v1233 = vsel %vm1227, %v1232, %v1231
      %vm1234 = vcmp.lt.s32.totalorder %v1094, 0
      %v1235 = vsub.s32 0, %v1094
      %v1236 = vsel %vm1234, %v1235, %v1094
      %v1237 = vshrl.u32 %v1236, 4
      %v1238 = vand.u32 %v1236, 15
      %v1239 = vsub.s32 0, %v1238
      %v1240 = vsel %vm1234, %v1239, %v1238
      %vm1241 = vcmp.lt.s32.totalorder %v1095, 0
      %v1242 = vsub.s32 0, %v1095
      %v1243 = vsel %vm1241, %v1242, %v1095
      %v1244 = vshrl.u32 %v1243, 4
      %v1245 = vand.u32 %v1243, 15
      %v1246 = vsub.s32 0, %v1245
      %v1247 = vsel %vm1241, %v1246, %v1245
      %vm1248 = vcmp.lt.s32.totalorder %v1096, 0
      %v1249 = vsub.s32 0, %v1096
      %v1250 = vsel %vm1248, %v1249, %v1096
      %v1251 = vshrl.u32 %v1250, 4
      %v1252 = vand.u32 %v1250, 15
      %v1253 = vsub.s32 0, %v1252
      %v1254 = vsel %vm1248, %v1253, %v1252
      %vm1255 = vcmp.lt.s32.totalorder %v1097, 0
      %v1256 = vsub.s32 0, %v1097
      %v1257 = vsel %vm1255, %v1256, %v1097
      %v1258 = vshrl.u32 %v1257, 4
      %v1259 = vand.u32 %v1257, 15
      %v1260 = vsub.s32 0, %v1259
      %v1261 = vsel %vm1255, %v1260, %v1259
      %vm1262 = vcmp.lt.s32.totalorder %v1098, 0
      %v1263 = vsub.s32 0, %v1098
      %v1264 = vsel %vm1262, %v1263, %v1098
      %v1265 = vshrl.u32 %v1264, 4
      %v1266 = vand.u32 %v1264, 15
      %v1267 = vsub.s32 0, %v1266
      %v1268 = vsel %vm1262, %v1267, %v1266
      %vm1269 = vcmp.lt.s32.totalorder %v1099, 0
      %v1270 = vsub.s32 0, %v1099
      %v1271 = vsel %vm1269, %v1270, %v1099
      %v1272 = vshrl.u32 %v1271, 4
      %v1273 = vand.u32 %v1271, 15
      %v1274 = vsub.s32 0, %v1273
      %v1275 = vsel %vm1269, %v1274, %v1273
      %vm1276 = vcmp.lt.s32.totalorder %v1100, 0
      %v1277 = vsub.s32 0, %v1100
      %v1278 = vsel %vm1276, %v1277, %v1100
      %v1279 = vshrl.u32 %v1278, 4
      %v1280 = vand.u32 %v1278, 15
      %v1281 = vsub.s32 0, %v1280
      %v1282 = vsel %vm1276, %v1281, %v1280
      %vm1283 = vcmp.lt.s32.totalorder %v1101, 0
      %v1284 = vsub.s32 0, %v1101
      %v1285 = vsel %vm1283, %v1284, %v1101
      %v1286 = vshrl.u32 %v1285, 4
      %v1287 = vand.u32 %v1285, 15
      %v1288 = vsub.s32 0, %v1287
      %v1289 = vsel %vm1283, %v1288, %v1287
      %vm1290 = vcmp.lt.s32.totalorder %v1102, 0
      %v1291 = vsub.s32 0, %v1102
      %v1292 = vsel %vm1290, %v1291, %v1102
      %v1293 = vshrl.u32 %v1292, 4
      %v1294 = vand.u32 %v1292, 15
      %v1295 = vsub.s32 0, %v1294
      %v1296 = vsel %vm1290, %v1295, %v1294
      %vm1297 = vcmp.lt.s32.totalorder %v1103, 0
      %v1298 = vsub.s32 0, %v1103
      %v1299 = vsel %vm1297, %v1298, %v1103
      %v1300 = vshrl.u32 %v1299, 4
      %v1301 = vand.u32 %v1299, 15
      %v1302 = vsub.s32 0, %v1301
      %v1303 = vsel %vm1297, %v1302, %v1301
      %vm1304 = vcmp.lt.s32.totalorder %v1104, 0
      %v1305 = vsub.s32 0, %v1104
      %v1306 = vsel %vm1304, %v1305, %v1104
      %v1307 = vshrl.u32 %v1306, 4
      %v1308 = vand.u32 %v1306, 15
      %v1309 = vsub.s32 0, %v1308
      %v1310 = vsel %vm1304, %v1309, %v1308
      %vm1311 = vcmp.lt.s32.totalorder %v1105, 0
      %v1312 = vsub.s32 0, %v1105
      %v1313 = vsel %vm1311, %v1312, %v1105
      %v1314 = vshrl.u32 %v1313, 4
      %v1315 = vand.u32 %v1313, 15
      %v1316 = vsub.s32 0, %v1315
      %v1317 = vsel %vm1311, %v1316, %v1315
      %vm1318 = vcmp.lt.s32.totalorder %v1106, 0
      %v1319 = vsub.s32 0, %v1106
      %v1320 = vsel %vm1318, %v1319, %v1106
      %v1321 = vshrl.u32 %v1320, 4
      %v1322 = vand.u32 %v1320, 15
      %v1323 = vsub.s32 0, %v1322
      %v1324 = vsel %vm1318, %v1323, %v1322
      %vm1325 = vcmp.lt.s32.totalorder %v1107, 0
      %v1326 = vsub.s32 0, %v1107
      %v1327 = vsel %vm1325, %v1326, %v1107
      %v1328 = vshrl.u32 %v1327, 4
      %v1329 = vand.u32 %v1327, 15
      %v1330 = vsub.s32 0, %v1329
      %v1331 = vsel %vm1325, %v1330, %v1329
      %vm1332 = vcmp.ne.s32.totalorder %v1114, 0
      %vm1333 = vcmp.ne.s32.totalorder %v1121, 0
      %vm1334 = vcmp.ne.s32.totalorder %v1128, 0
      %vm1335 = vcmp.ne.s32.totalorder %v1135, 0
      %vm1336 = vcmp.ne.s32.totalorder %v1142, 0
      %vm1337 = vcmp.ne.s32.totalorder %v1149, 0
      %vm1338 = vcmp.ne.s32.totalorder %v1156, 0
      %vm1339 = vcmp.ne.s32.totalorder %v1163, 0
      %vm1340 = vcmp.ne.s32.totalorder %v1170, 0
      %vm1341 = vcmp.ne.s32.totalorder %v1177, 0
      %vm1342 = vcmp.ne.s32.totalorder %v1184, 0
      %vm1343 = vcmp.ne.s32.totalorder %v1191, 0
      %vm1344 = vcmp.ne.s32.totalorder %v1198, 0
      %vm1345 = vcmp.ne.s32.totalorder %v1205, 0
      %vm1346 = vcmp.ne.s32.totalorder %v1212, 0
      %vm1347 = vcmp.ne.s32.totalorder %v1219, 0
      %vm1348 = vcmp.ne.s32.totalorder %v1226, 0
      %vm1349 = vcmp.ne.s32.totalorder %v1233, 0
      %vm1350 = vcmp.ne.s32.totalorder %v1240, 0
      %vm1351 = vcmp.ne.s32.totalorder %v1247, 0
      %vm1352 = vcmp.ne.s32.totalorder %v1254, 0
      %vm1353 = vcmp.ne.s32.totalorder %v1261, 0
      %vm1354 = vcmp.ne.s32.totalorder %v1268, 0
      %vm1355 = vcmp.ne.s32.totalorder %v1275, 0
      %vm1356 = vcmp.ne.s32.totalorder %v1282, 0
      %vm1357 = vcmp.ne.s32.totalorder %v1289, 0
      %vm1358 = vcmp.ne.s32.totalorder %v1296, 0
      %vm1359 = vcmp.ne.s32.totalorder %v1303, 0
      %vm1360 = vcmp.ne.s32.totalorder %v1310, 0
      %vm1361 = vcmp.ne.s32.totalorder %v1317, 0
      %vm1362 = vcmp.ne.s32.totalorder %v1324, 0
      %vm1363 = vcmp.ne.s32.totalorder %v1331, 0
      %vm1364 = vcmp.lt.s32.totalorder %v1114, 0
      %vm1365 = vcmp.lt.s32.totalorder %v1121, 0
      %vm1366 = vcmp.lt.s32.totalorder %v1128, 0
      %vm1367 = vcmp.lt.s32.totalorder %v1135, 0
      %vm1368 = vcmp.lt.s32.totalorder %v1142, 0
      %vm1369 = vcmp.lt.s32.totalorder %v1149, 0
      %vm1370 = vcmp.lt.s32.totalorder %v1156, 0
      %vm1371 = vcmp.lt.s32.totalorder %v1163, 0
      %vm1372 = vcmp.lt.s32.totalorder %v1170, 0
      %vm1373 = vcmp.lt.s32.totalorder %v1177, 0
      %vm1374 = vcmp.lt.s32.totalorder %v1184, 0
      %vm1375 = vcmp.lt.s32.totalorder %v1191, 0
      %vm1376 = vcmp.lt.s32.totalorder %v1198, 0
      %vm1377 = vcmp.lt.s32.totalorder %v1205, 0
      %vm1378 = vcmp.lt.s32.totalorder %v1212, 0
      %vm1379 = vcmp.lt.s32.totalorder %v1219, 0
      %vm1380 = vcmp.lt.s32.totalorder %v1226, 0
      %vm1381 = vcmp.lt.s32.totalorder %v1233, 0
      %vm1382 = vcmp.lt.s32.totalorder %v1240, 0
      %vm1383 = vcmp.lt.s32.totalorder %v1247, 0
      %vm1384 = vcmp.lt.s32.totalorder %v1254, 0
      %vm1385 = vcmp.lt.s32.totalorder %v1261, 0
      %vm1386 = vcmp.lt.s32.totalorder %v1268, 0
      %vm1387 = vcmp.lt.s32.totalorder %v1275, 0
      %vm1388 = vcmp.lt.s32.totalorder %v1282, 0
      %vm1389 = vcmp.lt.s32.totalorder %v1289, 0
      %vm1390 = vcmp.lt.s32.totalorder %v1296, 0
      %vm1391 = vcmp.lt.s32.totalorder %v1303, 0
      %vm1392 = vcmp.lt.s32.totalorder %v1310, 0
      %vm1393 = vcmp.lt.s32.totalorder %v1317, 0
      %vm1394 = vcmp.lt.s32.totalorder %v1324, 0
      %vm1395 = vcmp.lt.s32.totalorder %v1331, 0
      %vm1396 = vmand %vm1364, %vm1332
      %vm1397 = vmand %vm1365, %vm1333
      %vm1398 = vmand %vm1366, %vm1334
      %vm1399 = vmand %vm1367, %vm1335
      %vm1400 = vmand %vm1368, %vm1336
      %vm1401 = vmand %vm1369, %vm1337
      %vm1402 = vmand %vm1370, %vm1338
      %vm1403 = vmand %vm1371, %vm1339
      %vm1404 = vmand %vm1372, %vm1340
      %vm1405 = vmand %vm1373, %vm1341
      %vm1406 = vmand %vm1374, %vm1342
      %vm1407 = vmand %vm1375, %vm1343
      %vm1408 = vmand %vm1376, %vm1344
      %vm1409 = vmand %vm1377, %vm1345
      %vm1410 = vmand %vm1378, %vm1346
      %vm1411 = vmand %vm1379, %vm1347
      %vm1412 = vmand %vm1380, %vm1348
      %vm1413 = vmand %vm1381, %vm1349
      %vm1414 = vmand %vm1382, %vm1350
      %vm1415 = vmand %vm1383, %vm1351
      %vm1416 = vmand %vm1384, %vm1352
      %vm1417 = vmand %vm1385, %vm1353
      %vm1418 = vmand %vm1386, %vm1354
      %vm1419 = vmand %vm1387, %vm1355
      %vm1420 = vmand %vm1388, %vm1356
      %vm1421 = vmand %vm1389, %vm1357
      %vm1422 = vmand %vm1390, %vm1358
      %vm1423 = vmand %vm1391, %vm1359
      %vm1424 = vmand %vm1392, %vm1360
      %vm1425 = vmand %vm1393, %vm1361
      %vm1426 = vmand %vm1394, %vm1362
      %vm1427 = vmand %vm1395, %vm1363
      %v1428 = vadd.s32 %v1114, 16
      %v1429 = vadd.s32 %v1121, 16
      %v1430 = vadd.s32 %v1128, 16
      %v1431 = vadd.s32 %v1135, 16
      %v1432 = vadd.s32 %v1142, 16
      %v1433 = vadd.s32 %v1149, 16
      %v1434 = vadd.s32 %v1156, 16
      %v1435 = vadd.s32 %v1163, 16
      %v1436 = vadd.s32 %v1170, 16
      %v1437 = vadd.s32 %v1177, 16
      %v1438 = vadd.s32 %v1184, 16
      %v1439 = vadd.s32 %v1191, 16
      %v1440 = vadd.s32 %v1198, 16
      %v1441 = vadd.s32 %v1205, 16
      %v1442 = vadd.s32 %v1212, 16
      %v1443 = vadd.s32 %v1219, 16
      %v1444 = vadd.s32 %v1226, 16
      %v1445 = vadd.s32 %v1233, 16
      %v1446 = vadd.s32 %v1240, 16
      %v1447 = vadd.s32 %v1247, 16
      %v1448 = vadd.s32 %v1254, 16
      %v1449 = vadd.s32 %v1261, 16
      %v1450 = vadd.s32 %v1268, 16
      %v1451 = vadd.s32 %v1275, 16
      %v1452 = vadd.s32 %v1282, 16
      %v1453 = vadd.s32 %v1289, 16
      %v1454 = vadd.s32 %v1296, 16
      %v1455 = vadd.s32 %v1303, 16
      %v1456 = vadd.s32 %v1310, 16
      %v1457 = vadd.s32 %v1317, 16
      %v1458 = vadd.s32 %v1324, 16
      %v1459 = vadd.s32 %v1331, 16
      %v1460 = vsel %vm1396, %v1428, %v1114
      %v1461 = vsel %vm1397, %v1429, %v1121
      %v1462 = vsel %vm1398, %v1430, %v1128
      %v1463 = vsel %vm1399, %v1431, %v1135
      %v1464 = vsel %vm1400, %v1432, %v1142
      %v1465 = vsel %vm1401, %v1433, %v1149
      %v1466 = vsel %vm1402, %v1434, %v1156
      %v1467 = vsel %vm1403, %v1435, %v1163
      %v1468 = vsel %vm1404, %v1436, %v1170
      %v1469 = vsel %vm1405, %v1437, %v1177
      %v1470 = vsel %vm1406, %v1438, %v1184
      %v1471 = vsel %vm1407, %v1439, %v1191
      %v1472 = vsel %vm1408, %v1440, %v1198
      %v1473 = vsel %vm1409, %v1441, %v1205
      %v1474 = vsel %vm1410, %v1442, %v1212
      %v1475 = vsel %vm1411, %v1443, %v1219
      %v1476 = vsel %vm1412, %v1444, %v1226
      %v1477 = vsel %vm1413, %v1445, %v1233
      %v1478 = vsel %vm1414, %v1446, %v1240
      %v1479 = vsel %vm1415, %v1447, %v1247
      %v1480 = vsel %vm1416, %v1448, %v1254
      %v1481 = vsel %vm1417, %v1449, %v1261
      %v1482 = vsel %vm1418, %v1450, %v1268
      %v1483 = vsel %vm1419, %v1451, %v1275
      %v1484 = vsel %vm1420, %v1452, %v1282
      %v1485 = vsel %vm1421, %v1453, %v1289
      %v1486 = vsel %vm1422, %v1454, %v1296
      %v1487 = vsel %vm1423, %v1455, %v1303
      %v1488 = vsel %vm1424, %v1456, %v1310
      %v1489 = vsel %vm1425, %v1457, %v1317
      %v1490 = vsel %vm1426, %v1458, %v1324
      %v1491 = vsel %vm1427, %v1459, %v1331
      %vm1492 = vcmp.gt.s32.totalorder %v1460, 0
      %vm1493 = vcmp.gt.s32.totalorder %v1461, 0
      %vm1494 = vcmp.gt.s32.totalorder %v1462, 0
      %vm1495 = vcmp.gt.s32.totalorder %v1463, 0
      %vm1496 = vcmp.gt.s32.totalorder %v1464, 0
      %vm1497 = vcmp.gt.s32.totalorder %v1465, 0
      %vm1498 = vcmp.gt.s32.totalorder %v1466, 0
      %vm1499 = vcmp.gt.s32.totalorder %v1467, 0
      %vm1500 = vcmp.gt.s32.totalorder %v1468, 0
      %vm1501 = vcmp.gt.s32.totalorder %v1469, 0
      %vm1502 = vcmp.gt.s32.totalorder %v1470, 0
      %vm1503 = vcmp.gt.s32.totalorder %v1471, 0
      %vm1504 = vcmp.gt.s32.totalorder %v1472, 0
      %vm1505 = vcmp.gt.s32.totalorder %v1473, 0
      %vm1506 = vcmp.gt.s32.totalorder %v1474, 0
      %vm1507 = vcmp.gt.s32.totalorder %v1475, 0
      %vm1508 = vcmp.gt.s32.totalorder %v1476, 0
      %vm1509 = vcmp.gt.s32.totalorder %v1477, 0
      %vm1510 = vcmp.gt.s32.totalorder %v1478, 0
      %vm1511 = vcmp.gt.s32.totalorder %v1479, 0
      %vm1512 = vcmp.gt.s32.totalorder %v1480, 0
      %vm1513 = vcmp.gt.s32.totalorder %v1481, 0
      %vm1514 = vcmp.gt.s32.totalorder %v1482, 0
      %vm1515 = vcmp.gt.s32.totalorder %v1483, 0
      %vm1516 = vcmp.gt.s32.totalorder %v1484, 0
      %vm1517 = vcmp.gt.s32.totalorder %v1485, 0
      %vm1518 = vcmp.gt.s32.totalorder %v1486, 0
      %vm1519 = vcmp.gt.s32.totalorder %v1487, 0
      %vm1520 = vcmp.gt.s32.totalorder %v1488, 0
      %vm1521 = vcmp.gt.s32.totalorder %v1489, 0
      %vm1522 = vcmp.gt.s32.totalorder %v1490, 0
      %vm1523 = vcmp.gt.s32.totalorder %v1491, 0
      %vm1524 = vcmp.lt.s32.totalorder %v1460, 15
      %vm1525 = vcmp.lt.s32.totalorder %v1461, 15
      %vm1526 = vcmp.lt.s32.totalorder %v1462, 15
      %vm1527 = vcmp.lt.s32.totalorder %v1463, 15
      %vm1528 = vcmp.lt.s32.totalorder %v1464, 15
      %vm1529 = vcmp.lt.s32.totalorder %v1465, 15
      %vm1530 = vcmp.lt.s32.totalorder %v1466, 15
      %vm1531 = vcmp.lt.s32.totalorder %v1467, 15
      %vm1532 = vcmp.lt.s32.totalorder %v1468, 15
      %vm1533 = vcmp.lt.s32.totalorder %v1469, 15
      %vm1534 = vcmp.lt.s32.totalorder %v1470, 15
      %vm1535 = vcmp.lt.s32.totalorder %v1471, 15
      %vm1536 = vcmp.lt.s32.totalorder %v1472, 15
      %vm1537 = vcmp.lt.s32.totalorder %v1473, 15
      %vm1538 = vcmp.lt.s32.totalorder %v1474, 15
      %vm1539 = vcmp.lt.s32.totalorder %v1475, 15
      %vm1540 = vcmp.lt.s32.totalorder %v1476, 15
      %vm1541 = vcmp.lt.s32.totalorder %v1477, 15
      %vm1542 = vcmp.lt.s32.totalorder %v1478, 15
      %vm1543 = vcmp.lt.s32.totalorder %v1479, 15
      %vm1544 = vcmp.lt.s32.totalorder %v1480, 15
      %vm1545 = vcmp.lt.s32.totalorder %v1481, 15
      %vm1546 = vcmp.lt.s32.totalorder %v1482, 15
      %vm1547 = vcmp.lt.s32.totalorder %v1483, 15
      %vm1548 = vcmp.lt.s32.totalorder %v1484, 15
      %vm1549 = vcmp.lt.s32.totalorder %v1485, 15
      %vm1550 = vcmp.lt.s32.totalorder %v1486, 15
      %vm1551 = vcmp.lt.s32.totalorder %v1487, 15
      %vm1552 = vcmp.lt.s32.totalorder %v1488, 15
      %vm1553 = vcmp.lt.s32.totalorder %v1489, 15
      %vm1554 = vcmp.lt.s32.totalorder %v1490, 15
      %vm1555 = vcmp.lt.s32.totalorder %v1491, 15
      %v1556 = vld [vmem:[#allocation2 + $0x4] sm:$0x8]
      %v1557 = vld [vmem:[#allocation2 + $0x8] sm:$0xf]
      %v1558 = vld [vmem:[#allocation2 + $0xc] sm:$0xf]
      %v1559 = vld [vmem:[#allocation2 + $0x10] sm:$0xf]
      %v1560 = vld [vmem:[#allocation2 + $0x14] sm:$0xf]
      %v1561 = vld [vmem:[#allocation2 + $0x18] sm:$0xf]
      %v1562 = vld [vmem:[#allocation2 + $0x1c] sm:$0xf]
      %v1563 = vld [vmem:[#allocation2 + $0x20] sm:$0xf]
      %v1564 = vld [vmem:[#allocation2 + $0x24] sm:$0xf]
      %v1565 = vld [vmem:[#allocation2 + $0x28] sm:$0xf]
      %v1566 = vld [vmem:[#allocation2 + $0x2c] sm:$0xf]
      %v1567 = vld [vmem:[#allocation2 + $0x30] sm:$0xf]
      %v1568 = vld [vmem:[#allocation2 + $0x34] sm:$0xf]
      %v1569 = vld [vmem:[#allocation2 + $0x38] sm:$0xf]
      %v1570 = vld [vmem:[#allocation2 + $0x3c] sm:$0xf]
      %v1571 = vld [vmem:[#allocation2 + $0x40] sm:$0xf]
      %v1572 = vld [vmem:[#allocation2 + $0x44] sm:$0xf]
      %v1573 = vld [vmem:[#allocation2 + $0x48] sm:$0xf]
      %v1574 = vld [vmem:[#allocation2 + $0x4c] sm:$0xf]
      %v1575 = vld [vmem:[#allocation2 + $0x50] sm:$0xf]
      %v1576 = vld [vmem:[#allocation2 + $0x54] sm:$0xf]
      %v1577 = vld [vmem:[#allocation2 + $0x58] sm:$0xf]
      %v1578 = vld [vmem:[#allocation2 + $0x5c] sm:$0xf]
      %v1579 = vld [vmem:[#allocation2 + $0x60] sm:$0xf]
      %v1580 = vld [vmem:[#allocation2 + $0x64] sm:$0xf]
      %v1581 = vld [vmem:[#allocation2 + $0x68] sm:$0xf]
      %v1582 = vld [vmem:[#allocation2 + $0x6c] sm:$0xf]
      %v1583 = vld [vmem:[#allocation2 + $0x70] sm:$0xf]
      %v1584 = vld [vmem:[#allocation2 + $0x74] sm:$0xf]
      %v1585 = vld [vmem:[#allocation2 + $0x78] sm:$0xf]
      %v1586 = vld [vmem:[#allocation2 + $0x7c] sm:$0xf]
      %v1587 = vld [vmem:[#allocation2 + $0x80] sm:$0xf]
      %v1588 = vld [vmem:[#allocation2 + $0x84] sm:$0xf]
      %v1589 = vsel %vm1492, 1, 0
      %v1590 = vsel %vm1493, 1, 0
      %v1591 = vsel %vm1494, 1, 0
      %v1592 = vsel %vm1495, 1, 0
      %v1593 = vsel %vm1496, 1, 0
      %v1594 = vsel %vm1497, 1, 0
      %v1595 = vsel %vm1498, 1, 0
      %v1596 = vsel %vm1499, 1, 0
      %v1597 = vsel %vm1500, 1, 0
      %v1598 = vsel %vm1501, 1, 0
      %v1599 = vsel %vm1502, 1, 0
      %v1600 = vsel %vm1503, 1, 0
      %v1601 = vsel %vm1504, 1, 0
      %v1602 = vsel %vm1505, 1, 0
      %v1603 = vsel %vm1506, 1, 0
      %v1604 = vsel %vm1507, 1, 0
      %v1605 = vsel %vm1508, 1, 0
      %v1606 = vsel %vm1509, 1, 0
      %v1607 = vsel %vm1510, 1, 0
      %v1608 = vsel %vm1511, 1, 0
      %v1609 = vsel %vm1512, 1, 0
      %v1610 = vsel %vm1513, 1, 0
      %v1611 = vsel %vm1514, 1, 0
      %v1612 = vsel %vm1515, 1, 0
      %v1613 = vsel %vm1516, 1, 0
      %v1614 = vsel %vm1517, 1, 0
      %v1615 = vsel %vm1518, 1, 0
      %v1616 = vsel %vm1519, 1, 0
      %v1617 = vsel %vm1520, 1, 0
      %v1618 = vsel %vm1521, 1, 0
      %v1619 = vsel %vm1522, 1, 0
      %v1620 = vsel %vm1523, 1, 0
      %vm1621 = vcmp.eq.s32.totalorder %v1589, 1
      %vm1622 = vcmp.eq.s32.totalorder %v1590, 1
      %vm1623 = vcmp.eq.s32.totalorder %v1591, 1
      %vm1624 = vcmp.eq.s32.totalorder %v1592, 1
      %vm1625 = vcmp.eq.s32.totalorder %v1593, 1
      %vm1626 = vcmp.eq.s32.totalorder %v1594, 1
      %vm1627 = vcmp.eq.s32.totalorder %v1595, 1
      %vm1628 = vcmp.eq.s32.totalorder %v1596, 1
      %vm1629 = vcmp.eq.s32.totalorder %v1597, 1
      %vm1630 = vcmp.eq.s32.totalorder %v1598, 1
      %vm1631 = vcmp.eq.s32.totalorder %v1599, 1
      %vm1632 = vcmp.eq.s32.totalorder %v1600, 1
      %vm1633 = vcmp.eq.s32.totalorder %v1601, 1
      %vm1634 = vcmp.eq.s32.totalorder %v1602, 1
      %vm1635 = vcmp.eq.s32.totalorder %v1603, 1
      %vm1636 = vcmp.eq.s32.totalorder %v1604, 1
      %vm1637 = vcmp.eq.s32.totalorder %v1605, 1
      %vm1638 = vcmp.eq.s32.totalorder %v1606, 1
      %vm1639 = vcmp.eq.s32.totalorder %v1607, 1
      %vm1640 = vcmp.eq.s32.totalorder %v1608, 1
      %vm1641 = vcmp.eq.s32.totalorder %v1609, 1
      %vm1642 = vcmp.eq.s32.totalorder %v1610, 1
      %vm1643 = vcmp.eq.s32.totalorder %v1611, 1
      %vm1644 = vcmp.eq.s32.totalorder %v1612, 1
      %vm1645 = vcmp.eq.s32.totalorder %v1613, 1
      %vm1646 = vcmp.eq.s32.totalorder %v1614, 1
      %vm1647 = vcmp.eq.s32.totalorder %v1615, 1
      %vm1648 = vcmp.eq.s32.totalorder %v1616, 1
      %vm1649 = vcmp.eq.s32.totalorder %v1617, 1
      %vm1650 = vcmp.eq.s32.totalorder %v1618, 1
      %vm1651 = vcmp.eq.s32.totalorder %v1619, 1
      %vm1652 = vcmp.eq.s32.totalorder %v1620, 1
      %vm1653 = vmpackc.low %vm1621, %vm1621
      %vm1654 = vmpackc.low %vm1622, %vm1622
      %vm1655 = vmpackc.low %vm1623, %vm1623
      %vm1656 = vmpackc.low %vm1624, %vm1624
      %vm1657 = vmpackc.low %vm1625, %vm1625
      %vm1658 = vmpackc.low %vm1626, %vm1626
      %vm1659 = vmpackc.low %vm1627, %vm1627
      %vm1660 = vmpackc.low %vm1628, %vm1628
      %vm1661 = vmpackc.low %vm1629, %vm1629
      %vm1662 = vmpackc.low %vm1630, %vm1630
      %vm1663 = vmpackc.low %vm1631, %vm1631
      %vm1664 = vmpackc.low %vm1632, %vm1632
      %vm1665 = vmpackc.low %vm1633, %vm1633
      %vm1666 = vmpackc.low %vm1634, %vm1634
      %vm1667 = vmpackc.low %vm1635, %vm1635
      %vm1668 = vmpackc.low %vm1636, %vm1636
      %vm1669 = vmpackc.low %vm1637, %vm1637
      %vm1670 = vmpackc.low %vm1638, %vm1638
      %vm1671 = vmpackc.low %vm1639, %vm1639
      %vm1672 = vmpackc.low %vm1640, %vm1640
      %vm1673 = vmpackc.low %vm1641, %vm1641
      %vm1674 = vmpackc.low %vm1642, %vm1642
      %vm1675 = vmpackc.low %vm1643, %vm1643
      %vm1676 = vmpackc.low %vm1644, %vm1644
      %vm1677 = vmpackc.low %vm1645, %vm1645
      %vm1678 = vmpackc.low %vm1646, %vm1646
      %vm1679 = vmpackc.low %vm1647, %vm1647
      %vm1680 = vmpackc.low %vm1648, %vm1648
      %vm1681 = vmpackc.low %vm1649, %vm1649
      %vm1682 = vmpackc.low %vm1650, %vm1650
      %vm1683 = vmpackc.low %vm1651, %vm1651
      %vm1684 = vmpackc.low %vm1652, %vm1652
      %v1685 = vsel %vm1653, 65537, 0
      %v1686 = vsel %vm1654, 65537, 0
      %v1687 = vsel %vm1655, 65537, 0
      %v1688 = vsel %vm1656, 65537, 0
      %v1689 = vsel %vm1657, 65537, 0
      %v1690 = vsel %vm1658, 65537, 0
      %v1691 = vsel %vm1659, 65537, 0
      %v1692 = vsel %vm1660, 65537, 0
      %v1693 = vsel %vm1661, 65537, 0
      %v1694 = vsel %vm1662, 65537, 0
      %v1695 = vsel %vm1663, 65537, 0
      %v1696 = vsel %vm1664, 65537, 0
      %v1697 = vsel %vm1665, 65537, 0
      %v1698 = vsel %vm1666, 65537, 0
      %v1699 = vsel %vm1667, 65537, 0
      %v1700 = vsel %vm1668, 65537, 0
      %v1701 = vsel %vm1669, 65537, 0
      %v1702 = vsel %vm1670, 65537, 0
      %v1703 = vsel %vm1671, 65537, 0
      %v1704 = vsel %vm1672, 65537, 0
      %v1705 = vsel %vm1673, 65537, 0
      %v1706 = vsel %vm1674, 65537, 0
      %v1707 = vsel %vm1675, 65537, 0
      %v1708 = vsel %vm1676, 65537, 0
      %v1709 = vsel %vm1677, 65537, 0
      %v1710 = vsel %vm1678, 65537, 0
      %v1711 = vsel %vm1679, 65537, 0
      %v1712 = vsel %vm1680, 65537, 0
      %v1713 = vsel %vm1681, 65537, 0
      %v1714 = vsel %vm1682, 65537, 0
      %v1715 = vsel %vm1683, 65537, 0
      %v1716 = vsel %vm1684, 65537, 0
      %vm1717 = vsmask.f32 3328
      %vm1718 = vsmask.f32 7440
      %vm1719 = vmor %vm1717, %vm1718
      %v1721 = vshll.u32 %v1685, 16
      %v1723 = vrot.slane %v1721, 5
      %v1724 = vshrl.u32 %v1685, 16
      %v1726 = vrot.slane %v1724, 4
      %v1727 = vor.u32 %v1726, %v1723
      %v1728 = vrot.slane %v1727, 4
      %v1730 = vshll.u32 %v1686, 16
      %v1732 = vrot.slane %v1730, 5
      %v1733 = vsel %vm1719, %v1728, %v1732
      %v1734 = vshrl.u32 %v1686, 16
      %v1736 = vrot.slane %v1734, 4
      %v1737 = vor.u32 %v1736, %v1732
      %v1738 = vrot.slane %v1737, 4
      %v1740 = vshll.u32 %v1687, 16
      %v1742 = vrot.slane %v1740, 5
      %v1743 = vsel %vm1719, %v1738, %v1742
      %v1744 = vshrl.u32 %v1687, 16
      %v1746 = vrot.slane %v1744, 4
      %v1747 = vor.u32 %v1746, %v1742
      %v1748 = vrot.slane %v1747, 4
      %v1750 = vshll.u32 %v1688, 16
      %v1752 = vrot.slane %v1750, 5
      %v1753 = vsel %vm1719, %v1748, %v1752
      %v1754 = vshrl.u32 %v1688, 16
      %v1756 = vrot.slane %v1754, 4
      %v1757 = vor.u32 %v1756, %v1752
      %v1758 = vrot.slane %v1757, 4
      %v1760 = vshll.u32 %v1689, 16
      %v1762 = vrot.slane %v1760, 5
      %v1763 = vsel %vm1719, %v1758, %v1762
      %v1764 = vshrl.u32 %v1689, 16
      %v1766 = vrot.slane %v1764, 4
      %v1767 = vor.u32 %v1766, %v1762
      %v1768 = vrot.slane %v1767, 4
      %v1770 = vshll.u32 %v1690, 16
      %v1772 = vrot.slane %v1770, 5
      %v1773 = vsel %vm1719, %v1768, %v1772
      %v1774 = vshrl.u32 %v1690, 16
      %v1776 = vrot.slane %v1774, 4
      %v1777 = vor.u32 %v1776, %v1772
      %v1778 = vrot.slane %v1777, 4
      %v1780 = vshll.u32 %v1691, 16
      %v1782 = vrot.slane %v1780, 5
      %v1783 = vsel %vm1719, %v1778, %v1782
      %v1784 = vshrl.u32 %v1691, 16
      %v1786 = vrot.slane %v1784, 4
      %v1787 = vor.u32 %v1786, %v1782
      %v1788 = vrot.slane %v1787, 4
      %v1790 = vshll.u32 %v1692, 16
      %v1792 = vrot.slane %v1790, 5
      %v1793 = vsel %vm1719, %v1788, %v1792
      %v1794 = vshrl.u32 %v1692, 16
      %v1796 = vrot.slane %v1794, 4
      %v1797 = vor.u32 %v1796, %v1792
      %v1798 = vrot.slane %v1797, 4
      %v1800 = vshll.u32 %v1693, 16
      %v1802 = vrot.slane %v1800, 5
      %v1803 = vsel %vm1719, %v1798, %v1802
      %v1804 = vshrl.u32 %v1693, 16
      %v1806 = vrot.slane %v1804, 4
      %v1807 = vor.u32 %v1806, %v1802
      %v1808 = vrot.slane %v1807, 4
      %v1810 = vshll.u32 %v1694, 16
      %v1812 = vrot.slane %v1810, 5
      %v1813 = vsel %vm1719, %v1808, %v1812
      %v1814 = vshrl.u32 %v1694, 16
      %v1816 = vrot.slane %v1814, 4
      %v1817 = vor.u32 %v1816, %v1812
      %v1818 = vrot.slane %v1817, 4
      %v1820 = vshll.u32 %v1695, 16
      %v1822 = vrot.slane %v1820, 5
      %v1823 = vsel %vm1719, %v1818, %v1822
      %v1824 = vshrl.u32 %v1695, 16
      %v1826 = vrot.slane %v1824, 4
      %v1827 = vor.u32 %v1826, %v1822
      %v1828 = vrot.slane %v1827, 4
      %v1830 = vshll.u32 %v1696, 16
      %v1832 = vrot.slane %v1830, 5
      %v1833 = vsel %vm1719, %v1828, %v1832
      %v1834 = vshrl.u32 %v1696, 16
      %v1836 = vrot.slane %v1834, 4
      %v1837 = vor.u32 %v1836, %v1832
      %v1838 = vrot.slane %v1837, 4
      %v1840 = vshll.u32 %v1697, 16
      %v1842 = vrot.slane %v1840, 5
      %v1843 = vsel %vm1719, %v1838, %v1842
      %v1844 = vshrl.u32 %v1697, 16
      %v1846 = vrot.slane %v1844, 4
      %v1847 = vor.u32 %v1846, %v1842
      %v1848 = vrot.slane %v1847, 4
      %v1850 = vshll.u32 %v1698, 16
      %v1852 = vrot.slane %v1850, 5
      %v1853 = vsel %vm1719, %v1848, %v1852
      %v1854 = vshrl.u32 %v1698, 16
      %v1856 = vrot.slane %v1854, 4
      %v1857 = vor.u32 %v1856, %v1852
      %v1858 = vrot.slane %v1857, 4
      %v1860 = vshll.u32 %v1699, 16
      %v1862 = vrot.slane %v1860, 5
      %v1863 = vsel %vm1719, %v1858, %v1862
      %v1864 = vshrl.u32 %v1699, 16
      %v1866 = vrot.slane %v1864, 4
      %v1867 = vor.u32 %v1866, %v1862
      %v1868 = vrot.slane %v1867, 4
      %v1870 = vshll.u32 %v1700, 16
      %v1872 = vrot.slane %v1870, 5
      %v1873 = vsel %vm1719, %v1868, %v1872
      %v1874 = vshrl.u32 %v1700, 16
      %v1876 = vrot.slane %v1874, 4
      %v1877 = vor.u32 %v1876, %v1872
      %v1878 = vrot.slane %v1877, 4
      %v1880 = vshll.u32 %v1701, 16
      %v1882 = vrot.slane %v1880, 5
      %v1883 = vsel %vm1719, %v1878, %v1882
      %v1884 = vshrl.u32 %v1701, 16
      %v1886 = vrot.slane %v1884, 4
      %v1887 = vor.u32 %v1886, %v1882
      %v1888 = vrot.slane %v1887, 4
      %v1890 = vshll.u32 %v1702, 16
      %v1892 = vrot.slane %v1890, 5
      %v1893 = vsel %vm1719, %v1888, %v1892
      %v1894 = vshrl.u32 %v1702, 16
      %v1896 = vrot.slane %v1894, 4
      %v1897 = vor.u32 %v1896, %v1892
      %v1898 = vrot.slane %v1897, 4
      %v1900 = vshll.u32 %v1703, 16
      %v1902 = vrot.slane %v1900, 5
      %v1903 = vsel %vm1719, %v1898, %v1902
      %v1904 = vshrl.u32 %v1703, 16
      %v1906 = vrot.slane %v1904, 4
      %v1907 = vor.u32 %v1906, %v1902
      %v1908 = vrot.slane %v1907, 4
      %v1910 = vshll.u32 %v1704, 16
      %v1912 = vrot.slane %v1910, 5
      %v1913 = vsel %vm1719, %v1908, %v1912
      %v1914 = vshrl.u32 %v1704, 16
      %v1916 = vrot.slane %v1914, 4
      %v1917 = vor.u32 %v1916, %v1912
      %v1918 = vrot.slane %v1917, 4
      %v1920 = vshll.u32 %v1705, 16
      %v1922 = vrot.slane %v1920, 5
      %v1923 = vsel %vm1719, %v1918, %v1922
      %v1924 = vshrl.u32 %v1705, 16
      %v1926 = vrot.slane %v1924, 4
      %v1927 = vor.u32 %v1926, %v1922
      %v1928 = vrot.slane %v1927, 4
      %v1930 = vshll.u32 %v1706, 16
      %v1932 = vrot.slane %v1930, 5
      %v1933 = vsel %vm1719, %v1928, %v1932
      %v1934 = vshrl.u32 %v1706, 16
      %v1936 = vrot.slane %v1934, 4
      %v1937 = vor.u32 %v1936, %v1932
      %v1938 = vrot.slane %v1937, 4
      %v1940 = vshll.u32 %v1707, 16
      %v1942 = vrot.slane %v1940, 5
      %v1943 = vsel %vm1719, %v1938, %v1942
      %v1944 = vshrl.u32 %v1707, 16
      %v1946 = vrot.slane %v1944, 4
      %v1947 = vor.u32 %v1946, %v1942
      %v1948 = vrot.slane %v1947, 4
      %v1950 = vshll.u32 %v1708, 16
      %v1952 = vrot.slane %v1950, 5
      %v1953 = vsel %vm1719, %v1948, %v1952
      %v1954 = vshrl.u32 %v1708, 16
      %v1956 = vrot.slane %v1954, 4
      %v1957 = vor.u32 %v1956, %v1952
      %v1958 = vrot.slane %v1957, 4
      %v1960 = vshll.u32 %v1709, 16
      %v1962 = vrot.slane %v1960, 5
      %v1963 = vsel %vm1719, %v1958, %v1962
      %v1964 = vshrl.u32 %v1709, 16
      %v1966 = vrot.slane %v1964, 4
      %v1967 = vor.u32 %v1966, %v1962
      %v1968 = vrot.slane %v1967, 4
      %v1970 = vshll.u32 %v1710, 16
      %v1972 = vrot.slane %v1970, 5
      %v1973 = vsel %vm1719, %v1968, %v1972
      %v1974 = vshrl.u32 %v1710, 16
      %v1976 = vrot.slane %v1974, 4
      %v1977 = vor.u32 %v1976, %v1972
      %v1978 = vrot.slane %v1977, 4
      %v1980 = vshll.u32 %v1711, 16
      %v1982 = vrot.slane %v1980, 5
      %v1983 = vsel %vm1719, %v1978, %v1982
      %v1984 = vshrl.u32 %v1711, 16
      %v1986 = vrot.slane %v1984, 4
      %v1987 = vor.u32 %v1986, %v1982
      %v1988 = vrot.slane %v1987, 4
      %v1990 = vshll.u32 %v1712, 16
      %v1992 = vrot.slane %v1990, 5
      %v1993 = vsel %vm1719, %v1988, %v1992
      %v1994 = vshrl.u32 %v1712, 16
      %v1996 = vrot.slane %v1994, 4
      %v1997 = vor.u32 %v1996, %v1992
      %v1998 = vrot.slane %v1997, 4
      %v2000 = vshll.u32 %v1713, 16
      %v2002 = vrot.slane %v2000, 5
      %v2003 = vsel %vm1719, %v1998, %v2002
      %v2004 = vshrl.u32 %v1713, 16
      %v2006 = vrot.slane %v2004, 4
      %v2007 = vor.u32 %v2006, %v2002
      %v2008 = vrot.slane %v2007, 4
      %v2010 = vshll.u32 %v1714, 16
      %v2012 = vrot.slane %v2010, 5
      %v2013 = vsel %vm1719, %v2008, %v2012
      %v2014 = vshrl.u32 %v1714, 16
      %v2016 = vrot.slane %v2014, 4
      %v2017 = vor.u32 %v2016, %v2012
      %v2018 = vrot.slane %v2017, 4
      %v2020 = vshll.u32 %v1715, 16
      %v2022 = vrot.slane %v2020, 5
      %v2023 = vsel %vm1719, %v2018, %v2022
      %v2024 = vshrl.u32 %v1715, 16
      %v2026 = vrot.slane %v2024, 4
      %v2027 = vor.u32 %v2026, %v2022
      %v2028 = vrot.slane %v2027, 4
      %v2030 = vshll.u32 %v1716, 16
      %v2032 = vrot.slane %v2030, 5
      %v2033 = vsel %vm1719, %v2028, %v2032
      %v2034 = vshrl.u32 %v1716, 16
      %v2036 = vrot.slane %v2034, 4
      %v2037 = vor.u32 %v2036, %v2032
      %v2038 = vrot.slane %v2037, 4
      %vm2039 = vcmp.ne.s16.totalorder %v1723, 0
      %vm2040 = vcmp.ne.s16.totalorder %v1733, 0
      %vm2041 = vcmp.ne.s16.totalorder %v1743, 0
      %vm2042 = vcmp.ne.s16.totalorder %v1753, 0
      %vm2043 = vcmp.ne.s16.totalorder %v1763, 0
      %vm2044 = vcmp.ne.s16.totalorder %v1773, 0
      %vm2045 = vcmp.ne.s16.totalorder %v1783, 0
      %vm2046 = vcmp.ne.s16.totalorder %v1793, 0
      %vm2047 = vcmp.ne.s16.totalorder %v1803, 0
      %vm2048 = vcmp.ne.s16.totalorder %v1813, 0
      %vm2049 = vcmp.ne.s16.totalorder %v1823, 0
      %vm2050 = vcmp.ne.s16.totalorder %v1833, 0
      %vm2051 = vcmp.ne.s16.totalorder %v1843, 0
      %vm2052 = vcmp.ne.s16.totalorder %v1853, 0
      %vm2053 = vcmp.ne.s16.totalorder %v1863, 0
      %vm2054 = vcmp.ne.s16.totalorder %v1873, 0
      %vm2055 = vcmp.ne.s16.totalorder %v1883, 0
      %vm2056 = vcmp.ne.s16.totalorder %v1893, 0
      %vm2057 = vcmp.ne.s16.totalorder %v1903, 0
      %vm2058 = vcmp.ne.s16.totalorder %v1913, 0
      %vm2059 = vcmp.ne.s16.totalorder %v1923, 0
      %vm2060 = vcmp.ne.s16.totalorder %v1933, 0
      %vm2061 = vcmp.ne.s16.totalorder %v1943, 0
      %vm2062 = vcmp.ne.s16.totalorder %v1953, 0
      %vm2063 = vcmp.ne.s16.totalorder %v1963, 0
      %vm2064 = vcmp.ne.s16.totalorder %v1973, 0
      %vm2065 = vcmp.ne.s16.totalorder %v1983, 0
      %vm2066 = vcmp.ne.s16.totalorder %v1993, 0
      %vm2067 = vcmp.ne.s16.totalorder %v2003, 0
      %vm2068 = vcmp.ne.s16.totalorder %v2013, 0
      %vm2069 = vcmp.ne.s16.totalorder %v2023, 0
      %vm2070 = vcmp.ne.s16.totalorder %v2033, 0
      %vm2071 = vcmp.ne.s16.totalorder %v2038, 0
      %v2072 = vsel %vm2039, %v1556, 0
      %v2073 = vsel %vm2040, %v1557, 0
      %v2074 = vsel %vm2041, %v1558, 0
      %v2075 = vsel %vm2042, %v1559, 0
      %v2076 = vsel %vm2043, %v1560, 0
      %v2077 = vsel %vm2044, %v1561, 0
      %v2078 = vsel %vm2045, %v1562, 0
      %v2079 = vsel %vm2046, %v1563, 0
      %v2080 = vsel %vm2047, %v1564, 0
      %v2081 = vsel %vm2048, %v1565, 0
      %v2082 = vsel %vm2049, %v1566, 0
      %v2083 = vsel %vm2050, %v1567, 0
      %v2084 = vsel %vm2051, %v1568, 0
      %v2085 = vsel %vm2052, %v1569, 0
      %v2086 = vsel %vm2053, %v1570, 0
      %v2087 = vsel %vm2054, %v1571, 0
      %v2088 = vsel %vm2055, %v1572, 0
      %v2089 = vsel %vm2056, %v1573, 0
      %v2090 = vsel %vm2057, %v1574, 0
      %v2091 = vsel %vm2058, %v1575, 0
      %v2092 = vsel %vm2059, %v1576, 0
      %v2093 = vsel %vm2060, %v1577, 0
      %v2094 = vsel %vm2061, %v1578, 0
      %v2095 = vsel %vm2062, %v1579, 0
      %v2096 = vsel %vm2063, %v1580, 0
      %v2097 = vsel %vm2064, %v1581, 0
      %v2098 = vsel %vm2065, %v1582, 0
      %v2099 = vsel %vm2066, %v1583, 0
      %v2100 = vsel %vm2067, %v1584, 0
      %v2101 = vsel %vm2068, %v1585, 0
      %v2102 = vsel %vm2069, %v1586, 0
      %v2103 = vsel %vm2070, %v1587, 0
      %v2104 = vsel %vm2071, %v1588, 0
      %v2105 = vld [vmem:[%s4] sm:$0xf]
      %s2106 = scalar_lea.vmem %s4, 4
      %v2107 = vld [vmem:[%s2106] sm:$0xf]
      %v2140 = vunpack.c.l.b16 %v1557
      %v2141 = vunpack.c.l.b16 %v1558
      %v2142 = vunpack.c.l.b16 %v1559
      %v2143 = vunpack.c.l.b16 %v1560
      %v2144 = vunpack.c.l.b16 %v1561
      %v2145 = vunpack.c.l.b16 %v1562
      %v2146 = vunpack.c.l.b16 %v1563
      %v2147 = vunpack.c.l.b16 %v1564
      %v2148 = vunpack.c.l.b16 %v1565
      %v2149 = vunpack.c.l.b16 %v1566
      %v2150 = vunpack.c.l.b16 %v1567
      %v2151 = vunpack.c.l.b16 %v1568
      %v2152 = vunpack.c.l.b16 %v1569
      %v2153 = vunpack.c.l.b16 %v1570
      %v2154 = vunpack.c.l.b16 %v1571
      %v2155 = vunpack.c.l.b16 %v1572
      %v2156 = vunpack.c.l.b16 %v1573
      %v2157 = vunpack.c.l.b16 %v1574
      %v2158 = vunpack.c.l.b16 %v1575
      %v2159 = vunpack.c.l.b16 %v1576
      %v2160 = vunpack.c.l.b16 %v1577
      %v2161 = vunpack.c.l.b16 %v1578
      %v2162 = vunpack.c.l.b16 %v1579
      %v2163 = vunpack.c.l.b16 %v1580
      %v2164 = vunpack.c.l.b16 %v1581
      %v2165 = vunpack.c.l.b16 %v1582
      %v2166 = vunpack.c.l.b16 %v1583
      %v2167 = vunpack.c.l.b16 %v1584
      %v2168 = vunpack.c.l.b16 %v1585
      %v2169 = vunpack.c.l.b16 %v1586
      %v2170 = vunpack.c.l.b16 %v1587
      %v2171 = vunpack.c.l.b16 %v1588
      %v2172 = vpack.c.b16 %v2141, %v2140
      %v2173 = vpack.c.b16 %v2143, %v2142
      %v2174 = vpack.c.b16 %v2145, %v2144
      %v2175 = vpack.c.b16 %v2147, %v2146
      %v2176 = vpack.c.b16 %v2149, %v2148
      %v2177 = vpack.c.b16 %v2151, %v2150
      %v2178 = vpack.c.b16 %v2153, %v2152
      %v2179 = vpack.c.b16 %v2155, %v2154
      %v2180 = vpack.c.b16 %v2157, %v2156
      %v2181 = vpack.c.b16 %v2159, %v2158
      %v2182 = vpack.c.b16 %v2161, %v2160
      %v2183 = vpack.c.b16 %v2163, %v2162
      %v2184 = vpack.c.b16 %v2165, %v2164
      %v2185 = vpack.c.b16 %v2167, %v2166
      %v2186 = vpack.c.b16 %v2169, %v2168
      %v2187 = vpack.c.b16 %v2171, %v2170
      %v2189 = vsel %vm427, %v2172, 0
      %v2192 = vsel %vm427, %v2173, 0
      %v2195 = vsel %vm427, %v2174, 0
      %v2198 = vsel %vm427, %v2175, 0
      %v2201 = vsel %vm427, %v2176, 0
      %v2204 = vsel %vm427, %v2177, 0
      %v2207 = vsel %vm427, %v2178, 0
      %v2210 = vsel %vm427, %v2179, 0
      %v2213 = vsel %vm427, %v2180, 0
      %v2216 = vsel %vm427, %v2181, 0
      %v2219 = vsel %vm427, %v2182, 0
      %v2222 = vsel %vm427, %v2183, 0
      %v2225 = vsel %vm427, %v2184, 0
      %v2228 = vsel %vm427, %v2185, 0
      %v2231 = vsel %vm427, %v2186, 0
      %v2234 = vsel %vm427, %v2187, 0
      %v2237 = vsel %vm476, %v2107, 0
      %2239 = vmatprep.subr.bf16.mxu0 0
      %2240 = vmatpush1.bf16.msra.mxu0 %v2237
      %2241 = vmatprep.subr.bf16.mxu0 0
      %2242 = vmatpush1.bf16.msra.mxu0 0
      %2243 = vmatprep.subr.bf16.mxu0 0
      %2244 = vmatpush1.bf16.msra.mxu0 0
      %2245 = vmatprep.subr.bf16.mxu0 0
      %2246 = vmatpush1.bf16.msra.mxu0 0
      %2247 = vmatprep.subr.bf16.mxu0 0
      %2248 = vmatpush1.bf16.msra.mxu0 0
      %2249 = vmatprep.subr.bf16.mxu0 0
      %2250 = vmatpush1.bf16.msra.mxu0 0
      %2251 = vmatprep.subr.bf16.mxu0 0
      %2252 = vmatpush1.bf16.msra.mxu0 0
      %2253 = vmatprep.subr.bf16.mxu0 0
      %2254 = vmatpush1.bf16.msra.mxu0 0
      %2255 = vmatprep.subr.bf16.mxu0 0
      %2256 = vmatpush1.bf16.msra.mxu0 0
      %2257 = vmatprep.subr.bf16.mxu0 0
      %2258 = vmatpush1.bf16.msra.mxu0 0
      %2259 = vmatprep.subr.bf16.mxu0 0
      %2260 = vmatpush1.bf16.msra.mxu0 0
      %2261 = vmatprep.subr.bf16.mxu0 0
      %2262 = vmatpush1.bf16.msra.mxu0 0
      %2263 = vmatprep.subr.bf16.mxu0 0
      %2264 = vmatpush1.bf16.msra.mxu0 0
      %2265 = vmatprep.subr.bf16.mxu0 0
      %2266 = vmatpush1.bf16.msra.mxu0 0
      %2267 = vmatprep.subr.bf16.mxu0 0
      %2268 = vmatpush1.bf16.msra.mxu0 0
      %2269 = vmatprep.subr.bf16.mxu0 0
      %2270 = vmatpush1.bf16.msra.mxu0 0
      %2271 = vmatprep.mubr.bf16.mxu0 0
      %2272 = vmatmul.mubr.bf16.gmra.mrb[0].mxu0 %v2189
      %v2273 = vpop.f32.mrb[0].mxu0
      %v2274 = vadd.f32 0.0, %v2273
      %v2275 = vpop.f32.mrb[0].mxu0
      %v2276 = vpop.f32.mrb[0].mxu0
      %v2277 = vadd.f32 0.0, %v2276
      %v2278 = vpop.f32.mrb[0].mxu0
      %2279 = vmatprep.mubr.bf16.mxu0 0
      %2280 = vmatmul.mubr.bf16.gmra.mrb[0].mxu0 %v2192
      %v2281 = vpop.f32.mrb[0].mxu0
      %v2282 = vadd.f32 0.0, %v2281
      %v2283 = vpop.f32.mrb[0].mxu0
      %v2284 = vpop.f32.mrb[0].mxu0
      %v2285 = vadd.f32 0.0, %v2284
      %v2286 = vpop.f32.mrb[0].mxu0
      %2287 = vmatprep.mubr.bf16.mxu0 0
      %2288 = vmatmul.mubr.bf16.gmra.mrb[0].mxu0 %v2195
      %v2289 = vpop.f32.mrb[0].mxu0
      %v2290 = vadd.f32 0.0, %v2289
      %v2291 = vpop.f32.mrb[0].mxu0
      %v2292 = vpop.f32.mrb[0].mxu0
      %v2293 = vadd.f32 0.0, %v2292
      %v2294 = vpop.f32.mrb[0].mxu0
      %2295 = vmatprep.mubr.bf16.mxu0 0
      %2296 = vmatmul.mubr.bf16.gmra.mrb[0].mxu0 %v2198
      %v2297 = vpop.f32.mrb[0].mxu0
      %v2298 = vadd.f32 0.0, %v2297
      %v2299 = vpop.f32.mrb[0].mxu0
      %v2300 = vpop.f32.mrb[0].mxu0
      %v2301 = vadd.f32 0.0, %v2300
      %v2302 = vpop.f32.mrb[0].mxu0
      %2303 = vmatprep.mubr.bf16.mxu0 0
      %2304 = vmatmul.mubr.bf16.gmra.mrb[0].mxu0 %v2201
      %v2305 = vpop.f32.mrb[0].mxu0
      %v2306 = vadd.f32 0.0, %v2305
      %v2307 = vpop.f32.mrb[0].mxu0
      %v2308 = vpop.f32.mrb[0].mxu0
      %v2309 = vadd.f32 0.0, %v2308
      %v2310 = vpop.f32.mrb[0].mxu0
      %2311 = vmatprep.mubr.bf16.mxu0 0
      %2312 = vmatmul.mubr.bf16.gmra.mrb[0].mxu0 %v2204
      %v2313 = vpop.f32.mrb[0].mxu0
      %v2314 = vadd.f32 0.0, %v2313
      %v2315 = vpop.f32.mrb[0].mxu0
      %v2316 = vpop.f32.mrb[0].mxu0
      %v2317 = vadd.f32 0.0, %v2316
      %v2318 = vpop.f32.mrb[0].mxu0
      %2319 = vmatprep.mubr.bf16.mxu0 0
      %2320 = vmatmul.mubr.bf16.gmra.mrb[0].mxu0 %v2207
      %v2321 = vpop.f32.mrb[0].mxu0
      %v2322 = vadd.f32 0.0, %v2321
      %v2323 = vpop.f32.mrb[0].mxu0
      %v2324 = vpop.f32.mrb[0].mxu0
      %v2325 = vadd.f32 0.0, %v2324
      %v2326 = vpop.f32.mrb[0].mxu0
      %2327 = vmatprep.mubr.bf16.mxu0 0
      %2328 = vmatmul.mubr.bf16.gmra.mrb[0].mxu0 %v2210
      %v2329 = vpop.f32.mrb[0].mxu0
      %v2330 = vadd.f32 0.0, %v2329
      %v2331 = vpop.f32.mrb[0].mxu0
      %v2332 = vpop.f32.mrb[0].mxu0
      %v2333 = vadd.f32 0.0, %v2332
      %v2334 = vpop.f32.mrb[0].mxu0
      %2335 = vmatprep.mubr.bf16.mxu0 0
      %2336 = vmatmul.mubr.bf16.gmra.mrb[0].mxu0 %v2213
      %v2337 = vpop.f32.mrb[0].mxu0
      %v2338 = vadd.f32 0.0, %v2337
      %v2339 = vpop.f32.mrb[0].mxu0
      %v2340 = vpop.f32.mrb[0].mxu0
      %v2341 = vadd.f32 0.0, %v2340
      %v2342 = vpop.f32.mrb[0].mxu0
      %2343 = vmatprep.mubr.bf16.mxu0 0
      %2344 = vmatmul.mubr.bf16.gmra.mrb[0].mxu0 %v2216
      %v2345 = vpop.f32.mrb[0].mxu0
      %v2346 = vadd.f32 0.0, %v2345
      %v2347 = vpop.f32.mrb[0].mxu0
      %v2348 = vpop.f32.mrb[0].mxu0
      %v2349 = vadd.f32 0.0, %v2348
      %v2350 = vpop.f32.mrb[0].mxu0
      %2351 = vmatprep.mubr.bf16.mxu0 0
      %2352 = vmatmul.mubr.bf16.gmra.mrb[0].mxu0 %v2219
      %v2353 = vpop.f32.mrb[0].mxu0
      %v2354 = vadd.f32 0.0, %v2353
      %v2355 = vpop.f32.mrb[0].mxu0
      %v2356 = vpop.f32.mrb[0].mxu0
      %v2357 = vadd.f32 0.0, %v2356
      %v2358 = vpop.f32.mrb[0].mxu0
      %2359 = vmatprep.mubr.bf16.mxu0 0
      %2360 = vmatmul.mubr.bf16.gmra.mrb[0].mxu0 %v2222
      %v2361 = vpop.f32.mrb[0].mxu0
      %v2362 = vadd.f32 0.0, %v2361
      %v2363 = vpop.f32.mrb[0].mxu0
      %v2364 = vpop.f32.mrb[0].mxu0
      %v2365 = vadd.f32 0.0, %v2364
      %v2366 = vpop.f32.mrb[0].mxu0
      %2367 = vmatprep.mubr.bf16.mxu0 0
      %2368 = vmatmul.mubr.bf16.gmra.mrb[0].mxu0 %v2225
      %v2369 = vpop.f32.mrb[0].mxu0
      %v2370 = vadd.f32 0.0, %v2369
      %v2371 = vpop.f32.mrb[0].mxu0
      %v2372 = vpop.f32.mrb[0].mxu0
      %v2373 = vadd.f32 0.0, %v2372
      %v2374 = vpop.f32.mrb[0].mxu0
      %2375 = vmatprep.mubr.bf16.mxu0 0
      %2376 = vmatmul.mubr.bf16.gmra.mrb[0].mxu0 %v2228
      %v2377 = vpop.f32.mrb[0].mxu0
      %v2378 = vadd.f32 0.0, %v2377
      %v2379 = vpop.f32.mrb[0].mxu0
      %v2380 = vpop.f32.mrb[0].mxu0
      %v2381 = vadd.f32 0.0, %v2380
      %v2382 = vpop.f32.mrb[0].mxu0
      %2383 = vmatprep.mubr.bf16.mxu0 0
      %2384 = vmatmul.mubr.bf16.gmra.mrb[0].mxu0 %v2231
      %v2385 = vpop.f32.mrb[0].mxu0
      %v2386 = vadd.f32 0.0, %v2385
      %v2387 = vpop.f32.mrb[0].mxu0
      %v2388 = vpop.f32.mrb[0].mxu0
      %v2389 = vadd.f32 0.0, %v2388
      %v2390 = vpop.f32.mrb[0].mxu0
      %2391 = vmatprep.mubr.bf16.mxu0 0
      %2392 = vmatmul.mubr.bf16.gmra.mrb[0].mxu0 %v2234
      %v2393 = vpop.f32.mrb[0].mxu0
      %v2394 = vadd.f32 0.0, %v2393
      %v2395 = vpop.f32.mrb[0].mxu0
      %v2396 = vpop.f32.mrb[0].mxu0
      %v2397 = vadd.f32 0.0, %v2396
      %v2398 = vpop.f32.mrb[0].mxu0
      %2399 = vdwg.mxu0
      %v2433 = vunpack.c.l.b16 %v2072
      %v2434 = vunpack.c.l.b16 %v2073
      %v2435 = vunpack.c.l.b16 %v2074
      %v2436 = vunpack.c.l.b16 %v2075
      %v2437 = vunpack.c.l.b16 %v2076
      %v2438 = vunpack.c.l.b16 %v2077
      %v2439 = vunpack.c.l.b16 %v2078
      %v2440 = vunpack.c.l.b16 %v2079
      %v2441 = vunpack.c.l.b16 %v2080
      %v2442 = vunpack.c.l.b16 %v2081
      %v2443 = vunpack.c.l.b16 %v2082
      %v2444 = vunpack.c.l.b16 %v2083
      %v2445 = vunpack.c.l.b16 %v2084
      %v2446 = vunpack.c.l.b16 %v2085
      %v2447 = vunpack.c.l.b16 %v2086
      %v2448 = vunpack.c.l.b16 %v2087
      %v2449 = vunpack.c.l.b16 %v2088
      %v2450 = vunpack.c.l.b16 %v2089
      %v2451 = vunpack.c.l.b16 %v2090
      %v2452 = vunpack.c.l.b16 %v2091
      %v2453 = vunpack.c.l.b16 %v2092
      %v2454 = vunpack.c.l.b16 %v2093
      %v2455 = vunpack.c.l.b16 %v2094
      %v2456 = vunpack.c.l.b16 %v2095
      %v2457 = vunpack.c.l.b16 %v2096
      %v2458 = vunpack.c.l.b16 %v2097
      %v2459 = vunpack.c.l.b16 %v2098
      %v2460 = vunpack.c.l.b16 %v2099
      %v2461 = vunpack.c.l.b16 %v2100
      %v2462 = vunpack.c.l.b16 %v2101
      %v2463 = vunpack.c.l.b16 %v2102
      %v2464 = vunpack.c.l.b16 %v2103
      %v2465 = vunpack.c.l.b16 %v2104
      %v2466 = vpack.c.b16 %v2434, %v2433
      %v2467 = vpack.c.b16 %v2436, %v2435
      %v2468 = vpack.c.b16 %v2438, %v2437
      %v2469 = vpack.c.b16 %v2440, %v2439
      %v2470 = vpack.c.b16 %v2442, %v2441
      %v2471 = vpack.c.b16 %v2444, %v2443
      %v2472 = vpack.c.b16 %v2446, %v2445
      %v2473 = vpack.c.b16 %v2448, %v2447
      %v2474 = vpack.c.b16 %v2450, %v2449
      %v2475 = vpack.c.b16 %v2452, %v2451
      %v2476 = vpack.c.b16 %v2454, %v2453
      %v2477 = vpack.c.b16 %v2456, %v2455
      %v2478 = vpack.c.b16 %v2458, %v2457
      %v2479 = vpack.c.b16 %v2460, %v2459
      %v2480 = vpack.c.b16 %v2462, %v2461
      %v2481 = vpack.c.b16 %v2464, %v2463
      %v2482 = vpack.c.b16 %v2465, %v2465
      %vm2483 = vsmask.f32 4352
      %v2485 = vshrl.u32 %v2466, 16
      %v2487 = vrot.slane %v2485, 3
      %v2488 = vshll.u32 %v2466, 16
      %v2490 = vrot.slane %v2488, 4
      %v2491 = vor.u32 %v2487, %v2490
      %v2493 = vshrl.u32 %v2467, 16
      %v2495 = vrot.slane %v2493, 3
      %v2496 = vshll.u32 %v2467, 16
      %v2498 = vrot.slane %v2496, 4
      %v2499 = vor.u32 %v2495, %v2498
      %v2500 = vsel %vm2483, %v2491, %v2499
      %v2502 = vshrl.u32 %v2468, 16
      %v2504 = vrot.slane %v2502, 3
      %v2505 = vshll.u32 %v2468, 16
      %v2507 = vrot.slane %v2505, 4
      %v2508 = vor.u32 %v2504, %v2507
      %v2509 = vsel %vm2483, %v2499, %v2508
      %v2511 = vshrl.u32 %v2469, 16
      %v2513 = vrot.slane %v2511, 3
      %v2514 = vshll.u32 %v2469, 16
      %v2516 = vrot.slane %v2514, 4
      %v2517 = vor.u32 %v2513, %v2516
      %v2518 = vsel %vm2483, %v2508, %v2517
      %v2520 = vshrl.u32 %v2470, 16
      %v2522 = vrot.slane %v2520, 3
      %v2523 = vshll.u32 %v2470, 16
      %v2525 = vrot.slane %v2523, 4
      %v2526 = vor.u32 %v2522, %v2525
      %v2527 = vsel %vm2483, %v2517, %v2526
      %v2529 = vshrl.u32 %v2471, 16
      %v2531 = vrot.slane %v2529, 3
      %v2532 = vshll.u32 %v2471, 16
      %v2534 = vrot.slane %v2532, 4
      %v2535 = vor.u32 %v2531, %v2534
      %v2536 = vsel %vm2483, %v2526, %v2535
      %v2538 = vshrl.u32 %v2472, 16
      %v2540 = vrot.slane %v2538, 3
      %v2541 = vshll.u32 %v2472, 16
      %v2543 = vrot.slane %v2541, 4
      %v2544 = vor.u32 %v2540, %v2543
      %v2545 = vsel %vm2483, %v2535, %v2544
      %v2547 = vshrl.u32 %v2473, 16
      %v2549 = vrot.slane %v2547, 3
      %v2550 = vshll.u32 %v2473, 16
      %v2552 = vrot.slane %v2550, 4
      %v2553 = vor.u32 %v2549, %v2552
      %v2554 = vsel %vm2483, %v2544, %v2553
      %v2556 = vshrl.u32 %v2474, 16
      %v2558 = vrot.slane %v2556, 3
      %v2559 = vshll.u32 %v2474, 16
      %v2561 = vrot.slane %v2559, 4
      %v2562 = vor.u32 %v2558, %v2561
      %v2563 = vsel %vm2483, %v2553, %v2562
      %v2565 = vshrl.u32 %v2475, 16
      %v2567 = vrot.slane %v2565, 3
      %v2568 = vshll.u32 %v2475, 16
      %v2570 = vrot.slane %v2568, 4
      %v2571 = vor.u32 %v2567, %v2570
      %v2572 = vsel %vm2483, %v2562, %v2571
      %v2574 = vshrl.u32 %v2476, 16
      %v2576 = vrot.slane %v2574, 3
      %v2577 = vshll.u32 %v2476, 16
      %v2579 = vrot.slane %v2577, 4
      %v2580 = vor.u32 %v2576, %v2579
      %v2581 = vsel %vm2483, %v2571, %v2580
      %v2583 = vshrl.u32 %v2477, 16
      %v2585 = vrot.slane %v2583, 3
      %v2586 = vshll.u32 %v2477, 16
      %v2588 = vrot.slane %v2586, 4
      %v2589 = vor.u32 %v2585, %v2588
      %v2590 = vsel %vm2483, %v2580, %v2589
      %v2592 = vshrl.u32 %v2478, 16
      %v2594 = vrot.slane %v2592, 3
      %v2595 = vshll.u32 %v2478, 16
      %v2597 = vrot.slane %v2595, 4
      %v2598 = vor.u32 %v2594, %v2597
      %v2599 = vsel %vm2483, %v2589, %v2598
      %v2601 = vshrl.u32 %v2479, 16
      %v2603 = vrot.slane %v2601, 3
      %v2604 = vshll.u32 %v2479, 16
      %v2606 = vrot.slane %v2604, 4
      %v2607 = vor.u32 %v2603, %v2606
      %v2608 = vsel %vm2483, %v2598, %v2607
      %v2610 = vshrl.u32 %v2480, 16
      %v2612 = vrot.slane %v2610, 3
      %v2613 = vshll.u32 %v2480, 16
      %v2615 = vrot.slane %v2613, 4
      %v2616 = vor.u32 %v2612, %v2615
      %v2617 = vsel %vm2483, %v2607, %v2616
      %v2619 = vshrl.u32 %v2481, 16
      %v2621 = vrot.slane %v2619, 3
      %v2622 = vshll.u32 %v2481, 16
      %v2624 = vrot.slane %v2622, 4
      %v2625 = vor.u32 %v2621, %v2624
      %v2626 = vsel %vm2483, %v2616, %v2625
      %v2628 = vshrl.u32 %v2482, 16
      %v2630 = vrot.slane %v2628, 3
      %v2631 = vshll.u32 %v2482, 16
      %v2633 = vrot.slane %v2631, 4
      %v2634 = vor.u32 %v2630, %v2633
      %v2635 = vsel %vm2483, %v2625, %v2634
      %v2637 = vsel %vm427, %v2500, 0
      %v2640 = vsel %vm427, %v2509, 0
      %v2643 = vsel %vm427, %v2518, 0
      %v2646 = vsel %vm427, %v2527, 0
      %v2649 = vsel %vm427, %v2536, 0
      %v2652 = vsel %vm427, %v2545, 0
      %v2655 = vsel %vm427, %v2554, 0
      %v2658 = vsel %vm427, %v2563, 0
      %v2661 = vsel %vm427, %v2572, 0
      %v2664 = vsel %vm427, %v2581, 0
      %v2667 = vsel %vm427, %v2590, 0
      %v2670 = vsel %vm427, %v2599, 0
      %v2673 = vsel %vm427, %v2608, 0
      %v2676 = vsel %vm427, %v2617, 0
      %v2679 = vsel %vm427, %v2626, 0
      %v2682 = vsel %vm427, %v2635, 0
      %v2685 = vsel %vm476, %v2105, 0
      %2687 = vmatprep.subr.bf16.mxu0 0
      %2688 = vmatpush1.bf16.msra.mxu0 %v2685
      %2689 = vmatprep.subr.bf16.mxu0 0
      %2690 = vmatpush1.bf16.msra.mxu0 0
      %2691 = vmatprep.subr.bf16.mxu0 0
      %2692 = vmatpush1.bf16.msra.mxu0 0
      %2693 = vmatprep.subr.bf16.mxu0 0
      %2694 = vmatpush1.bf16.msra.mxu0 0
      %2695 = vmatprep.subr.bf16.mxu0 0
      %2696 = vmatpush1.bf16.msra.mxu0 0
      %2697 = vmatprep.subr.bf16.mxu0 0
      %2698 = vmatpush1.bf16.msra.mxu0 0
      %2699 = vmatprep.subr.bf16.mxu0 0
      %2700 = vmatpush1.bf16.msra.mxu0 0
      %2701 = vmatprep.subr.bf16.mxu0 0
      %2702 = vmatpush1.bf16.msra.mxu0 0
      %2703 = vmatprep.subr.bf16.mxu0 0
      %2704 = vmatpush1.bf16.msra.mxu0 0
      %2705 = vmatprep.subr.bf16.mxu0 0
      %2706 = vmatpush1.bf16.msra.mxu0 0
      %2707 = vmatprep.subr.bf16.mxu0 0
      %2708 = vmatpush1.bf16.msra.mxu0 0
      %2709 = vmatprep.subr.bf16.mxu0 0
      %2710 = vmatpush1.bf16.msra.mxu0 0
      %2711 = vmatprep.subr.bf16.mxu0 0
      %2712 = vmatpush1.bf16.msra.mxu0 0
      %2713 = vmatprep.subr.bf16.mxu0 0
      %2714 = vmatpush1.bf16.msra.mxu0 0
      %2715 = vmatprep.subr.bf16.mxu0 0
      %2716 = vmatpush1.bf16.msra.mxu0 0
      %2717 = vmatprep.subr.bf16.mxu0 0
      %2718 = vmatpush1.bf16.msra.mxu0 0
      %2719 = vmatprep.mubr.bf16.mxu0 0
      %2720 = vmatmul.mubr.bf16.gmra.mrb[0].mxu0 %v2637
      %v2721 = vpop.f32.mrb[0].mxu0
      %v2722 = vadd.f32 %v2274, %v2721
      %v2723 = vpop.f32.mrb[0].mxu0
      %v2724 = vpop.f32.mrb[0].mxu0
      %v2725 = vadd.f32 %v2277, %v2724
      %v2726 = vpop.f32.mrb[0].mxu0
      %2727 = vmatprep.mubr.bf16.mxu0 0
      %2728 = vmatmul.mubr.bf16.gmra.mrb[0].mxu0 %v2640
      %v2729 = vpop.f32.mrb[0].mxu0
      %v2730 = vadd.f32 %v2282, %v2729
      %v2731 = vpop.f32.mrb[0].mxu0
      %v2732 = vpop.f32.mrb[0].mxu0
      %v2733 = vadd.f32 %v2285, %v2732
      %v2734 = vpop.f32.mrb[0].mxu0
      %2735 = vmatprep.mubr.bf16.mxu0 0
      %2736 = vmatmul.mubr.bf16.gmra.mrb[0].mxu0 %v2643
      %v2737 = vpop.f32.mrb[0].mxu0
      %v2738 = vadd.f32 %v2290, %v2737
      %v2739 = vpop.f32.mrb[0].mxu0
      %v2740 = vpop.f32.mrb[0].mxu0
      %v2741 = vadd.f32 %v2293, %v2740
      %v2742 = vpop.f32.mrb[0].mxu0
      %2743 = vmatprep.mubr.bf16.mxu0 0
      %2744 = vmatmul.mubr.bf16.gmra.mrb[0].mxu0 %v2646
      %v2745 = vpop.f32.mrb[0].mxu0
      %v2746 = vadd.f32 %v2298, %v2745
      %v2747 = vpop.f32.mrb[0].mxu0
      %v2748 = vpop.f32.mrb[0].mxu0
      %v2749 = vadd.f32 %v2301, %v2748
      %v2750 = vpop.f32.mrb[0].mxu0
      %2751 = vmatprep.mubr.bf16.mxu0 0
      %2752 = vmatmul.mubr.bf16.gmra.mrb[0].mxu0 %v2649
      %v2753 = vpop.f32.mrb[0].mxu0
      %v2754 = vadd.f32 %v2306, %v2753
      %v2755 = vpop.f32.mrb[0].mxu0
      %v2756 = vpop.f32.mrb[0].mxu0
      %v2757 = vadd.f32 %v2309, %v2756
      %v2758 = vpop.f32.mrb[0].mxu0
      %2759 = vmatprep.mubr.bf16.mxu0 0
      %2760 = vmatmul.mubr.bf16.gmra.mrb[0].mxu0 %v2652
      %v2761 = vpop.f32.mrb[0].mxu0
      %v2762 = vadd.f32 %v2314, %v2761
      %v2763 = vpop.f32.mrb[0].mxu0
      %v2764 = vpop.f32.mrb[0].mxu0
      %v2765 = vadd.f32 %v2317, %v2764
      %v2766 = vpop.f32.mrb[0].mxu0
      %2767 = vmatprep.mubr.bf16.mxu0 0
      %2768 = vmatmul.mubr.bf16.gmra.mrb[0].mxu0 %v2655
      %v2769 = vpop.f32.mrb[0].mxu0
      %v2770 = vadd.f32 %v2322, %v2769
      %v2771 = vpop.f32.mrb[0].mxu0
      %v2772 = vpop.f32.mrb[0].mxu0
      %v2773 = vadd.f32 %v2325, %v2772
      %v2774 = vpop.f32.mrb[0].mxu0
      %2775 = vmatprep.mubr.bf16.mxu0 0
      %2776 = vmatmul.mubr.bf16.gmra.mrb[0].mxu0 %v2658
      %v2777 = vpop.f32.mrb[0].mxu0
      %v2778 = vadd.f32 %v2330, %v2777
      %v2779 = vpop.f32.mrb[0].mxu0
      %v2780 = vpop.f32.mrb[0].mxu0
      %v2781 = vadd.f32 %v2333, %v2780
      %v2782 = vpop.f32.mrb[0].mxu0
      %2783 = vmatprep.mubr.bf16.mxu0 0
      %2784 = vmatmul.mubr.bf16.gmra.mrb[0].mxu0 %v2661
      %v2785 = vpop.f32.mrb[0].mxu0
      %v2786 = vadd.f32 %v2338, %v2785
      %v2787 = vpop.f32.mrb[0].mxu0
      %v2788 = vpop.f32.mrb[0].mxu0
      %v2789 = vadd.f32 %v2341, %v2788
      %v2790 = vpop.f32.mrb[0].mxu0
      %2791 = vmatprep.mubr.bf16.mxu0 0
      %2792 = vmatmul.mubr.bf16.gmra.mrb[0].mxu0 %v2664
      %v2793 = vpop.f32.mrb[0].mxu0
      %v2794 = vadd.f32 %v2346, %v2793
      %v2795 = vpop.f32.mrb[0].mxu0
      %v2796 = vpop.f32.mrb[0].mxu0
      %v2797 = vadd.f32 %v2349, %v2796
      %v2798 = vpop.f32.mrb[0].mxu0
      %2799 = vmatprep.mubr.bf16.mxu0 0
      %2800 = vmatmul.mubr.bf16.gmra.mrb[0].mxu0 %v2667
      %v2801 = vpop.f32.mrb[0].mxu0
      %v2802 = vadd.f32 %v2354, %v2801
      %v2803 = vpop.f32.mrb[0].mxu0
      %v2804 = vpop.f32.mrb[0].mxu0
      %v2805 = vadd.f32 %v2357, %v2804
      %v2806 = vpop.f32.mrb[0].mxu0
      %2807 = vmatprep.mubr.bf16.mxu0 0
      %2808 = vmatmul.mubr.bf16.gmra.mrb[0].mxu0 %v2670
      %v2809 = vpop.f32.mrb[0].mxu0
      %v2810 = vadd.f32 %v2362, %v2809
      %v2811 = vpop.f32.mrb[0].mxu0
      %v2812 = vpop.f32.mrb[0].mxu0
      %v2813 = vadd.f32 %v2365, %v2812
      %v2814 = vpop.f32.mrb[0].mxu0
      %2815 = vmatprep.mubr.bf16.mxu0 0
      %2816 = vmatmul.mubr.bf16.gmra.mrb[0].mxu0 %v2673
      %v2817 = vpop.f32.mrb[0].mxu0
      %v2818 = vadd.f32 %v2370, %v2817
      %v2819 = vpop.f32.mrb[0].mxu0
      %v2820 = vpop.f32.mrb[0].mxu0
      %v2821 = vadd.f32 %v2373, %v2820
      %v2822 = vpop.f32.mrb[0].mxu0
      %2823 = vmatprep.mubr.bf16.mxu0 0
      %2824 = vmatmul.mubr.bf16.gmra.mrb[0].mxu0 %v2676
      %v2825 = vpop.f32.mrb[0].mxu0
      %v2826 = vadd.f32 %v2378, %v2825
      %v2827 = vpop.f32.mrb[0].mxu0
      %v2828 = vpop.f32.mrb[0].mxu0
      %v2829 = vadd.f32 %v2381, %v2828
      %v2830 = vpop.f32.mrb[0].mxu0
      %2831 = vmatprep.mubr.bf16.mxu0 0
      %2832 = vmatmul.mubr.bf16.gmra.mrb[0].mxu0 %v2679
      %v2833 = vpop.f32.mrb[0].mxu0
      %v2834 = vadd.f32 %v2386, %v2833
      %v2835 = vpop.f32.mrb[0].mxu0
      %v2836 = vpop.f32.mrb[0].mxu0
      %v2837 = vadd.f32 %v2389, %v2836
      %v2838 = vpop.f32.mrb[0].mxu0
      %2839 = vmatprep.mubr.bf16.mxu0 0
      %2840 = vmatmul.mubr.bf16.gmra.mrb[0].mxu0 %v2682
      %v2841 = vpop.f32.mrb[0].mxu0
      %v2842 = vadd.f32 %v2394, %v2841
      %v2843 = vpop.f32.mrb[0].mxu0
      %v2844 = vpop.f32.mrb[0].mxu0
      %v2845 = vadd.f32 %v2397, %v2844
      %v2846 = vpop.f32.mrb[0].mxu0
      %2847 = vdwg.mxu0
      %v2848 = vld [vmem:[#allocation2 + $0x8] sm:$0xf]
      %v2849 = vld [vmem:[#allocation2 + $0xc] sm:$0xf]
      %v2850 = vld [vmem:[#allocation2 + $0x10] sm:$0xf]
      %v2851 = vld [vmem:[#allocation2 + $0x14] sm:$0xf]
      %v2852 = vld [vmem:[#allocation2 + $0x18] sm:$0xf]
      %v2853 = vld [vmem:[#allocation2 + $0x1c] sm:$0xf]
      %v2854 = vld [vmem:[#allocation2 + $0x20] sm:$0xf]
      %v2855 = vld [vmem:[#allocation2 + $0x24] sm:$0xf]
      %v2856 = vld [vmem:[#allocation2 + $0x28] sm:$0xf]
      %v2857 = vld [vmem:[#allocation2 + $0x2c] sm:$0xf]
      %v2858 = vld [vmem:[#allocation2 + $0x30] sm:$0xf]
      %v2859 = vld [vmem:[#allocation2 + $0x34] sm:$0xf]
      %v2860 = vld [vmem:[#allocation2 + $0x38] sm:$0xf]
      %v2861 = vld [vmem:[#allocation2 + $0x3c] sm:$0xf]
      %v2862 = vld [vmem:[#allocation2 + $0x40] sm:$0xf]
      %v2863 = vld [vmem:[#allocation2 + $0x44] sm:$0xf]
      %v2864 = vld [vmem:[#allocation2 + $0x48] sm:$0xf]
      %v2865 = vld [vmem:[#allocation2 + $0x4c] sm:$0xf]
      %v2866 = vld [vmem:[#allocation2 + $0x50] sm:$0xf]
      %v2867 = vld [vmem:[#allocation2 + $0x54] sm:$0xf]
      %v2868 = vld [vmem:[#allocation2 + $0x58] sm:$0xf]
      %v2869 = vld [vmem:[#allocation2 + $0x5c] sm:$0xf]
      %v2870 = vld [vmem:[#allocation2 + $0x60] sm:$0xf]
      %v2871 = vld [vmem:[#allocation2 + $0x64] sm:$0xf]
      %v2872 = vld [vmem:[#allocation2 + $0x68] sm:$0xf]
      %v2873 = vld [vmem:[#allocation2 + $0x6c] sm:$0xf]
      %v2874 = vld [vmem:[#allocation2 + $0x70] sm:$0xf]
      %v2875 = vld [vmem:[#allocation2 + $0x74] sm:$0xf]
      %v2876 = vld [vmem:[#allocation2 + $0x78] sm:$0xf]
      %v2877 = vld [vmem:[#allocation2 + $0x7c] sm:$0xf]
      %v2878 = vld [vmem:[#allocation2 + $0x80] sm:$0xf]
      %v2879 = vld [vmem:[#allocation2 + $0x84] sm:$0xf]
      %v2880 = vld [vmem:[#allocation2 + $0x88] sm:$0x1]
      %v2881 = vsel %vm1524, 1, 0
      %v2882 = vsel %vm1525, 1, 0
      %v2883 = vsel %vm1526, 1, 0
      %v2884 = vsel %vm1527, 1, 0
      %v2885 = vsel %vm1528, 1, 0
      %v2886 = vsel %vm1529, 1, 0
      %v2887 = vsel %vm1530, 1, 0
      %v2888 = vsel %vm1531, 1, 0
      %v2889 = vsel %vm1532, 1, 0
      %v2890 = vsel %vm1533, 1, 0
      %v2891 = vsel %vm1534, 1, 0
      %v2892 = vsel %vm1535, 1, 0
      %v2893 = vsel %vm1536, 1, 0
      %v2894 = vsel %vm1537, 1, 0
      %v2895 = vsel %vm1538, 1, 0
      %v2896 = vsel %vm1539, 1, 0
      %v2897 = vsel %vm1540, 1, 0
      %v2898 = vsel %vm1541, 1, 0
      %v2899 = vsel %vm1542, 1, 0
      %v2900 = vsel %vm1543, 1, 0
      %v2901 = vsel %vm1544, 1, 0
      %v2902 = vsel %vm1545, 1, 0
      %v2903 = vsel %vm1546, 1, 0
      %v2904 = vsel %vm1547, 1, 0
      %v2905 = vsel %vm1548, 1, 0
      %v2906 = vsel %vm1549, 1, 0
      %v2907 = vsel %vm1550, 1, 0
      %v2908 = vsel %vm1551, 1, 0
      %v2909 = vsel %vm1552, 1, 0
      %v2910 = vsel %vm1553, 1, 0
      %v2911 = vsel %vm1554, 1, 0
      %v2912 = vsel %vm1555, 1, 0
      %vm2913 = vcmp.eq.s32.totalorder %v2881, 1
      %vm2914 = vcmp.eq.s32.totalorder %v2882, 1
      %vm2915 = vcmp.eq.s32.totalorder %v2883, 1
      %vm2916 = vcmp.eq.s32.totalorder %v2884, 1
      %vm2917 = vcmp.eq.s32.totalorder %v2885, 1
      %vm2918 = vcmp.eq.s32.totalorder %v2886, 1
      %vm2919 = vcmp.eq.s32.totalorder %v2887, 1
      %vm2920 = vcmp.eq.s32.totalorder %v2888, 1
      %vm2921 = vcmp.eq.s32.totalorder %v2889, 1
      %vm2922 = vcmp.eq.s32.totalorder %v2890, 1
      %vm2923 = vcmp.eq.s32.totalorder %v2891, 1
      %vm2924 = vcmp.eq.s32.totalorder %v2892, 1
      %vm2925 = vcmp.eq.s32.totalorder %v2893, 1
      %vm2926 = vcmp.eq.s32.totalorder %v2894, 1
      %vm2927 = vcmp.eq.s32.totalorder %v2895, 1
      %vm2928 = vcmp.eq.s32.totalorder %v2896, 1
      %vm2929 = vcmp.eq.s32.totalorder %v2897, 1
      %vm2930 = vcmp.eq.s32.totalorder %v2898, 1
      %vm2931 = vcmp.eq.s32.totalorder %v2899, 1
      %vm2932 = vcmp.eq.s32.totalorder %v2900, 1
      %vm2933 = vcmp.eq.s32.totalorder %v2901, 1
      %vm2934 = vcmp.eq.s32.totalorder %v2902, 1
      %vm2935 = vcmp.eq.s32.totalorder %v2903, 1
      %vm2936 = vcmp.eq.s32.totalorder %v2904, 1
      %vm2937 = vcmp.eq.s32.totalorder %v2905, 1
      %vm2938 = vcmp.eq.s32.totalorder %v2906, 1
      %vm2939 = vcmp.eq.s32.totalorder %v2907, 1
      %vm2940 = vcmp.eq.s32.totalorder %v2908, 1
      %vm2941 = vcmp.eq.s32.totalorder %v2909, 1
      %vm2942 = vcmp.eq.s32.totalorder %v2910, 1
      %vm2943 = vcmp.eq.s32.totalorder %v2911, 1
      %vm2944 = vcmp.eq.s32.totalorder %v2912, 1
      %vm2945 = vmpackc.low %vm2913, %vm2913
      %vm2946 = vmpackc.low %vm2914, %vm2914
      %vm2947 = vmpackc.low %vm2915, %vm2915
      %vm2948 = vmpackc.low %vm2916, %vm2916
      %vm2949 = vmpackc.low %vm2917, %vm2917
      %vm2950 = vmpackc.low %vm2918, %vm2918
      %vm2951 = vmpackc.low %vm2919, %vm2919
      %vm2952 = vmpackc.low %vm2920, %vm2920
      %vm2953 = vmpackc.low %vm2921, %vm2921
      %vm2954 = vmpackc.low %vm2922, %vm2922
      %vm2955 = vmpackc.low %vm2923, %vm2923
      %vm2956 = vmpackc.low %vm2924, %vm2924
      %vm2957 = vmpackc.low %vm2925, %vm2925
      %vm2958 = vmpackc.low %vm2926, %vm2926
      %vm2959 = vmpackc.low %vm2927, %vm2927
      %vm2960 = vmpackc.low %vm2928, %vm2928
      %vm2961 = vmpackc.low %vm2929, %vm2929
      %vm2962 = vmpackc.low %vm2930, %vm2930
      %vm2963 = vmpackc.low %vm2931, %vm2931
      %vm2964 = vmpackc.low %vm2932, %vm2932
      %vm2965 = vmpackc.low %vm2933, %vm2933
      %vm2966 = vmpackc.low %vm2934, %vm2934
      %vm2967 = vmpackc.low %vm2935, %vm2935
      %vm2968 = vmpackc.low %vm2936, %vm2936
      %vm2969 = vmpackc.low %vm2937, %vm2937
      %vm2970 = vmpackc.low %vm2938, %vm2938
      %vm2971 = vmpackc.low %vm2939, %vm2939
      %vm2972 = vmpackc.low %vm2940, %vm2940
      %vm2973 = vmpackc.low %vm2941, %vm2941
      %vm2974 = vmpackc.low %vm2942, %vm2942
      %vm2975 = vmpackc.low %vm2943, %vm2943
      %vm2976 = vmpackc.low %vm2944, %vm2944
      %v2977 = vsel %vm2945, 65537, 0
      %v2978 = vsel %vm2946, 65537, 0
      %v2979 = vsel %vm2947, 65537, 0
      %v2980 = vsel %vm2948, 65537, 0
      %v2981 = vsel %vm2949, 65537, 0
      %v2982 = vsel %vm2950, 65537, 0
      %v2983 = vsel %vm2951, 65537, 0
      %v2984 = vsel %vm2952, 65537, 0
      %v2985 = vsel %vm2953, 65537, 0
      %v2986 = vsel %vm2954, 65537, 0
      %v2987 = vsel %vm2955, 65537, 0
      %v2988 = vsel %vm2956, 65537, 0
      %v2989 = vsel %vm2957, 65537, 0
      %v2990 = vsel %vm2958, 65537, 0
      %v2991 = vsel %vm2959, 65537, 0
      %v2992 = vsel %vm2960, 65537, 0
      %v2993 = vsel %vm2961, 65537, 0
      %v2994 = vsel %vm2962, 65537, 0
      %v2995 = vsel %vm2963, 65537, 0
      %v2996 = vsel %vm2964, 65537, 0
      %v2997 = vsel %vm2965, 65537, 0
      %v2998 = vsel %vm2966, 65537, 0
      %v2999 = vsel %vm2967, 65537, 0
      %v3000 = vsel %vm2968, 65537, 0
      %v3001 = vsel %vm2969, 65537, 0
      %v3002 = vsel %vm2970, 65537, 0
      %v3003 = vsel %vm2971, 65537, 0
      %v3004 = vsel %vm2972, 65537, 0
      %v3005 = vsel %vm2973, 65537, 0
      %v3006 = vsel %vm2974, 65537, 0
      %v3007 = vsel %vm2975, 65537, 0
      %v3008 = vsel %vm2976, 65537, 0
      %vm3009 = vsmask.f32 256
      %vm3010 = vsmask.f32 4368
      %vm3011 = vmor %vm3009, %vm3010
      %v3013 = vshrl.u32 %v2977, 16
      %v3015 = vrot.slane %v3013, 7
      %v3016 = vshll.u32 %v2977, 16
      %v3018 = vor.u32 %v3015, %v3016
      %v3019 = vrot.slane %v3015, 4
      %v3021 = vshrl.u32 %v2978, 16
      %v3023 = vrot.slane %v3021, 7
      %v3024 = vshll.u32 %v2978, 16
      %v3026 = vor.u32 %v3023, %v3024
      %v3027 = vsel %vm3011, %v3019, %v3026
      %v3028 = vrot.slane %v3023, 4
      %v3030 = vshrl.u32 %v2979, 16
      %v3032 = vrot.slane %v3030, 7
      %v3033 = vshll.u32 %v2979, 16
      %v3035 = vor.u32 %v3032, %v3033
      %v3036 = vsel %vm3011, %v3028, %v3035
      %v3037 = vrot.slane %v3032, 4
      %v3039 = vshrl.u32 %v2980, 16
      %v3041 = vrot.slane %v3039, 7
      %v3042 = vshll.u32 %v2980, 16
      %v3044 = vor.u32 %v3041, %v3042
      %v3045 = vsel %vm3011, %v3037, %v3044
      %v3046 = vrot.slane %v3041, 4
      %v3048 = vshrl.u32 %v2981, 16
      %v3050 = vrot.slane %v3048, 7
      %v3051 = vshll.u32 %v2981, 16
      %v3053 = vor.u32 %v3050, %v3051
      %v3054 = vsel %vm3011, %v3046, %v3053
      %v3055 = vrot.slane %v3050, 4
      %v3057 = vshrl.u32 %v2982, 16
      %v3059 = vrot.slane %v3057, 7
      %v3060 = vshll.u32 %v2982, 16
      %v3062 = vor.u32 %v3059, %v3060
      %v3063 = vsel %vm3011, %v3055, %v3062
      %v3064 = vrot.slane %v3059, 4
      %v3066 = vshrl.u32 %v2983, 16
      %v3068 = vrot.slane %v3066, 7
      %v3069 = vshll.u32 %v2983, 16
      %v3071 = vor.u32 %v3068, %v3069
      %v3072 = vsel %vm3011, %v3064, %v3071
      %v3073 = vrot.slane %v3068, 4
      %v3075 = vshrl.u32 %v2984, 16
      %v3077 = vrot.slane %v3075, 7
      %v3078 = vshll.u32 %v2984, 16
      %v3080 = vor.u32 %v3077, %v3078
      %v3081 = vsel %vm3011, %v3073, %v3080
      %v3082 = vrot.slane %v3077, 4
      %v3084 = vshrl.u32 %v2985, 16
      %v3086 = vrot.slane %v3084, 7
      %v3087 = vshll.u32 %v2985, 16
      %v3089 = vor.u32 %v3086, %v3087
      %v3090 = vsel %vm3011, %v3082, %v3089
      %v3091 = vrot.slane %v3086, 4
      %v3093 = vshrl.u32 %v2986, 16
      %v3095 = vrot.slane %v3093, 7
      %v3096 = vshll.u32 %v2986, 16
      %v3098 = vor.u32 %v3095, %v3096
      %v3099 = vsel %vm3011, %v3091, %v3098
      %v3100 = vrot.slane %v3095, 4
      %v3102 = vshrl.u32 %v2987, 16
      %v3104 = vrot.slane %v3102, 7
      %v3105 = vshll.u32 %v2987, 16
      %v3107 = vor.u32 %v3104, %v3105
      %v3108 = vsel %vm3011, %v3100, %v3107
      %v3109 = vrot.slane %v3104, 4
      %v3111 = vshrl.u32 %v2988, 16
      %v3113 = vrot.slane %v3111, 7
      %v3114 = vshll.u32 %v2988, 16
      %v3116 = vor.u32 %v3113, %v3114
      %v3117 = vsel %vm3011, %v3109, %v3116
      %v3118 = vrot.slane %v3113, 4
      %v3120 = vshrl.u32 %v2989, 16
      %v3122 = vrot.slane %v3120, 7
      %v3123 = vshll.u32 %v2989, 16
      %v3125 = vor.u32 %v3122, %v3123
      %v3126 = vsel %vm3011, %v3118, %v3125
      %v3127 = vrot.slane %v3122, 4
      %v3129 = vshrl.u32 %v2990, 16
      %v3131 = vrot.slane %v3129, 7
      %v3132 = vshll.u32 %v2990, 16
      %v3134 = vor.u32 %v3131, %v3132
      %v3135 = vsel %vm3011, %v3127, %v3134
      %v3136 = vrot.slane %v3131, 4
      %v3138 = vshrl.u32 %v2991, 16
      %v3140 = vrot.slane %v3138, 7
      %v3141 = vshll.u32 %v2991, 16
      %v3143 = vor.u32 %v3140, %v3141
      %v3144 = vsel %vm3011, %v3136, %v3143
      %v3145 = vrot.slane %v3140, 4
      %v3147 = vshrl.u32 %v2992, 16
      %v3149 = vrot.slane %v3147, 7
      %v3150 = vshll.u32 %v2992, 16
      %v3152 = vor.u32 %v3149, %v3150
      %v3153 = vsel %vm3011, %v3145, %v3152
      %v3154 = vrot.slane %v3149, 4
      %v3156 = vshrl.u32 %v2993, 16
      %v3158 = vrot.slane %v3156, 7
      %v3159 = vshll.u32 %v2993, 16
      %v3161 = vor.u32 %v3158, %v3159
      %v3162 = vsel %vm3011, %v3154, %v3161
      %v3163 = vrot.slane %v3158, 4
      %v3165 = vshrl.u32 %v2994, 16
      %v3167 = vrot.slane %v3165, 7
      %v3168 = vshll.u32 %v2994, 16
      %v3170 = vor.u32 %v3167, %v3168
      %v3171 = vsel %vm3011, %v3163, %v3170
      %v3172 = vrot.slane %v3167, 4
      %v3174 = vshrl.u32 %v2995, 16
      %v3176 = vrot.slane %v3174, 7
      %v3177 = vshll.u32 %v2995, 16
      %v3179 = vor.u32 %v3176, %v3177
      %v3180 = vsel %vm3011, %v3172, %v3179
      %v3181 = vrot.slane %v3176, 4
      %v3183 = vshrl.u32 %v2996, 16
      %v3185 = vrot.slane %v3183, 7
      %v3186 = vshll.u32 %v2996, 16
      %v3188 = vor.u32 %v3185, %v3186
      %v3189 = vsel %vm3011, %v3181, %v3188
      %v3190 = vrot.slane %v3185, 4
      %v3192 = vshrl.u32 %v2997, 16
      %v3194 = vrot.slane %v3192, 7
      %v3195 = vshll.u32 %v2997, 16
      %v3197 = vor.u32 %v3194, %v3195
      %v3198 = vsel %vm3011, %v3190, %v3197
      %v3199 = vrot.slane %v3194, 4
      %v3201 = vshrl.u32 %v2998, 16
      %v3203 = vrot.slane %v3201, 7
      %v3204 = vshll.u32 %v2998, 16
      %v3206 = vor.u32 %v3203, %v3204
      %v3207 = vsel %vm3011, %v3199, %v3206
      %v3208 = vrot.slane %v3203, 4
      %v3210 = vshrl.u32 %v2999, 16
      %v3212 = vrot.slane %v3210, 7
      %v3213 = vshll.u32 %v2999, 16
      %v3215 = vor.u32 %v3212, %v3213
      %v3216 = vsel %vm3011, %v3208, %v3215
      %v3217 = vrot.slane %v3212, 4
      %v3219 = vshrl.u32 %v3000, 16
      %v3221 = vrot.slane %v3219, 7
      %v3222 = vshll.u32 %v3000, 16
      %v3224 = vor.u32 %v3221, %v3222
      %v3225 = vsel %vm3011, %v3217, %v3224
      %v3226 = vrot.slane %v3221, 4
      %v3228 = vshrl.u32 %v3001, 16
      %v3230 = vrot.slane %v3228, 7
      %v3231 = vshll.u32 %v3001, 16
      %v3233 = vor.u32 %v3230, %v3231
      %v3234 = vsel %vm3011, %v3226, %v3233
      %v3235 = vrot.slane %v3230, 4
      %v3237 = vshrl.u32 %v3002, 16
      %v3239 = vrot.slane %v3237, 7
      %v3240 = vshll.u32 %v3002, 16
      %v3242 = vor.u32 %v3239, %v3240
      %v3243 = vsel %vm3011, %v3235, %v3242
      %v3244 = vrot.slane %v3239, 4
      %v3246 = vshrl.u32 %v3003, 16
      %v3248 = vrot.slane %v3246, 7
      %v3249 = vshll.u32 %v3003, 16
      %v3251 = vor.u32 %v3248, %v3249
      %v3252 = vsel %vm3011, %v3244, %v3251
      %v3253 = vrot.slane %v3248, 4
      %v3255 = vshrl.u32 %v3004, 16
      %v3257 = vrot.slane %v3255, 7
      %v3258 = vshll.u32 %v3004, 16
      %v3260 = vor.u32 %v3257, %v3258
      %v3261 = vsel %vm3011, %v3253, %v3260
      %v3262 = vrot.slane %v3257, 4
      %v3264 = vshrl.u32 %v3005, 16
      %v3266 = vrot.slane %v3264, 7
      %v3267 = vshll.u32 %v3005, 16
      %v3269 = vor.u32 %v3266, %v3267
      %v3270 = vsel %vm3011, %v3262, %v3269
      %v3271 = vrot.slane %v3266, 4
      %v3273 = vshrl.u32 %v3006, 16
      %v3275 = vrot.slane %v3273, 7
      %v3276 = vshll.u32 %v3006, 16
      %v3278 = vor.u32 %v3275, %v3276
      %v3279 = vsel %vm3011, %v3271, %v3278
      %v3280 = vrot.slane %v3275, 4
      %v3282 = vshrl.u32 %v3007, 16
      %v3284 = vrot.slane %v3282, 7
      %v3285 = vshll.u32 %v3007, 16
      %v3287 = vor.u32 %v3284, %v3285
      %v3288 = vsel %vm3011, %v3280, %v3287
      %v3289 = vrot.slane %v3284, 4
      %v3291 = vshrl.u32 %v3008, 16
      %v3293 = vrot.slane %v3291, 7
      %v3294 = vshll.u32 %v3008, 16
      %v3296 = vor.u32 %v3293, %v3294
      %v3297 = vsel %vm3011, %v3289, %v3296
      %v3298 = vrot.slane %v3293, 4
      %vm3299 = vcmp.ne.s16.totalorder %v3018, 0
      %vm3300 = vcmp.ne.s16.totalorder %v3027, 0
      %vm3301 = vcmp.ne.s16.totalorder %v3036, 0
      %vm3302 = vcmp.ne.s16.totalorder %v3045, 0
      %vm3303 = vcmp.ne.s16.totalorder %v3054, 0
      %vm3304 = vcmp.ne.s16.totalorder %v3063, 0
      %vm3305 = vcmp.ne.s16.totalorder %v3072, 0
      %vm3306 = vcmp.ne.s16.totalorder %v3081, 0
      %vm3307 = vcmp.ne.s16.totalorder %v3090, 0
      %vm3308 = vcmp.ne.s16.totalorder %v3099, 0
      %vm3309 = vcmp.ne.s16.totalorder %v3108, 0
      %vm3310 = vcmp.ne.s16.totalorder %v3117, 0
      %vm3311 = vcmp.ne.s16.totalorder %v3126, 0
      %vm3312 = vcmp.ne.s16.totalorder %v3135, 0
      %vm3313 = vcmp.ne.s16.totalorder %v3144, 0
      %vm3314 = vcmp.ne.s16.totalorder %v3153, 0
      %vm3315 = vcmp.ne.s16.totalorder %v3162, 0
      %vm3316 = vcmp.ne.s16.totalorder %v3171, 0
      %vm3317 = vcmp.ne.s16.totalorder %v3180, 0
      %vm3318 = vcmp.ne.s16.totalorder %v3189, 0
      %vm3319 = vcmp.ne.s16.totalorder %v3198, 0
      %vm3320 = vcmp.ne.s16.totalorder %v3207, 0
      %vm3321 = vcmp.ne.s16.totalorder %v3216, 0
      %vm3322 = vcmp.ne.s16.totalorder %v3225, 0
      %vm3323 = vcmp.ne.s16.totalorder %v3234, 0
      %vm3324 = vcmp.ne.s16.totalorder %v3243, 0
      %vm3325 = vcmp.ne.s16.totalorder %v3252, 0
      %vm3326 = vcmp.ne.s16.totalorder %v3261, 0
      %vm3327 = vcmp.ne.s16.totalorder %v3270, 0
      %vm3328 = vcmp.ne.s16.totalorder %v3279, 0
      %vm3329 = vcmp.ne.s16.totalorder %v3288, 0
      %vm3330 = vcmp.ne.s16.totalorder %v3297, 0
      %vm3331 = vcmp.ne.s16.totalorder %v3298, 0
      %v3332 = vsel %vm3299, %v2848, 0
      %v3333 = vsel %vm3300, %v2849, 0
      %v3334 = vsel %vm3301, %v2850, 0
      %v3335 = vsel %vm3302, %v2851, 0
      %v3336 = vsel %vm3303, %v2852, 0
      %v3337 = vsel %vm3304, %v2853, 0
      %v3338 = vsel %vm3305, %v2854, 0
      %v3339 = vsel %vm3306, %v2855, 0
      %v3340 = vsel %vm3307, %v2856, 0
      %v3341 = vsel %vm3308, %v2857, 0
      %v3342 = vsel %vm3309, %v2858, 0
      %v3343 = vsel %vm3310, %v2859, 0
      %v3344 = vsel %vm3311, %v2860, 0
      %v3345 = vsel %vm3312, %v2861, 0
      %v3346 = vsel %vm3313, %v2862, 0
      %v3347 = vsel %vm3314, %v2863, 0
      %v3348 = vsel %vm3315, %v2864, 0
      %v3349 = vsel %vm3316, %v2865, 0
      %v3350 = vsel %vm3317, %v2866, 0
      %v3351 = vsel %vm3318, %v2867, 0
      %v3352 = vsel %vm3319, %v2868, 0
      %v3353 = vsel %vm3320, %v2869, 0
      %v3354 = vsel %vm3321, %v2870, 0
      %v3355 = vsel %vm3322, %v2871, 0
      %v3356 = vsel %vm3323, %v2872, 0
      %v3357 = vsel %vm3324, %v2873, 0
      %v3358 = vsel %vm3325, %v2874, 0
      %v3359 = vsel %vm3326, %v2875, 0
      %v3360 = vsel %vm3327, %v2876, 0
      %v3361 = vsel %vm3328, %v2877, 0
      %v3362 = vsel %vm3329, %v2878, 0
      %v3363 = vsel %vm3330, %v2879, 0
      %v3364 = vsel %vm3331, %v2880, 0
      %s3365 = scalar_lea.vmem %s4, 8
      %v3366 = vld [vmem:[%s3365] sm:$0xf]
      %v3400 = vunpack.c.l.b16 %v3332
      %v3401 = vunpack.c.l.b16 %v3333
      %v3402 = vunpack.c.l.b16 %v3334
      %v3403 = vunpack.c.l.b16 %v3335
      %v3404 = vunpack.c.l.b16 %v3336
      %v3405 = vunpack.c.l.b16 %v3337
      %v3406 = vunpack.c.l.b16 %v3338
      %v3407 = vunpack.c.l.b16 %v3339
      %v3408 = vunpack.c.l.b16 %v3340
      %v3409 = vunpack.c.l.b16 %v3341
      %v3410 = vunpack.c.l.b16 %v3342
      %v3411 = vunpack.c.l.b16 %v3343
      %v3412 = vunpack.c.l.b16 %v3344
      %v3413 = vunpack.c.l.b16 %v3345
      %v3414 = vunpack.c.l.b16 %v3346
      %v3415 = vunpack.c.l.b16 %v3347
      %v3416 = vunpack.c.l.b16 %v3348
      %v3417 = vunpack.c.l.b16 %v3349
      %v3418 = vunpack.c.l.b16 %v3350
      %v3419 = vunpack.c.l.b16 %v3351
      %v3420 = vunpack.c.l.b16 %v3352
      %v3421 = vunpack.c.l.b16 %v3353
      %v3422 = vunpack.c.l.b16 %v3354
      %v3423 = vunpack.c.l.b16 %v3355
      %v3424 = vunpack.c.l.b16 %v3356
      %v3425 = vunpack.c.l.b16 %v3357
      %v3426 = vunpack.c.l.b16 %v3358
      %v3427 = vunpack.c.l.b16 %v3359
      %v3428 = vunpack.c.l.b16 %v3360
      %v3429 = vunpack.c.l.b16 %v3361
      %v3430 = vunpack.c.l.b16 %v3362
      %v3431 = vunpack.c.l.b16 %v3363
      %v3432 = vunpack.c.l.b16 %v3364
      %v3433 = vpack.c.b16 %v3401, %v3400
      %v3434 = vpack.c.b16 %v3403, %v3402
      %v3435 = vpack.c.b16 %v3405, %v3404
      %v3436 = vpack.c.b16 %v3407, %v3406
      %v3437 = vpack.c.b16 %v3409, %v3408
      %v3438 = vpack.c.b16 %v3411, %v3410
      %v3439 = vpack.c.b16 %v3413, %v3412
      %v3440 = vpack.c.b16 %v3415, %v3414
      %v3441 = vpack.c.b16 %v3417, %v3416
      %v3442 = vpack.c.b16 %v3419, %v3418
      %v3443 = vpack.c.b16 %v3421, %v3420
      %v3444 = vpack.c.b16 %v3423, %v3422
      %v3445 = vpack.c.b16 %v3425, %v3424
      %v3446 = vpack.c.b16 %v3427, %v3426
      %v3447 = vpack.c.b16 %v3429, %v3428
      %v3448 = vpack.c.b16 %v3431, %v3430
      %v3449 = vpack.c.b16 %v3432, %v3432
      %vm3450 = vsmask.f32 7424
      %v3452 = vshrl.u32 %v3433, 16
      %v3454 = vshll.u32 %v3433, 16
      %v3456 = vrot.slane %v3454, 1
      %v3457 = vor.u32 %v3452, %v3456
      %v3459 = vshll.u32 %v3434, 16
      %v3461 = vrot.slane %v3459, 1
      %v3462 = vsel %vm3450, %v3457, %v3461
      %v3463 = vshrl.u32 %v3434, 16
      %v3465 = vor.u32 %v3463, %v3461
      %v3467 = vshll.u32 %v3435, 16
      %v3469 = vrot.slane %v3467, 1
      %v3470 = vsel %vm3450, %v3465, %v3469
      %v3471 = vshrl.u32 %v3435, 16
      %v3473 = vor.u32 %v3471, %v3469
      %v3475 = vshll.u32 %v3436, 16
      %v3477 = vrot.slane %v3475, 1
      %v3478 = vsel %vm3450, %v3473, %v3477
      %v3479 = vshrl.u32 %v3436, 16
      %v3481 = vor.u32 %v3479, %v3477
      %v3483 = vshll.u32 %v3437, 16
      %v3485 = vrot.slane %v3483, 1
      %v3486 = vsel %vm3450, %v3481, %v3485
      %v3487 = vshrl.u32 %v3437, 16
      %v3489 = vor.u32 %v3487, %v3485
      %v3491 = vshll.u32 %v3438, 16
      %v3493 = vrot.slane %v3491, 1
      %v3494 = vsel %vm3450, %v3489, %v3493
      %v3495 = vshrl.u32 %v3438, 16
      %v3497 = vor.u32 %v3495, %v3493
      %v3499 = vshll.u32 %v3439, 16
      %v3501 = vrot.slane %v3499, 1
      %v3502 = vsel %vm3450, %v3497, %v3501
      %v3503 = vshrl.u32 %v3439, 16
      %v3505 = vor.u32 %v3503, %v3501
      %v3507 = vshll.u32 %v3440, 16
      %v3509 = vrot.slane %v3507, 1
      %v3510 = vsel %vm3450, %v3505, %v3509
      %v3511 = vshrl.u32 %v3440, 16
      %v3513 = vor.u32 %v3511, %v3509
      %v3515 = vshll.u32 %v3441, 16
      %v3517 = vrot.slane %v3515, 1
      %v3518 = vsel %vm3450, %v3513, %v3517
      %v3519 = vshrl.u32 %v3441, 16
      %v3521 = vor.u32 %v3519, %v3517
      %v3523 = vshll.u32 %v3442, 16
      %v3525 = vrot.slane %v3523, 1
      %v3526 = vsel %vm3450, %v3521, %v3525
      %v3527 = vshrl.u32 %v3442, 16
      %v3529 = vor.u32 %v3527, %v3525
      %v3531 = vshll.u32 %v3443, 16
      %v3533 = vrot.slane %v3531, 1
      %v3534 = vsel %vm3450, %v3529, %v3533
      %v3535 = vshrl.u32 %v3443, 16
      %v3537 = vor.u32 %v3535, %v3533
      %v3539 = vshll.u32 %v3444, 16
      %v3541 = vrot.slane %v3539, 1
      %v3542 = vsel %vm3450, %v3537, %v3541
      %v3543 = vshrl.u32 %v3444, 16
      %v3545 = vor.u32 %v3543, %v3541
      %v3547 = vshll.u32 %v3445, 16
      %v3549 = vrot.slane %v3547, 1
      %v3550 = vsel %vm3450, %v3545, %v3549
      %v3551 = vshrl.u32 %v3445, 16
      %v3553 = vor.u32 %v3551, %v3549
      %v3555 = vshll.u32 %v3446, 16
      %v3557 = vrot.slane %v3555, 1
      %v3558 = vsel %vm3450, %v3553, %v3557
      %v3559 = vshrl.u32 %v3446, 16
      %v3561 = vor.u32 %v3559, %v3557
      %v3563 = vshll.u32 %v3447, 16
      %v3565 = vrot.slane %v3563, 1
      %v3566 = vsel %vm3450, %v3561, %v3565
      %v3567 = vshrl.u32 %v3447, 16
      %v3569 = vor.u32 %v3567, %v3565
      %v3571 = vshll.u32 %v3448, 16
      %v3573 = vrot.slane %v3571, 1
      %v3574 = vsel %vm3450, %v3569, %v3573
      %v3575 = vshrl.u32 %v3448, 16
      %v3577 = vor.u32 %v3575, %v3573
      %v3579 = vshll.u32 %v3449, 16
      %v3581 = vrot.slane %v3579, 1
      %v3582 = vsel %vm3450, %v3577, %v3581
      %v3584 = vsel %vm427, %v3462, 0
      %v3587 = vsel %vm427, %v3470, 0
      %v3590 = vsel %vm427, %v3478, 0
      %v3593 = vsel %vm427, %v3486, 0
      %v3596 = vsel %vm427, %v3494, 0
      %v3599 = vsel %vm427, %v3502, 0
      %v3602 = vsel %vm427, %v3510, 0
      %v3605 = vsel %vm427, %v3518, 0
      %v3608 = vsel %vm427, %v3526, 0
      %v3611 = vsel %vm427, %v3534, 0
      %v3614 = vsel %vm427, %v3542, 0
      %v3617 = vsel %vm427, %v3550, 0
      %v3620 = vsel %vm427, %v3558, 0
      %v3623 = vsel %vm427, %v3566, 0
      %v3626 = vsel %vm427, %v3574, 0
      %v3629 = vsel %vm427, %v3582, 0
      %v3632 = vsel %vm476, %v3366, 0
      %3634 = vmatprep.subr.bf16.mxu0 0
      %3635 = vmatpush1.bf16.msra.mxu0 %v3632
      %3636 = vmatprep.subr.bf16.mxu0 0
      %3637 = vmatpush1.bf16.msra.mxu0 0
      %3638 = vmatprep.subr.bf16.mxu0 0
      %3639 = vmatpush1.bf16.msra.mxu0 0
      %3640 = vmatprep.subr.bf16.mxu0 0
      %3641 = vmatpush1.bf16.msra.mxu0 0
      %3642 = vmatprep.subr.bf16.mxu0 0
      %3643 = vmatpush1.bf16.msra.mxu0 0
      %3644 = vmatprep.subr.bf16.mxu0 0
      %3645 = vmatpush1.bf16.msra.mxu0 0
      %3646 = vmatprep.subr.bf16.mxu0 0
      %3647 = vmatpush1.bf16.msra.mxu0 0
      %3648 = vmatprep.subr.bf16.mxu0 0
      %3649 = vmatpush1.bf16.msra.mxu0 0
      %3650 = vmatprep.subr.bf16.mxu0 0
      %3651 = vmatpush1.bf16.msra.mxu0 0
      %3652 = vmatprep.subr.bf16.mxu0 0
      %3653 = vmatpush1.bf16.msra.mxu0 0
      %3654 = vmatprep.subr.bf16.mxu0 0
      %3655 = vmatpush1.bf16.msra.mxu0 0
      %3656 = vmatprep.subr.bf16.mxu0 0
      %3657 = vmatpush1.bf16.msra.mxu0 0
      %3658 = vmatprep.subr.bf16.mxu0 0
      %3659 = vmatpush1.bf16.msra.mxu0 0
      %3660 = vmatprep.subr.bf16.mxu0 0
      %3661 = vmatpush1.bf16.msra.mxu0 0
      %3662 = vmatprep.subr.bf16.mxu0 0
      %3663 = vmatpush1.bf16.msra.mxu0 0
      %3664 = vmatprep.subr.bf16.mxu0 0
      %3665 = vmatpush1.bf16.msra.mxu0 0
      %3666 = vmatprep.mubr.bf16.mxu0 0
      %3667 = vmatmul.mubr.bf16.gmra.mrb[0].mxu0 %v3584
      %v3668 = vpop.f32.mrb[0].mxu0
      %v3669 = vadd.f32 0.0, %v3668
      %v3670 = vpop.f32.mrb[0].mxu0
      %v3671 = vpop.f32.mrb[0].mxu0
      %v3672 = vadd.f32 0.0, %v3671
      %v3673 = vpop.f32.mrb[0].mxu0
      %3674 = vmatprep.mubr.bf16.mxu0 0
      %3675 = vmatmul.mubr.bf16.gmra.mrb[0].mxu0 %v3587
      %v3676 = vpop.f32.mrb[0].mxu0
      %v3677 = vadd.f32 0.0, %v3676
      %v3678 = vpop.f32.mrb[0].mxu0
      %v3679 = vpop.f32.mrb[0].mxu0
      %v3680 = vadd.f32 0.0, %v3679
      %v3681 = vpop.f32.mrb[0].mxu0
      %3682 = vmatprep.mubr.bf16.mxu0 0
      %3683 = vmatmul.mubr.bf16.gmra.mrb[0].mxu0 %v3590
      %v3684 = vpop.f32.mrb[0].mxu0
      %v3685 = vadd.f32 0.0, %v3684
      %v3686 = vpop.f32.mrb[0].mxu0
      %v3687 = vpop.f32.mrb[0].mxu0
      %v3688 = vadd.f32 0.0, %v3687
      %v3689 = vpop.f32.mrb[0].mxu0
      %3690 = vmatprep.mubr.bf16.mxu0 0
      %3691 = vmatmul.mubr.bf16.gmra.mrb[0].mxu0 %v3593
      %v3692 = vpop.f32.mrb[0].mxu0
      %v3693 = vadd.f32 0.0, %v3692
      %v3694 = vpop.f32.mrb[0].mxu0
      %v3695 = vpop.f32.mrb[0].mxu0
      %v3696 = vadd.f32 0.0, %v3695
      %v3697 = vpop.f32.mrb[0].mxu0
      %3698 = vmatprep.mubr.bf16.mxu0 0
      %3699 = vmatmul.mubr.bf16.gmra.mrb[0].mxu0 %v3596
      %v3700 = vpop.f32.mrb[0].mxu0
      %v3701 = vadd.f32 0.0, %v3700
      %v3702 = vpop.f32.mrb[0].mxu0
      %v3703 = vpop.f32.mrb[0].mxu0
      %v3704 = vadd.f32 0.0, %v3703
      %v3705 = vpop.f32.mrb[0].mxu0
      %3706 = vmatprep.mubr.bf16.mxu0 0
      %3707 = vmatmul.mubr.bf16.gmra.mrb[0].mxu0 %v3599
      %v3708 = vpop.f32.mrb[0].mxu0
      %v3709 = vadd.f32 0.0, %v3708
      %v3710 = vpop.f32.mrb[0].mxu0
      %v3711 = vpop.f32.mrb[0].mxu0
      %v3712 = vadd.f32 0.0, %v3711
      %v3713 = vpop.f32.mrb[0].mxu0
      %3714 = vmatprep.mubr.bf16.mxu0 0
      %3715 = vmatmul.mubr.bf16.gmra.mrb[0].mxu0 %v3602
      %v3716 = vpop.f32.mrb[0].mxu0
      %v3717 = vadd.f32 0.0, %v3716
      %v3718 = vpop.f32.mrb[0].mxu0
      %v3719 = vpop.f32.mrb[0].mxu0
      %v3720 = vadd.f32 0.0, %v3719
      %v3721 = vpop.f32.mrb[0].mxu0
      %3722 = vmatprep.mubr.bf16.mxu0 0
      %3723 = vmatmul.mubr.bf16.gmra.mrb[0].mxu0 %v3605
      %v3724 = vpop.f32.mrb[0].mxu0
      %v3725 = vadd.f32 0.0, %v3724
      %v3726 = vpop.f32.mrb[0].mxu0
      %v3727 = vpop.f32.mrb[0].mxu0
      %v3728 = vadd.f32 0.0, %v3727
      %v3729 = vpop.f32.mrb[0].mxu0
      %3730 = vmatprep.mubr.bf16.mxu0 0
      %3731 = vmatmul.mubr.bf16.gmra.mrb[0].mxu0 %v3608
      %v3732 = vpop.f32.mrb[0].mxu0
      %v3733 = vadd.f32 0.0, %v3732
      %v3734 = vpop.f32.mrb[0].mxu0
      %v3735 = vpop.f32.mrb[0].mxu0
      %v3736 = vadd.f32 0.0, %v3735
      %v3737 = vpop.f32.mrb[0].mxu0
      %3738 = vmatprep.mubr.bf16.mxu0 0
      %3739 = vmatmul.mubr.bf16.gmra.mrb[0].mxu0 %v3611
      %v3740 = vpop.f32.mrb[0].mxu0
      %v3741 = vadd.f32 0.0, %v3740
      %v3742 = vpop.f32.mrb[0].mxu0
      %v3743 = vpop.f32.mrb[0].mxu0
      %v3744 = vadd.f32 0.0, %v3743
      %v3745 = vpop.f32.mrb[0].mxu0
      %3746 = vmatprep.mubr.bf16.mxu0 0
      %3747 = vmatmul.mubr.bf16.gmra.mrb[0].mxu0 %v3614
      %v3748 = vpop.f32.mrb[0].mxu0
      %v3749 = vadd.f32 0.0, %v3748
      %v3750 = vpop.f32.mrb[0].mxu0
      %v3751 = vpop.f32.mrb[0].mxu0
      %v3752 = vadd.f32 0.0, %v3751
      %v3753 = vpop.f32.mrb[0].mxu0
      %3754 = vmatprep.mubr.bf16.mxu0 0
      %3755 = vmatmul.mubr.bf16.gmra.mrb[0].mxu0 %v3617
      %v3756 = vpop.f32.mrb[0].mxu0
      %v3757 = vadd.f32 0.0, %v3756
      %v3758 = vpop.f32.mrb[0].mxu0
      %v3759 = vpop.f32.mrb[0].mxu0
      %v3760 = vadd.f32 0.0, %v3759
      %v3761 = vpop.f32.mrb[0].mxu0
      %3762 = vmatprep.mubr.bf16.mxu0 0
      %3763 = vmatmul.mubr.bf16.gmra.mrb[0].mxu0 %v3620
      %v3764 = vpop.f32.mrb[0].mxu0
      %v3765 = vadd.f32 0.0, %v3764
      %v3766 = vpop.f32.mrb[0].mxu0
      %v3767 = vpop.f32.mrb[0].mxu0
      %v3768 = vadd.f32 0.0, %v3767
      %v3769 = vpop.f32.mrb[0].mxu0
      %3770 = vmatprep.mubr.bf16.mxu0 0
      %3771 = vmatmul.mubr.bf16.gmra.mrb[0].mxu0 %v3623
      %v3772 = vpop.f32.mrb[0].mxu0
      %v3773 = vadd.f32 0.0, %v3772
      %v3774 = vpop.f32.mrb[0].mxu0
      %v3775 = vpop.f32.mrb[0].mxu0
      %v3776 = vadd.f32 0.0, %v3775
      %v3777 = vpop.f32.mrb[0].mxu0
      %3778 = vmatprep.mubr.bf16.mxu0 0
      %3779 = vmatmul.mubr.bf16.gmra.mrb[0].mxu0 %v3626
      %v3780 = vpop.f32.mrb[0].mxu0
      %v3781 = vadd.f32 0.0, %v3780
      %v3782 = vpop.f32.mrb[0].mxu0
      %v3783 = vpop.f32.mrb[0].mxu0
      %v3784 = vadd.f32 0.0, %v3783
      %v3785 = vpop.f32.mrb[0].mxu0
      %3786 = vmatprep.mubr.bf16.mxu0 0
      %3787 = vmatmul.mubr.bf16.gmra.mrb[0].mxu0 %v3629
      %v3788 = vpop.f32.mrb[0].mxu0
      %v3789 = vadd.f32 0.0, %v3788
      %v3790 = vpop.f32.mrb[0].mxu0
      %v3791 = vpop.f32.mrb[0].mxu0
      %v3792 = vadd.f32 0.0, %v3791
      %v3793 = vpop.f32.mrb[0].mxu0
      %3794 = vdwg.mxu0
      %v3795 = vadd.f32 %v2722, %v3669
      %v3796 = vadd.f32 %v2725, %v3672
      %v3797 = vadd.f32 %v2730, %v3677
      %v3798 = vadd.f32 %v2733, %v3680
      %v3799 = vadd.f32 %v2738, %v3685
      %v3800 = vadd.f32 %v2741, %v3688
      %v3801 = vadd.f32 %v2746, %v3693
      %v3802 = vadd.f32 %v2749, %v3696
      %v3803 = vadd.f32 %v2754, %v3701
      %v3804 = vadd.f32 %v2757, %v3704
      %v3805 = vadd.f32 %v2762, %v3709
      %v3806 = vadd.f32 %v2765, %v3712
      %v3807 = vadd.f32 %v2770, %v3717
      %v3808 = vadd.f32 %v2773, %v3720
      %v3809 = vadd.f32 %v2778, %v3725
      %v3810 = vadd.f32 %v2781, %v3728
      %v3811 = vadd.f32 %v2786, %v3733
      %v3812 = vadd.f32 %v2789, %v3736
      %v3813 = vadd.f32 %v2794, %v3741
      %v3814 = vadd.f32 %v2797, %v3744
      %v3815 = vadd.f32 %v2802, %v3749
      %v3816 = vadd.f32 %v2805, %v3752
      %v3817 = vadd.f32 %v2810, %v3757
      %v3818 = vadd.f32 %v2813, %v3760
      %v3819 = vadd.f32 %v2818, %v3765
      %v3820 = vadd.f32 %v2821, %v3768
      %v3821 = vadd.f32 %v2826, %v3773
      %v3822 = vadd.f32 %v2829, %v3776
      %v3823 = vadd.f32 %v2834, %v3781
      %v3824 = vadd.f32 %v2837, %v3784
      %v3825 = vadd.f32 %v2842, %v3789
      %v3826 = vadd.f32 %v2845, %v3792
      %v3827 = vld [vmem:[#allocation2 + $0xc] sm:$0x8]
      %v3828 = vld [vmem:[#allocation2 + $0x10] sm:$0xf]
      %v3829 = vld [vmem:[#allocation2 + $0x14] sm:$0xf]
      %v3830 = vld [vmem:[#allocation2 + $0x18] sm:$0xf]
      %v3831 = vld [vmem:[#allocation2 + $0x1c] sm:$0xf]
      %v3832 = vld [vmem:[#allocation2 + $0x20] sm:$0xf]
      %v3833 = vld [vmem:[#allocation2 + $0x24] sm:$0xf]
      %v3834 = vld [vmem:[#allocation2 + $0x28] sm:$0xf]
      %v3835 = vld [vmem:[#allocation2 + $0x2c] sm:$0xf]
      %v3836 = vld [vmem:[#allocation2 + $0x30] sm:$0xf]
      %v3837 = vld [vmem:[#allocation2 + $0x34] sm:$0xf]
      %v3838 = vld [vmem:[#allocation2 + $0x38] sm:$0xf]
      %v3839 = vld [vmem:[#allocation2 + $0x3c] sm:$0xf]
      %v3840 = vld [vmem:[#allocation2 + $0x40] sm:$0xf]
      %v3841 = vld [vmem:[#allocation2 + $0x44] sm:$0xf]
      %v3842 = vld [vmem:[#allocation2 + $0x48] sm:$0xf]
      %v3843 = vld [vmem:[#allocation2 + $0x4c] sm:$0xf]
      %v3844 = vld [vmem:[#allocation2 + $0x50] sm:$0xf]
      %v3845 = vld [vmem:[#allocation2 + $0x54] sm:$0xf]
      %v3846 = vld [vmem:[#allocation2 + $0x58] sm:$0xf]
      %v3847 = vld [vmem:[#allocation2 + $0x5c] sm:$0xf]
      %v3848 = vld [vmem:[#allocation2 + $0x60] sm:$0xf]
      %v3849 = vld [vmem:[#allocation2 + $0x64] sm:$0xf]
      %v3850 = vld [vmem:[#allocation2 + $0x68] sm:$0xf]
      %v3851 = vld [vmem:[#allocation2 + $0x6c] sm:$0xf]
      %v3852 = vld [vmem:[#allocation2 + $0x70] sm:$0xf]
      %v3853 = vld [vmem:[#allocation2 + $0x74] sm:$0xf]
      %v3854 = vld [vmem:[#allocation2 + $0x78] sm:$0xf]
      %v3855 = vld [vmem:[#allocation2 + $0x7c] sm:$0xf]
      %v3856 = vld [vmem:[#allocation2 + $0x80] sm:$0xf]
      %v3857 = vld [vmem:[#allocation2 + $0x84] sm:$0xf]
      %v3858 = vld [vmem:[#allocation2 + $0x88] sm:$0xf]
      %v3859 = vld [vmem:[#allocation2 + $0x8c] sm:$0xf]
      %v3860 = vsel %vm2039, %v3827, 0
      %v3861 = vsel %vm2040, %v3828, 0
      %v3862 = vsel %vm2041, %v3829, 0
      %v3863 = vsel %vm2042, %v3830, 0
      %v3864 = vsel %vm2043, %v3831, 0
      %v3865 = vsel %vm2044, %v3832, 0
      %v3866 = vsel %vm2045, %v3833, 0
      %v3867 = vsel %vm2046, %v3834, 0
      %v3868 = vsel %vm2047, %v3835, 0
      %v3869 = vsel %vm2048, %v3836, 0
      %v3870 = vsel %vm2049, %v3837, 0
      %v3871 = vsel %vm2050, %v3838, 0
      %v3872 = vsel %vm2051, %v3839, 0
      %v3873 = vsel %vm2052, %v3840, 0
      %v3874 = vsel %vm2053, %v3841, 0
      %v3875 = vsel %vm2054, %v3842, 0
      %v3876 = vsel %vm2055, %v3843, 0
      %v3877 = vsel %vm2056, %v3844, 0
      %v3878 = vsel %vm2057, %v3845, 0
      %v3879 = vsel %vm2058, %v3846, 0
      %v3880 = vsel %vm2059, %v3847, 0
      %v3881 = vsel %vm2060, %v3848, 0
      %v3882 = vsel %vm2061, %v3849, 0
      %v3883 = vsel %vm2062, %v3850, 0
      %v3884 = vsel %vm2063, %v3851, 0
      %v3885 = vsel %vm2064, %v3852, 0
      %v3886 = vsel %vm2065, %v3853, 0
      %v3887 = vsel %vm2066, %v3854, 0
      %v3888 = vsel %vm2067, %v3855, 0
      %v3889 = vsel %vm2068, %v3856, 0
      %v3890 = vsel %vm2069, %v3857, 0
      %v3891 = vsel %vm2070, %v3858, 0
      %v3892 = vsel %vm2071, %v3859, 0
      %s3893 = scalar_lea.vmem %s4, 12
      %v3894 = vld [vmem:[%s3893] sm:$0xf]
      %v3928 = vunpack.c.l.b16 %v3860
      %v3929 = vunpack.c.l.b16 %v3861
      %v3930 = vunpack.c.l.b16 %v3862
      %v3931 = vunpack.c.l.b16 %v3863
      %v3932 = vunpack.c.l.b16 %v3864
      %v3933 = vunpack.c.l.b16 %v3865
      %v3934 = vunpack.c.l.b16 %v3866
      %v3935 = vunpack.c.l.b16 %v3867
      %v3936 = vunpack.c.l.b16 %v3868
      %v3937 = vunpack.c.l.b16 %v3869
      %v3938 = vunpack.c.l.b16 %v3870
      %v3939 = vunpack.c.l.b16 %v3871
      %v3940 = vunpack.c.l.b16 %v3872
      %v3941 = vunpack.c.l.b16 %v3873
      %v3942 = vunpack.c.l.b16 %v3874
      %v3943 = vunpack.c.l.b16 %v3875
      %v3944 = vunpack.c.l.b16 %v3876
      %v3945 = vunpack.c.l.b16 %v3877
      %v3946 = vunpack.c.l.b16 %v3878
      %v3947 = vunpack.c.l.b16 %v3879
      %v3948 = vunpack.c.l.b16 %v3880
      %v3949 = vunpack.c.l.b16 %v3881
      %v3950 = vunpack.c.l.b16 %v3882
      %v3951 = vunpack.c.l.b16 %v3883
      %v3952 = vunpack.c.l.b16 %v3884
      %v3953 = vunpack.c.l.b16 %v3885
      %v3954 = vunpack.c.l.b16 %v3886
      %v3955 = vunpack.c.l.b16 %v3887
      %v3956 = vunpack.c.l.b16 %v3888
      %v3957 = vunpack.c.l.b16 %v3889
      %v3958 = vunpack.c.l.b16 %v3890
      %v3959 = vunpack.c.l.b16 %v3891
      %v3960 = vunpack.c.l.b16 %v3892
      %v3961 = vpack.c.b16 %v3929, %v3928
      %v3962 = vpack.c.b16 %v3931, %v3930
      %v3963 = vpack.c.b16 %v3933, %v3932
      %v3964 = vpack.c.b16 %v3935, %v3934
      %v3965 = vpack.c.b16 %v3937, %v3936
      %v3966 = vpack.c.b16 %v3939, %v3938
      %v3967 = vpack.c.b16 %v3941, %v3940
      %v3968 = vpack.c.b16 %v3943, %v3942
      %v3969 = vpack.c.b16 %v3945, %v3944
      %v3970 = vpack.c.b16 %v3947, %v3946
      %v3971 = vpack.c.b16 %v3949, %v3948
      %v3972 = vpack.c.b16 %v3951, %v3950
      %v3973 = vpack.c.b16 %v3953, %v3952
      %v3974 = vpack.c.b16 %v3955, %v3954
      %v3975 = vpack.c.b16 %v3957, %v3956
      %v3976 = vpack.c.b16 %v3959, %v3958
      %v3977 = vpack.c.b16 %v3960, %v3960
      %v3979 = vshrl.u32 %v3961, 16
      %v3981 = vrot.slane %v3979, 3
      %v3982 = vshll.u32 %v3961, 16
      %v3984 = vrot.slane %v3982, 4
      %v3985 = vor.u32 %v3981, %v3984
      %v3987 = vshrl.u32 %v3962, 16
      %v3989 = vrot.slane %v3987, 3
      %v3990 = vshll.u32 %v3962, 16
      %v3992 = vrot.slane %v3990, 4
      %v3993 = vor.u32 %v3989, %v3992
      %v3994 = vsel %vm2483, %v3985, %v3993
      %v3996 = vshrl.u32 %v3963, 16
      %v3998 = vrot.slane %v3996, 3
      %v3999 = vshll.u32 %v3963, 16
      %v4001 = vrot.slane %v3999, 4
      %v4002 = vor.u32 %v3998, %v4001
      %v4003 = vsel %vm2483, %v3993, %v4002
      %v4005 = vshrl.u32 %v3964, 16
      %v4007 = vrot.slane %v4005, 3
      %v4008 = vshll.u32 %v3964, 16
      %v4010 = vrot.slane %v4008, 4
      %v4011 = vor.u32 %v4007, %v4010
      %v4012 = vsel %vm2483, %v4002, %v4011
      %v4014 = vshrl.u32 %v3965, 16
      %v4016 = vrot.slane %v4014, 3
      %v4017 = vshll.u32 %v3965, 16
      %v4019 = vrot.slane %v4017, 4
      %v4020 = vor.u32 %v4016, %v4019
      %v4021 = vsel %vm2483, %v4011, %v4020
      %v4023 = vshrl.u32 %v3966, 16
      %v4025 = vrot.slane %v4023, 3
      %v4026 = vshll.u32 %v3966, 16
      %v4028 = vrot.slane %v4026, 4
      %v4029 = vor.u32 %v4025, %v4028
      %v4030 = vsel %vm2483, %v4020, %v4029
      %v4032 = vshrl.u32 %v3967, 16
      %v4034 = vrot.slane %v4032, 3
      %v4035 = vshll.u32 %v3967, 16
      %v4037 = vrot.slane %v4035, 4
      %v4038 = vor.u32 %v4034, %v4037
      %v4039 = vsel %vm2483, %v4029, %v4038
      %v4041 = vshrl.u32 %v3968, 16
      %v4043 = vrot.slane %v4041, 3
      %v4044 = vshll.u32 %v3968, 16
      %v4046 = vrot.slane %v4044, 4
      %v4047 = vor.u32 %v4043, %v4046
      %v4048 = vsel %vm2483, %v4038, %v4047
      %v4050 = vshrl.u32 %v3969, 16
      %v4052 = vrot.slane %v4050, 3
      %v4053 = vshll.u32 %v3969, 16
      %v4055 = vrot.slane %v4053, 4
      %v4056 = vor.u32 %v4052, %v4055
      %v4057 = vsel %vm2483, %v4047, %v4056
      %v4059 = vshrl.u32 %v3970, 16
      %v4061 = vrot.slane %v4059, 3
      %v4062 = vshll.u32 %v3970, 16
      %v4064 = vrot.slane %v4062, 4
      %v4065 = vor.u32 %v4061, %v4064
      %v4066 = vsel %vm2483, %v4056, %v4065
      %v4068 = vshrl.u32 %v3971, 16
      %v4070 = vrot.slane %v4068, 3
      %v4071 = vshll.u32 %v3971, 16
      %v4073 = vrot.slane %v4071, 4
      %v4074 = vor.u32 %v4070, %v4073
      %v4075 = vsel %vm2483, %v4065, %v4074
      %v4077 = vshrl.u32 %v3972, 16
      %v4079 = vrot.slane %v4077, 3
      %v4080 = vshll.u32 %v3972, 16
      %v4082 = vrot.slane %v4080, 4
      %v4083 = vor.u32 %v4079, %v4082
      %v4084 = vsel %vm2483, %v4074, %v4083
      %v4086 = vshrl.u32 %v3973, 16
      %v4088 = vrot.slane %v4086, 3
      %v4089 = vshll.u32 %v3973, 16
      %v4091 = vrot.slane %v4089, 4
      %v4092 = vor.u32 %v4088, %v4091
      %v4093 = vsel %vm2483, %v4083, %v4092
      %v4095 = vshrl.u32 %v3974, 16
      %v4097 = vrot.slane %v4095, 3
      %v4098 = vshll.u32 %v3974, 16
      %v4100 = vrot.slane %v4098, 4
      %v4101 = vor.u32 %v4097, %v4100
      %v4102 = vsel %vm2483, %v4092, %v4101
      %v4104 = vshrl.u32 %v3975, 16
      %v4106 = vrot.slane %v4104, 3
      %v4107 = vshll.u32 %v3975, 16
      %v4109 = vrot.slane %v4107, 4
      %v4110 = vor.u32 %v4106, %v4109
      %v4111 = vsel %vm2483, %v4101, %v4110
      %v4113 = vshrl.u32 %v3976, 16
      %v4115 = vrot.slane %v4113, 3
      %v4116 = vshll.u32 %v3976, 16
      %v4118 = vrot.slane %v4116, 4
      %v4119 = vor.u32 %v4115, %v4118
      %v4120 = vsel %vm2483, %v4110, %v4119
      %v4122 = vshrl.u32 %v3977, 16
      %v4124 = vrot.slane %v4122, 3
      %v4125 = vshll.u32 %v3977, 16
      %v4127 = vrot.slane %v4125, 4
      %v4128 = vor.u32 %v4124, %v4127
      %v4129 = vsel %vm2483, %v4119, %v4128
      %v4131 = vsel %vm427, %v3994, 0
      %v4134 = vsel %vm427, %v4003, 0
      %v4137 = vsel %vm427, %v4012, 0
      %v4140 = vsel %vm427, %v4021, 0
      %v4143 = vsel %vm427, %v4030, 0
      %v4146 = vsel %vm427, %v4039, 0
      %v4149 = vsel %vm427, %v4048, 0
      %v4152 = vsel %vm427, %v4057, 0
      %v4155 = vsel %vm427, %v4066, 0
      %v4158 = vsel %vm427, %v4075, 0
      %v4161 = vsel %vm427, %v4084, 0
      %v4164 = vsel %vm427, %v4093, 0
      %v4167 = vsel %vm427, %v4102, 0
      %v4170 = vsel %vm427, %v4111, 0
      %v4173 = vsel %vm427, %v4120, 0
      %v4176 = vsel %vm427, %v4129, 0
      %v4179 = vsel %vm476, %v3894, 0
      %4181 = vmatprep.subr.bf16.mxu0 0
      %4182 = vmatpush1.bf16.msra.mxu0 %v4179
      %4183 = vmatprep.subr.bf16.mxu0 0
      %4184 = vmatpush1.bf16.msra.mxu0 0
      %4185 = vmatprep.subr.bf16.mxu0 0
      %4186 = vmatpush1.bf16.msra.mxu0 0
      %4187 = vmatprep.subr.bf16.mxu0 0
      %4188 = vmatpush1.bf16.msra.mxu0 0
      %4189 = vmatprep.subr.bf16.mxu0 0
      %4190 = vmatpush1.bf16.msra.mxu0 0
      %4191 = vmatprep.subr.bf16.mxu0 0
      %4192 = vmatpush1.bf16.msra.mxu0 0
      %4193 = vmatprep.subr.bf16.mxu0 0
      %4194 = vmatpush1.bf16.msra.mxu0 0
      %4195 = vmatprep.subr.bf16.mxu0 0
      %4196 = vmatpush1.bf16.msra.mxu0 0
      %4197 = vmatprep.subr.bf16.mxu0 0
      %4198 = vmatpush1.bf16.msra.mxu0 0
      %4199 = vmatprep.subr.bf16.mxu0 0
      %4200 = vmatpush1.bf16.msra.mxu0 0
      %4201 = vmatprep.subr.bf16.mxu0 0
      %4202 = vmatpush1.bf16.msra.mxu0 0
      %4203 = vmatprep.subr.bf16.mxu0 0
      %4204 = vmatpush1.bf16.msra.mxu0 0
      %4205 = vmatprep.subr.bf16.mxu0 0
      %4206 = vmatpush1.bf16.msra.mxu0 0
      %4207 = vmatprep.subr.bf16.mxu0 0
      %4208 = vmatpush1.bf16.msra.mxu0 0
      %4209 = vmatprep.subr.bf16.mxu0 0
      %4210 = vmatpush1.bf16.msra.mxu0 0
      %4211 = vmatprep.subr.bf16.mxu0 0
      %4212 = vmatpush1.bf16.msra.mxu0 0
      %4213 = vmatprep.mubr.bf16.mxu0 0
      %4214 = vmatmul.mubr.bf16.gmra.mrb[0].mxu0 %v4131
      %v4215 = vpop.f32.mrb[0].mxu0
      %v4216 = vadd.f32 0.0, %v4215
      %v4217 = vpop.f32.mrb[0].mxu0
      %v4218 = vpop.f32.mrb[0].mxu0
      %v4219 = vadd.f32 0.0, %v4218
      %v4220 = vpop.f32.mrb[0].mxu0
      %4221 = vmatprep.mubr.bf16.mxu0 0
      %4222 = vmatmul.mubr.bf16.gmra.mrb[0].mxu0 %v4134
      %v4223 = vpop.f32.mrb[0].mxu0
      %v4224 = vadd.f32 0.0, %v4223
      %v4225 = vpop.f32.mrb[0].mxu0
      %v4226 = vpop.f32.mrb[0].mxu0
      %v4227 = vadd.f32 0.0, %v4226
      %v4228 = vpop.f32.mrb[0].mxu0
      %4229 = vmatprep.mubr.bf16.mxu0 0
      %4230 = vmatmul.mubr.bf16.gmra.mrb[0].mxu0 %v4137
      %v4231 = vpop.f32.mrb[0].mxu0
      %v4232 = vadd.f32 0.0, %v4231
      %v4233 = vpop.f32.mrb[0].mxu0
      %v4234 = vpop.f32.mrb[0].mxu0
      %v4235 = vadd.f32 0.0, %v4234
      %v4236 = vpop.f32.mrb[0].mxu0
      %4237 = vmatprep.mubr.bf16.mxu0 0
      %4238 = vmatmul.mubr.bf16.gmra.mrb[0].mxu0 %v4140
      %v4239 = vpop.f32.mrb[0].mxu0
      %v4240 = vadd.f32 0.0, %v4239
      %v4241 = vpop.f32.mrb[0].mxu0
      %v4242 = vpop.f32.mrb[0].mxu0
      %v4243 = vadd.f32 0.0, %v4242
      %v4244 = vpop.f32.mrb[0].mxu0
      %4245 = vmatprep.mubr.bf16.mxu0 0
      %4246 = vmatmul.mubr.bf16.gmra.mrb[0].mxu0 %v4143
      %v4247 = vpop.f32.mrb[0].mxu0
      %v4248 = vadd.f32 0.0, %v4247
      %v4249 = vpop.f32.mrb[0].mxu0
      %v4250 = vpop.f32.mrb[0].mxu0
      %v4251 = vadd.f32 0.0, %v4250
      %v4252 = vpop.f32.mrb[0].mxu0
      %4253 = vmatprep.mubr.bf16.mxu0 0
      %4254 = vmatmul.mubr.bf16.gmra.mrb[0].mxu0 %v4146
      %v4255 = vpop.f32.mrb[0].mxu0
      %v4256 = vadd.f32 0.0, %v4255
      %v4257 = vpop.f32.mrb[0].mxu0
      %v4258 = vpop.f32.mrb[0].mxu0
      %v4259 = vadd.f32 0.0, %v4258
      %v4260 = vpop.f32.mrb[0].mxu0
      %4261 = vmatprep.mubr.bf16.mxu0 0
      %4262 = vmatmul.mubr.bf16.gmra.mrb[0].mxu0 %v4149
      %v4263 = vpop.f32.mrb[0].mxu0
      %v4264 = vadd.f32 0.0, %v4263
      %v4265 = vpop.f32.mrb[0].mxu0
      %v4266 = vpop.f32.mrb[0].mxu0
      %v4267 = vadd.f32 0.0, %v4266
      %v4268 = vpop.f32.mrb[0].mxu0
      %4269 = vmatprep.mubr.bf16.mxu0 0
      %4270 = vmatmul.mubr.bf16.gmra.mrb[0].mxu0 %v4152
      %v4271 = vpop.f32.mrb[0].mxu0
      %v4272 = vadd.f32 0.0, %v4271
      %v4273 = vpop.f32.mrb[0].mxu0
      %v4274 = vpop.f32.mrb[0].mxu0
      %v4275 = vadd.f32 0.0, %v4274
      %v4276 = vpop.f32.mrb[0].mxu0
      %4277 = vmatprep.mubr.bf16.mxu0 0
      %4278 = vmatmul.mubr.bf16.gmra.mrb[0].mxu0 %v4155
      %v4279 = vpop.f32.mrb[0].mxu0
      %v4280 = vadd.f32 0.0, %v4279
      %v4281 = vpop.f32.mrb[0].mxu0
      %v4282 = vpop.f32.mrb[0].mxu0
      %v4283 = vadd.f32 0.0, %v4282
      %v4284 = vpop.f32.mrb[0].mxu0
      %4285 = vmatprep.mubr.bf16.mxu0 0
      %4286 = vmatmul.mubr.bf16.gmra.mrb[0].mxu0 %v4158
      %v4287 = vpop.f32.mrb[0].mxu0
      %v4288 = vadd.f32 0.0, %v4287
      %v4289 = vpop.f32.mrb[0].mxu0
      %v4290 = vpop.f32.mrb[0].mxu0
      %v4291 = vadd.f32 0.0, %v4290
      %v4292 = vpop.f32.mrb[0].mxu0
      %4293 = vmatprep.mubr.bf16.mxu0 0
      %4294 = vmatmul.mubr.bf16.gmra.mrb[0].mxu0 %v4161
      %v4295 = vpop.f32.mrb[0].mxu0
      %v4296 = vadd.f32 0.0, %v4295
      %v4297 = vpop.f32.mrb[0].mxu0
      %v4298 = vpop.f32.mrb[0].mxu0
      %v4299 = vadd.f32 0.0, %v4298
      %v4300 = vpop.f32.mrb[0].mxu0
      %4301 = vmatprep.mubr.bf16.mxu0 0
      %4302 = vmatmul.mubr.bf16.gmra.mrb[0].mxu0 %v4164
      %v4303 = vpop.f32.mrb[0].mxu0
      %v4304 = vadd.f32 0.0, %v4303
      %v4305 = vpop.f32.mrb[0].mxu0
      %v4306 = vpop.f32.mrb[0].mxu0
      %v4307 = vadd.f32 0.0, %v4306
      %v4308 = vpop.f32.mrb[0].mxu0
      %4309 = vmatprep.mubr.bf16.mxu0 0
      %4310 = vmatmul.mubr.bf16.gmra.mrb[0].mxu0 %v4167
      %v4311 = vpop.f32.mrb[0].mxu0
      %v4312 = vadd.f32 0.0, %v4311
      %v4313 = vpop.f32.mrb[0].mxu0
      %v4314 = vpop.f32.mrb[0].mxu0
      %v4315 = vadd.f32 0.0, %v4314
      %v4316 = vpop.f32.mrb[0].mxu0
      %4317 = vmatprep.mubr.bf16.mxu0 0
      %4318 = vmatmul.mubr.bf16.gmra.mrb[0].mxu0 %v4170
      %v4319 = vpop.f32.mrb[0].mxu0
      %v4320 = vadd.f32 0.0, %v4319
      %v4321 = vpop.f32.mrb[0].mxu0
      %v4322 = vpop.f32.mrb[0].mxu0
      %v4323 = vadd.f32 0.0, %v4322
      %v4324 = vpop.f32.mrb[0].mxu0
      %4325 = vmatprep.mubr.bf16.mxu0 0
      %4326 = vmatmul.mubr.bf16.gmra.mrb[0].mxu0 %v4173
      %v4327 = vpop.f32.mrb[0].mxu0
      %v4328 = vadd.f32 0.0, %v4327
      %v4329 = vpop.f32.mrb[0].mxu0
      %v4330 = vpop.f32.mrb[0].mxu0
      %v4331 = vadd.f32 0.0, %v4330
      %v4332 = vpop.f32.mrb[0].mxu0
      %4333 = vmatprep.mubr.bf16.mxu0 0
      %4334 = vmatmul.mubr.bf16.gmra.mrb[0].mxu0 %v4176
      %v4335 = vpop.f32.mrb[0].mxu0
      %v4336 = vadd.f32 0.0, %v4335
      %v4337 = vpop.f32.mrb[0].mxu0
      %v4338 = vpop.f32.mrb[0].mxu0
      %v4339 = vadd.f32 0.0, %v4338
      %v4340 = vpop.f32.mrb[0].mxu0
      %4341 = vdwg.mxu0
      %v4342 = vadd.f32 %v3795, %v4216
      %v4343 = vadd.f32 %v3796, %v4219
      %v4344 = vadd.f32 %v3797, %v4224
      %v4345 = vadd.f32 %v3798, %v4227
      %v4346 = vadd.f32 %v3799, %v4232
      %v4347 = vadd.f32 %v3800, %v4235
      %v4348 = vadd.f32 %v3801, %v4240
      %v4349 = vadd.f32 %v3802, %v4243
      %v4350 = vadd.f32 %v3803, %v4248
      %v4351 = vadd.f32 %v3804, %v4251
      %v4352 = vadd.f32 %v3805, %v4256
      %v4353 = vadd.f32 %v3806, %v4259
      %v4354 = vadd.f32 %v3807, %v4264
      %v4355 = vadd.f32 %v3808, %v4267
      %v4356 = vadd.f32 %v3809, %v4272
      %v4357 = vadd.f32 %v3810, %v4275
      %v4358 = vadd.f32 %v3811, %v4280
      %v4359 = vadd.f32 %v3812, %v4283
      %v4360 = vadd.f32 %v3813, %v4288
      %v4361 = vadd.f32 %v3814, %v4291
      %v4362 = vadd.f32 %v3815, %v4296
      %v4363 = vadd.f32 %v3816, %v4299
      %v4364 = vadd.f32 %v3817, %v4304
      %v4365 = vadd.f32 %v3818, %v4307
      %v4366 = vadd.f32 %v3819, %v4312
      %v4367 = vadd.f32 %v3820, %v4315
      %v4368 = vadd.f32 %v3821, %v4320
      %v4369 = vadd.f32 %v3822, %v4323
      %v4370 = vadd.f32 %v3823, %v4328
      %v4371 = vadd.f32 %v3824, %v4331
      %v4372 = vadd.f32 %v3825, %v4336
      %v4373 = vadd.f32 %v3826, %v4339
      %s4374 = scalar_lea.vmem %s4, 16
      %v4375 = vld [vmem:[%s4374] sm:$0xf]
      %v4408 = vunpack.c.l.b16 %v3828
      %v4409 = vunpack.c.l.b16 %v3829
      %v4410 = vunpack.c.l.b16 %v3830
      %v4411 = vunpack.c.l.b16 %v3831
      %v4412 = vunpack.c.l.b16 %v3832
      %v4413 = vunpack.c.l.b16 %v3833
      %v4414 = vunpack.c.l.b16 %v3834
      %v4415 = vunpack.c.l.b16 %v3835
      %v4416 = vunpack.c.l.b16 %v3836
      %v4417 = vunpack.c.l.b16 %v3837
      %v4418 = vunpack.c.l.b16 %v3838
      %v4419 = vunpack.c.l.b16 %v3839
      %v4420 = vunpack.c.l.b16 %v3840
      %v4421 = vunpack.c.l.b16 %v3841
      %v4422 = vunpack.c.l.b16 %v3842
      %v4423 = vunpack.c.l.b16 %v3843
      %v4424 = vunpack.c.l.b16 %v3844
      %v4425 = vunpack.c.l.b16 %v3845
      %v4426 = vunpack.c.l.b16 %v3846
      %v4427 = vunpack.c.l.b16 %v3847
      %v4428 = vunpack.c.l.b16 %v3848
      %v4429 = vunpack.c.l.b16 %v3849
      %v4430 = vunpack.c.l.b16 %v3850
      %v4431 = vunpack.c.l.b16 %v3851
      %v4432 = vunpack.c.l.b16 %v3852
      %v4433 = vunpack.c.l.b16 %v3853
      %v4434 = vunpack.c.l.b16 %v3854
      %v4435 = vunpack.c.l.b16 %v3855
      %v4436 = vunpack.c.l.b16 %v3856
      %v4437 = vunpack.c.l.b16 %v3857
      %v4438 = vunpack.c.l.b16 %v3858
      %v4439 = vunpack.c.l.b16 %v3859
      %v4440 = vpack.c.b16 %v4409, %v4408
      %v4441 = vpack.c.b16 %v4411, %v4410
      %v4442 = vpack.c.b16 %v4413, %v4412
      %v4443 = vpack.c.b16 %v4415, %v4414
      %v4444 = vpack.c.b16 %v4417, %v4416
      %v4445 = vpack.c.b16 %v4419, %v4418
      %v4446 = vpack.c.b16 %v4421, %v4420
      %v4447 = vpack.c.b16 %v4423, %v4422
      %v4448 = vpack.c.b16 %v4425, %v4424
      %v4449 = vpack.c.b16 %v4427, %v4426
      %v4450 = vpack.c.b16 %v4429, %v4428
      %v4451 = vpack.c.b16 %v4431, %v4430
      %v4452 = vpack.c.b16 %v4433, %v4432
      %v4453 = vpack.c.b16 %v4435, %v4434
      %v4454 = vpack.c.b16 %v4437, %v4436
      %v4455 = vpack.c.b16 %v4439, %v4438
      %v4457 = vsel %vm427, %v4440, 0
      %v4460 = vsel %vm427, %v4441, 0
      %v4463 = vsel %vm427, %v4442, 0
      %v4466 = vsel %vm427, %v4443, 0
      %v4469 = vsel %vm427, %v4444, 0
      %v4472 = vsel %vm427, %v4445, 0
      %v4475 = vsel %vm427, %v4446, 0
      %v4478 = vsel %vm427, %v4447, 0
      %v4481 = vsel %vm427, %v4448, 0
      %v4484 = vsel %vm427, %v4449, 0
      %v4487 = vsel %vm427, %v4450, 0
      %v4490 = vsel %vm427, %v4451, 0
      %v4493 = vsel %vm427, %v4452, 0
      %v4496 = vsel %vm427, %v4453, 0
      %v4499 = vsel %vm427, %v4454, 0
      %v4502 = vsel %vm427, %v4455, 0
      %v4505 = vsel %vm476, %v4375, 0
      %4507 = vmatprep.subr.bf16.mxu0 0
      %4508 = vmatpush1.bf16.msra.mxu0 %v4505
      %4509 = vmatprep.subr.bf16.mxu0 0
      %4510 = vmatpush1.bf16.msra.mxu0 0
      %4511 = vmatprep.subr.bf16.mxu0 0
      %4512 = vmatpush1.bf16.msra.mxu0 0
      %4513 = vmatprep.subr.bf16.mxu0 0
      %4514 = vmatpush1.bf16.msra.mxu0 0
      %4515 = vmatprep.subr.bf16.mxu0 0
      %4516 = vmatpush1.bf16.msra.mxu0 0
      %4517 = vmatprep.subr.bf16.mxu0 0
      %4518 = vmatpush1.bf16.msra.mxu0 0
      %4519 = vmatprep.subr.bf16.mxu0 0
      %4520 = vmatpush1.bf16.msra.mxu0 0
      %4521 = vmatprep.subr.bf16.mxu0 0
      %4522 = vmatpush1.bf16.msra.mxu0 0
      %4523 = vmatprep.subr.bf16.mxu0 0
      %4524 = vmatpush1.bf16.msra.mxu0 0
      %4525 = vmatprep.subr.bf16.mxu0 0
      %4526 = vmatpush1.bf16.msra.mxu0 0
      %4527 = vmatprep.subr.bf16.mxu0 0
      %4528 = vmatpush1.bf16.msra.mxu0 0
      %4529 = vmatprep.subr.bf16.mxu0 0
      %4530 = vmatpush1.bf16.msra.mxu0 0
      %4531 = vmatprep.subr.bf16.mxu0 0
      %4532 = vmatpush1.bf16.msra.mxu0 0
      %4533 = vmatprep.subr.bf16.mxu0 0
      %4534 = vmatpush1.bf16.msra.mxu0 0
      %4535 = vmatprep.subr.bf16.mxu0 0
      %4536 = vmatpush1.bf16.msra.mxu0 0
      %4537 = vmatprep.subr.bf16.mxu0 0
      %4538 = vmatpush1.bf16.msra.mxu0 0
      %4539 = vmatprep.mubr.bf16.mxu0 0
      %4540 = vmatmul.mubr.bf16.gmra.mrb[0].mxu0 %v4457
      %v4541 = vpop.f32.mrb[0].mxu0
      %v4542 = vadd.f32 0.0, %v4541
      %v4543 = vpop.f32.mrb[0].mxu0
      %v4544 = vpop.f32.mrb[0].mxu0
      %v4545 = vadd.f32 0.0, %v4544
      %v4546 = vpop.f32.mrb[0].mxu0
      %4547 = vmatprep.mubr.bf16.mxu0 0
      %4548 = vmatmul.mubr.bf16.gmra.mrb[0].mxu0 %v4460
      %v4549 = vpop.f32.mrb[0].mxu0
      %v4550 = vadd.f32 0.0, %v4549
      %v4551 = vpop.f32.mrb[0].mxu0
      %v4552 = vpop.f32.mrb[0].mxu0
      %v4553 = vadd.f32 0.0, %v4552
      %v4554 = vpop.f32.mrb[0].mxu0
      %4555 = vmatprep.mubr.bf16.mxu0 0
      %4556 = vmatmul.mubr.bf16.gmra.mrb[0].mxu0 %v4463
      %v4557 = vpop.f32.mrb[0].mxu0
      %v4558 = vadd.f32 0.0, %v4557
      %v4559 = vpop.f32.mrb[0].mxu0
      %v4560 = vpop.f32.mrb[0].mxu0
      %v4561 = vadd.f32 0.0, %v4560
      %v4562 = vpop.f32.mrb[0].mxu0
      %4563 = vmatprep.mubr.bf16.mxu0 0
      %4564 = vmatmul.mubr.bf16.gmra.mrb[0].mxu0 %v4466
      %v4565 = vpop.f32.mrb[0].mxu0
      %v4566 = vadd.f32 0.0, %v4565
      %v4567 = vpop.f32.mrb[0].mxu0
      %v4568 = vpop.f32.mrb[0].mxu0
      %v4569 = vadd.f32 0.0, %v4568
      %v4570 = vpop.f32.mrb[0].mxu0
      %4571 = vmatprep.mubr.bf16.mxu0 0
      %4572 = vmatmul.mubr.bf16.gmra.mrb[0].mxu0 %v4469
      %v4573 = vpop.f32.mrb[0].mxu0
      %v4574 = vadd.f32 0.0, %v4573
      %v4575 = vpop.f32.mrb[0].mxu0
      %v4576 = vpop.f32.mrb[0].mxu0
      %v4577 = vadd.f32 0.0, %v4576
      %v4578 = vpop.f32.mrb[0].mxu0
      %4579 = vmatprep.mubr.bf16.mxu0 0
      %4580 = vmatmul.mubr.bf16.gmra.mrb[0].mxu0 %v4472
      %v4581 = vpop.f32.mrb[0].mxu0
      %v4582 = vadd.f32 0.0, %v4581
      %v4583 = vpop.f32.mrb[0].mxu0
      %v4584 = vpop.f32.mrb[0].mxu0
      %v4585 = vadd.f32 0.0, %v4584
      %v4586 = vpop.f32.mrb[0].mxu0
      %4587 = vmatprep.mubr.bf16.mxu0 0
      %4588 = vmatmul.mubr.bf16.gmra.mrb[0].mxu0 %v4475
      %v4589 = vpop.f32.mrb[0].mxu0
      %v4590 = vadd.f32 0.0, %v4589
      %v4591 = vpop.f32.mrb[0].mxu0
      %v4592 = vpop.f32.mrb[0].mxu0
      %v4593 = vadd.f32 0.0, %v4592
      %v4594 = vpop.f32.mrb[0].mxu0
      %4595 = vmatprep.mubr.bf16.mxu0 0
      %4596 = vmatmul.mubr.bf16.gmra.mrb[0].mxu0 %v4478
      %v4597 = vpop.f32.mrb[0].mxu0
      %v4598 = vadd.f32 0.0, %v4597
      %v4599 = vpop.f32.mrb[0].mxu0
      %v4600 = vpop.f32.mrb[0].mxu0
      %v4601 = vadd.f32 0.0, %v4600
      %v4602 = vpop.f32.mrb[0].mxu0
      %4603 = vmatprep.mubr.bf16.mxu0 0
      %4604 = vmatmul.mubr.bf16.gmra.mrb[0].mxu0 %v4481
      %v4605 = vpop.f32.mrb[0].mxu0
      %v4606 = vadd.f32 0.0, %v4605
      %v4607 = vpop.f32.mrb[0].mxu0
      %v4608 = vpop.f32.mrb[0].mxu0
      %v4609 = vadd.f32 0.0, %v4608
      %v4610 = vpop.f32.mrb[0].mxu0
      %4611 = vmatprep.mubr.bf16.mxu0 0
      %4612 = vmatmul.mubr.bf16.gmra.mrb[0].mxu0 %v4484
      %v4613 = vpop.f32.mrb[0].mxu0
      %v4614 = vadd.f32 0.0, %v4613
      %v4615 = vpop.f32.mrb[0].mxu0
      %v4616 = vpop.f32.mrb[0].mxu0
      %v4617 = vadd.f32 0.0, %v4616
      %v4618 = vpop.f32.mrb[0].mxu0
      %4619 = vmatprep.mubr.bf16.mxu0 0
      %4620 = vmatmul.mubr.bf16.gmra.mrb[0].mxu0 %v4487
      %v4621 = vpop.f32.mrb[0].mxu0
      %v4622 = vadd.f32 0.0, %v4621
      %v4623 = vpop.f32.mrb[0].mxu0
      %v4624 = vpop.f32.mrb[0].mxu0
      %v4625 = vadd.f32 0.0, %v4624
      %v4626 = vpop.f32.mrb[0].mxu0
      %4627 = vmatprep.mubr.bf16.mxu0 0
      %4628 = vmatmul.mubr.bf16.gmra.mrb[0].mxu0 %v4490
      %v4629 = vpop.f32.mrb[0].mxu0
      %v4630 = vadd.f32 0.0, %v4629
      %v4631 = vpop.f32.mrb[0].mxu0
      %v4632 = vpop.f32.mrb[0].mxu0
      %v4633 = vadd.f32 0.0, %v4632
      %v4634 = vpop.f32.mrb[0].mxu0
      %4635 = vmatprep.mubr.bf16.mxu0 0
      %4636 = vmatmul.mubr.bf16.gmra.mrb[0].mxu0 %v4493
      %v4637 = vpop.f32.mrb[0].mxu0
      %v4638 = vadd.f32 0.0, %v4637
      %v4639 = vpop.f32.mrb[0].mxu0
      %v4640 = vpop.f32.mrb[0].mxu0
      %v4641 = vadd.f32 0.0, %v4640
      %v4642 = vpop.f32.mrb[0].mxu0
      %4643 = vmatprep.mubr.bf16.mxu0 0
      %4644 = vmatmul.mubr.bf16.gmra.mrb[0].mxu0 %v4496
      %v4645 = vpop.f32.mrb[0].mxu0
      %v4646 = vadd.f32 0.0, %v4645
      %v4647 = vpop.f32.mrb[0].mxu0
      %v4648 = vpop.f32.mrb[0].mxu0
      %v4649 = vadd.f32 0.0, %v4648
      %v4650 = vpop.f32.mrb[0].mxu0
      %4651 = vmatprep.mubr.bf16.mxu0 0
      %4652 = vmatmul.mubr.bf16.gmra.mrb[0].mxu0 %v4499
      %v4653 = vpop.f32.mrb[0].mxu0
      %v4654 = vadd.f32 0.0, %v4653
      %v4655 = vpop.f32.mrb[0].mxu0
      %v4656 = vpop.f32.mrb[0].mxu0
      %v4657 = vadd.f32 0.0, %v4656
      %v4658 = vpop.f32.mrb[0].mxu0
      %4659 = vmatprep.mubr.bf16.mxu0 0
      %4660 = vmatmul.mubr.bf16.gmra.mrb[0].mxu0 %v4502
      %v4661 = vpop.f32.mrb[0].mxu0
      %v4662 = vadd.f32 0.0, %v4661
      %v4663 = vpop.f32.mrb[0].mxu0
      %v4664 = vpop.f32.mrb[0].mxu0
      %v4665 = vadd.f32 0.0, %v4664
      %v4666 = vpop.f32.mrb[0].mxu0
      %4667 = vdwg.mxu0
      %v4668 = vadd.f32 %v4342, %v4542
      %v4669 = vadd.f32 %v4343, %v4545
      %v4670 = vadd.f32 %v4344, %v4550
      %v4671 = vadd.f32 %v4345, %v4553
      %v4672 = vadd.f32 %v4346, %v4558
      %v4673 = vadd.f32 %v4347, %v4561
      %v4674 = vadd.f32 %v4348, %v4566
      %v4675 = vadd.f32 %v4349, %v4569
      %v4676 = vadd.f32 %v4350, %v4574
      %v4677 = vadd.f32 %v4351, %v4577
      %v4678 = vadd.f32 %v4352, %v4582
      %v4679 = vadd.f32 %v4353, %v4585
      %v4680 = vadd.f32 %v4354, %v4590
      %v4681 = vadd.f32 %v4355, %v4593
      %v4682 = vadd.f32 %v4356, %v4598
      %v4683 = vadd.f32 %v4357, %v4601
      %v4684 = vadd.f32 %v4358, %v4606
      %v4685 = vadd.f32 %v4359, %v4609
      %v4686 = vadd.f32 %v4360, %v4614
      %v4687 = vadd.f32 %v4361, %v4617
      %v4688 = vadd.f32 %v4362, %v4622
      %v4689 = vadd.f32 %v4363, %v4625
      %v4690 = vadd.f32 %v4364, %v4630
      %v4691 = vadd.f32 %v4365, %v4633
      %v4692 = vadd.f32 %v4366, %v4638
      %v4693 = vadd.f32 %v4367, %v4641
      %v4694 = vadd.f32 %v4368, %v4646
      %v4695 = vadd.f32 %v4369, %v4649
      %v4696 = vadd.f32 %v4370, %v4654
      %v4697 = vadd.f32 %v4371, %v4657
      %v4698 = vadd.f32 %v4372, %v4662
      %v4699 = vadd.f32 %v4373, %v4665
      %v4700 = vld [vmem:[#allocation2 + $0x10] sm:$0xf]
      %v4701 = vld [vmem:[#allocation2 + $0x14] sm:$0xf]
      %v4702 = vld [vmem:[#allocation2 + $0x18] sm:$0xf]
      %v4703 = vld [vmem:[#allocation2 + $0x1c] sm:$0xf]
      %v4704 = vld [vmem:[#allocation2 + $0x20] sm:$0xf]
      %v4705 = vld [vmem:[#allocation2 + $0x24] sm:$0xf]
      %v4706 = vld [vmem:[#allocation2 + $0x28] sm:$0xf]
      %v4707 = vld [vmem:[#allocation2 + $0x2c] sm:$0xf]
      %v4708 = vld [vmem:[#allocation2 + $0x30] sm:$0xf]
      %v4709 = vld [vmem:[#allocation2 + $0x34] sm:$0xf]
      %v4710 = vld [vmem:[#allocation2 + $0x38] sm:$0xf]
      %v4711 = vld [vmem:[#allocation2 + $0x3c] sm:$0xf]
      %v4712 = vld [vmem:[#allocation2 + $0x40] sm:$0xf]
      %v4713 = vld [vmem:[#allocation2 + $0x44] sm:$0xf]
      %v4714 = vld [vmem:[#allocation2 + $0x48] sm:$0xf]
      %v4715 = vld [vmem:[#allocation2 + $0x4c] sm:$0xf]
      %v4716 = vld [vmem:[#allocation2 + $0x50] sm:$0xf]
      %v4717 = vld [vmem:[#allocation2 + $0x54] sm:$0xf]
      %v4718 = vld [vmem:[#allocation2 + $0x58] sm:$0xf]
      %v4719 = vld [vmem:[#allocation2 + $0x5c] sm:$0xf]
      %v4720 = vld [vmem:[#allocation2 + $0x60] sm:$0xf]
      %v4721 = vld [vmem:[#allocation2 + $0x64] sm:$0xf]
      %v4722 = vld [vmem:[#allocation2 + $0x68] sm:$0xf]
      %v4723 = vld [vmem:[#allocation2 + $0x6c] sm:$0xf]
      %v4724 = vld [vmem:[#allocation2 + $0x70] sm:$0xf]
      %v4725 = vld [vmem:[#allocation2 + $0x74] sm:$0xf]
      %v4726 = vld [vmem:[#allocation2 + $0x78] sm:$0xf]
      %v4727 = vld [vmem:[#allocation2 + $0x7c] sm:$0xf]
      %v4728 = vld [vmem:[#allocation2 + $0x80] sm:$0xf]
      %v4729 = vld [vmem:[#allocation2 + $0x84] sm:$0xf]
      %v4730 = vld [vmem:[#allocation2 + $0x88] sm:$0xf]
      %v4731 = vld [vmem:[#allocation2 + $0x8c] sm:$0xf]
      %v4732 = vld [vmem:[#allocation2 + $0x90] sm:$0x1]
      %v4733 = vsel %vm3299, %v4700, 0
      %v4734 = vsel %vm3300, %v4701, 0
      %v4735 = vsel %vm3301, %v4702, 0
      %v4736 = vsel %vm3302, %v4703, 0
      %v4737 = vsel %vm3303, %v4704, 0
      %v4738 = vsel %vm3304, %v4705, 0
      %v4739 = vsel %vm3305, %v4706, 0
      %v4740 = vsel %vm3306, %v4707, 0
      %v4741 = vsel %vm3307, %v4708, 0
      %v4742 = vsel %vm3308, %v4709, 0
      %v4743 = vsel %vm3309, %v4710, 0
      %v4744 = vsel %vm3310, %v4711, 0
      %v4745 = vsel %vm3311, %v4712, 0
      %v4746 = vsel %vm3312, %v4713, 0
      %v4747 = vsel %vm3313, %v4714, 0
      %v4748 = vsel %vm3314, %v4715, 0
      %v4749 = vsel %vm3315, %v4716, 0
      %v4750 = vsel %vm3316, %v4717, 0
      %v4751 = vsel %vm3317, %v4718, 0
      %v4752 = vsel %vm3318, %v4719, 0
      %v4753 = vsel %vm3319, %v4720, 0
      %v4754 = vsel %vm3320, %v4721, 0
      %v4755 = vsel %vm3321, %v4722, 0
      %v4756 = vsel %vm3322, %v4723, 0
      %v4757 = vsel %vm3323, %v4724, 0
      %v4758 = vsel %vm3324, %v4725, 0
      %v4759 = vsel %vm3325, %v4726, 0
      %v4760 = vsel %vm3326, %v4727, 0
      %v4761 = vsel %vm3327, %v4728, 0
      %v4762 = vsel %vm3328, %v4729, 0
      %v4763 = vsel %vm3329, %v4730, 0
      %v4764 = vsel %vm3330, %v4731, 0
      %v4765 = vsel %vm3331, %v4732, 0
      %s4766 = scalar_lea.vmem %s4, 20
      %v4767 = vld [vmem:[%s4766] sm:$0xf]
      %v4801 = vunpack.c.l.b16 %v4733
      %v4802 = vunpack.c.l.b16 %v4734
      %v4803 = vunpack.c.l.b16 %v4735
      %v4804 = vunpack.c.l.b16 %v4736
      %v4805 = vunpack.c.l.b16 %v4737
      %v4806 = vunpack.c.l.b16 %v4738
      %v4807 = vunpack.c.l.b16 %v4739
      %v4808 = vunpack.c.l.b16 %v4740
      %v4809 = vunpack.c.l.b16 %v4741
      %v4810 = vunpack.c.l.b16 %v4742
      %v4811 = vunpack.c.l.b16 %v4743
      %v4812 = vunpack.c.l.b16 %v4744
      %v4813 = vunpack.c.l.b16 %v4745
      %v4814 = vunpack.c.l.b16 %v4746
      %v4815 = vunpack.c.l.b16 %v4747
      %v4816 = vunpack.c.l.b16 %v4748
      %v4817 = vunpack.c.l.b16 %v4749
      %v4818 = vunpack.c.l.b16 %v4750
      %v4819 = vunpack.c.l.b16 %v4751
      %v4820 = vunpack.c.l.b16 %v4752
      %v4821 = vunpack.c.l.b16 %v4753
      %v4822 = vunpack.c.l.b16 %v4754
      %v4823 = vunpack.c.l.b16 %v4755
      %v4824 = vunpack.c.l.b16 %v4756
      %v4825 = vunpack.c.l.b16 %v4757
      %v4826 = vunpack.c.l.b16 %v4758
      %v4827 = vunpack.c.l.b16 %v4759
      %v4828 = vunpack.c.l.b16 %v4760
      %v4829 = vunpack.c.l.b16 %v4761
      %v4830 = vunpack.c.l.b16 %v4762
      %v4831 = vunpack.c.l.b16 %v4763
      %v4832 = vunpack.c.l.b16 %v4764
      %v4833 = vunpack.c.l.b16 %v4765
      %v4834 = vpack.c.b16 %v4802, %v4801
      %v4835 = vpack.c.b16 %v4804, %v4803
      %v4836 = vpack.c.b16 %v4806, %v4805
      %v4837 = vpack.c.b16 %v4808, %v4807
      %v4838 = vpack.c.b16 %v4810, %v4809
      %v4839 = vpack.c.b16 %v4812, %v4811
      %v4840 = vpack.c.b16 %v4814, %v4813
      %v4841 = vpack.c.b16 %v4816, %v4815
      %v4842 = vpack.c.b16 %v4818, %v4817
      %v4843 = vpack.c.b16 %v4820, %v4819
      %v4844 = vpack.c.b16 %v4822, %v4821
      %v4845 = vpack.c.b16 %v4824, %v4823
      %v4846 = vpack.c.b16 %v4826, %v4825
      %v4847 = vpack.c.b16 %v4828, %v4827
      %v4848 = vpack.c.b16 %v4830, %v4829
      %v4849 = vpack.c.b16 %v4832, %v4831
      %v4850 = vpack.c.b16 %v4833, %v4833
      %v4852 = vshrl.u32 %v4834, 16
      %v4854 = vshll.u32 %v4834, 16
      %v4856 = vrot.slane %v4854, 1
      %v4857 = vor.u32 %v4852, %v4856
      %v4859 = vshll.u32 %v4835, 16
      %v4861 = vrot.slane %v4859, 1
      %v4862 = vsel %vm3450, %v4857, %v4861
      %v4863 = vshrl.u32 %v4835, 16
      %v4865 = vor.u32 %v4863, %v4861
      %v4867 = vshll.u32 %v4836, 16
      %v4869 = vrot.slane %v4867, 1
      %v4870 = vsel %vm3450, %v4865, %v4869
      %v4871 = vshrl.u32 %v4836, 16
      %v4873 = vor.u32 %v4871, %v4869
      %v4875 = vshll.u32 %v4837, 16
      %v4877 = vrot.slane %v4875, 1
      %v4878 = vsel %vm3450, %v4873, %v4877
      %v4879 = vshrl.u32 %v4837, 16
      %v4881 = vor.u32 %v4879, %v4877
      %v4883 = vshll.u32 %v4838, 16
      %v4885 = vrot.slane %v4883, 1
      %v4886 = vsel %vm3450, %v4881, %v4885
      %v4887 = vshrl.u32 %v4838, 16
      %v4889 = vor.u32 %v4887, %v4885
      %v4891 = vshll.u32 %v4839, 16
      %v4893 = vrot.slane %v4891, 1
      %v4894 = vsel %vm3450, %v4889, %v4893
      %v4895 = vshrl.u32 %v4839, 16
      %v4897 = vor.u32 %v4895, %v4893
      %v4899 = vshll.u32 %v4840, 16
      %v4901 = vrot.slane %v4899, 1
      %v4902 = vsel %vm3450, %v4897, %v4901
      %v4903 = vshrl.u32 %v4840, 16
      %v4905 = vor.u32 %v4903, %v4901
      %v4907 = vshll.u32 %v4841, 16
      %v4909 = vrot.slane %v4907, 1
      %v4910 = vsel %vm3450, %v4905, %v4909
      %v4911 = vshrl.u32 %v4841, 16
      %v4913 = vor.u32 %v4911, %v4909
      %v4915 = vshll.u32 %v4842, 16
      %v4917 = vrot.slane %v4915, 1
      %v4918 = vsel %vm3450, %v4913, %v4917
      %v4919 = vshrl.u32 %v4842, 16
      %v4921 = vor.u32 %v4919, %v4917
      %v4923 = vshll.u32 %v4843, 16
      %v4925 = vrot.slane %v4923, 1
      %v4926 = vsel %vm3450, %v4921, %v4925
      %v4927 = vshrl.u32 %v4843, 16
      %v4929 = vor.u32 %v4927, %v4925
      %v4931 = vshll.u32 %v4844, 16
      %v4933 = vrot.slane %v4931, 1
      %v4934 = vsel %vm3450, %v4929, %v4933
      %v4935 = vshrl.u32 %v4844, 16
      %v4937 = vor.u32 %v4935, %v4933
      %v4939 = vshll.u32 %v4845, 16
      %v4941 = vrot.slane %v4939, 1
      %v4942 = vsel %vm3450, %v4937, %v4941
      %v4943 = vshrl.u32 %v4845, 16
      %v4945 = vor.u32 %v4943, %v4941
      %v4947 = vshll.u32 %v4846, 16
      %v4949 = vrot.slane %v4947, 1
      %v4950 = vsel %vm3450, %v4945, %v4949
      %v4951 = vshrl.u32 %v4846, 16
      %v4953 = vor.u32 %v4951, %v4949
      %v4955 = vshll.u32 %v4847, 16
      %v4957 = vrot.slane %v4955, 1
      %v4958 = vsel %vm3450, %v4953, %v4957
      %v4959 = vshrl.u32 %v4847, 16
      %v4961 = vor.u32 %v4959, %v4957
      %v4963 = vshll.u32 %v4848, 16
      %v4965 = vrot.slane %v4963, 1
      %v4966 = vsel %vm3450, %v4961, %v4965
      %v4967 = vshrl.u32 %v4848, 16
      %v4969 = vor.u32 %v4967, %v4965
      %v4971 = vshll.u32 %v4849, 16
      %v4973 = vrot.slane %v4971, 1
      %v4974 = vsel %vm3450, %v4969, %v4973
      %v4975 = vshrl.u32 %v4849, 16
      %v4977 = vor.u32 %v4975, %v4973
      %v4979 = vshll.u32 %v4850, 16
      %v4981 = vrot.slane %v4979, 1
      %v4982 = vsel %vm3450, %v4977, %v4981
      %v4984 = vsel %vm427, %v4862, 0
      %v4987 = vsel %vm427, %v4870, 0
      %v4990 = vsel %vm427, %v4878, 0
      %v4993 = vsel %vm427, %v4886, 0
      %v4996 = vsel %vm427, %v4894, 0
      %v4999 = vsel %vm427, %v4902, 0
      %v5002 = vsel %vm427, %v4910, 0
      %v5005 = vsel %vm427, %v4918, 0
      %v5008 = vsel %vm427, %v4926, 0
      %v5011 = vsel %vm427, %v4934, 0
      %v5014 = vsel %vm427, %v4942, 0
      %v5017 = vsel %vm427, %v4950, 0
      %v5020 = vsel %vm427, %v4958, 0
      %v5023 = vsel %vm427, %v4966, 0
      %v5026 = vsel %vm427, %v4974, 0
      %v5029 = vsel %vm427, %v4982, 0
      %v5032 = vsel %vm476, %v4767, 0
      %5034 = vmatprep.subr.bf16.mxu0 0
      %5035 = vmatpush1.bf16.msra.mxu0 %v5032
      %5036 = vmatprep.subr.bf16.mxu0 0
      %5037 = vmatpush1.bf16.msra.mxu0 0
      %5038 = vmatprep.subr.bf16.mxu0 0
      %5039 = vmatpush1.bf16.msra.mxu0 0
      %5040 = vmatprep.subr.bf16.mxu0 0
      %5041 = vmatpush1.bf16.msra.mxu0 0
      %5042 = vmatprep.subr.bf16.mxu0 0
      %5043 = vmatpush1.bf16.msra.mxu0 0
      %5044 = vmatprep.subr.bf16.mxu0 0
      %5045 = vmatpush1.bf16.msra.mxu0 0
      %5046 = vmatprep.subr.bf16.mxu0 0
      %5047 = vmatpush1.bf16.msra.mxu0 0
      %5048 = vmatprep.subr.bf16.mxu0 0
      %5049 = vmatpush1.bf16.msra.mxu0 0
      %5050 = vmatprep.subr.bf16.mxu0 0
      %5051 = vmatpush1.bf16.msra.mxu0 0
      %5052 = vmatprep.subr.bf16.mxu0 0
      %5053 = vmatpush1.bf16.msra.mxu0 0
      %5054 = vmatprep.subr.bf16.mxu0 0
      %5055 = vmatpush1.bf16.msra.mxu0 0
      %5056 = vmatprep.subr.bf16.mxu0 0
      %5057 = vmatpush1.bf16.msra.mxu0 0
      %5058 = vmatprep.subr.bf16.mxu0 0
      %5059 = vmatpush1.bf16.msra.mxu0 0
      %5060 = vmatprep.subr.bf16.mxu0 0
      %5061 = vmatpush1.bf16.msra.mxu0 0
      %5062 = vmatprep.subr.bf16.mxu0 0
      %5063 = vmatpush1.bf16.msra.mxu0 0
      %5064 = vmatprep.subr.bf16.mxu0 0
      %5065 = vmatpush1.bf16.msra.mxu0 0
      %5066 = vmatprep.mubr.bf16.mxu0 0
      %5067 = vmatmul.mubr.bf16.gmra.mrb[0].mxu0 %v4984
      %v5068 = vpop.f32.mrb[0].mxu0
      %v5069 = vadd.f32 0.0, %v5068
      %v5070 = vpop.f32.mrb[0].mxu0
      %v5071 = vpop.f32.mrb[0].mxu0
      %v5072 = vadd.f32 0.0, %v5071
      %v5073 = vpop.f32.mrb[0].mxu0
      %5074 = vmatprep.mubr.bf16.mxu0 0
      %5075 = vmatmul.mubr.bf16.gmra.mrb[0].mxu0 %v4987
      %v5076 = vpop.f32.mrb[0].mxu0
      %v5077 = vadd.f32 0.0, %v5076
      %v5078 = vpop.f32.mrb[0].mxu0
      %v5079 = vpop.f32.mrb[0].mxu0
      %v5080 = vadd.f32 0.0, %v5079
      %v5081 = vpop.f32.mrb[0].mxu0
      %5082 = vmatprep.mubr.bf16.mxu0 0
      %5083 = vmatmul.mubr.bf16.gmra.mrb[0].mxu0 %v4990
      %v5084 = vpop.f32.mrb[0].mxu0
      %v5085 = vadd.f32 0.0, %v5084
      %v5086 = vpop.f32.mrb[0].mxu0
      %v5087 = vpop.f32.mrb[0].mxu0
      %v5088 = vadd.f32 0.0, %v5087
      %v5089 = vpop.f32.mrb[0].mxu0
      %5090 = vmatprep.mubr.bf16.mxu0 0
      %5091 = vmatmul.mubr.bf16.gmra.mrb[0].mxu0 %v4993
      %v5092 = vpop.f32.mrb[0].mxu0
      %v5093 = vadd.f32 0.0, %v5092
      %v5094 = vpop.f32.mrb[0].mxu0
      %v5095 = vpop.f32.mrb[0].mxu0
      %v5096 = vadd.f32 0.0, %v5095
      %v5097 = vpop.f32.mrb[0].mxu0
      %5098 = vmatprep.mubr.bf16.mxu0 0
      %5099 = vmatmul.mubr.bf16.gmra.mrb[0].mxu0 %v4996
      %v5100 = vpop.f32.mrb[0].mxu0
      %v5101 = vadd.f32 0.0, %v5100
      %v5102 = vpop.f32.mrb[0].mxu0
      %v5103 = vpop.f32.mrb[0].mxu0
      %v5104 = vadd.f32 0.0, %v5103
      %v5105 = vpop.f32.mrb[0].mxu0
      %5106 = vmatprep.mubr.bf16.mxu0 0
      %5107 = vmatmul.mubr.bf16.gmra.mrb[0].mxu0 %v4999
      %v5108 = vpop.f32.mrb[0].mxu0
      %v5109 = vadd.f32 0.0, %v5108
      %v5110 = vpop.f32.mrb[0].mxu0
      %v5111 = vpop.f32.mrb[0].mxu0
      %v5112 = vadd.f32 0.0, %v5111
      %v5113 = vpop.f32.mrb[0].mxu0
      %5114 = vmatprep.mubr.bf16.mxu0 0
      %5115 = vmatmul.mubr.bf16.gmra.mrb[0].mxu0 %v5002
      %v5116 = vpop.f32.mrb[0].mxu0
      %v5117 = vadd.f32 0.0, %v5116
      %v5118 = vpop.f32.mrb[0].mxu0
      %v5119 = vpop.f32.mrb[0].mxu0
      %v5120 = vadd.f32 0.0, %v5119
      %v5121 = vpop.f32.mrb[0].mxu0
      %5122 = vmatprep.mubr.bf16.mxu0 0
      %5123 = vmatmul.mubr.bf16.gmra.mrb[0].mxu0 %v5005
      %v5124 = vpop.f32.mrb[0].mxu0
      %v5125 = vadd.f32 0.0, %v5124
      %v5126 = vpop.f32.mrb[0].mxu0
      %v5127 = vpop.f32.mrb[0].mxu0
      %v5128 = vadd.f32 0.0, %v5127
      %v5129 = vpop.f32.mrb[0].mxu0
      %5130 = vmatprep.mubr.bf16.mxu0 0
      %5131 = vmatmul.mubr.bf16.gmra.mrb[0].mxu0 %v5008
      %v5132 = vpop.f32.mrb[0].mxu0
      %v5133 = vadd.f32 0.0, %v5132
      %v5134 = vpop.f32.mrb[0].mxu0
      %v5135 = vpop.f32.mrb[0].mxu0
      %v5136 = vadd.f32 0.0, %v5135
      %v5137 = vpop.f32.mrb[0].mxu0
      %5138 = vmatprep.mubr.bf16.mxu0 0
      %5139 = vmatmul.mubr.bf16.gmra.mrb[0].mxu0 %v5011
      %v5140 = vpop.f32.mrb[0].mxu0
      %v5141 = vadd.f32 0.0, %v5140
      %v5142 = vpop.f32.mrb[0].mxu0
      %v5143 = vpop.f32.mrb[0].mxu0
      %v5144 = vadd.f32 0.0, %v5143
      %v5145 = vpop.f32.mrb[0].mxu0
      %5146 = vmatprep.mubr.bf16.mxu0 0
      %5147 = vmatmul.mubr.bf16.gmra.mrb[0].mxu0 %v5014
      %v5148 = vpop.f32.mrb[0].mxu0
      %v5149 = vadd.f32 0.0, %v5148
      %v5150 = vpop.f32.mrb[0].mxu0
      %v5151 = vpop.f32.mrb[0].mxu0
      %v5152 = vadd.f32 0.0, %v5151
      %v5153 = vpop.f32.mrb[0].mxu0
      %5154 = vmatprep.mubr.bf16.mxu0 0
      %5155 = vmatmul.mubr.bf16.gmra.mrb[0].mxu0 %v5017
      %v5156 = vpop.f32.mrb[0].mxu0
      %v5157 = vadd.f32 0.0, %v5156
      %v5158 = vpop.f32.mrb[0].mxu0
      %v5159 = vpop.f32.mrb[0].mxu0
      %v5160 = vadd.f32 0.0, %v5159
      %v5161 = vpop.f32.mrb[0].mxu0
      %5162 = vmatprep.mubr.bf16.mxu0 0
      %5163 = vmatmul.mubr.bf16.gmra.mrb[0].mxu0 %v5020
      %v5164 = vpop.f32.mrb[0].mxu0
      %v5165 = vadd.f32 0.0, %v5164
      %v5166 = vpop.f32.mrb[0].mxu0
      %v5167 = vpop.f32.mrb[0].mxu0
      %v5168 = vadd.f32 0.0, %v5167
      %v5169 = vpop.f32.mrb[0].mxu0
      %5170 = vmatprep.mubr.bf16.mxu0 0
      %5171 = vmatmul.mubr.bf16.gmra.mrb[0].mxu0 %v5023
      %v5172 = vpop.f32.mrb[0].mxu0
      %v5173 = vadd.f32 0.0, %v5172
      %v5174 = vpop.f32.mrb[0].mxu0
      %v5175 = vpop.f32.mrb[0].mxu0
      %v5176 = vadd.f32 0.0, %v5175
      %v5177 = vpop.f32.mrb[0].mxu0
      %5178 = vmatprep.mubr.bf16.mxu0 0
      %5179 = vmatmul.mubr.bf16.gmra.mrb[0].mxu0 %v5026
      %v5180 = vpop.f32.mrb[0].mxu0
      %v5181 = vadd.f32 0.0, %v5180
      %v5182 = vpop.f32.mrb[0].mxu0
      %v5183 = vpop.f32.mrb[0].mxu0
      %v5184 = vadd.f32 0.0, %v5183
      %v5185 = vpop.f32.mrb[0].mxu0
      %5186 = vmatprep.mubr.bf16.mxu0 0
      %5187 = vmatmul.mubr.bf16.gmra.mrb[0].mxu0 %v5029
      %v5188 = vpop.f32.mrb[0].mxu0
      %v5189 = vadd.f32 0.0, %v5188
      %v5190 = vpop.f32.mrb[0].mxu0
      %v5191 = vpop.f32.mrb[0].mxu0
      %v5192 = vadd.f32 0.0, %v5191
      %v5193 = vpop.f32.mrb[0].mxu0
      %5194 = vdwg.mxu0
      %v5195 = vadd.f32 %v4668, %v5069
      %v5196 = vadd.f32 %v4669, %v5072
      %v5197 = vadd.f32 %v4670, %v5077
      %v5198 = vadd.f32 %v4671, %v5080
      %v5199 = vadd.f32 %v4672, %v5085
      %v5200 = vadd.f32 %v4673, %v5088
      %v5201 = vadd.f32 %v4674, %v5093
      %v5202 = vadd.f32 %v4675, %v5096
      %v5203 = vadd.f32 %v4676, %v5101
      %v5204 = vadd.f32 %v4677, %v5104
      %v5205 = vadd.f32 %v4678, %v5109
      %v5206 = vadd.f32 %v4679, %v5112
      %v5207 = vadd.f32 %v4680, %v5117
      %v5208 = vadd.f32 %v4681, %v5120
      %v5209 = vadd.f32 %v4682, %v5125
      %v5210 = vadd.f32 %v4683, %v5128
      %v5211 = vadd.f32 %v4684, %v5133
      %v5212 = vadd.f32 %v4685, %v5136
      %v5213 = vadd.f32 %v4686, %v5141
      %v5214 = vadd.f32 %v4687, %v5144
      %v5215 = vadd.f32 %v4688, %v5149
      %v5216 = vadd.f32 %v4689, %v5152
      %v5217 = vadd.f32 %v4690, %v5157
      %v5218 = vadd.f32 %v4691, %v5160
      %v5219 = vadd.f32 %v4692, %v5165
      %v5220 = vadd.f32 %v4693, %v5168
      %v5221 = vadd.f32 %v4694, %v5173
      %v5222 = vadd.f32 %v4695, %v5176
      %v5223 = vadd.f32 %v4696, %v5181
      %v5224 = vadd.f32 %v4697, %v5184
      %v5225 = vadd.f32 %v4698, %v5189
      %v5226 = vadd.f32 %v4699, %v5192
      %v5227 = vld [vmem:[#allocation2 + $0x14] sm:$0x8]
      %v5228 = vld [vmem:[#allocation2 + $0x18] sm:$0xf]
      %v5229 = vld [vmem:[#allocation2 + $0x1c] sm:$0xf]
      %v5230 = vld [vmem:[#allocation2 + $0x20] sm:$0xf]
      %v5231 = vld [vmem:[#allocation2 + $0x24] sm:$0xf]
      %v5232 = vld [vmem:[#allocation2 + $0x28] sm:$0xf]
      %v5233 = vld [vmem:[#allocation2 + $0x2c] sm:$0xf]
      %v5234 = vld [vmem:[#allocation2 + $0x30] sm:$0xf]
      %v5235 = vld [vmem:[#allocation2 + $0x34] sm:$0xf]
      %v5236 = vld [vmem:[#allocation2 + $0x38] sm:$0xf]
      %v5237 = vld [vmem:[#allocation2 + $0x3c] sm:$0xf]
      %v5238 = vld [vmem:[#allocation2 + $0x40] sm:$0xf]
      %v5239 = vld [vmem:[#allocation2 + $0x44] sm:$0xf]
      %v5240 = vld [vmem:[#allocation2 + $0x48] sm:$0xf]
      %v5241 = vld [vmem:[#allocation2 + $0x4c] sm:$0xf]
      %v5242 = vld [vmem:[#allocation2 + $0x50] sm:$0xf]
      %v5243 = vld [vmem:[#allocation2 + $0x54] sm:$0xf]
      %v5244 = vld [vmem:[#allocation2 + $0x58] sm:$0xf]
      %v5245 = vld [vmem:[#allocation2 + $0x5c] sm:$0xf]
      %v5246 = vld [vmem:[#allocation2 + $0x60] sm:$0xf]
      %v5247 = vld [vmem:[#allocation2 + $0x64] sm:$0xf]
      %v5248 = vld [vmem:[#allocation2 + $0x68] sm:$0xf]
      %v5249 = vld [vmem:[#allocation2 + $0x6c] sm:$0xf]
      %v5250 = vld [vmem:[#allocation2 + $0x70] sm:$0xf]
      %v5251 = vld [vmem:[#allocation2 + $0x74] sm:$0xf]
      %v5252 = vld [vmem:[#allocation2 + $0x78] sm:$0xf]
      %v5253 = vld [vmem:[#allocation2 + $0x7c] sm:$0xf]
      %v5254 = vld [vmem:[#allocation2 + $0x80] sm:$0xf]
      %v5255 = vld [vmem:[#allocation2 + $0x84] sm:$0xf]
      %v5256 = vld [vmem:[#allocation2 + $0x88] sm:$0xf]
      %v5257 = vld [vmem:[#allocation2 + $0x8c] sm:$0xf]
      %v5258 = vld [vmem:[#allocation2 + $0x90] sm:$0xf]
      %v5259 = vld [vmem:[#allocation2 + $0x94] sm:$0xf]
      %v5260 = vsel %vm2039, %v5227, 0
      %v5261 = vsel %vm2040, %v5228, 0
      %v5262 = vsel %vm2041, %v5229, 0
      %v5263 = vsel %vm2042, %v5230, 0
      %v5264 = vsel %vm2043, %v5231, 0
      %v5265 = vsel %vm2044, %v5232, 0
      %v5266 = vsel %vm2045, %v5233, 0
      %v5267 = vsel %vm2046, %v5234, 0
      %v5268 = vsel %vm2047, %v5235, 0
      %v5269 = vsel %vm2048, %v5236, 0
      %v5270 = vsel %vm2049, %v5237, 0
      %v5271 = vsel %vm2050, %v5238, 0
      %v5272 = vsel %vm2051, %v5239, 0
      %v5273 = vsel %vm2052, %v5240, 0
      %v5274 = vsel %vm2053, %v5241, 0
      %v5275 = vsel %vm2054, %v5242, 0
      %v5276 = vsel %vm2055, %v5243, 0
      %v5277 = vsel %vm2056, %v5244, 0
      %v5278 = vsel %vm2057, %v5245, 0
      %v5279 = vsel %vm2058, %v5246, 0
      %v5280 = vsel %vm2059, %v5247, 0
      %v5281 = vsel %vm2060, %v5248, 0
      %v5282 = vsel %vm2061, %v5249, 0
      %v5283 = vsel %vm2062, %v5250, 0
      %v5284 = vsel %vm2063, %v5251, 0
      %v5285 = vsel %vm2064, %v5252, 0
      %v5286 = vsel %vm2065, %v5253, 0
      %v5287 = vsel %vm2066, %v5254, 0
      %v5288 = vsel %vm2067, %v5255, 0
      %v5289 = vsel %vm2068, %v5256, 0
      %v5290 = vsel %vm2069, %v5257, 0
      %v5291 = vsel %vm2070, %v5258, 0
      %v5292 = vsel %vm2071, %v5259, 0
      %s5293 = scalar_lea.vmem %s4, 24
      %v5294 = vld [vmem:[%s5293] sm:$0xf]
      %v5328 = vunpack.c.l.b16 %v5260
      %v5329 = vunpack.c.l.b16 %v5261
      %v5330 = vunpack.c.l.b16 %v5262
      %v5331 = vunpack.c.l.b16 %v5263
      %v5332 = vunpack.c.l.b16 %v5264
      %v5333 = vunpack.c.l.b16 %v5265
      %v5334 = vunpack.c.l.b16 %v5266
      %v5335 = vunpack.c.l.b16 %v5267
      %v5336 = vunpack.c.l.b16 %v5268
      %v5337 = vunpack.c.l.b16 %v5269
      %v5338 = vunpack.c.l.b16 %v5270
      %v5339 = vunpack.c.l.b16 %v5271
      %v5340 = vunpack.c.l.b16 %v5272
      %v5341 = vunpack.c.l.b16 %v5273
      %v5342 = vunpack.c.l.b16 %v5274
      %v5343 = vunpack.c.l.b16 %v5275
      %v5344 = vunpack.c.l.b16 %v5276
      %v5345 = vunpack.c.l.b16 %v5277
      %v5346 = vunpack.c.l.b16 %v5278
      %v5347 = vunpack.c.l.b16 %v5279
      %v5348 = vunpack.c.l.b16 %v5280
      %v5349 = vunpack.c.l.b16 %v5281
      %v5350 = vunpack.c.l.b16 %v5282
      %v5351 = vunpack.c.l.b16 %v5283
      %v5352 = vunpack.c.l.b16 %v5284
      %v5353 = vunpack.c.l.b16 %v5285
      %v5354 = vunpack.c.l.b16 %v5286
      %v5355 = vunpack.c.l.b16 %v5287
      %v5356 = vunpack.c.l.b16 %v5288
      %v5357 = vunpack.c.l.b16 %v5289
      %v5358 = vunpack.c.l.b16 %v5290
      %v5359 = vunpack.c.l.b16 %v5291
      %v5360 = vunpack.c.l.b16 %v5292
      %v5361 = vpack.c.b16 %v5329, %v5328
      %v5362 = vpack.c.b16 %v5331, %v5330
      %v5363 = vpack.c.b16 %v5333, %v5332
      %v5364 = vpack.c.b16 %v5335, %v5334
      %v5365 = vpack.c.b16 %v5337, %v5336
      %v5366 = vpack.c.b16 %v5339, %v5338
      %v5367 = vpack.c.b16 %v5341, %v5340
      %v5368 = vpack.c.b16 %v5343, %v5342
      %v5369 = vpack.c.b16 %v5345, %v5344
      %v5370 = vpack.c.b16 %v5347, %v5346
      %v5371 = vpack.c.b16 %v5349, %v5348
      %v5372 = vpack.c.b16 %v5351, %v5350
      %v5373 = vpack.c.b16 %v5353, %v5352
      %v5374 = vpack.c.b16 %v5355, %v5354
      %v5375 = vpack.c.b16 %v5357, %v5356
      %v5376 = vpack.c.b16 %v5359, %v5358
      %v5377 = vpack.c.b16 %v5360, %v5360
      %v5379 = vshrl.u32 %v5361, 16
      %v5381 = vrot.slane %v5379, 3
      %v5382 = vshll.u32 %v5361, 16
      %v5384 = vrot.slane %v5382, 4
      %v5385 = vor.u32 %v5381, %v5384
      %v5387 = vshrl.u32 %v5362, 16
      %v5389 = vrot.slane %v5387, 3
      %v5390 = vshll.u32 %v5362, 16
      %v5392 = vrot.slane %v5390, 4
      %v5393 = vor.u32 %v5389, %v5392
      %v5394 = vsel %vm2483, %v5385, %v5393
      %v5396 = vshrl.u32 %v5363, 16
      %v5398 = vrot.slane %v5396, 3
      %v5399 = vshll.u32 %v5363, 16
      %v5401 = vrot.slane %v5399, 4
      %v5402 = vor.u32 %v5398, %v5401
      %v5403 = vsel %vm2483, %v5393, %v5402
      %v5405 = vshrl.u32 %v5364, 16
      %v5407 = vrot.slane %v5405, 3
      %v5408 = vshll.u32 %v5364, 16
      %v5410 = vrot.slane %v5408, 4
      %v5411 = vor.u32 %v5407, %v5410
      %v5412 = vsel %vm2483, %v5402, %v5411
      %v5414 = vshrl.u32 %v5365, 16
      %v5416 = vrot.slane %v5414, 3
      %v5417 = vshll.u32 %v5365, 16
      %v5419 = vrot.slane %v5417, 4
      %v5420 = vor.u32 %v5416, %v5419
      %v5421 = vsel %vm2483, %v5411, %v5420
      %v5423 = vshrl.u32 %v5366, 16
      %v5425 = vrot.slane %v5423, 3
      %v5426 = vshll.u32 %v5366, 16
      %v5428 = vrot.slane %v5426, 4
      %v5429 = vor.u32 %v5425, %v5428
      %v5430 = vsel %vm2483, %v5420, %v5429
      %v5432 = vshrl.u32 %v5367, 16
      %v5434 = vrot.slane %v5432, 3
      %v5435 = vshll.u32 %v5367, 16
      %v5437 = vrot.slane %v5435, 4
      %v5438 = vor.u32 %v5434, %v5437
      %v5439 = vsel %vm2483, %v5429, %v5438
      %v5441 = vshrl.u32 %v5368, 16
      %v5443 = vrot.slane %v5441, 3
      %v5444 = vshll.u32 %v5368, 16
      %v5446 = vrot.slane %v5444, 4
      %v5447 = vor.u32 %v5443, %v5446
      %v5448 = vsel %vm2483, %v5438, %v5447
      %v5450 = vshrl.u32 %v5369, 16
      %v5452 = vrot.slane %v5450, 3
      %v5453 = vshll.u32 %v5369, 16
      %v5455 = vrot.slane %v5453, 4
      %v5456 = vor.u32 %v5452, %v5455
      %v5457 = vsel %vm2483, %v5447, %v5456
      %v5459 = vshrl.u32 %v5370, 16
      %v5461 = vrot.slane %v5459, 3
      %v5462 = vshll.u32 %v5370, 16
      %v5464 = vrot.slane %v5462, 4
      %v5465 = vor.u32 %v5461, %v5464
      %v5466 = vsel %vm2483, %v5456, %v5465
      %v5468 = vshrl.u32 %v5371, 16
      %v5470 = vrot.slane %v5468, 3
      %v5471 = vshll.u32 %v5371, 16
      %v5473 = vrot.slane %v5471, 4
      %v5474 = vor.u32 %v5470, %v5473
      %v5475 = vsel %vm2483, %v5465, %v5474
      %v5477 = vshrl.u32 %v5372, 16
      %v5479 = vrot.slane %v5477, 3
      %v5480 = vshll.u32 %v5372, 16
      %v5482 = vrot.slane %v5480, 4
      %v5483 = vor.u32 %v5479, %v5482
      %v5484 = vsel %vm2483, %v5474, %v5483
      %v5486 = vshrl.u32 %v5373, 16
      %v5488 = vrot.slane %v5486, 3
      %v5489 = vshll.u32 %v5373, 16
      %v5491 = vrot.slane %v5489, 4
      %v5492 = vor.u32 %v5488, %v5491
      %v5493 = vsel %vm2483, %v5483, %v5492
      %v5495 = vshrl.u32 %v5374, 16
      %v5497 = vrot.slane %v5495, 3
      %v5498 = vshll.u32 %v5374, 16
      %v5500 = vrot.slane %v5498, 4
      %v5501 = vor.u32 %v5497, %v5500
      %v5502 = vsel %vm2483, %v5492, %v5501
      %v5504 = vshrl.u32 %v5375, 16
      %v5506 = vrot.slane %v5504, 3
      %v5507 = vshll.u32 %v5375, 16
      %v5509 = vrot.slane %v5507, 4
      %v5510 = vor.u32 %v5506, %v5509
      %v5511 = vsel %vm2483, %v5501, %v5510
      %v5513 = vshrl.u32 %v5376, 16
      %v5515 = vrot.slane %v5513, 3
      %v5516 = vshll.u32 %v5376, 16
      %v5518 = vrot.slane %v5516, 4
      %v5519 = vor.u32 %v5515, %v5518
      %v5520 = vsel %vm2483, %v5510, %v5519
      %v5522 = vshrl.u32 %v5377, 16
      %v5524 = vrot.slane %v5522, 3
      %v5525 = vshll.u32 %v5377, 16
      %v5527 = vrot.slane %v5525, 4
      %v5528 = vor.u32 %v5524, %v5527
      %v5529 = vsel %vm2483, %v5519, %v5528
      %v5531 = vsel %vm427, %v5394, 0
      %v5534 = vsel %vm427, %v5403, 0
      %v5537 = vsel %vm427, %v5412, 0
      %v5540 = vsel %vm427, %v5421, 0
      %v5543 = vsel %vm427, %v5430, 0
      %v5546 = vsel %vm427, %v5439, 0
      %v5549 = vsel %vm427, %v5448, 0
      %v5552 = vsel %vm427, %v5457, 0
      %v5555 = vsel %vm427, %v5466, 0
      %v5558 = vsel %vm427, %v5475, 0
      %v5561 = vsel %vm427, %v5484, 0
      %v5564 = vsel %vm427, %v5493, 0
      %v5567 = vsel %vm427, %v5502, 0
      %v5570 = vsel %vm427, %v5511, 0
      %v5573 = vsel %vm427, %v5520, 0
      %v5576 = vsel %vm427, %v5529, 0
      %v5579 = vsel %vm476, %v5294, 0
      %5581 = vmatprep.subr.bf16.mxu0 0
      %5582 = vmatpush1.bf16.msra.mxu0 %v5579
      %5583 = vmatprep.subr.bf16.mxu0 0
      %5584 = vmatpush1.bf16.msra.mxu0 0
      %5585 = vmatprep.subr.bf16.mxu0 0
      %5586 = vmatpush1.bf16.msra.mxu0 0
      %5587 = vmatprep.subr.bf16.mxu0 0
      %5588 = vmatpush1.bf16.msra.mxu0 0
      %5589 = vmatprep.subr.bf16.mxu0 0
      %5590 = vmatpush1.bf16.msra.mxu0 0
      %5591 = vmatprep.subr.bf16.mxu0 0
      %5592 = vmatpush1.bf16.msra.mxu0 0
      %5593 = vmatprep.subr.bf16.mxu0 0
      %5594 = vmatpush1.bf16.msra.mxu0 0
      %5595 = vmatprep.subr.bf16.mxu0 0
      %5596 = vmatpush1.bf16.msra.mxu0 0
      %5597 = vmatprep.subr.bf16.mxu0 0
      %5598 = vmatpush1.bf16.msra.mxu0 0
      %5599 = vmatprep.subr.bf16.mxu0 0
      %5600 = vmatpush1.bf16.msra.mxu0 0
      %5601 = vmatprep.subr.bf16.mxu0 0
      %5602 = vmatpush1.bf16.msra.mxu0 0
      %5603 = vmatprep.subr.bf16.mxu0 0
      %5604 = vmatpush1.bf16.msra.mxu0 0
      %5605 = vmatprep.subr.bf16.mxu0 0
      %5606 = vmatpush1.bf16.msra.mxu0 0
      %5607 = vmatprep.subr.bf16.mxu0 0
      %5608 = vmatpush1.bf16.msra.mxu0 0
      %5609 = vmatprep.subr.bf16.mxu0 0
      %5610 = vmatpush1.bf16.msra.mxu0 0
      %5611 = vmatprep.subr.bf16.mxu0 0
      %5612 = vmatpush1.bf16.msra.mxu0 0
      %5613 = vmatprep.mubr.bf16.mxu0 0
      %5614 = vmatmul.mubr.bf16.gmra.mrb[0].mxu0 %v5531
      %v5615 = vpop.f32.mrb[0].mxu0
      %v5616 = vadd.f32 0.0, %v5615
      %v5617 = vpop.f32.mrb[0].mxu0
      %v5618 = vpop.f32.mrb[0].mxu0
      %v5619 = vadd.f32 0.0, %v5618
      %v5620 = vpop.f32.mrb[0].mxu0
      %5621 = vmatprep.mubr.bf16.mxu0 0
      %5622 = vmatmul.mubr.bf16.gmra.mrb[0].mxu0 %v5534
      %v5623 = vpop.f32.mrb[0].mxu0
      %v5624 = vadd.f32 0.0, %v5623
      %v5625 = vpop.f32.mrb[0].mxu0
      %v5626 = vpop.f32.mrb[0].mxu0
      %v5627 = vadd.f32 0.0, %v5626
      %v5628 = vpop.f32.mrb[0].mxu0
      %5629 = vmatprep.mubr.bf16.mxu0 0
      %5630 = vmatmul.mubr.bf16.gmra.mrb[0].mxu0 %v5537
      %v5631 = vpop.f32.mrb[0].mxu0
      %v5632 = vadd.f32 0.0, %v5631
      %v5633 = vpop.f32.mrb[0].mxu0
      %v5634 = vpop.f32.mrb[0].mxu0
      %v5635 = vadd.f32 0.0, %v5634
      %v5636 = vpop.f32.mrb[0].mxu0
      %5637 = vmatprep.mubr.bf16.mxu0 0
      %5638 = vmatmul.mubr.bf16.gmra.mrb[0].mxu0 %v5540
      %v5639 = vpop.f32.mrb[0].mxu0
      %v5640 = vadd.f32 0.0, %v5639
      %v5641 = vpop.f32.mrb[0].mxu0
      %v5642 = vpop.f32.mrb[0].mxu0
      %v5643 = vadd.f32 0.0, %v5642
      %v5644 = vpop.f32.mrb[0].mxu0
      %5645 = vmatprep.mubr.bf16.mxu0 0
      %5646 = vmatmul.mubr.bf16.gmra.mrb[0].mxu0 %v5543
      %v5647 = vpop.f32.mrb[0].mxu0
      %v5648 = vadd.f32 0.0, %v5647
      %v5649 = vpop.f32.mrb[0].mxu0
      %v5650 = vpop.f32.mrb[0].mxu0
      %v5651 = vadd.f32 0.0, %v5650
      %v5652 = vpop.f32.mrb[0].mxu0
      %5653 = vmatprep.mubr.bf16.mxu0 0
      %5654 = vmatmul.mubr.bf16.gmra.mrb[0].mxu0 %v5546
      %v5655 = vpop.f32.mrb[0].mxu0
      %v5656 = vadd.f32 0.0, %v5655
      %v5657 = vpop.f32.mrb[0].mxu0
      %v5658 = vpop.f32.mrb[0].mxu0
      %v5659 = vadd.f32 0.0, %v5658
      %v5660 = vpop.f32.mrb[0].mxu0
      %5661 = vmatprep.mubr.bf16.mxu0 0
      %5662 = vmatmul.mubr.bf16.gmra.mrb[0].mxu0 %v5549
      %v5663 = vpop.f32.mrb[0].mxu0
      %v5664 = vadd.f32 0.0, %v5663
      %v5665 = vpop.f32.mrb[0].mxu0
      %v5666 = vpop.f32.mrb[0].mxu0
      %v5667 = vadd.f32 0.0, %v5666
      %v5668 = vpop.f32.mrb[0].mxu0
      %5669 = vmatprep.mubr.bf16.mxu0 0
      %5670 = vmatmul.mubr.bf16.gmra.mrb[0].mxu0 %v5552
      %v5671 = vpop.f32.mrb[0].mxu0
      %v5672 = vadd.f32 0.0, %v5671
      %v5673 = vpop.f32.mrb[0].mxu0
      %v5674 = vpop.f32.mrb[0].mxu0
      %v5675 = vadd.f32 0.0, %v5674
      %v5676 = vpop.f32.mrb[0].mxu0
      %5677 = vmatprep.mubr.bf16.mxu0 0
      %5678 = vmatmul.mubr.bf16.gmra.mrb[0].mxu0 %v5555
      %v5679 = vpop.f32.mrb[0].mxu0
      %v5680 = vadd.f32 0.0, %v5679
      %v5681 = vpop.f32.mrb[0].mxu0
      %v5682 = vpop.f32.mrb[0].mxu0
      %v5683 = vadd.f32 0.0, %v5682
      %v5684 = vpop.f32.mrb[0].mxu0
      %5685 = vmatprep.mubr.bf16.mxu0 0
      %5686 = vmatmul.mubr.bf16.gmra.mrb[0].mxu0 %v5558
      %v5687 = vpop.f32.mrb[0].mxu0
      %v5688 = vadd.f32 0.0, %v5687
      %v5689 = vpop.f32.mrb[0].mxu0
      %v5690 = vpop.f32.mrb[0].mxu0
      %v5691 = vadd.f32 0.0, %v5690
      %v5692 = vpop.f32.mrb[0].mxu0
      %5693 = vmatprep.mubr.bf16.mxu0 0
      %5694 = vmatmul.mubr.bf16.gmra.mrb[0].mxu0 %v5561
      %v5695 = vpop.f32.mrb[0].mxu0
      %v5696 = vadd.f32 0.0, %v5695
      %v5697 = vpop.f32.mrb[0].mxu0
      %v5698 = vpop.f32.mrb[0].mxu0
      %v5699 = vadd.f32 0.0, %v5698
      %v5700 = vpop.f32.mrb[0].mxu0
      %5701 = vmatprep.mubr.bf16.mxu0 0
      %5702 = vmatmul.mubr.bf16.gmra.mrb[0].mxu0 %v5564
      %v5703 = vpop.f32.mrb[0].mxu0
      %v5704 = vadd.f32 0.0, %v5703
      %v5705 = vpop.f32.mrb[0].mxu0
      %v5706 = vpop.f32.mrb[0].mxu0
      %v5707 = vadd.f32 0.0, %v5706
      %v5708 = vpop.f32.mrb[0].mxu0
      %5709 = vmatprep.mubr.bf16.mxu0 0
      %5710 = vmatmul.mubr.bf16.gmra.mrb[0].mxu0 %v5567
      %v5711 = vpop.f32.mrb[0].mxu0
      %v5712 = vadd.f32 0.0, %v5711
      %v5713 = vpop.f32.mrb[0].mxu0
      %v5714 = vpop.f32.mrb[0].mxu0
      %v5715 = vadd.f32 0.0, %v5714
      %v5716 = vpop.f32.mrb[0].mxu0
      %5717 = vmatprep.mubr.bf16.mxu0 0
      %5718 = vmatmul.mubr.bf16.gmra.mrb[0].mxu0 %v5570
      %v5719 = vpop.f32.mrb[0].mxu0
      %v5720 = vadd.f32 0.0, %v5719
      %v5721 = vpop.f32.mrb[0].mxu0
      %v5722 = vpop.f32.mrb[0].mxu0
      %v5723 = vadd.f32 0.0, %v5722
      %v5724 = vpop.f32.mrb[0].mxu0
      %5725 = vmatprep.mubr.bf16.mxu0 0
      %5726 = vmatmul.mubr.bf16.gmra.mrb[0].mxu0 %v5573
      %v5727 = vpop.f32.mrb[0].mxu0
      %v5728 = vadd.f32 0.0, %v5727
      %v5729 = vpop.f32.mrb[0].mxu0
      %v5730 = vpop.f32.mrb[0].mxu0
      %v5731 = vadd.f32 0.0, %v5730
      %v5732 = vpop.f32.mrb[0].mxu0
      %5733 = vmatprep.mubr.bf16.mxu0 0
      %5734 = vmatmul.mubr.bf16.gmra.mrb[0].mxu0 %v5576
      %v5735 = vpop.f32.mrb[0].mxu0
      %v5736 = vadd.f32 0.0, %v5735
      %v5737 = vpop.f32.mrb[0].mxu0
      %v5738 = vpop.f32.mrb[0].mxu0
      %v5739 = vadd.f32 0.0, %v5738
      %v5740 = vpop.f32.mrb[0].mxu0
      %5741 = vdwg.mxu0
      %v5742 = vadd.f32 %v5195, %v5616
      %v5743 = vadd.f32 %v5196, %v5619
      %v5744 = vadd.f32 %v5197, %v5624
      %v5745 = vadd.f32 %v5198, %v5627
      %v5746 = vadd.f32 %v5199, %v5632
      %v5747 = vadd.f32 %v5200, %v5635
      %v5748 = vadd.f32 %v5201, %v5640
      %v5749 = vadd.f32 %v5202, %v5643
      %v5750 = vadd.f32 %v5203, %v5648
      %v5751 = vadd.f32 %v5204, %v5651
      %v5752 = vadd.f32 %v5205, %v5656
      %v5753 = vadd.f32 %v5206, %v5659
      %v5754 = vadd.f32 %v5207, %v5664
      %v5755 = vadd.f32 %v5208, %v5667
      %v5756 = vadd.f32 %v5209, %v5672
      %v5757 = vadd.f32 %v5210, %v5675
      %v5758 = vadd.f32 %v5211, %v5680
      %v5759 = vadd.f32 %v5212, %v5683
      %v5760 = vadd.f32 %v5213, %v5688
      %v5761 = vadd.f32 %v5214, %v5691
      %v5762 = vadd.f32 %v5215, %v5696
      %v5763 = vadd.f32 %v5216, %v5699
      %v5764 = vadd.f32 %v5217, %v5704
      %v5765 = vadd.f32 %v5218, %v5707
      %v5766 = vadd.f32 %v5219, %v5712
      %v5767 = vadd.f32 %v5220, %v5715
      %v5768 = vadd.f32 %v5221, %v5720
      %v5769 = vadd.f32 %v5222, %v5723
      %v5770 = vadd.f32 %v5223, %v5728
      %v5771 = vadd.f32 %v5224, %v5731
      %v5772 = vadd.f32 %v5225, %v5736
      %v5773 = vadd.f32 %v5226, %v5739
      %s5774 = scalar_lea.vmem %s4, 28
      %v5775 = vld [vmem:[%s5774] sm:$0xf]
      %v5808 = vunpack.c.l.b16 %v5228
      %v5809 = vunpack.c.l.b16 %v5229
      %v5810 = vunpack.c.l.b16 %v5230
      %v5811 = vunpack.c.l.b16 %v5231
      %v5812 = vunpack.c.l.b16 %v5232
      %v5813 = vunpack.c.l.b16 %v5233
      %v5814 = vunpack.c.l.b16 %v5234
      %v5815 = vunpack.c.l.b16 %v5235
      %v5816 = vunpack.c.l.b16 %v5236
      %v5817 = vunpack.c.l.b16 %v5237
      %v5818 = vunpack.c.l.b16 %v5238
      %v5819 = vunpack.c.l.b16 %v5239
      %v5820 = vunpack.c.l.b16 %v5240
      %v5821 = vunpack.c.l.b16 %v5241
      %v5822 = vunpack.c.l.b16 %v5242
      %v5823 = vunpack.c.l.b16 %v5243
      %v5824 = vunpack.c.l.b16 %v5244
      %v5825 = vunpack.c.l.b16 %v5245
      %v5826 = vunpack.c.l.b16 %v5246
      %v5827 = vunpack.c.l.b16 %v5247
      %v5828 = vunpack.c.l.b16 %v5248
      %v5829 = vunpack.c.l.b16 %v5249
      %v5830 = vunpack.c.l.b16 %v5250
      %v5831 = vunpack.c.l.b16 %v5251
      %v5832 = vunpack.c.l.b16 %v5252
      %v5833 = vunpack.c.l.b16 %v5253
      %v5834 = vunpack.c.l.b16 %v5254
      %v5835 = vunpack.c.l.b16 %v5255
      %v5836 = vunpack.c.l.b16 %v5256
      %v5837 = vunpack.c.l.b16 %v5257
      %v5838 = vunpack.c.l.b16 %v5258
      %v5839 = vunpack.c.l.b16 %v5259
      %v5840 = vpack.c.b16 %v5809, %v5808
      %v5841 = vpack.c.b16 %v5811, %v5810
      %v5842 = vpack.c.b16 %v5813, %v5812
      %v5843 = vpack.c.b16 %v5815, %v5814
      %v5844 = vpack.c.b16 %v5817, %v5816
      %v5845 = vpack.c.b16 %v5819, %v5818
      %v5846 = vpack.c.b16 %v5821, %v5820
      %v5847 = vpack.c.b16 %v5823, %v5822
      %v5848 = vpack.c.b16 %v5825, %v5824
      %v5849 = vpack.c.b16 %v5827, %v5826
      %v5850 = vpack.c.b16 %v5829, %v5828
      %v5851 = vpack.c.b16 %v5831, %v5830
      %v5852 = vpack.c.b16 %v5833, %v5832
      %v5853 = vpack.c.b16 %v5835, %v5834
      %v5854 = vpack.c.b16 %v5837, %v5836
      %v5855 = vpack.c.b16 %v5839, %v5838
      %v5857 = vsel %vm427, %v5840, 0
      %v5860 = vsel %vm427, %v5841, 0
      %v5863 = vsel %vm427, %v5842, 0
      %v5866 = vsel %vm427, %v5843, 0
      %v5869 = vsel %vm427, %v5844, 0
      %v5872 = vsel %vm427, %v5845, 0
      %v5875 = vsel %vm427, %v5846, 0
      %v5878 = vsel %vm427, %v5847, 0
      %v5881 = vsel %vm427, %v5848, 0
      %v5884 = vsel %vm427, %v5849, 0
      %v5887 = vsel %vm427, %v5850, 0
      %v5890 = vsel %vm427, %v5851, 0
      %v5893 = vsel %vm427, %v5852, 0
      %v5896 = vsel %vm427, %v5853, 0
      %v5899 = vsel %vm427, %v5854, 0
      %v5902 = vsel %vm427, %v5855, 0
      %v5905 = vsel %vm476, %v5775, 0
      %5907 = vmatprep.subr.bf16.mxu0 0
      %5908 = vmatpush1.bf16.msra.mxu0 %v5905
      %5909 = vmatprep.subr.bf16.mxu0 0
      %5910 = vmatpush1.bf16.msra.mxu0 0
      %5911 = vmatprep.subr.bf16.mxu0 0
      %5912 = vmatpush1.bf16.msra.mxu0 0
      %5913 = vmatprep.subr.bf16.mxu0 0
      %5914 = vmatpush1.bf16.msra.mxu0 0
      %5915 = vmatprep.subr.bf16.mxu0 0
      %5916 = vmatpush1.bf16.msra.mxu0 0
      %5917 = vmatprep.subr.bf16.mxu0 0
      %5918 = vmatpush1.bf16.msra.mxu0 0
      %5919 = vmatprep.subr.bf16.mxu0 0
      %5920 = vmatpush1.bf16.msra.mxu0 0
      %5921 = vmatprep.subr.bf16.mxu0 0
      %5922 = vmatpush1.bf16.msra.mxu0 0
      %5923 = vmatprep.subr.bf16.mxu0 0
      %5924 = vmatpush1.bf16.msra.mxu0 0
      %5925 = vmatprep.subr.bf16.mxu0 0
      %5926 = vmatpush1.bf16.msra.mxu0 0
      %5927 = vmatprep.subr.bf16.mxu0 0
      %5928 = vmatpush1.bf16.msra.mxu0 0
      %5929 = vmatprep.subr.bf16.mxu0 0
      %5930 = vmatpush1.bf16.msra.mxu0 0
      %5931 = vmatprep.subr.bf16.mxu0 0
      %5932 = vmatpush1.bf16.msra.mxu0 0
      %5933 = vmatprep.subr.bf16.mxu0 0
      %5934 = vmatpush1.bf16.msra.mxu0 0
      %5935 = vmatprep.subr.bf16.mxu0 0
      %5936 = vmatpush1.bf16.msra.mxu0 0
      %5937 = vmatprep.subr.bf16.mxu0 0
      %5938 = vmatpush1.bf16.msra.mxu0 0
      %5939 = vmatprep.mubr.bf16.mxu0 0
      %5940 = vmatmul.mubr.bf16.gmra.mrb[0].mxu0 %v5857
      %v5941 = vpop.f32.mrb[0].mxu0
      %v5942 = vadd.f32 0.0, %v5941
      %v5943 = vpop.f32.mrb[0].mxu0
      %v5944 = vpop.f32.mrb[0].mxu0
      %v5945 = vadd.f32 0.0, %v5944
      %v5946 = vpop.f32.mrb[0].mxu0
      %5947 = vmatprep.mubr.bf16.mxu0 0
      %5948 = vmatmul.mubr.bf16.gmra.mrb[0].mxu0 %v5860
      %v5949 = vpop.f32.mrb[0].mxu0
      %v5950 = vadd.f32 0.0, %v5949
      %v5951 = vpop.f32.mrb[0].mxu0
      %v5952 = vpop.f32.mrb[0].mxu0
      %v5953 = vadd.f32 0.0, %v5952
      %v5954 = vpop.f32.mrb[0].mxu0
      %5955 = vmatprep.mubr.bf16.mxu0 0
      %5956 = vmatmul.mubr.bf16.gmra.mrb[0].mxu0 %v5863
      %v5957 = vpop.f32.mrb[0].mxu0
      %v5958 = vadd.f32 0.0, %v5957
      %v5959 = vpop.f32.mrb[0].mxu0
      %v5960 = vpop.f32.mrb[0].mxu0
      %v5961 = vadd.f32 0.0, %v5960
      %v5962 = vpop.f32.mrb[0].mxu0
      %5963 = vmatprep.mubr.bf16.mxu0 0
      %5964 = vmatmul.mubr.bf16.gmra.mrb[0].mxu0 %v5866
      %v5965 = vpop.f32.mrb[0].mxu0
      %v5966 = vadd.f32 0.0, %v5965
      %v5967 = vpop.f32.mrb[0].mxu0
      %v5968 = vpop.f32.mrb[0].mxu0
      %v5969 = vadd.f32 0.0, %v5968
      %v5970 = vpop.f32.mrb[0].mxu0
      %5971 = vmatprep.mubr.bf16.mxu0 0
      %5972 = vmatmul.mubr.bf16.gmra.mrb[0].mxu0 %v5869
      %v5973 = vpop.f32.mrb[0].mxu0
      %v5974 = vadd.f32 0.0, %v5973
      %v5975 = vpop.f32.mrb[0].mxu0
      %v5976 = vpop.f32.mrb[0].mxu0
      %v5977 = vadd.f32 0.0, %v5976
      %v5978 = vpop.f32.mrb[0].mxu0
      %5979 = vmatprep.mubr.bf16.mxu0 0
      %5980 = vmatmul.mubr.bf16.gmra.mrb[0].mxu0 %v5872
      %v5981 = vpop.f32.mrb[0].mxu0
      %v5982 = vadd.f32 0.0, %v5981
      %v5983 = vpop.f32.mrb[0].mxu0
      %v5984 = vpop.f32.mrb[0].mxu0
      %v5985 = vadd.f32 0.0, %v5984
      %v5986 = vpop.f32.mrb[0].mxu0
      %5987 = vmatprep.mubr.bf16.mxu0 0
      %5988 = vmatmul.mubr.bf16.gmra.mrb[0].mxu0 %v5875
      %v5989 = vpop.f32.mrb[0].mxu0
      %v5990 = vadd.f32 0.0, %v5989
      %v5991 = vpop.f32.mrb[0].mxu0
      %v5992 = vpop.f32.mrb[0].mxu0
      %v5993 = vadd.f32 0.0, %v5992
      %v5994 = vpop.f32.mrb[0].mxu0
      %5995 = vmatprep.mubr.bf16.mxu0 0
      %5996 = vmatmul.mubr.bf16.gmra.mrb[0].mxu0 %v5878
      %v5997 = vpop.f32.mrb[0].mxu0
      %v5998 = vadd.f32 0.0, %v5997
      %v5999 = vpop.f32.mrb[0].mxu0
      %v6000 = vpop.f32.mrb[0].mxu0
      %v6001 = vadd.f32 0.0, %v6000
      %v6002 = vpop.f32.mrb[0].mxu0
      %6003 = vmatprep.mubr.bf16.mxu0 0
      %6004 = vmatmul.mubr.bf16.gmra.mrb[0].mxu0 %v5881
      %v6005 = vpop.f32.mrb[0].mxu0
      %v6006 = vadd.f32 0.0, %v6005
      %v6007 = vpop.f32.mrb[0].mxu0
      %v6008 = vpop.f32.mrb[0].mxu0
      %v6009 = vadd.f32 0.0, %v6008
      %v6010 = vpop.f32.mrb[0].mxu0
      %6011 = vmatprep.mubr.bf16.mxu0 0
      %6012 = vmatmul.mubr.bf16.gmra.mrb[0].mxu0 %v5884
      %v6013 = vpop.f32.mrb[0].mxu0
      %v6014 = vadd.f32 0.0, %v6013
      %v6015 = vpop.f32.mrb[0].mxu0
      %v6016 = vpop.f32.mrb[0].mxu0
      %v6017 = vadd.f32 0.0, %v6016
      %v6018 = vpop.f32.mrb[0].mxu0
      %6019 = vmatprep.mubr.bf16.mxu0 0
      %6020 = vmatmul.mubr.bf16.gmra.mrb[0].mxu0 %v5887
      %v6021 = vpop.f32.mrb[0].mxu0
      %v6022 = vadd.f32 0.0, %v6021
      %v6023 = vpop.f32.mrb[0].mxu0
      %v6024 = vpop.f32.mrb[0].mxu0
      %v6025 = vadd.f32 0.0, %v6024
      %v6026 = vpop.f32.mrb[0].mxu0
      %6027 = vmatprep.mubr.bf16.mxu0 0
      %6028 = vmatmul.mubr.bf16.gmra.mrb[0].mxu0 %v5890
      %v6029 = vpop.f32.mrb[0].mxu0
      %v6030 = vadd.f32 0.0, %v6029
      %v6031 = vpop.f32.mrb[0].mxu0
      %v6032 = vpop.f32.mrb[0].mxu0
      %v6033 = vadd.f32 0.0, %v6032
      %v6034 = vpop.f32.mrb[0].mxu0
      %6035 = vmatprep.mubr.bf16.mxu0 0
      %6036 = vmatmul.mubr.bf16.gmra.mrb[0].mxu0 %v5893
      %v6037 = vpop.f32.mrb[0].mxu0
      %v6038 = vadd.f32 0.0, %v6037
      %v6039 = vpop.f32.mrb[0].mxu0
      %v6040 = vpop.f32.mrb[0].mxu0
      %v6041 = vadd.f32 0.0, %v6040
      %v6042 = vpop.f32.mrb[0].mxu0
      %6043 = vmatprep.mubr.bf16.mxu0 0
      %6044 = vmatmul.mubr.bf16.gmra.mrb[0].mxu0 %v5896
      %v6045 = vpop.f32.mrb[0].mxu0
      %v6046 = vadd.f32 0.0, %v6045
      %v6047 = vpop.f32.mrb[0].mxu0
      %v6048 = vpop.f32.mrb[0].mxu0
      %v6049 = vadd.f32 0.0, %v6048
      %v6050 = vpop.f32.mrb[0].mxu0
      %6051 = vmatprep.mubr.bf16.mxu0 0
      %6052 = vmatmul.mubr.bf16.gmra.mrb[0].mxu0 %v5899
      %v6053 = vpop.f32.mrb[0].mxu0
      %v6054 = vadd.f32 0.0, %v6053
      %v6055 = vpop.f32.mrb[0].mxu0
      %v6056 = vpop.f32.mrb[0].mxu0
      %v6057 = vadd.f32 0.0, %v6056
      %v6058 = vpop.f32.mrb[0].mxu0
      %6059 = vmatprep.mubr.bf16.mxu0 0
      %6060 = vmatmul.mubr.bf16.gmra.mrb[0].mxu0 %v5902
      %v6061 = vpop.f32.mrb[0].mxu0
      %v6062 = vadd.f32 0.0, %v6061
      %v6063 = vpop.f32.mrb[0].mxu0
      %v6064 = vpop.f32.mrb[0].mxu0
      %v6065 = vadd.f32 0.0, %v6064
      %v6066 = vpop.f32.mrb[0].mxu0
      %6067 = vdwg.mxu0
      %v6068 = vadd.f32 %v5742, %v5942
      %v6069 = vadd.f32 %v5743, %v5945
      %v6070 = vadd.f32 %v5744, %v5950
      %v6071 = vadd.f32 %v5745, %v5953
      %v6072 = vadd.f32 %v5746, %v5958
      %v6073 = vadd.f32 %v5747, %v5961
      %v6074 = vadd.f32 %v5748, %v5966
      %v6075 = vadd.f32 %v5749, %v5969
      %v6076 = vadd.f32 %v5750, %v5974
      %v6077 = vadd.f32 %v5751, %v5977
      %v6078 = vadd.f32 %v5752, %v5982
      %v6079 = vadd.f32 %v5753, %v5985
      %v6080 = vadd.f32 %v5754, %v5990
      %v6081 = vadd.f32 %v5755, %v5993
      %v6082 = vadd.f32 %v5756, %v5998
      %v6083 = vadd.f32 %v5757, %v6001
      %v6084 = vadd.f32 %v5758, %v6006
      %v6085 = vadd.f32 %v5759, %v6009
      %v6086 = vadd.f32 %v5760, %v6014
      %v6087 = vadd.f32 %v5761, %v6017
      %v6088 = vadd.f32 %v5762, %v6022
      %v6089 = vadd.f32 %v5763, %v6025
      %v6090 = vadd.f32 %v5764, %v6030
      %v6091 = vadd.f32 %v5765, %v6033
      %v6092 = vadd.f32 %v5766, %v6038
      %v6093 = vadd.f32 %v5767, %v6041
      %v6094 = vadd.f32 %v5768, %v6046
      %v6095 = vadd.f32 %v5769, %v6049
      %v6096 = vadd.f32 %v5770, %v6054
      %v6097 = vadd.f32 %v5771, %v6057
      %v6098 = vadd.f32 %v5772, %v6062
      %v6099 = vadd.f32 %v5773, %v6065
      %v6100 = vld [vmem:[#allocation2 + $0x18] sm:$0xf]
      %v6101 = vld [vmem:[#allocation2 + $0x1c] sm:$0xf]
      %v6102 = vld [vmem:[#allocation2 + $0x20] sm:$0xf]
      %v6103 = vld [vmem:[#allocation2 + $0x24] sm:$0xf]
      %v6104 = vld [vmem:[#allocation2 + $0x28] sm:$0xf]
      %v6105 = vld [vmem:[#allocation2 + $0x2c] sm:$0xf]
      %v6106 = vld [vmem:[#allocation2 + $0x30] sm:$0xf]
      %v6107 = vld [vmem:[#allocation2 + $0x34] sm:$0xf]
      %v6108 = vld [vmem:[#allocation2 + $0x38] sm:$0xf]
      %v6109 = vld [vmem:[#allocation2 + $0x3c] sm:$0xf]
      %v6110 = vld [vmem:[#allocation2 + $0x40] sm:$0xf]
      %v6111 = vld [vmem:[#allocation2 + $0x44] sm:$0xf]
      %v6112 = vld [vmem:[#allocation2 + $0x48] sm:$0xf]
      %v6113 = vld [vmem:[#allocation2 + $0x4c] sm:$0xf]
      %v6114 = vld [vmem:[#allocation2 + $0x50] sm:$0xf]
      %v6115 = vld [vmem:[#allocation2 + $0x54] sm:$0xf]
      %v6116 = vld [vmem:[#allocation2 + $0x58] sm:$0xf]
      %v6117 = vld [vmem:[#allocation2 + $0x5c] sm:$0xf]
      %v6118 = vld [vmem:[#allocation2 + $0x60] sm:$0xf]
      %v6119 = vld [vmem:[#allocation2 + $0x64] sm:$0xf]
      %v6120 = vld [vmem:[#allocation2 + $0x68] sm:$0xf]
      %v6121 = vld [vmem:[#allocation2 + $0x6c] sm:$0xf]
      %v6122 = vld [vmem:[#allocation2 + $0x70] sm:$0xf]
      %v6123 = vld [vmem:[#allocation2 + $0x74] sm:$0xf]
      %v6124 = vld [vmem:[#allocation2 + $0x78] sm:$0xf]
      %v6125 = vld [vmem:[#allocation2 + $0x7c] sm:$0xf]
      %v6126 = vld [vmem:[#allocation2 + $0x80] sm:$0xf]
      %v6127 = vld [vmem:[#allocation2 + $0x84] sm:$0xf]
      %v6128 = vld [vmem:[#allocation2 + $0x88] sm:$0xf]
      %v6129 = vld [vmem:[#allocation2 + $0x8c] sm:$0xf]
      %v6130 = vld [vmem:[#allocation2 + $0x90] sm:$0xf]
      %v6131 = vld [vmem:[#allocation2 + $0x94] sm:$0xf]
      %v6132 = vld [vmem:[#allocation2 + $0x98] sm:$0x1]
      %v6133 = vsel %vm3299, %v6100, 0
      %v6134 = vsel %vm3300, %v6101, 0
      %v6135 = vsel %vm3301, %v6102, 0
      %v6136 = vsel %vm3302, %v6103, 0
      %v6137 = vsel %vm3303, %v6104, 0
      %v6138 = vsel %vm3304, %v6105, 0
      %v6139 = vsel %vm3305, %v6106, 0
      %v6140 = vsel %vm3306, %v6107, 0
      %v6141 = vsel %vm3307, %v6108, 0
      %v6142 = vsel %vm3308, %v6109, 0
      %v6143 = vsel %vm3309, %v6110, 0
      %v6144 = vsel %vm3310, %v6111, 0
      %v6145 = vsel %vm3311, %v6112, 0
      %v6146 = vsel %vm3312, %v6113, 0
      %v6147 = vsel %vm3313, %v6114, 0
      %v6148 = vsel %vm3314, %v6115, 0
      %v6149 = vsel %vm3315, %v6116, 0
      %v6150 = vsel %vm3316, %v6117, 0
      %v6151 = vsel %vm3317, %v6118, 0
      %v6152 = vsel %vm3318, %v6119, 0
      %v6153 = vsel %vm3319, %v6120, 0
      %v6154 = vsel %vm3320, %v6121, 0
      %v6155 = vsel %vm3321, %v6122, 0
      %v6156 = vsel %vm3322, %v6123, 0
      %v6157 = vsel %vm3323, %v6124, 0
      %v6158 = vsel %vm3324, %v6125, 0
      %v6159 = vsel %vm3325, %v6126, 0
      %v6160 = vsel %vm3326, %v6127, 0
      %v6161 = vsel %vm3327, %v6128, 0
      %v6162 = vsel %vm3328, %v6129, 0
      %v6163 = vsel %vm3329, %v6130, 0
      %v6164 = vsel %vm3330, %v6131, 0
      %v6165 = vsel %vm3331, %v6132, 0
      %s6166 = scalar_lea.vmem %s4, 32
      %v6167 = vld [vmem:[%s6166] sm:$0xf]
      %v6201 = vunpack.c.l.b16 %v6133
      %v6202 = vunpack.c.l.b16 %v6134
      %v6203 = vunpack.c.l.b16 %v6135
      %v6204 = vunpack.c.l.b16 %v6136
      %v6205 = vunpack.c.l.b16 %v6137
      %v6206 = vunpack.c.l.b16 %v6138
      %v6207 = vunpack.c.l.b16 %v6139
      %v6208 = vunpack.c.l.b16 %v6140
      %v6209 = vunpack.c.l.b16 %v6141
      %v6210 = vunpack.c.l.b16 %v6142
      %v6211 = vunpack.c.l.b16 %v6143
      %v6212 = vunpack.c.l.b16 %v6144
      %v6213 = vunpack.c.l.b16 %v6145
      %v6214 = vunpack.c.l.b16 %v6146
      %v6215 = vunpack.c.l.b16 %v6147
      %v6216 = vunpack.c.l.b16 %v6148
      %v6217 = vunpack.c.l.b16 %v6149
      %v6218 = vunpack.c.l.b16 %v6150
      %v6219 = vunpack.c.l.b16 %v6151
      %v6220 = vunpack.c.l.b16 %v6152
      %v6221 = vunpack.c.l.b16 %v6153
      %v6222 = vunpack.c.l.b16 %v6154
      %v6223 = vunpack.c.l.b16 %v6155
      %v6224 = vunpack.c.l.b16 %v6156
      %v6225 = vunpack.c.l.b16 %v6157
      %v6226 = vunpack.c.l.b16 %v6158
      %v6227 = vunpack.c.l.b16 %v6159
      %v6228 = vunpack.c.l.b16 %v6160
      %v6229 = vunpack.c.l.b16 %v6161
      %v6230 = vunpack.c.l.b16 %v6162
      %v6231 = vunpack.c.l.b16 %v6163
      %v6232 = vunpack.c.l.b16 %v6164
      %v6233 = vunpack.c.l.b16 %v6165
      %v6234 = vpack.c.b16 %v6202, %v6201
      %v6235 = vpack.c.b16 %v6204, %v6203
      %v6236 = vpack.c.b16 %v6206, %v6205
      %v6237 = vpack.c.b16 %v6208, %v6207
      %v6238 = vpack.c.b16 %v6210, %v6209
      %v6239 = vpack.c.b16 %v6212, %v6211
      %v6240 = vpack.c.b16 %v6214, %v6213
      %v6241 = vpack.c.b16 %v6216, %v6215
      %v6242 = vpack.c.b16 %v6218, %v6217
      %v6243 = vpack.c.b16 %v6220, %v6219
      %v6244 = vpack.c.b16 %v6222, %v6221
      %v6245 = vpack.c.b16 %v6224, %v6223
      %v6246 = vpack.c.b16 %v6226, %v6225
      %v6247 = vpack.c.b16 %v6228, %v6227
      %v6248 = vpack.c.b16 %v6230, %v6229
      %v6249 = vpack.c.b16 %v6232, %v6231
      %v6250 = vpack.c.b16 %v6233, %v6233
      %v6252 = vshrl.u32 %v6234, 16
      %v6254 = vshll.u32 %v6234, 16
      %v6256 = vrot.slane %v6254, 1
      %v6257 = vor.u32 %v6252, %v6256
      %v6259 = vshll.u32 %v6235, 16
      %v6261 = vrot.slane %v6259, 1
      %v6262 = vsel %vm3450, %v6257, %v6261
      %v6263 = vshrl.u32 %v6235, 16
      %v6265 = vor.u32 %v6263, %v6261
      %v6267 = vshll.u32 %v6236, 16
      %v6269 = vrot.slane %v6267, 1
      %v6270 = vsel %vm3450, %v6265, %v6269
      %v6271 = vshrl.u32 %v6236, 16
      %v6273 = vor.u32 %v6271, %v6269
      %v6275 = vshll.u32 %v6237, 16
      %v6277 = vrot.slane %v6275, 1
      %v6278 = vsel %vm3450, %v6273, %v6277
      %v6279 = vshrl.u32 %v6237, 16
      %v6281 = vor.u32 %v6279, %v6277
      %v6283 = vshll.u32 %v6238, 16
      %v6285 = vrot.slane %v6283, 1
      %v6286 = vsel %vm3450, %v6281, %v6285
      %v6287 = vshrl.u32 %v6238, 16
      %v6289 = vor.u32 %v6287, %v6285
      %v6291 = vshll.u32 %v6239, 16
      %v6293 = vrot.slane %v6291, 1
      %v6294 = vsel %vm3450, %v6289, %v6293
      %v6295 = vshrl.u32 %v6239, 16
      %v6297 = vor.u32 %v6295, %v6293
      %v6299 = vshll.u32 %v6240, 16
      %v6301 = vrot.slane %v6299, 1
      %v6302 = vsel %vm3450, %v6297, %v6301
      %v6303 = vshrl.u32 %v6240, 16
      %v6305 = vor.u32 %v6303, %v6301
      %v6307 = vshll.u32 %v6241, 16
      %v6309 = vrot.slane %v6307, 1
      %v6310 = vsel %vm3450, %v6305, %v6309
      %v6311 = vshrl.u32 %v6241, 16
      %v6313 = vor.u32 %v6311, %v6309
      %v6315 = vshll.u32 %v6242, 16
      %v6317 = vrot.slane %v6315, 1
      %v6318 = vsel %vm3450, %v6313, %v6317
      %v6319 = vshrl.u32 %v6242, 16
      %v6321 = vor.u32 %v6319, %v6317
      %v6323 = vshll.u32 %v6243, 16
      %v6325 = vrot.slane %v6323, 1
      %v6326 = vsel %vm3450, %v6321, %v6325
      %v6327 = vshrl.u32 %v6243, 16
      %v6329 = vor.u32 %v6327, %v6325
      %v6331 = vshll.u32 %v6244, 16
      %v6333 = vrot.slane %v6331, 1
      %v6334 = vsel %vm3450, %v6329, %v6333
      %v6335 = vshrl.u32 %v6244, 16
      %v6337 = vor.u32 %v6335, %v6333
      %v6339 = vshll.u32 %v6245, 16
      %v6341 = vrot.slane %v6339, 1
      %v6342 = vsel %vm3450, %v6337, %v6341
      %v6343 = vshrl.u32 %v6245, 16
      %v6345 = vor.u32 %v6343, %v6341
      %v6347 = vshll.u32 %v6246, 16
      %v6349 = vrot.slane %v6347, 1
      %v6350 = vsel %vm3450, %v6345, %v6349
      %v6351 = vshrl.u32 %v6246, 16
      %v6353 = vor.u32 %v6351, %v6349
      %v6355 = vshll.u32 %v6247, 16
      %v6357 = vrot.slane %v6355, 1
      %v6358 = vsel %vm3450, %v6353, %v6357
      %v6359 = vshrl.u32 %v6247, 16
      %v6361 = vor.u32 %v6359, %v6357
      %v6363 = vshll.u32 %v6248, 16
      %v6365 = vrot.slane %v6363, 1
      %v6366 = vsel %vm3450, %v6361, %v6365
      %v6367 = vshrl.u32 %v6248, 16
      %v6369 = vor.u32 %v6367, %v6365
      %v6371 = vshll.u32 %v6249, 16
      %v6373 = vrot.slane %v6371, 1
      %v6374 = vsel %vm3450, %v6369, %v6373
      %v6375 = vshrl.u32 %v6249, 16
      %v6377 = vor.u32 %v6375, %v6373
      %v6379 = vshll.u32 %v6250, 16
      %v6381 = vrot.slane %v6379, 1
      %v6382 = vsel %vm3450, %v6377, %v6381
      %v6384 = vsel %vm427, %v6262, 0
      %v6387 = vsel %vm427, %v6270, 0
      %v6390 = vsel %vm427, %v6278, 0
      %v6393 = vsel %vm427, %v6286, 0
      %v6396 = vsel %vm427, %v6294, 0
      %v6399 = vsel %vm427, %v6302, 0
      %v6402 = vsel %vm427, %v6310, 0
      %v6405 = vsel %vm427, %v6318, 0
      %v6408 = vsel %vm427, %v6326, 0
      %v6411 = vsel %vm427, %v6334, 0
      %v6414 = vsel %vm427, %v6342, 0
      %v6417 = vsel %vm427, %v6350, 0
      %v6420 = vsel %vm427, %v6358, 0
      %v6423 = vsel %vm427, %v6366, 0
      %v6426 = vsel %vm427, %v6374, 0
      %v6429 = vsel %vm427, %v6382, 0
      %v6432 = vsel %vm476, %v6167, 0
      %6434 = vmatprep.subr.bf16.mxu0 0
      %6435 = vmatpush1.bf16.msra.mxu0 %v6432
      %6436 = vmatprep.subr.bf16.mxu0 0
      %6437 = vmatpush1.bf16.msra.mxu0 0
      %6438 = vmatprep.subr.bf16.mxu0 0
      %6439 = vmatpush1.bf16.msra.mxu0 0
      %6440 = vmatprep.subr.bf16.mxu0 0
      %6441 = vmatpush1.bf16.msra.mxu0 0
      %6442 = vmatprep.subr.bf16.mxu0 0
      %6443 = vmatpush1.bf16.msra.mxu0 0
      %6444 = vmatprep.subr.bf16.mxu0 0
      %6445 = vmatpush1.bf16.msra.mxu0 0
      %6446 = vmatprep.subr.bf16.mxu0 0
      %6447 = vmatpush1.bf16.msra.mxu0 0
      %6448 = vmatprep.subr.bf16.mxu0 0
      %6449 = vmatpush1.bf16.msra.mxu0 0
      %6450 = vmatprep.subr.bf16.mxu0 0
      %6451 = vmatpush1.bf16.msra.mxu0 0
      %6452 = vmatprep.subr.bf16.mxu0 0
      %6453 = vmatpush1.bf16.msra.mxu0 0
      %6454 = vmatprep.subr.bf16.mxu0 0
      %6455 = vmatpush1.bf16.msra.mxu0 0
      %6456 = vmatprep.subr.bf16.mxu0 0
      %6457 = vmatpush1.bf16.msra.mxu0 0
      %6458 = vmatprep.subr.bf16.mxu0 0
      %6459 = vmatpush1.bf16.msra.mxu0 0
      %6460 = vmatprep.subr.bf16.mxu0 0
      %6461 = vmatpush1.bf16.msra.mxu0 0
      %6462 = vmatprep.subr.bf16.mxu0 0
      %6463 = vmatpush1.bf16.msra.mxu0 0
      %6464 = vmatprep.subr.bf16.mxu0 0
      %6465 = vmatpush1.bf16.msra.mxu0 0
      %6466 = vmatprep.mubr.bf16.mxu0 0
      %6467 = vmatmul.mubr.bf16.gmra.mrb[0].mxu0 %v6384
      %v6468 = vpop.f32.mrb[0].mxu0
      %v6469 = vadd.f32 0.0, %v6468
      %v6470 = vpop.f32.mrb[0].mxu0
      %v6471 = vpop.f32.mrb[0].mxu0
      %v6472 = vadd.f32 0.0, %v6471
      %v6473 = vpop.f32.mrb[0].mxu0
      %6474 = vmatprep.mubr.bf16.mxu0 0
      %6475 = vmatmul.mubr.bf16.gmra.mrb[0].mxu0 %v6387
      %v6476 = vpop.f32.mrb[0].mxu0
      %v6477 = vadd.f32 0.0, %v6476
      %v6478 = vpop.f32.mrb[0].mxu0
      %v6479 = vpop.f32.mrb[0].mxu0
      %v6480 = vadd.f32 0.0, %v6479
      %v6481 = vpop.f32.mrb[0].mxu0
      %6482 = vmatprep.mubr.bf16.mxu0 0
      %6483 = vmatmul.mubr.bf16.gmra.mrb[0].mxu0 %v6390
      %v6484 = vpop.f32.mrb[0].mxu0
      %v6485 = vadd.f32 0.0, %v6484
      %v6486 = vpop.f32.mrb[0].mxu0
      %v6487 = vpop.f32.mrb[0].mxu0
      %v6488 = vadd.f32 0.0, %v6487
      %v6489 = vpop.f32.mrb[0].mxu0
      %6490 = vmatprep.mubr.bf16.mxu0 0
      %6491 = vmatmul.mubr.bf16.gmra.mrb[0].mxu0 %v6393
      %v6492 = vpop.f32.mrb[0].mxu0
      %v6493 = vadd.f32 0.0, %v6492
      %v6494 = vpop.f32.mrb[0].mxu0
      %v6495 = vpop.f32.mrb[0].mxu0
      %v6496 = vadd.f32 0.0, %v6495
      %v6497 = vpop.f32.mrb[0].mxu0
      %6498 = vmatprep.mubr.bf16.mxu0 0
      %6499 = vmatmul.mubr.bf16.gmra.mrb[0].mxu0 %v6396
      %v6500 = vpop.f32.mrb[0].mxu0
      %v6501 = vadd.f32 0.0, %v6500
      %v6502 = vpop.f32.mrb[0].mxu0
      %v6503 = vpop.f32.mrb[0].mxu0
      %v6504 = vadd.f32 0.0, %v6503
      %v6505 = vpop.f32.mrb[0].mxu0
      %6506 = vmatprep.mubr.bf16.mxu0 0
      %6507 = vmatmul.mubr.bf16.gmra.mrb[0].mxu0 %v6399
      %v6508 = vpop.f32.mrb[0].mxu0
      %v6509 = vadd.f32 0.0, %v6508
      %v6510 = vpop.f32.mrb[0].mxu0
      %v6511 = vpop.f32.mrb[0].mxu0
      %v6512 = vadd.f32 0.0, %v6511
      %v6513 = vpop.f32.mrb[0].mxu0
      %6514 = vmatprep.mubr.bf16.mxu0 0
      %6515 = vmatmul.mubr.bf16.gmra.mrb[0].mxu0 %v6402
      %v6516 = vpop.f32.mrb[0].mxu0
      %v6517 = vadd.f32 0.0, %v6516
      %v6518 = vpop.f32.mrb[0].mxu0
      %v6519 = vpop.f32.mrb[0].mxu0
      %v6520 = vadd.f32 0.0, %v6519
      %v6521 = vpop.f32.mrb[0].mxu0
      %6522 = vmatprep.mubr.bf16.mxu0 0
      %6523 = vmatmul.mubr.bf16.gmra.mrb[0].mxu0 %v6405
      %v6524 = vpop.f32.mrb[0].mxu0
      %v6525 = vadd.f32 0.0, %v6524
      %v6526 = vpop.f32.mrb[0].mxu0
      %v6527 = vpop.f32.mrb[0].mxu0
      %v6528 = vadd.f32 0.0, %v6527
      %v6529 = vpop.f32.mrb[0].mxu0
      %6530 = vmatprep.mubr.bf16.mxu0 0
      %6531 = vmatmul.mubr.bf16.gmra.mrb[0].mxu0 %v6408
      %v6532 = vpop.f32.mrb[0].mxu0
      %v6533 = vadd.f32 0.0, %v6532
      %v6534 = vpop.f32.mrb[0].mxu0
      %v6535 = vpop.f32.mrb[0].mxu0
      %v6536 = vadd.f32 0.0, %v6535
      %v6537 = vpop.f32.mrb[0].mxu0
      %6538 = vmatprep.mubr.bf16.mxu0 0
      %6539 = vmatmul.mubr.bf16.gmra.mrb[0].mxu0 %v6411
      %v6540 = vpop.f32.mrb[0].mxu0
      %v6541 = vadd.f32 0.0, %v6540
      %v6542 = vpop.f32.mrb[0].mxu0
      %v6543 = vpop.f32.mrb[0].mxu0
      %v6544 = vadd.f32 0.0, %v6543
      %v6545 = vpop.f32.mrb[0].mxu0
      %6546 = vmatprep.mubr.bf16.mxu0 0
      %6547 = vmatmul.mubr.bf16.gmra.mrb[0].mxu0 %v6414
      %v6548 = vpop.f32.mrb[0].mxu0
      %v6549 = vadd.f32 0.0, %v6548
      %v6550 = vpop.f32.mrb[0].mxu0
      %v6551 = vpop.f32.mrb[0].mxu0
      %v6552 = vadd.f32 0.0, %v6551
      %v6553 = vpop.f32.mrb[0].mxu0
      %6554 = vmatprep.mubr.bf16.mxu0 0
      %6555 = vmatmul.mubr.bf16.gmra.mrb[0].mxu0 %v6417
      %v6556 = vpop.f32.mrb[0].mxu0
      %v6557 = vadd.f32 0.0, %v6556
      %v6558 = vpop.f32.mrb[0].mxu0
      %v6559 = vpop.f32.mrb[0].mxu0
      %v6560 = vadd.f32 0.0, %v6559
      %v6561 = vpop.f32.mrb[0].mxu0
      %6562 = vmatprep.mubr.bf16.mxu0 0
      %6563 = vmatmul.mubr.bf16.gmra.mrb[0].mxu0 %v6420
      %v6564 = vpop.f32.mrb[0].mxu0
      %v6565 = vadd.f32 0.0, %v6564
      %v6566 = vpop.f32.mrb[0].mxu0
      %v6567 = vpop.f32.mrb[0].mxu0
      %v6568 = vadd.f32 0.0, %v6567
      %v6569 = vpop.f32.mrb[0].mxu0
      %6570 = vmatprep.mubr.bf16.mxu0 0
      %6571 = vmatmul.mubr.bf16.gmra.mrb[0].mxu0 %v6423
      %v6572 = vpop.f32.mrb[0].mxu0
      %v6573 = vadd.f32 0.0, %v6572
      %v6574 = vpop.f32.mrb[0].mxu0
      %v6575 = vpop.f32.mrb[0].mxu0
      %v6576 = vadd.f32 0.0, %v6575
      %v6577 = vpop.f32.mrb[0].mxu0
      %6578 = vmatprep.mubr.bf16.mxu0 0
      %6579 = vmatmul.mubr.bf16.gmra.mrb[0].mxu0 %v6426
      %v6580 = vpop.f32.mrb[0].mxu0
      %v6581 = vadd.f32 0.0, %v6580
      %v6582 = vpop.f32.mrb[0].mxu0
      %v6583 = vpop.f32.mrb[0].mxu0
      %v6584 = vadd.f32 0.0, %v6583
      %v6585 = vpop.f32.mrb[0].mxu0
      %6586 = vmatprep.mubr.bf16.mxu0 0
      %6587 = vmatmul.mubr.bf16.gmra.mrb[0].mxu0 %v6429
      %v6588 = vpop.f32.mrb[0].mxu0
      %v6589 = vadd.f32 0.0, %v6588
      %v6590 = vpop.f32.mrb[0].mxu0
      %v6591 = vpop.f32.mrb[0].mxu0
      %v6592 = vadd.f32 0.0, %v6591
      %v6593 = vpop.f32.mrb[0].mxu0
      %6594 = vdwg.mxu0
      %v6595 = vadd.f32 %v6068, %v6469
      %v6596 = vadd.f32 %v6069, %v6472
      %v6597 = vadd.f32 %v6070, %v6477
      %v6598 = vadd.f32 %v6071, %v6480
      %v6599 = vadd.f32 %v6072, %v6485
      %v6600 = vadd.f32 %v6073, %v6488
      %v6601 = vadd.f32 %v6074, %v6493
      %v6602 = vadd.f32 %v6075, %v6496
      %v6603 = vadd.f32 %v6076, %v6501
      %v6604 = vadd.f32 %v6077, %v6504
      %v6605 = vadd.f32 %v6078, %v6509
      %v6606 = vadd.f32 %v6079, %v6512
      %v6607 = vadd.f32 %v6080, %v6517
      %v6608 = vadd.f32 %v6081, %v6520
      %v6609 = vadd.f32 %v6082, %v6525
      %v6610 = vadd.f32 %v6083, %v6528
      %v6611 = vadd.f32 %v6084, %v6533
      %v6612 = vadd.f32 %v6085, %v6536
      %v6613 = vadd.f32 %v6086, %v6541
      %v6614 = vadd.f32 %v6087, %v6544
      %v6615 = vadd.f32 %v6088, %v6549
      %v6616 = vadd.f32 %v6089, %v6552
      %v6617 = vadd.f32 %v6090, %v6557
      %v6618 = vadd.f32 %v6091, %v6560
      %v6619 = vadd.f32 %v6092, %v6565
      %v6620 = vadd.f32 %v6093, %v6568
      %v6621 = vadd.f32 %v6094, %v6573
      %v6622 = vadd.f32 %v6095, %v6576
      %v6623 = vadd.f32 %v6096, %v6581
      %v6624 = vadd.f32 %v6097, %v6584
      %v6625 = vadd.f32 %v6098, %v6589
      %v6626 = vadd.f32 %v6099, %v6592
      %v6627 = vld [vmem:[%s5] sm:$0x1]
      %v6629 = vlaneseq
      %v6630 = vshrl.u32 %v6629, 7
      %v6631 = vsub.s32 0, %v6630
      %v6632 = vrot.slane %v6627, %v6631
      %v6634 = vmul.f32 %v6595, %v6632
      %v6635 = vmul.f32 %v6596, %v6632
      %v6636 = vmul.f32 %v6597, %v6632
      %v6637 = vmul.f32 %v6598, %v6632
      %v6638 = vmul.f32 %v6599, %v6632
      %v6639 = vmul.f32 %v6600, %v6632
      %v6640 = vmul.f32 %v6601, %v6632
      %v6641 = vmul.f32 %v6602, %v6632
      %v6642 = vmul.f32 %v6603, %v6632
      %v6643 = vmul.f32 %v6604, %v6632
      %v6644 = vmul.f32 %v6605, %v6632
      %v6645 = vmul.f32 %v6606, %v6632
      %v6646 = vmul.f32 %v6607, %v6632
      %v6647 = vmul.f32 %v6608, %v6632
      %v6648 = vmul.f32 %v6609, %v6632
      %v6649 = vmul.f32 %v6610, %v6632
      %v6650 = vmul.f32 %v6611, %v6632
      %v6651 = vmul.f32 %v6612, %v6632
      %v6652 = vmul.f32 %v6613, %v6632
      %v6653 = vmul.f32 %v6614, %v6632
      %v6654 = vmul.f32 %v6615, %v6632
      %v6655 = vmul.f32 %v6616, %v6632
      %v6656 = vmul.f32 %v6617, %v6632
      %v6657 = vmul.f32 %v6618, %v6632
      %v6658 = vmul.f32 %v6619, %v6632
      %v6659 = vmul.f32 %v6620, %v6632
      %v6660 = vmul.f32 %v6621, %v6632
      %v6661 = vmul.f32 %v6622, %v6632
      %v6662 = vmul.f32 %v6623, %v6632
      %v6663 = vmul.f32 %v6624, %v6632
      %v6664 = vmul.f32 %v6625, %v6632
      %v6665 = vmul.f32 %v6626, %v6632
      %v6666 = vld [vmem:[%s6] sm:$0x1]
      %v6668 = vlaneseq
      %v6669 = vshrl.u32 %v6668, 7
      %v6670 = vsub.s32 0, %v6669
      %v6671 = vrot.slane %v6666, %v6670
      %v6673 = vadd.f32 %v6634, %v6671
      %v6674 = vadd.f32 %v6635, %v6671
      %v6675 = vadd.f32 %v6636, %v6671
      %v6676 = vadd.f32 %v6637, %v6671
      %v6677 = vadd.f32 %v6638, %v6671
      %v6678 = vadd.f32 %v6639, %v6671
      %v6679 = vadd.f32 %v6640, %v6671
      %v6680 = vadd.f32 %v6641, %v6671
      %v6681 = vadd.f32 %v6642, %v6671
      %v6682 = vadd.f32 %v6643, %v6671
      %v6683 = vadd.f32 %v6644, %v6671
      %v6684 = vadd.f32 %v6645, %v6671
      %v6685 = vadd.f32 %v6646, %v6671
      %v6686 = vadd.f32 %v6647, %v6671
      %v6687 = vadd.f32 %v6648, %v6671
      %v6688 = vadd.f32 %v6649, %v6671
      %v6689 = vadd.f32 %v6650, %v6671
      %v6690 = vadd.f32 %v6651, %v6671
      %v6691 = vadd.f32 %v6652, %v6671
      %v6692 = vadd.f32 %v6653, %v6671
      %v6693 = vadd.f32 %v6654, %v6671
      %v6694 = vadd.f32 %v6655, %v6671
      %v6695 = vadd.f32 %v6656, %v6671
      %v6696 = vadd.f32 %v6657, %v6671
      %v6697 = vadd.f32 %v6658, %v6671
      %v6698 = vadd.f32 %v6659, %v6671
      %v6699 = vadd.f32 %v6660, %v6671
      %v6700 = vadd.f32 %v6661, %v6671
      %v6701 = vadd.f32 %v6662, %v6671
      %v6702 = vadd.f32 %v6663, %v6671
      %v6703 = vadd.f32 %v6664, %v6671
      %v6704 = vadd.f32 %v6665, %v6671
      %v6705 = vsub.f32 0.0, %v6673
      %v6706 = vsub.f32 0.0, %v6674
      %v6707 = vsub.f32 0.0, %v6675
      %v6708 = vsub.f32 0.0, %v6676
      %v6709 = vsub.f32 0.0, %v6677
      %v6710 = vsub.f32 0.0, %v6678
      %v6711 = vsub.f32 0.0, %v6679
      %v6712 = vsub.f32 0.0, %v6680
      %v6713 = vsub.f32 0.0, %v6681
      %v6714 = vsub.f32 0.0, %v6682
      %v6715 = vsub.f32 0.0, %v6683
      %v6716 = vsub.f32 0.0, %v6684
      %v6717 = vsub.f32 0.0, %v6685
      %v6718 = vsub.f32 0.0, %v6686
      %v6719 = vsub.f32 0.0, %v6687
      %v6720 = vsub.f32 0.0, %v6688
      %v6721 = vsub.f32 0.0, %v6689
      %v6722 = vsub.f32 0.0, %v6690
      %v6723 = vsub.f32 0.0, %v6691
      %v6724 = vsub.f32 0.0, %v6692
      %v6725 = vsub.f32 0.0, %v6693
      %v6726 = vsub.f32 0.0, %v6694
      %v6727 = vsub.f32 0.0, %v6695
      %v6728 = vsub.f32 0.0, %v6696
      %v6729 = vsub.f32 0.0, %v6697
      %v6730 = vsub.f32 0.0, %v6698
      %v6731 = vsub.f32 0.0, %v6699
      %v6732 = vsub.f32 0.0, %v6700
      %v6733 = vsub.f32 0.0, %v6701
      %v6734 = vsub.f32 0.0, %v6702
      %v6735 = vsub.f32 0.0, %v6703
      %v6736 = vsub.f32 0.0, %v6704
      %v6737 = vmul.f32 %v6705, 1.442695
      %v6738 = vpow.pop %v6737
      %v6739 = vmul.f32 %v6706, 1.442695
      %v6740 = vpow.pop %v6739
      %v6741 = vmul.f32 %v6707, 1.442695
      %v6742 = vpow.pop %v6741
      %v6743 = vmul.f32 %v6708, 1.442695
      %v6744 = vpow.pop %v6743
      %v6745 = vmul.f32 %v6709, 1.442695
      %v6746 = vpow.pop %v6745
      %v6747 = vmul.f32 %v6710, 1.442695
      %v6748 = vpow.pop %v6747
      %v6749 = vmul.f32 %v6711, 1.442695
      %v6750 = vpow.pop %v6749
      %v6751 = vmul.f32 %v6712, 1.442695
      %v6752 = vpow.pop %v6751
      %v6753 = vmul.f32 %v6713, 1.442695
      %v6754 = vpow.pop %v6753
      %v6755 = vmul.f32 %v6714, 1.442695
      %v6756 = vpow.pop %v6755
      %v6757 = vmul.f32 %v6715, 1.442695
      %v6758 = vpow.pop %v6757
      %v6759 = vmul.f32 %v6716, 1.442695
      %v6760 = vpow.pop %v6759
      %v6761 = vmul.f32 %v6717, 1.442695
      %v6762 = vpow.pop %v6761
      %v6763 = vmul.f32 %v6718, 1.442695
      %v6764 = vpow.pop %v6763
      %v6765 = vmul.f32 %v6719, 1.442695
      %v6766 = vpow.pop %v6765
      %v6767 = vmul.f32 %v6720, 1.442695
      %v6768 = vpow.pop %v6767
      %v6769 = vmul.f32 %v6721, 1.442695
      %v6770 = vpow.pop %v6769
      %v6771 = vmul.f32 %v6722, 1.442695
      %v6772 = vpow.pop %v6771
      %v6773 = vmul.f32 %v6723, 1.442695
      %v6774 = vpow.pop %v6773
      %v6775 = vmul.f32 %v6724, 1.442695
      %v6776 = vpow.pop %v6775
      %v6777 = vmul.f32 %v6725, 1.442695
      %v6778 = vpow.pop %v6777
      %v6779 = vmul.f32 %v6726, 1.442695
      %v6780 = vpow.pop %v6779
      %v6781 = vmul.f32 %v6727, 1.442695
      %v6782 = vpow.pop %v6781
      %v6783 = vmul.f32 %v6728, 1.442695
      %v6784 = vpow.pop %v6783
      %v6785 = vmul.f32 %v6729, 1.442695
      %v6786 = vpow.pop %v6785
      %v6787 = vmul.f32 %v6730, 1.442695
      %v6788 = vpow.pop %v6787
      %v6789 = vmul.f32 %v6731, 1.442695
      %v6790 = vpow.pop %v6789
      %v6791 = vmul.f32 %v6732, 1.442695
      %v6792 = vpow.pop %v6791
      %v6793 = vmul.f32 %v6733, 1.442695
      %v6794 = vpow.pop %v6793
      %v6795 = vmul.f32 %v6734, 1.442695
      %v6796 = vpow.pop %v6795
      %v6797 = vmul.f32 %v6735, 1.442695
      %v6798 = vpow.pop %v6797
      %v6799 = vmul.f32 %v6736, 1.442695
      %v6800 = vpow.pop %v6799
      %v6801 = vadd.f32 %v6738, 1.0
      %v6802 = vadd.f32 %v6740, 1.0
      %v6803 = vadd.f32 %v6742, 1.0
      %v6804 = vadd.f32 %v6744, 1.0
      %v6805 = vadd.f32 %v6746, 1.0
      %v6806 = vadd.f32 %v6748, 1.0
      %v6807 = vadd.f32 %v6750, 1.0
      %v6808 = vadd.f32 %v6752, 1.0
      %v6809 = vadd.f32 %v6754, 1.0
      %v6810 = vadd.f32 %v6756, 1.0
      %v6811 = vadd.f32 %v6758, 1.0
      %v6812 = vadd.f32 %v6760, 1.0
      %v6813 = vadd.f32 %v6762, 1.0
      %v6814 = vadd.f32 %v6764, 1.0
      %v6815 = vadd.f32 %v6766, 1.0
      %v6816 = vadd.f32 %v6768, 1.0
      %v6817 = vadd.f32 %v6770, 1.0
      %v6818 = vadd.f32 %v6772, 1.0
      %v6819 = vadd.f32 %v6774, 1.0
      %v6820 = vadd.f32 %v6776, 1.0
      %v6821 = vadd.f32 %v6778, 1.0
      %v6822 = vadd.f32 %v6780, 1.0
      %v6823 = vadd.f32 %v6782, 1.0
      %v6824 = vadd.f32 %v6784, 1.0
      %v6825 = vadd.f32 %v6786, 1.0
      %v6826 = vadd.f32 %v6788, 1.0
      %v6827 = vadd.f32 %v6790, 1.0
      %v6828 = vadd.f32 %v6792, 1.0
      %v6829 = vadd.f32 %v6794, 1.0
      %v6830 = vadd.f32 %v6796, 1.0
      %v6831 = vadd.f32 %v6798, 1.0
      %v6832 = vadd.f32 %v6800, 1.0
      %v6833 = vrcp.pop %v6801
      %v6834 = vrcp.pop %v6802
      %v6835 = vrcp.pop %v6803
      %v6836 = vrcp.pop %v6804
      %v6837 = vrcp.pop %v6805
      %v6838 = vrcp.pop %v6806
      %v6839 = vrcp.pop %v6807
      %v6840 = vrcp.pop %v6808
      %v6841 = vrcp.pop %v6809
      %v6842 = vrcp.pop %v6810
      %v6843 = vrcp.pop %v6811
      %v6844 = vrcp.pop %v6812
      %v6845 = vrcp.pop %v6813
      %v6846 = vrcp.pop %v6814
      %v6847 = vrcp.pop %v6815
      %v6848 = vrcp.pop %v6816
      %v6849 = vrcp.pop %v6817
      %v6850 = vrcp.pop %v6818
      %v6851 = vrcp.pop %v6819
      %v6852 = vrcp.pop %v6820
      %v6853 = vrcp.pop %v6821
      %v6854 = vrcp.pop %v6822
      %v6855 = vrcp.pop %v6823
      %v6856 = vrcp.pop %v6824
      %v6857 = vrcp.pop %v6825
      %v6858 = vrcp.pop %v6826
      %v6859 = vrcp.pop %v6827
      %v6860 = vrcp.pop %v6828
      %v6861 = vrcp.pop %v6829
      %v6862 = vrcp.pop %v6830
      %v6863 = vrcp.pop %v6831
      %v6864 = vrcp.pop %v6832
      %v6865 = vmul.f32 %v6673, %v6833
      %v6866 = vmul.f32 %v6674, %v6834
      %v6867 = vmul.f32 %v6675, %v6835
      %v6868 = vmul.f32 %v6676, %v6836
      %v6869 = vmul.f32 %v6677, %v6837
      %v6870 = vmul.f32 %v6678, %v6838
      %v6871 = vmul.f32 %v6679, %v6839
      %v6872 = vmul.f32 %v6680, %v6840
      %v6873 = vmul.f32 %v6681, %v6841
      %v6874 = vmul.f32 %v6682, %v6842
      %v6875 = vmul.f32 %v6683, %v6843
      %v6876 = vmul.f32 %v6684, %v6844
      %v6877 = vmul.f32 %v6685, %v6845
      %v6878 = vmul.f32 %v6686, %v6846
      %v6879 = vmul.f32 %v6687, %v6847
      %v6880 = vmul.f32 %v6688, %v6848
      %v6881 = vmul.f32 %v6689, %v6849
      %v6882 = vmul.f32 %v6690, %v6850
      %v6883 = vmul.f32 %v6691, %v6851
      %v6884 = vmul.f32 %v6692, %v6852
      %v6885 = vmul.f32 %v6693, %v6853
      %v6886 = vmul.f32 %v6694, %v6854
      %v6887 = vmul.f32 %v6695, %v6855
      %v6888 = vmul.f32 %v6696, %v6856
      %v6889 = vmul.f32 %v6697, %v6857
      %v6890 = vmul.f32 %v6698, %v6858
      %v6891 = vmul.f32 %v6699, %v6859
      %v6892 = vmul.f32 %v6700, %v6860
      %v6893 = vmul.f32 %v6701, %v6861
      %v6894 = vmul.f32 %v6702, %v6862
      %v6895 = vmul.f32 %v6703, %v6863
      %v6896 = vmul.f32 %v6704, %v6864
      %v6897 = vunpack.c.l.bf16 %v314
      %v6898 = vunpack.c.l.bf16 %v315
      %v6899 = vunpack.c.l.bf16 %v316
      %v6900 = vunpack.c.l.bf16 %v317
      %v6901 = vunpack.c.l.bf16 %v318
      %v6902 = vunpack.c.l.bf16 %v319
      %v6903 = vunpack.c.l.bf16 %v320
      %v6904 = vunpack.c.l.bf16 %v321
      %v6905 = vunpack.c.l.bf16 %v322
      %v6906 = vunpack.c.l.bf16 %v323
      %v6907 = vunpack.c.l.bf16 %v324
      %v6908 = vunpack.c.l.bf16 %v325
      %v6909 = vunpack.c.l.bf16 %v326
      %v6910 = vunpack.c.l.bf16 %v327
      %v6911 = vunpack.c.l.bf16 %v328
      %v6912 = vunpack.c.l.bf16 %v329
      %v6913 = vunpack.c.l.bf16 %v330
      %v6914 = vunpack.c.l.bf16 %v331
      %v6915 = vunpack.c.l.bf16 %v332
      %v6916 = vunpack.c.l.bf16 %v333
      %v6917 = vunpack.c.l.bf16 %v334
      %v6918 = vunpack.c.l.bf16 %v335
      %v6919 = vunpack.c.l.bf16 %v336
      %v6920 = vunpack.c.l.bf16 %v337
      %v6921 = vunpack.c.l.bf16 %v338
      %v6922 = vunpack.c.l.bf16 %v339
      %v6923 = vunpack.c.l.bf16 %v340
      %v6924 = vunpack.c.l.bf16 %v341
      %v6925 = vunpack.c.l.bf16 %v342
      %v6926 = vunpack.c.l.bf16 %v343
      %v6927 = vunpack.c.l.bf16 %v344
      %v6928 = vunpack.c.l.bf16 %v345
      %v6929 = vadd.f32 %v6865, %v6897
      %v6930 = vadd.f32 %v6866, %v6898
      %v6931 = vadd.f32 %v6867, %v6899
      %v6932 = vadd.f32 %v6868, %v6900
      %v6933 = vadd.f32 %v6869, %v6901
      %v6934 = vadd.f32 %v6870, %v6902
      %v6935 = vadd.f32 %v6871, %v6903
      %v6936 = vadd.f32 %v6872, %v6904
      %v6937 = vadd.f32 %v6873, %v6905
      %v6938 = vadd.f32 %v6874, %v6906
      %v6939 = vadd.f32 %v6875, %v6907
      %v6940 = vadd.f32 %v6876, %v6908
      %v6941 = vadd.f32 %v6877, %v6909
      %v6942 = vadd.f32 %v6878, %v6910
      %v6943 = vadd.f32 %v6879, %v6911
      %v6944 = vadd.f32 %v6880, %v6912
      %v6945 = vadd.f32 %v6881, %v6913
      %v6946 = vadd.f32 %v6882, %v6914
      %v6947 = vadd.f32 %v6883, %v6915
      %v6948 = vadd.f32 %v6884, %v6916
      %v6949 = vadd.f32 %v6885, %v6917
      %v6950 = vadd.f32 %v6886, %v6918
      %v6951 = vadd.f32 %v6887, %v6919
      %v6952 = vadd.f32 %v6888, %v6920
      %v6953 = vadd.f32 %v6889, %v6921
      %v6954 = vadd.f32 %v6890, %v6922
      %v6955 = vadd.f32 %v6891, %v6923
      %v6956 = vadd.f32 %v6892, %v6924
      %v6957 = vadd.f32 %v6893, %v6925
      %v6958 = vadd.f32 %v6894, %v6926
      %v6959 = vadd.f32 %v6895, %v6927
      %v6960 = vadd.f32 %v6896, %v6928
      %v6961 = vpack.c.bf16 %v6930, %v6929
      %v6962 = vpack.c.bf16 %v6932, %v6931
      %v6963 = vpack.c.bf16 %v6934, %v6933
      %v6964 = vpack.c.bf16 %v6936, %v6935
      %v6965 = vpack.c.bf16 %v6938, %v6937
      %v6966 = vpack.c.bf16 %v6940, %v6939
      %v6967 = vpack.c.bf16 %v6942, %v6941
      %v6968 = vpack.c.bf16 %v6944, %v6943
      %v6969 = vpack.c.bf16 %v6946, %v6945
      %v6970 = vpack.c.bf16 %v6948, %v6947
      %v6971 = vpack.c.bf16 %v6950, %v6949
      %v6972 = vpack.c.bf16 %v6952, %v6951
      %v6973 = vpack.c.bf16 %v6954, %v6953
      %v6974 = vpack.c.bf16 %v6956, %v6955
      %v6975 = vpack.c.bf16 %v6958, %v6957
      %v6976 = vpack.c.bf16 %v6960, %v6959
      %v6993 = vunpack.c.l.b16 %v6961
      %v6994 = vunpack.c.h.b16 %v6961
      %v6995 = vunpack.c.l.b16 %v6962
      %v6996 = vunpack.c.h.b16 %v6962
      %v6997 = vunpack.c.l.b16 %v6963
      %v6998 = vunpack.c.h.b16 %v6963
      %v6999 = vunpack.c.l.b16 %v6964
      %v7000 = vunpack.c.h.b16 %v6964
      %v7001 = vunpack.c.l.b16 %v6965
      %v7002 = vunpack.c.h.b16 %v6965
      %v7003 = vunpack.c.l.b16 %v6966
      %v7004 = vunpack.c.h.b16 %v6966
      %v7005 = vunpack.c.l.b16 %v6967
      %v7006 = vunpack.c.h.b16 %v6967
      %v7007 = vunpack.c.l.b16 %v6968
      %v7008 = vunpack.c.h.b16 %v6968
      %v7009 = vunpack.c.l.b16 %v6969
      %v7010 = vunpack.c.h.b16 %v6969
      %v7011 = vunpack.c.l.b16 %v6970
      %v7012 = vunpack.c.h.b16 %v6970
      %v7013 = vunpack.c.l.b16 %v6971
      %v7014 = vunpack.c.h.b16 %v6971
      %v7015 = vunpack.c.l.b16 %v6972
      %v7016 = vunpack.c.h.b16 %v6972
      %v7017 = vunpack.c.l.b16 %v6973
      %v7018 = vunpack.c.h.b16 %v6973
      %v7019 = vunpack.c.l.b16 %v6974
      %v7020 = vunpack.c.h.b16 %v6974
      %v7021 = vunpack.c.l.b16 %v6975
      %v7022 = vunpack.c.h.b16 %v6975
      %v7023 = vunpack.c.l.b16 %v6976
      %v7024 = vunpack.c.h.b16 %v6976
      %v7025 = vpack.c.b16 %v6993, %v6993
      %v7026 = vpack.c.b16 %v6994, %v6994
      %v7027 = vpack.c.b16 %v6995, %v6995
      %v7028 = vpack.c.b16 %v6996, %v6996
      %v7029 = vpack.c.b16 %v6997, %v6997
      %v7030 = vpack.c.b16 %v6998, %v6998
      %v7031 = vpack.c.b16 %v6999, %v6999
      %v7032 = vpack.c.b16 %v7000, %v7000
      %v7033 = vpack.c.b16 %v7001, %v7001
      %v7034 = vpack.c.b16 %v7002, %v7002
      %v7035 = vpack.c.b16 %v7003, %v7003
      %v7036 = vpack.c.b16 %v7004, %v7004
      %v7037 = vpack.c.b16 %v7005, %v7005
      %v7038 = vpack.c.b16 %v7006, %v7006
      %v7039 = vpack.c.b16 %v7007, %v7007
      %v7040 = vpack.c.b16 %v7008, %v7008
      %v7041 = vpack.c.b16 %v7009, %v7009
      %v7042 = vpack.c.b16 %v7010, %v7010
      %v7043 = vpack.c.b16 %v7011, %v7011
      %v7044 = vpack.c.b16 %v7012, %v7012
      %v7045 = vpack.c.b16 %v7013, %v7013
      %v7046 = vpack.c.b16 %v7014, %v7014
      %v7047 = vpack.c.b16 %v7015, %v7015
      %v7048 = vpack.c.b16 %v7016, %v7016
      %v7049 = vpack.c.b16 %v7017, %v7017
      %v7050 = vpack.c.b16 %v7018, %v7018
      %v7051 = vpack.c.b16 %v7019, %v7019
      %v7052 = vpack.c.b16 %v7020, %v7020
      %v7053 = vpack.c.b16 %v7021, %v7021
      %v7054 = vpack.c.b16 %v7022, %v7022
      %v7055 = vpack.c.b16 %v7023, %v7023
      %v7056 = vpack.c.b16 %v7024, %v7024
      %7089 = vst.msk [vmem:[%s300] sm:$0xf] %vm306, %v7025
      %7090 = vst.msk [vmem:[%s300 + $0x4] sm:$0xf] %vm306, %v7026
      %7091 = vst.msk [vmem:[%s300 + $0x8] sm:$0xf] %vm306, %v7027
      %7092 = vst.msk [vmem:[%s300 + $0xc] sm:$0xf] %vm306, %v7028
      %7093 = vst.msk [vmem:[%s300 + $0x10] sm:$0xf] %vm306, %v7029
      %7094 = vst.msk [vmem:[%s300 + $0x14] sm:$0xf] %vm306, %v7030
      %7095 = vst.msk [vmem:[%s300 + $0x18] sm:$0xf] %vm306, %v7031
      %7096 = vst.msk [vmem:[%s300 + $0x1c] sm:$0xf] %vm306, %v7032
      %7097 = vst.msk [vmem:[%s300 + $0x20] sm:$0xf] %vm306, %v7033
      %7098 = vst.msk [vmem:[%s300 + $0x24] sm:$0xf] %vm306, %v7034
      %7099 = vst.msk [vmem:[%s300 + $0x28] sm:$0xf] %vm306, %v7035
      %7100 = vst.msk [vmem:[%s300 + $0x2c] sm:$0xf] %vm306, %v7036
      %7101 = vst.msk [vmem:[%s300 + $0x30] sm:$0xf] %vm306, %v7037
      %7102 = vst.msk [vmem:[%s300 + $0x34] sm:$0xf] %vm306, %v7038
      %7103 = vst.msk [vmem:[%s300 + $0x38] sm:$0xf] %vm306, %v7039
      %7104 = vst.msk [vmem:[%s300 + $0x3c] sm:$0xf] %vm306, %v7040
      %7105 = vst.msk [vmem:[%s300 + $0x40] sm:$0xf] %vm306, %v7041
      %7106 = vst.msk [vmem:[%s300 + $0x44] sm:$0xf] %vm306, %v7042
      %7107 = vst.msk [vmem:[%s300 + $0x48] sm:$0xf] %vm306, %v7043
      %7108 = vst.msk [vmem:[%s300 + $0x4c] sm:$0xf] %vm306, %v7044
      %7109 = vst.msk [vmem:[%s300 + $0x50] sm:$0xf] %vm306, %v7045
      %7110 = vst.msk [vmem:[%s300 + $0x54] sm:$0xf] %vm306, %v7046
      %7111 = vst.msk [vmem:[%s300 + $0x58] sm:$0xf] %vm306, %v7047
      %7112 = vst.msk [vmem:[%s300 + $0x5c] sm:$0xf] %vm306, %v7048
      %7113 = vst.msk [vmem:[%s300 + $0x60] sm:$0xf] %vm306, %v7049
      %7114 = vst.msk [vmem:[%s300 + $0x64] sm:$0xf] %vm306, %v7050
      %7115 = vst.msk [vmem:[%s300 + $0x68] sm:$0xf] %vm306, %v7051
      %7116 = vst.msk [vmem:[%s300 + $0x6c] sm:$0xf] %vm306, %v7052
      %7117 = vst.msk [vmem:[%s300 + $0x70] sm:$0xf] %vm306, %v7053
      %7118 = vst.msk [vmem:[%s300 + $0x74] sm:$0xf] %vm306, %v7054
      %7119 = vst.msk [vmem:[%s300 + $0x78] sm:$0xf] %vm306, %v7055
      %7120 = vst.msk [vmem:[%s300 + $0x7c] sm:$0xf] %vm306, %v7056
      %s7121 = smul.u32 32, %s23
      %p7122 = scmp.lt.s32.totalorder %s22, 1
      %s7123 = scalar_select %p7122, %s22, 1
      %p7124 = scmp.lt.s32.totalorder %s7121, 31
      %s7125 = scalar_select %p7124, %s7121, 31
      %s7126 = smul.addr %s7123, 32
      %s7127 = sadd.s32 %s7125, %s7126
      %s7128 = smul.addr %s7127, 4
      %s7129 = scalar_lea.vmem %s7, %s7128
      // Predicated region
      $region49: #{c3_forward.4} parent=47 // pred_check
        %p7130 = pneg %p202
      $region50: #{c3_forward.4} parent=47 // pred_check_branch
        %7132 = sbr.rel (%p7130) target = $region52
      $region51: #{c3_forward.4} parent=47 // pred_region
        %s7133 = smul.u32 32, %s23
      $region52: #{c3_forward.4} parent=47 // pred_fallthru
        _
    $region48: #{c3_forward.4} parent=5 // pred_fallthru
      _
    %p7134 = scmp.le.s32.totalorder 2, %s13
    // Predicated region
    $region53: #{c3_forward.4} parent=5 // pred_check
      %p7135 = pneg %p7134
    $region54: #{c3_forward.4} parent=5 // pred_check_branch
      %7137 = sbr.rel (%p7135) target = $region56
    $region55: #{c3_forward.4} parent=5 // pred_region
      %s7138 = ssub.s32 %s13, 2
      // Predicated region
      $region57: #{c3_forward.4} parent=55 // pred_check
        %p7139 = pneg %p208
      $region58: #{c3_forward.4} parent=55 // pred_check_branch
        %7141 = sbr.rel (%p7139) target = $region60
      $region59: #{c3_forward.4} parent=55 // pred_region
        %s7142 = smul.u32 32, %s25
        %p7143 = scmp.lt.s32.totalorder %s24, 1
        %s7144 = scalar_select %p7143, %s24, 1
        %p7145 = scmp.lt.s32.totalorder %s7142, 31
        %s7146 = scalar_select %p7145, %s7142, 31
        %s7147 = smul.addr %s7144, 32
        %s7148 = sadd.s32 %s7146, %s7147
        %s7149 = smul.addr %s7148, 4
        %s7150 = scalar_lea.vmem %s7, %s7149
      $region60: #{c3_forward.4} parent=55 // pred_fallthru
        _
    $region56: #{c3_forward.4} parent=5 // pred_fallthru
      _
  $region6: #{c3_forward.4} parent=0 // loop_footer
    %s17 = sadd.s32 1, %s13
  $region7: #{c3_forward.4} parent=0 // loop_footer_branch
    %12 = sbr.rel target = $region3
  $region8: #{c3_forward.4} parent=0 // loop_exit
    _

</llo_original>
